<compile_context>
chip_gen: v7x
topology: tpu7x:2x2x1
jax: 0.10.0
libtpu: 0.0.40
codegen_flags: <defaults>
</compile_context>

<pallas_src>
import jax
import jax.numpy as jnp
from jax import lax
from jax.experimental import pallas as pl
from jax.experimental.pallas import tpu as pltpu


CPAD = 128  # lane-dense channel padding used for every conv / attention operand


def _gelu_exact(x):
    # PyTorch nn.GELU() default = exact erf formulation.
    return 0.5 * x * (1.0 + lax.erf(x * (1.0 / jnp.sqrt(2.0)).astype(x.dtype)))


def cab_kernel(x_ref, w1_ref, b1_ref, w2_ref, b2_ref,
               wf1_ref, bf1_ref, wf2_ref, bf2_ref,
               o_ref, xpad_ref, col1_ref, midpad_ref, col2_ref):
    # x_ref   : (N, H, W, CPAD)        channel-padded NHWC input (whole batch)
    # o_ref   : (N, H*W, CPAD)         lane-dense output slab
    # xpad_ref: (N, H+2, W+2, CPAD)    zero-bordered conv1 input   (VMEM scratch)
    # col1_ref: (N*H*W, 9*CPAD)        im2col matrix for conv1     (VMEM scratch)
    # midpad  : (N, H+2, W+2, CPAD)    zero-bordered conv2 input   (VMEM scratch)
    # col2_ref: (N*H*W, 9*CPAD)        im2col matrix for conv2     (VMEM scratch)
    N, H, W, Cp = x_ref.shape
    HW = H * W

    # Border-only zeroing: the interior of both padded scratches is fully
    # overwritten below, so only the 1-pixel halo needs to be cleared.
    zrow = jnp.zeros((N, 1, W + 2, Cp), jnp.float32)
    zcol = jnp.zeros((N, H, 1, Cp), jnp.float32)
    for pad_ref in (xpad_ref, midpad_ref):
        pad_ref[:, 0:1, :, :] = zrow
        pad_ref[:, H + 1:H + 2, :, :] = zrow
        pad_ref[:, 1:1 + H, 0:1, :] = zcol
        pad_ref[:, 1:1 + H, W + 1:W + 2, :] = zcol

    # Interior fill: input is already padded to CPAD lanes by the wrapper, so
    # this is a single unmasked-lane assignment covering all 128 channels.
    xpad_ref[:, 1:1 + H, 1:1 + W, :] = x_ref[...].astype(jnp.float32)

    # ---- conv1 (3x3, stride 1, pad 1): im2col + single K=9*CPAD matmul ----
    for dy in range(3):
        for dx in range(3):
            t = dy * 3 + dx
            col1_ref[:, t * Cp:(t + 1) * Cp] = (
                xpad_ref[:, dy:dy + H, dx:dx + W, :].reshape(N * HW, Cp))
    acc1 = jnp.dot(col1_ref[...], w1_ref[...],
                   preferred_element_type=jnp.float32) + b1_ref[...]
    mid = _gelu_exact(acc1)                                   # (N*HW, CPAD)

    # ---- conv2 (3x3, stride 1, pad 1): same im2col scheme ----
    midpad_ref[:, 1:1 + H, 1:1 + W, :] = mid.reshape(N, H, W, Cp)
    for dy in range(3):
        for dx in range(3):
            t = dy * 3 + dx
            col2_ref[:, t * Cp:(t + 1) * Cp] = (
                midpad_ref[:, dy:dy + H, dx:dx + W, :].reshape(N * HW, Cp))
    acc2 = jnp.dot(col2_ref[...], w2_ref[...],
                   preferred_element_type=jnp.float32) + b2_ref[...]
    acc2 = acc2.reshape(N, HW, Cp)                            # (N, HW, CPAD)

    # ---- channel attention: GAP -> 1x1 -> ReLU -> 1x1 -> sigmoid -> scale ----
    # Padded lanes of acc2 are exactly zero (zero weight columns + zero bias),
    # so the per-sample spatial mean and the fc layers see no dead-lane leak.
    # The two 1x1 layers are degenerate matmuls (Csq=2): keep them on the
    # VPU (broadcast multiply) + XLU (reduce) instead of an MXU push/pop.
    pooled = jnp.mean(acc2, axis=1)                           # (N, CPAD)
    h1 = jnp.maximum(
        jnp.sum(pooled[:, None, :] * wf1_ref[...][None, :, :], axis=-1)
        + bf1_ref[...], 0.0)                                  # (N, Csq)
    att = jax.nn.sigmoid(
        jnp.sum(h1[:, :, None] * wf2_ref[...][None, :, :], axis=1)
        + bf2_ref[...])                                       # (N, CPAD)

    # Lane-dense store: last dim = CPAD (multiple of 128) -> unmasked vst.
    o_ref[...] = (acc2 * att[:, None, :]).astype(o_ref.dtype)


def _prep_params(params, C):
    """Zero-pad + reshape weights into im2col / broadcast form (CPAD lanes).

    In a real model this runs once at load time; here it is a few KiB of XLA
    work inside the jitted wrapper.  Padded rows/columns/biases are zero so
    dead lanes stay exactly zero throughout the kernel.
    """
    w1, b1, w2, b2, wf1, bf1, wf2, bf2 = params
    Cmid = w1.shape[3]
    f32 = jnp.float32
    w1m = jnp.pad(w1.astype(f32),
                  ((0, 0), (0, 0), (0, CPAD - C), (0, CPAD - Cmid))
                  ).reshape(9 * CPAD, CPAD)
    b1p = jnp.pad(b1.astype(f32), ((0, 0), (0, CPAD - Cmid)))
    w2m = jnp.pad(w2.astype(f32),
                  ((0, 0), (0, 0), (0, CPAD - Cmid), (0, CPAD - C))
                  ).reshape(9 * CPAD, CPAD)
    b2p = jnp.pad(b2.astype(f32), ((0, 0), (0, CPAD - C)))
    wf1t = jnp.pad(wf1.astype(f32).T, ((0, 0), (0, CPAD - C)))   # (Csq, CPAD)
    bf1p = bf1.astype(f32)                                       # (1, Csq)
    wf2p = jnp.pad(wf2.astype(f32), ((0, 0), (0, CPAD - C)))     # (Csq, CPAD)
    bf2p = jnp.pad(bf2.astype(f32), ((0, 0), (0, CPAD - C)))     # (1, CPAD)
    return w1m, b1p, w2m, b2p, wf1t, bf1p, wf2p, bf2p


def cab_forward(x_nchw, params):
    """CAB forward. Input/output in NCHW (PyTorch convention)."""
    w1, _, _, _, wf1, _, _, _ = params
    N, C, H, W = x_nchw.shape
    Csq = wf1.shape[1]
    assert C <= CPAD

    w1m, b1p, w2m, b2p, wf1t, bf1p, wf2p, bf2p = _prep_params(params, C)

    # NCHW -> NHWC; the channel pad to CPAD fuses into the same XLA copy, so
    # the kernel sees a lane-dense (N, H, W, 128) input block.
    x = jnp.transpose(x_nchw, (0, 2, 3, 1))
    x = jnp.pad(x, ((0, 0), (0, 0), (0, 0), (0, CPAD - C)))

    out = pl.pallas_call(
        cab_kernel,
        out_shape=jax.ShapeDtypeStruct((N, H * W, CPAD), x.dtype),
        grid=(1,),   # batch folded: single step, M = N*H*W im2col rows
        in_specs=[
            pl.BlockSpec((N, H, W, CPAD), lambda i: (0, 0, 0, 0)),
            pl.BlockSpec((9 * CPAD, CPAD), lambda i: (0, 0)),
            pl.BlockSpec((1, CPAD), lambda i: (0, 0)),
            pl.BlockSpec((9 * CPAD, CPAD), lambda i: (0, 0)),
            pl.BlockSpec((1, CPAD), lambda i: (0, 0)),
            pl.BlockSpec((Csq, CPAD), lambda i: (0, 0)),
            pl.BlockSpec((1, Csq), lambda i: (0, 0)),
            pl.BlockSpec((Csq, CPAD), lambda i: (0, 0)),
            pl.BlockSpec((1, CPAD), lambda i: (0, 0)),
        ],
        out_specs=pl.BlockSpec((N, H * W, CPAD), lambda i: (0, 0, 0)),
        scratch_shapes=[
            pltpu.VMEM((N, H + 2, W + 2, CPAD), jnp.float32),   # xpad
            pltpu.VMEM((N * H * W, 9 * CPAD), jnp.float32),     # im2col conv1
            pltpu.VMEM((N, H + 2, W + 2, CPAD), jnp.float32),   # midpad
            pltpu.VMEM((N * H * W, 9 * CPAD), jnp.float32),     # im2col conv2
        ],
        compiler_params=pltpu.CompilerParams(
            dimension_semantics=("arbitrary",),
            vmem_limit_bytes=32 * 1024 * 1024),
    )(x, w1m, b1p, w2m, b2p, wf1t, bf1p, wf2p, bf2p)

    # (N, H*W, CPAD) -> (N, H, W, CPAD) is a free row-major reshape; drop the
    # padded channel lanes and go back to NCHW.
    out = out.reshape(N, H, W, CPAD)[..., :C]
    return jnp.transpose(out, (0, 3, 1, 2))


def cab_reference(x_nchw, params):
    """Pure-JAX reference (XLA convs) for the correctness check."""
    w1, b1, w2, b2, wf1, bf1, wf2, bf2 = params
    x = jnp.transpose(x_nchw, (0, 2, 3, 1)).astype(jnp.float32)
    dn = ('NHWC', 'HWIO', 'NHWC')
    y = lax.conv_general_dilated(x, w1, (1, 1), 'SAME', dimension_numbers=dn)
    y = y + b1.reshape(1, 1, 1, -1)
    y = 0.5 * y * (1.0 + lax.erf(y / jnp.sqrt(2.0)))
    y = lax.conv_general_dilated(y, w2, (1, 1), 'SAME', dimension_numbers=dn)
    y = y + b2.reshape(1, 1, 1, -1)
    pooled = jnp.mean(y, axis=(1, 2))                          # (N, C)
    h = jnp.maximum(pooled @ wf1 + bf1, 0.0)
    att = jax.nn.sigmoid(h @ wf2 + bf2)                        # (N, C)
    out = y * att[:, None, None, :]
    return jnp.transpose(out, (0, 3, 1, 2))


def init_params(key, num_feat, compress_ratio, squeeze_factor):
    c_mid = num_feat // compress_ratio
    c_sq = num_feat // squeeze_factor
    ks = jax.random.split(key, 8)
    s = 0.1
    w1 = jax.random.normal(ks[0], (3, 3, num_feat, c_mid), jnp.float32) * s
    b1 = jax.random.normal(ks[1], (1, c_mid), jnp.float32) * s
    w2 = jax.random.normal(ks[2], (3, 3, c_mid, num_feat), jnp.float32) * s
    b2 = jax.random.normal(ks[3], (1, num_feat), jnp.float32) * s
    wf1 = jax.random.normal(ks[4], (num_feat, c_sq), jnp.float32) * s
    bf1 = jax.random.normal(ks[5], (1, c_sq), jnp.float32) * s
    wf2 = jax.random.normal(ks[6], (c_sq, num_feat), jnp.float32) * s
    bf2 = jax.random.normal(ks[7], (1, num_feat), jnp.float32) * s
    return (w1, b1, w2, b2, wf1, bf1, wf2, bf2)


if __name__ == "__main__":
    # num_feat=60 matches the module defaults (compress_ratio=3, squeeze_factor=30)
    N, C, H, W = 2, 60, 16, 16
    compress_ratio, squeeze_factor = 3, 30

    key = jax.random.PRNGKey(0)
    kx, kp = jax.random.split(key)
    x = jax.random.normal(kx, (N, C, H, W), jnp.float32)
    params = init_params(kp, C, compress_ratio, squeeze_factor)

    out = jax.block_until_ready(jax.jit(cab_forward)(x, params))
    ref = jax.block_until_ready(cab_reference(x, params))

    assert out.shape == (N, C, H, W), out.shape
    max_err = float(jnp.max(jnp.abs(out - ref)))
    assert jnp.allclose(out, ref, atol=1e-2, rtol=1e-2), max_err

    print("KERNEL_OK")
</pallas_src>

<mosaic_0001>
module attributes {stable_mosaic.version = 11 : i64} {
  func.func @cab_kernel(%arg0: i32, %arg1: memref<2x16x16x128xf32, #tpu.memory_space<vmem>>, %arg2: memref<1152x128xf32, #tpu.memory_space<vmem>>, %arg3: memref<1x128xf32, #tpu.memory_space<vmem>>, %arg4: memref<1152x128xf32, #tpu.memory_space<vmem>>, %arg5: memref<1x128xf32, #tpu.memory_space<vmem>>, %arg6: memref<2x128xf32, #tpu.memory_space<vmem>>, %arg7: memref<1x2xf32, #tpu.memory_space<vmem>>, %arg8: memref<2x128xf32, #tpu.memory_space<vmem>>, %arg9: memref<1x128xf32, #tpu.memory_space<vmem>>, %arg10: memref<2x256x128xf32, #tpu.memory_space<vmem>>, %arg11: memref<2x18x18x128xf32, #tpu.memory_space<vmem>>, %arg12: memref<512x1152xf32, #tpu.memory_space<vmem>>, %arg13: memref<2x18x18x128xf32, #tpu.memory_space<vmem>>, %arg14: memref<512x1152xf32, #tpu.memory_space<vmem>>) attributes {dimension_semantics = [#tpu.dimension_semantics<arbitrary>], iteration_bounds = array<i64: 1>, scalar_prefetch = 0 : i64, scratch_operands = 4 : i64, tpu.core_type = #tpu.core_type<tc>, window_params = [{pipeline_mode = #tpu.pipeline_mode<synchronous>, transform_indices = @transform_0, window_bounds = array<i64: 2, 16, 16, 128>}, {pipeline_mode = #tpu.pipeline_mode<synchronous>, transform_indices = @transform_1, window_bounds = array<i64: 1152, 128>}, {pipeline_mode = #tpu.pipeline_mode<synchronous>, transform_indices = @transform_2, window_bounds = array<i64: 1, 128>}, {pipeline_mode = #tpu.pipeline_mode<synchronous>, transform_indices = @transform_3, window_bounds = array<i64: 1152, 128>}, {pipeline_mode = #tpu.pipeline_mode<synchronous>, transform_indices = @transform_4, window_bounds = array<i64: 1, 128>}, {pipeline_mode = #tpu.pipeline_mode<synchronous>, transform_indices = @transform_5, window_bounds = array<i64: 2, 128>}, {pipeline_mode = #tpu.pipeline_mode<synchronous>, transform_indices = @transform_6, window_bounds = array<i64: 1, 2>}, {pipeline_mode = #tpu.pipeline_mode<synchronous>, transform_indices = @transform_7, window_bounds = array<i64: 2, 128>}, {pipeline_mode = #tpu.pipeline_mode<synchronous>, transform_indices = @transform_8, window_bounds = array<i64: 1, 128>}, {pipeline_mode = #tpu.pipeline_mode<synchronous>, transform_indices = @transform_9, window_bounds = array<i64: 2, 256, 128>}]} {
    %cst = arith.constant 0.000000e+00 : f32
    %0 = vector.broadcast %cst : f32 to vector<2x1x18x128xf32>
    %cst_0 = arith.constant 0.000000e+00 : f32
    %1 = vector.broadcast %cst_0 : f32 to vector<2x16x1x128xf32>
    %c0 = arith.constant 0 : index
    %c0_1 = arith.constant 0 : index
    %c0_2 = arith.constant 0 : index
    %c0_3 = arith.constant 0 : index
    %2 = vector.load %arg11[%c0, %c0_1, %c0_2, %c0_3] : memref<2x18x18x128xf32, #tpu.memory_space<vmem>>, vector<2x1x18x128xf32>
    tpu.vector_store %arg11[%c0, %c0_1, %c0_2, %c0_3], %0 {strides = array<i32>} : memref<2x18x18x128xf32, #tpu.memory_space<vmem>>, vector<2x1x18x128xf32>,
    %c0_4 = arith.constant 0 : index
    %c17 = arith.constant 17 : index
    %c0_5 = arith.constant 0 : index
    %c0_6 = arith.constant 0 : index
    %3 = vector.load %arg11[%c0_4, %c17, %c0_5, %c0_6] : memref<2x18x18x128xf32, #tpu.memory_space<vmem>>, vector<2x1x18x128xf32>
    tpu.vector_store %arg11[%c0_4, %c17, %c0_5, %c0_6], %0 {strides = array<i32>} : memref<2x18x18x128xf32, #tpu.memory_space<vmem>>, vector<2x1x18x128xf32>,
    %c0_7 = arith.constant 0 : index
    %c1 = arith.constant 1 : index
    %c0_8 = arith.constant 0 : index
    %c0_9 = arith.constant 0 : index
    %4 = vector.load %arg11[%c0_7, %c1, %c0_8, %c0_9] : memref<2x18x18x128xf32, #tpu.memory_space<vmem>>, vector<2x16x1x128xf32>
    tpu.vector_store %arg11[%c0_7, %c1, %c0_8, %c0_9], %1 {strides = array<i32>} : memref<2x18x18x128xf32, #tpu.memory_space<vmem>>, vector<2x16x1x128xf32>,
    %c0_10 = arith.constant 0 : index
    %c1_11 = arith.constant 1 : index
    %c17_12 = arith.constant 17 : index
    %c0_13 = arith.constant 0 : index
    %5 = vector.load %arg11[%c0_10, %c1_11, %c17_12, %c0_13] : memref<2x18x18x128xf32, #tpu.memory_space<vmem>>, vector<2x16x1x128xf32>
    tpu.vector_store %arg11[%c0_10, %c1_11, %c17_12, %c0_13], %1 {strides = array<i32>} : memref<2x18x18x128xf32, #tpu.memory_space<vmem>>, vector<2x16x1x128xf32>,
    %c0_14 = arith.constant 0 : index
    %c0_15 = arith.constant 0 : index
    %c0_16 = arith.constant 0 : index
    %c0_17 = arith.constant 0 : index
    %6 = vector.load %arg13[%c0_14, %c0_15, %c0_16, %c0_17] : memref<2x18x18x128xf32, #tpu.memory_space<vmem>>, vector<2x1x18x128xf32>
    tpu.vector_store %arg13[%c0_14, %c0_15, %c0_16, %c0_17], %0 {strides = array<i32>} : memref<2x18x18x128xf32, #tpu.memory_space<vmem>>, vector<2x1x18x128xf32>,
    %c0_18 = arith.constant 0 : index
    %c17_19 = arith.constant 17 : index
    %c0_20 = arith.constant 0 : index
    %c0_21 = arith.constant 0 : index
    %7 = vector.load %arg13[%c0_18, %c17_19, %c0_20, %c0_21] : memref<2x18x18x128xf32, #tpu.memory_space<vmem>>, vector<2x1x18x128xf32>
    tpu.vector_store %arg13[%c0_18, %c17_19, %c0_20, %c0_21], %0 {strides = array<i32>} : memref<2x18x18x128xf32, #tpu.memory_space<vmem>>, vector<2x1x18x128xf32>,
    %c0_22 = arith.constant 0 : index
    %c1_23 = arith.constant 1 : index
    %c0_24 = arith.constant 0 : index
    %c0_25 = arith.constant 0 : index
    %8 = vector.load %arg13[%c0_22, %c1_23, %c0_24, %c0_25] : memref<2x18x18x128xf32, #tpu.memory_space<vmem>>, vector<2x16x1x128xf32>
    tpu.vector_store %arg13[%c0_22, %c1_23, %c0_24, %c0_25], %1 {strides = array<i32>} : memref<2x18x18x128xf32, #tpu.memory_space<vmem>>, vector<2x16x1x128xf32>,
    %c0_26 = arith.constant 0 : index
    %c1_27 = arith.constant 1 : index
    %c17_28 = arith.constant 17 : index
    %c0_29 = arith.constant 0 : index
    %9 = vector.load %arg13[%c0_26, %c1_27, %c17_28, %c0_29] : memref<2x18x18x128xf32, #tpu.memory_space<vmem>>, vector<2x16x1x128xf32>
    tpu.vector_store %arg13[%c0_26, %c1_27, %c17_28, %c0_29], %1 {strides = array<i32>} : memref<2x18x18x128xf32, #tpu.memory_space<vmem>>, vector<2x16x1x128xf32>,
    %c0_30 = arith.constant 0 : index
    %c0_31 = arith.constant 0 : index
    %c0_32 = arith.constant 0 : index
    %c0_33 = arith.constant 0 : index
    %10 = vector.load %arg1[%c0_30, %c0_31, %c0_32, %c0_33] : memref<2x16x16x128xf32, #tpu.memory_space<vmem>>, vector<2x16x16x128xf32>
    %c0_34 = arith.constant 0 : index
    %c1_35 = arith.constant 1 : index
    %c1_36 = arith.constant 1 : index
    %c0_37 = arith.constant 0 : index
    %11 = vector.load %arg11[%c0_34, %c1_35, %c1_36, %c0_37] : memref<2x18x18x128xf32, #tpu.memory_space<vmem>>, vector<2x16x16x128xf32>
    tpu.vector_store %arg11[%c0_34, %c1_35, %c1_36, %c0_37], %10 {strides = array<i32>} : memref<2x18x18x128xf32, #tpu.memory_space<vmem>>, vector<2x16x16x128xf32>,
    %c0_38 = arith.constant 0 : index
    %c0_39 = arith.constant 0 : index
    %c0_40 = arith.constant 0 : index
    %c0_41 = arith.constant 0 : index
    %12 = vector.load %arg11[%c0_38, %c0_39, %c0_40, %c0_41] : memref<2x18x18x128xf32, #tpu.memory_space<vmem>>, vector<2x16x16x128xf32>
    %13 = vector.shape_cast %12 : vector<2x16x16x128xf32> to vector<512x128xf32>
    %c0_42 = arith.constant 0 : index
    %c0_43 = arith.constant 0 : index
    %14 = vector.load %arg12[%c0_42, %c0_43] : memref<512x1152xf32, #tpu.memory_space<vmem>>, vector<512x128xf32>
    tpu.vector_store %arg12[%c0_42, %c0_43], %13 {strides = array<i32>} : memref<512x1152xf32, #tpu.memory_space<vmem>>, vector<512x128xf32>,
    %c0_44 = arith.constant 0 : index
    %c0_45 = arith.constant 0 : index
    %c1_46 = arith.constant 1 : index
    %c0_47 = arith.constant 0 : index
    %15 = vector.load %arg11[%c0_44, %c0_45, %c1_46, %c0_47] : memref<2x18x18x128xf32, #tpu.memory_space<vmem>>, vector<2x16x16x128xf32>
    %16 = vector.shape_cast %15 : vector<2x16x16x128xf32> to vector<512x128xf32>
    %c0_48 = arith.constant 0 : index
    %c128 = arith.constant 128 : index
    %17 = vector.load %arg12[%c0_48, %c128] : memref<512x1152xf32, #tpu.memory_space<vmem>>, vector<512x128xf32>
    tpu.vector_store %arg12[%c0_48, %c128], %16 {strides = array<i32>} : memref<512x1152xf32, #tpu.memory_space<vmem>>, vector<512x128xf32>,
    %c0_49 = arith.constant 0 : index
    %c0_50 = arith.constant 0 : index
    %c2 = arith.constant 2 : index
    %c0_51 = arith.constant 0 : index
    %18 = vector.load %arg11[%c0_49, %c0_50, %c2, %c0_51] : memref<2x18x18x128xf32, #tpu.memory_space<vmem>>, vector<2x16x16x128xf32>
    %19 = vector.shape_cast %18 : vector<2x16x16x128xf32> to vector<512x128xf32>
    %c0_52 = arith.constant 0 : index
    %c256 = arith.constant 256 : index
    %20 = vector.load %arg12[%c0_52, %c256] : memref<512x1152xf32, #tpu.memory_space<vmem>>, vector<512x128xf32>
    tpu.vector_store %arg12[%c0_52, %c256], %19 {strides = array<i32>} : memref<512x1152xf32, #tpu.memory_space<vmem>>, vector<512x128xf32>,
    %c0_53 = arith.constant 0 : index
    %c1_54 = arith.constant 1 : index
    %c0_55 = arith.constant 0 : index
    %c0_56 = arith.constant 0 : index
    %21 = vector.load %arg11[%c0_53, %c1_54, %c0_55, %c0_56] : memref<2x18x18x128xf32, #tpu.memory_space<vmem>>, vector<2x16x16x128xf32>
    %22 = vector.shape_cast %21 : vector<2x16x16x128xf32> to vector<512x128xf32>
    %c0_57 = arith.constant 0 : index
    %c384 = arith.constant 384 : index
    %23 = vector.load %arg12[%c0_57, %c384] : memref<512x1152xf32, #tpu.memory_space<vmem>>, vector<512x128xf32>
    tpu.vector_store %arg12[%c0_57, %c384], %22 {strides = array<i32>} : memref<512x1152xf32, #tpu.memory_space<vmem>>, vector<512x128xf32>,
    %c0_58 = arith.constant 0 : index
    %c1_59 = arith.constant 1 : index
    %c1_60 = arith.constant 1 : index
    %c0_61 = arith.constant 0 : index
    %24 = vector.load %arg11[%c0_58, %c1_59, %c1_60, %c0_61] : memref<2x18x18x128xf32, #tpu.memory_space<vmem>>, vector<2x16x16x128xf32>
    %25 = vector.shape_cast %24 : vector<2x16x16x128xf32> to vector<512x128xf32>
    %c0_62 = arith.constant 0 : index
    %c512 = arith.constant 512 : index
    %26 = vector.load %arg12[%c0_62, %c512] : memref<512x1152xf32, #tpu.memory_space<vmem>>, vector<512x128xf32>
    tpu.vector_store %arg12[%c0_62, %c512], %25 {strides = array<i32>} : memref<512x1152xf32, #tpu.memory_space<vmem>>, vector<512x128xf32>,
    %c0_63 = arith.constant 0 : index
    %c1_64 = arith.constant 1 : index
    %c2_65 = arith.constant 2 : index
    %c0_66 = arith.constant 0 : index
    %27 = vector.load %arg11[%c0_63, %c1_64, %c2_65, %c0_66] : memref<2x18x18x128xf32, #tpu.memory_space<vmem>>, vector<2x16x16x128xf32>
    %28 = vector.shape_cast %27 : vector<2x16x16x128xf32> to vector<512x128xf32>
    %c0_67 = arith.constant 0 : index
    %c640 = arith.constant 640 : index
    %29 = vector.load %arg12[%c0_67, %c640] : memref<512x1152xf32, #tpu.memory_space<vmem>>, vector<512x128xf32>
    tpu.vector_store %arg12[%c0_67, %c640], %28 {strides = array<i32>} : memref<512x1152xf32, #tpu.memory_space<vmem>>, vector<512x128xf32>,
    %c0_68 = arith.constant 0 : index
    %c2_69 = arith.constant 2 : index
    %c0_70 = arith.constant 0 : index
    %c0_71 = arith.constant 0 : index
    %30 = vector.load %arg11[%c0_68, %c2_69, %c0_70, %c0_71] : memref<2x18x18x128xf32, #tpu.memory_space<vmem>>, vector<2x16x16x128xf32>
    %31 = vector.shape_cast %30 : vector<2x16x16x128xf32> to vector<512x128xf32>
    %c0_72 = arith.constant 0 : index
    %c768 = arith.constant 768 : index
    %32 = vector.load %arg12[%c0_72, %c768] : memref<512x1152xf32, #tpu.memory_space<vmem>>, vector<512x128xf32>
    tpu.vector_store %arg12[%c0_72, %c768], %31 {strides = array<i32>} : memref<512x1152xf32, #tpu.memory_space<vmem>>, vector<512x128xf32>,
    %c0_73 = arith.constant 0 : index
    %c2_74 = arith.constant 2 : index
    %c1_75 = arith.constant 1 : index
    %c0_76 = arith.constant 0 : index
    %33 = vector.load %arg11[%c0_73, %c2_74, %c1_75, %c0_76] : memref<2x18x18x128xf32, #tpu.memory_space<vmem>>, vector<2x16x16x128xf32>
    %34 = vector.shape_cast %33 : vector<2x16x16x128xf32> to vector<512x128xf32>
    %c0_77 = arith.constant 0 : index
    %c896 = arith.constant 896 : index
    %35 = vector.load %arg12[%c0_77, %c896] : memref<512x1152xf32, #tpu.memory_space<vmem>>, vector<512x128xf32>
    tpu.vector_store %arg12[%c0_77, %c896], %34 {strides = array<i32>} : memref<512x1152xf32, #tpu.memory_space<vmem>>, vector<512x128xf32>,
    %c0_78 = arith.constant 0 : index
    %c2_79 = arith.constant 2 : index
    %c2_80 = arith.constant 2 : index
    %c0_81 = arith.constant 0 : index
    %36 = vector.load %arg11[%c0_78, %c2_79, %c2_80, %c0_81] : memref<2x18x18x128xf32, #tpu.memory_space<vmem>>, vector<2x16x16x128xf32>
    %37 = vector.shape_cast %36 : vector<2x16x16x128xf32> to vector<512x128xf32>
    %c0_82 = arith.constant 0 : index
    %c1024 = arith.constant 1024 : index
    %38 = vector.load %arg12[%c0_82, %c1024] : memref<512x1152xf32, #tpu.memory_space<vmem>>, vector<512x128xf32>
    tpu.vector_store %arg12[%c0_82, %c1024], %37 {strides = array<i32>} : memref<512x1152xf32, #tpu.memory_space<vmem>>, vector<512x128xf32>,
    %c0_83 = arith.constant 0 : index
    %c0_84 = arith.constant 0 : index
    %39 = vector.load %arg12[%c0_83, %c0_84] : memref<512x1152xf32, #tpu.memory_space<vmem>>, vector<512x1152xf32>
    %c0_85 = arith.constant 0 : index
    %c0_86 = arith.constant 0 : index
    %40 = vector.load %arg2[%c0_85, %c0_86] : memref<1152x128xf32, #tpu.memory_space<vmem>>, vector<1152x128xf32>
    %cst_87 = arith.constant dense<0.000000e+00> : vector<512x128xf32>
    %41 = tpu.matmul %39, %40, %cst_87 {dimension_numbers = #tpu.dot_dimension_numbers<[1], [0], [0], [1], [0, 0, 1, 1], [], []>} : vector<512x1152xf32>, vector<1152x128xf32>, vector<512x128xf32> -> vector<512x128xf32>
    %c0_88 = arith.constant 0 : index
    %c0_89 = arith.constant 0 : index
    %42 = vector.load %arg3[%c0_88, %c0_89] : memref<1x128xf32, #tpu.memory_space<vmem>>, vector<1x128xf32>
    %43 = vector.broadcast %42 : vector<1x128xf32> to vector<512x128xf32>
    %44 = arith.addf %41, %43 : vector<512x128xf32>
    %cst_90 = arith.constant 5.000000e-01 : f32
    %45 = vector.broadcast %cst_90 : f32 to vector<512x128xf32>
    %46 = arith.mulf %45, %44 : vector<512x128xf32>
    %cst_91 = arith.constant 2.000000e+00 : f32
    %47 = math.sqrt %cst_91 : f32
    %cst_92 = arith.constant 1.000000e+00 : f32
    %48 = arith.divf %cst_92, %47 : f32
    %49 = vector.broadcast %48 : f32 to vector<512x128xf32>
    %50 = arith.mulf %44, %49 : vector<512x128xf32>
    %51 = math.erf %50 : vector<512x128xf32>
    %cst_93 = arith.constant 1.000000e+00 : f32
    %52 = vector.broadcast %cst_93 : f32 to vector<512x128xf32>
    %53 = arith.addf %52, %51 : vector<512x128xf32>
    %54 = arith.mulf %46, %53 : vector<512x128xf32>
    %55 = vector.shape_cast %54 : vector<512x128xf32> to vector<2x16x16x128xf32>
    %c0_94 = arith.constant 0 : index
    %c1_95 = arith.constant 1 : index
    %c1_96 = arith.constant 1 : index
    %c0_97 = arith.constant 0 : index
    %56 = vector.load %arg13[%c0_94, %c1_95, %c1_96, %c0_97] : memref<2x18x18x128xf32, #tpu.memory_space<vmem>>, vector<2x16x16x128xf32>
    tpu.vector_store %arg13[%c0_94, %c1_95, %c1_96, %c0_97], %55 {strides = array<i32>} : memref<2x18x18x128xf32, #tpu.memory_space<vmem>>, vector<2x16x16x128xf32>,
    %c0_98 = arith.constant 0 : index
    %c0_99 = arith.constant 0 : index
    %c0_100 = arith.constant 0 : index
    %c0_101 = arith.constant 0 : index
    %57 = vector.load %arg13[%c0_98, %c0_99, %c0_100, %c0_101] : memref<2x18x18x128xf32, #tpu.memory_space<vmem>>, vector<2x16x16x128xf32>
    %58 = vector.shape_cast %57 : vector<2x16x16x128xf32> to vector<512x128xf32>
    %c0_102 = arith.constant 0 : index
    %c0_103 = arith.constant 0 : index
    %59 = vector.load %arg14[%c0_102, %c0_103] : memref<512x1152xf32, #tpu.memory_space<vmem>>, vector<512x128xf32>
    tpu.vector_store %arg14[%c0_102, %c0_103], %58 {strides = array<i32>} : memref<512x1152xf32, #tpu.memory_space<vmem>>, vector<512x128xf32>,
    %c0_104 = arith.constant 0 : index
    %c0_105 = arith.constant 0 : index
    %c1_106 = arith.constant 1 : index
    %c0_107 = arith.constant 0 : index
    %60 = vector.load %arg13[%c0_104, %c0_105, %c1_106, %c0_107] : memref<2x18x18x128xf32, #tpu.memory_space<vmem>>, vector<2x16x16x128xf32>
    %61 = vector.shape_cast %60 : vector<2x16x16x128xf32> to vector<512x128xf32>
    %c0_108 = arith.constant 0 : index
    %c128_109 = arith.constant 128 : index
    %62 = vector.load %arg14[%c0_108, %c128_109] : memref<512x1152xf32, #tpu.memory_space<vmem>>, vector<512x128xf32>
    tpu.vector_store %arg14[%c0_108, %c128_109], %61 {strides = array<i32>} : memref<512x1152xf32, #tpu.memory_space<vmem>>, vector<512x128xf32>,
    %c0_110 = arith.constant 0 : index
    %c0_111 = arith.constant 0 : index
    %c2_112 = arith.constant 2 : index
    %c0_113 = arith.constant 0 : index
    %63 = vector.load %arg13[%c0_110, %c0_111, %c2_112, %c0_113] : memref<2x18x18x128xf32, #tpu.memory_space<vmem>>, vector<2x16x16x128xf32>
    %64 = vector.shape_cast %63 : vector<2x16x16x128xf32> to vector<512x128xf32>
    %c0_114 = arith.constant 0 : index
    %c256_115 = arith.constant 256 : index
    %65 = vector.load %arg14[%c0_114, %c256_115] : memref<512x1152xf32, #tpu.memory_space<vmem>>, vector<512x128xf32>
    tpu.vector_store %arg14[%c0_114, %c256_115], %64 {strides = array<i32>} : memref<512x1152xf32, #tpu.memory_space<vmem>>, vector<512x128xf32>,
    %c0_116 = arith.constant 0 : index
    %c1_117 = arith.constant 1 : index
    %c0_118 = arith.constant 0 : index
    %c0_119 = arith.constant 0 : index
    %66 = vector.load %arg13[%c0_116, %c1_117, %c0_118, %c0_119] : memref<2x18x18x128xf32, #tpu.memory_space<vmem>>, vector<2x16x16x128xf32>
    %67 = vector.shape_cast %66 : vector<2x16x16x128xf32> to vector<512x128xf32>
    %c0_120 = arith.constant 0 : index
    %c384_121 = arith.constant 384 : index
    %68 = vector.load %arg14[%c0_120, %c384_121] : memref<512x1152xf32, #tpu.memory_space<vmem>>, vector<512x128xf32>
    tpu.vector_store %arg14[%c0_120, %c384_121], %67 {strides = array<i32>} : memref<512x1152xf32, #tpu.memory_space<vmem>>, vector<512x128xf32>,
    %c0_122 = arith.constant 0 : index
    %c1_123 = arith.constant 1 : index
    %c1_124 = arith.constant 1 : index
    %c0_125 = arith.constant 0 : index
    %69 = vector.load %arg13[%c0_122, %c1_123, %c1_124, %c0_125] : memref<2x18x18x128xf32, #tpu.memory_space<vmem>>, vector<2x16x16x128xf32>
    %70 = vector.shape_cast %69 : vector<2x16x16x128xf32> to vector<512x128xf32>
    %c0_126 = arith.constant 0 : index
    %c512_127 = arith.constant 512 : index
    %71 = vector.load %arg14[%c0_126, %c512_127] : memref<512x1152xf32, #tpu.memory_space<vmem>>, vector<512x128xf32>
    tpu.vector_store %arg14[%c0_126, %c512_127], %70 {strides = array<i32>} : memref<512x1152xf32, #tpu.memory_space<vmem>>, vector<512x128xf32>,
    %c0_128 = arith.constant 0 : index
    %c1_129 = arith.constant 1 : index
    %c2_130 = arith.constant 2 : index
    %c0_131 = arith.constant 0 : index
    %72 = vector.load %arg13[%c0_128, %c1_129, %c2_130, %c0_131] : memref<2x18x18x128xf32, #tpu.memory_space<vmem>>, vector<2x16x16x128xf32>
    %73 = vector.shape_cast %72 : vector<2x16x16x128xf32> to vector<512x128xf32>
    %c0_132 = arith.constant 0 : index
    %c640_133 = arith.constant 640 : index
    %74 = vector.load %arg14[%c0_132, %c640_133] : memref<512x1152xf32, #tpu.memory_space<vmem>>, vector<512x128xf32>
    tpu.vector_store %arg14[%c0_132, %c640_133], %73 {strides = array<i32>} : memref<512x1152xf32, #tpu.memory_space<vmem>>, vector<512x128xf32>,
    %c0_134 = arith.constant 0 : index
    %c2_135 = arith.constant 2 : index
    %c0_136 = arith.constant 0 : index
    %c0_137 = arith.constant 0 : index
    %75 = vector.load %arg13[%c0_134, %c2_135, %c0_136, %c0_137] : memref<2x18x18x128xf32, #tpu.memory_space<vmem>>, vector<2x16x16x128xf32>
    %76 = vector.shape_cast %75 : vector<2x16x16x128xf32> to vector<512x128xf32>
    %c0_138 = arith.constant 0 : index
    %c768_139 = arith.constant 768 : index
    %77 = vector.load %arg14[%c0_138, %c768_139] : memref<512x1152xf32, #tpu.memory_space<vmem>>, vector<512x128xf32>
    tpu.vector_store %arg14[%c0_138, %c768_139], %76 {strides = array<i32>} : memref<512x1152xf32, #tpu.memory_space<vmem>>, vector<512x128xf32>,
    %c0_140 = arith.constant 0 : index
    %c2_141 = arith.constant 2 : index
    %c1_142 = arith.constant 1 : index
    %c0_143 = arith.constant 0 : index
    %78 = vector.load %arg13[%c0_140, %c2_141, %c1_142, %c0_143] : memref<2x18x18x128xf32, #tpu.memory_space<vmem>>, vector<2x16x16x128xf32>
    %79 = vector.shape_cast %78 : vector<2x16x16x128xf32> to vector<512x128xf32>
    %c0_144 = arith.constant 0 : index
    %c896_145 = arith.constant 896 : index
    %80 = vector.load %arg14[%c0_144, %c896_145] : memref<512x1152xf32, #tpu.memory_space<vmem>>, vector<512x128xf32>
    tpu.vector_store %arg14[%c0_144, %c896_145], %79 {strides = array<i32>} : memref<512x1152xf32, #tpu.memory_space<vmem>>, vector<512x128xf32>,
    %c0_146 = arith.constant 0 : index
    %c2_147 = arith.constant 2 : index
    %c2_148 = arith.constant 2 : index
    %c0_149 = arith.constant 0 : index
    %81 = vector.load %arg13[%c0_146, %c2_147, %c2_148, %c0_149] : memref<2x18x18x128xf32, #tpu.memory_space<vmem>>, vector<2x16x16x128xf32>
    %82 = vector.shape_cast %81 : vector<2x16x16x128xf32> to vector<512x128xf32>
    %c0_150 = arith.constant 0 : index
    %c1024_151 = arith.constant 1024 : index
    %83 = vector.load %arg14[%c0_150, %c1024_151] : memref<512x1152xf32, #tpu.memory_space<vmem>>, vector<512x128xf32>
    tpu.vector_store %arg14[%c0_150, %c1024_151], %82 {strides = array<i32>} : memref<512x1152xf32, #tpu.memory_space<vmem>>, vector<512x128xf32>,
    %c0_152 = arith.constant 0 : index
    %c0_153 = arith.constant 0 : index
    %84 = vector.load %arg14[%c0_152, %c0_153] : memref<512x1152xf32, #tpu.memory_space<vmem>>, vector<512x1152xf32>
    %c0_154 = arith.constant 0 : index
    %c0_155 = arith.constant 0 : index
    %85 = vector.load %arg4[%c0_154, %c0_155] : memref<1152x128xf32, #tpu.memory_space<vmem>>, vector<1152x128xf32>
    %cst_156 = arith.constant dense<0.000000e+00> : vector<512x128xf32>
    %86 = tpu.matmul %84, %85, %cst_156 {dimension_numbers = #tpu.dot_dimension_numbers<[1], [0], [0], [1], [0, 0, 1, 1], [], []>} : vector<512x1152xf32>, vector<1152x128xf32>, vector<512x128xf32> -> vector<512x128xf32>
    %c0_157 = arith.constant 0 : index
    %c0_158 = arith.constant 0 : index
    %87 = vector.load %arg5[%c0_157, %c0_158] : memref<1x128xf32, #tpu.memory_space<vmem>>, vector<1x128xf32>
    %88 = vector.broadcast %87 : vector<1x128xf32> to vector<512x128xf32>
    %89 = arith.addf %86, %88 : vector<512x128xf32>
    %90 = vector.shape_cast %89 : vector<512x128xf32> to vector<2x256x128xf32>
    %cst_159 = arith.constant dense<0.000000e+00> : vector<2x128xf32>
    %91 = vector.multi_reduction <add>, %90, %cst_159 [1] : vector<2x256x128xf32> to vector<2x128xf32>
    %cst_160 = arith.constant 2.560000e+02 : f32
    %92 = vector.broadcast %cst_160 : f32 to vector<2x128xf32>
    %93 = arith.divf %91, %92 : vector<2x128xf32>
    %94 = vector.shape_cast %93 : vector<2x128xf32> to vector<2x1x128xf32>
    %c0_161 = arith.constant 0 : index
    %c0_162 = arith.constant 0 : index
    %95 = vector.load %arg6[%c0_161, %c0_162] : memref<2x128xf32, #tpu.memory_space<vmem>>, vector<2x128xf32>
    %96 = vector.shape_cast %95 : vector<2x128xf32> to vector<1x2x128xf32>
    %97 = vector.broadcast %94 : vector<2x1x128xf32> to vector<2x2x128xf32>
    %98 = vector.broadcast %96 : vector<1x2x128xf32> to vector<2x2x128xf32>
    %99 = arith.mulf %97, %98 : vector<2x2x128xf32>
    %cst_163 = arith.constant dense<0.000000e+00> : vector<2x2xf32>
    %100 = vector.multi_reduction <add>, %99, %cst_163 [2] : vector<2x2x128xf32> to vector<2x2xf32>
    %c0_164 = arith.constant 0 : index
    %c0_165 = arith.constant 0 : index
    %101 = vector.load %arg7[%c0_164, %c0_165] : memref<1x2xf32, #tpu.memory_space<vmem>>, vector<1x2xf32>
    %102 = vector.broadcast %101 : vector<1x2xf32> to vector<2x2xf32>
    %103 = arith.addf %100, %102 : vector<2x2xf32>
    %cst_166 = arith.constant 0.000000e+00 : f32
    %104 = vector.broadcast %cst_166 : f32 to vector<2x2xf32>
    %105 = arith.maximumf %103, %104 : vector<2x2xf32>
    %106 = vector.shape_cast %105 : vector<2x2xf32> to vector<2x2x1xf32>
    %c0_167 = arith.constant 0 : index
    %c0_168 = arith.constant 0 : index
    %107 = vector.load %arg8[%c0_167, %c0_168] : memref<2x128xf32, #tpu.memory_space<vmem>>, vector<2x128xf32>
    %108 = vector.shape_cast %107 : vector<2x128xf32> to vector<1x2x128xf32>
    %109 = vector.broadcast %106 : vector<2x2x1xf32> to vector<2x2x128xf32>
    %110 = vector.broadcast %108 : vector<1x2x128xf32> to vector<2x2x128xf32>
    %111 = arith.mulf %109, %110 : vector<2x2x128xf32>
    %cst_169 = arith.constant dense<0.000000e+00> : vector<2x128xf32>
    %112 = vector.multi_reduction <add>, %111, %cst_169 [1] : vector<2x2x128xf32> to vector<2x128xf32>
    %c0_170 = arith.constant 0 : index
    %c0_171 = arith.constant 0 : index
    %113 = vector.load %arg9[%c0_170, %c0_171] : memref<1x128xf32, #tpu.memory_space<vmem>>, vector<1x128xf32>
    %114 = vector.broadcast %113 : vector<1x128xf32> to vector<2x128xf32>
    %115 = arith.addf %112, %114 : vector<2x128xf32>
    %116 = arith.negf %115 : vector<2x128xf32>
    %117 = math.exp %116 : vector<2x128xf32>
    %cst_172 = arith.constant 1.000000e+00 : f32
    %118 = vector.broadcast %cst_172 : f32 to vector<2x128xf32>
    %119 = arith.addf %118, %117 : vector<2x128xf32>
    %120 = arith.divf %118, %119 : vector<2x128xf32>
    %121 = vector.shape_cast %120 : vector<2x128xf32> to vector<2x1x128xf32>
    %122 = vector.broadcast %121 : vector<2x1x128xf32> to vector<2x256x128xf32>
    %123 = arith.mulf %90, %122 : vector<2x256x128xf32>
    %c0_173 = arith.constant 0 : index
    %c0_174 = arith.constant 0 : index
    %c0_175 = arith.constant 0 : index
    %124 = vector.load %arg10[%c0_173, %c0_174, %c0_175] : memref<2x256x128xf32, #tpu.memory_space<vmem>>, vector<2x256x128xf32>
    tpu.vector_store %arg10[%c0_173, %c0_174, %c0_175], %123 {strides = array<i32>} : memref<2x256x128xf32, #tpu.memory_space<vmem>>, vector<2x256x128xf32>,
    return
  }
  func.func @transform_0(%arg0: i32) -> (i32, i32, i32, i32) {
    %c0_i32 = arith.constant 0 : i32
    %c0_i32_0 = arith.constant 0 : i32
    %c0_i32_1 = arith.constant 0 : i32
    %c0_i32_2 = arith.constant 0 : i32
    %c0_i32_3 = arith.constant 0 : i32
    return %c0_i32, %c0_i32_0, %c0_i32_1, %c0_i32_2 : i32, i32, i32, i32
  }
  func.func @transform_1(%arg0: i32) -> (i32, i32) {
    %c0_i32 = arith.constant 0 : i32
    %c0_i32_0 = arith.constant 0 : i32
    %c0_i32_1 = arith.constant 0 : i32
    return %c0_i32, %c0_i32_0 : i32, i32
  }
  func.func @transform_2(%arg0: i32) -> (i32, i32) {
    %c0_i32 = arith.constant 0 : i32
    %c0_i32_0 = arith.constant 0 : i32
    %c0_i32_1 = arith.constant 0 : i32
    return %c0_i32, %c0_i32_0 : i32, i32
  }
  func.func @transform_3(%arg0: i32) -> (i32, i32) {
    %c0_i32 = arith.constant 0 : i32
    %c0_i32_0 = arith.constant 0 : i32
    %c0_i32_1 = arith.constant 0 : i32
    return %c0_i32, %c0_i32_0 : i32, i32
  }
  func.func @transform_4(%arg0: i32) -> (i32, i32) {
    %c0_i32 = arith.constant 0 : i32
    %c0_i32_0 = arith.constant 0 : i32
    %c0_i32_1 = arith.constant 0 : i32
    return %c0_i32, %c0_i32_0 : i32, i32
  }
  func.func @transform_5(%arg0: i32) -> (i32, i32) {
    %c0_i32 = arith.constant 0 : i32
    %c0_i32_0 = arith.constant 0 : i32
    %c0_i32_1 = arith.constant 0 : i32
    return %c0_i32, %c0_i32_0 : i32, i32
  }
  func.func @transform_6(%arg0: i32) -> (i32, i32) {
    %c0_i32 = arith.constant 0 : i32
    %c0_i32_0 = arith.constant 0 : i32
    %c0_i32_1 = arith.constant 0 : i32
    return %c0_i32, %c0_i32_0 : i32, i32
  }
  func.func @transform_7(%arg0: i32) -> (i32, i32) {
    %c0_i32 = arith.constant 0 : i32
    %c0_i32_0 = arith.constant 0 : i32
    %c0_i32_1 = arith.constant 0 : i32
    return %c0_i32, %c0_i32_0 : i32, i32
  }
  func.func @transform_8(%arg0: i32) -> (i32, i32) {
    %c0_i32 = arith.constant 0 : i32
    %c0_i32_0 = arith.constant 0 : i32
    %c0_i32_1 = arith.constant 0 : i32
    return %c0_i32, %c0_i32_0 : i32, i32
  }
  func.func @transform_9(%arg0: i32) -> (i32, i32, i32) {
    %c0_i32 = arith.constant 0 : i32
    %c0_i32_0 = arith.constant 0 : i32
    %c0_i32_1 = arith.constant 0 : i32
    %c0_i32_2 = arith.constant 0 : i32
    return %c0_i32, %c0_i32_0, %c0_i32_1 : i32, i32, i32
  }
}

</mosaic_0001>

<llo_original>
// kernel: cab_forward.1
$region0: #{cab_forward.1}
  #allocation0 [shape = 'u32[]', space=smem, size = 0x4, offset = 0x4, fixed_abs, tag = 'smem constant byte address 0x4 - core index']
  #allocation1 [shape = 'u32[144,128]{1,0:T(1,128)}', space=vmem, size = 0x12000, scoped, tag = 'internal scratch']
  #allocation2 [shape = 'f32[2,18,18,128]{3,2,1,0:T(8,128)}', space=vmem, size = 0x6c000, scoped, tag = 'scratch operand']
  #allocation3 [shape = 'f32[512,1152]{1,0:T(8,128)}', space=vmem, size = 0x240000, scoped, tag = 'scratch operand']
  #allocation4 [shape = 'f32[2,18,18,128]{3,2,1,0:T(8,128)}', space=vmem, size = 0x6c000, scoped, tag = 'scratch operand']
  #allocation5 [shape = 'f32[512,1152]{1,0:T(8,128)}', space=vmem, size = 0x240000, scoped, tag = 'scratch operand']
  %s0 = inlined_call_operand.vmem [shape: f32[2,16,16,128], index: 0, kind: input, shape index: {}]
  %s1 = inlined_call_operand.vmem [shape: f32[1152,128], index: 1, kind: input, shape index: {}]
  %s2 = inlined_call_operand.vmem [shape: f32[1,128], index: 2, kind: input, shape index: {}]
  %s3 = inlined_call_operand.vmem [shape: f32[1152,128], index: 3, kind: input, shape index: {}]
  %s4 = inlined_call_operand.vmem [shape: f32[1,128], index: 4, kind: input, shape index: {}]
  %s5 = inlined_call_operand.vmem [shape: f32[2,128], index: 5, kind: input, shape index: {}]
  %s6 = inlined_call_operand.vmem [shape: f32[1,2], index: 6, kind: input, shape index: {}]
  %s7 = inlined_call_operand.vmem [shape: f32[2,128], index: 7, kind: input, shape index: {}]
  %s8 = inlined_call_operand.vmem [shape: f32[1,128], index: 8, kind: input, shape index: {}]
  %s9 = inlined_call_operand.vmem [shape: f32[2,256,128], index: 9, kind: output, shape index: {}]
  %s10 = sld [smem:[#allocation0]]
  $region46: #{cab_forward.1} parent=0
    _
  %s12 = ssub.s32 1, %s10
  %s13 = scalar_select 0, %s12, %s10
  // Predicated region
  $region2: #{cab_forward.1} parent=0 // pred_check
    _
  $region3: #{cab_forward.1} parent=0 // pred_check_branch
    %15 = sbr.rel (0) target = $region5
  $region4: #{cab_forward.1} parent=0 // pred_region
    _
  $region5: #{cab_forward.1} parent=0 // pred_fallthru
    _
  // Predicated region
  $region6: #{cab_forward.1} parent=0 // pred_check
    _
  $region7: #{cab_forward.1} parent=0 // pred_check_branch
    %17 = sbr.rel (0) target = $region9
  $region8: #{cab_forward.1} parent=0 // pred_region
    _
  $region9: #{cab_forward.1} parent=0 // pred_fallthru
    _
  // Predicated region
  $region10: #{cab_forward.1} parent=0 // pred_check
    _
  $region11: #{cab_forward.1} parent=0 // pred_check_branch
    %19 = sbr.rel (0) target = $region13
  $region12: #{cab_forward.1} parent=0 // pred_region
    _
  $region13: #{cab_forward.1} parent=0 // pred_fallthru
    _
  // Predicated region
  $region14: #{cab_forward.1} parent=0 // pred_check
    _
  $region15: #{cab_forward.1} parent=0 // pred_check_branch
    %21 = sbr.rel (0) target = $region17
  $region16: #{cab_forward.1} parent=0 // pred_region
    _
  $region17: #{cab_forward.1} parent=0 // pred_fallthru
    _
  // Predicated region
  $region18: #{cab_forward.1} parent=0 // pred_check
    _
  $region19: #{cab_forward.1} parent=0 // pred_check_branch
    %23 = sbr.rel (0) target = $region21
  $region20: #{cab_forward.1} parent=0 // pred_region
    _
  $region21: #{cab_forward.1} parent=0 // pred_fallthru
    _
  // Predicated region
  $region22: #{cab_forward.1} parent=0 // pred_check
    _
  $region23: #{cab_forward.1} parent=0 // pred_check_branch
    %25 = sbr.rel (0) target = $region25
  $region24: #{cab_forward.1} parent=0 // pred_region
    _
  $region25: #{cab_forward.1} parent=0 // pred_fallthru
    _
  // Predicated region
  $region26: #{cab_forward.1} parent=0 // pred_check
    _
  $region27: #{cab_forward.1} parent=0 // pred_check_branch
    %27 = sbr.rel (0) target = $region29
  $region28: #{cab_forward.1} parent=0 // pred_region
    _
  $region29: #{cab_forward.1} parent=0 // pred_fallthru
    _
  // Predicated region
  $region30: #{cab_forward.1} parent=0 // pred_check
    _
  $region31: #{cab_forward.1} parent=0 // pred_check_branch
    %29 = sbr.rel (0) target = $region33
  $region32: #{cab_forward.1} parent=0 // pred_region
    _
  $region33: #{cab_forward.1} parent=0 // pred_fallthru
    _
  // Predicated region
  $region34: #{cab_forward.1} parent=0 // pred_check
    _
  $region35: #{cab_forward.1} parent=0 // pred_check_branch
    %31 = sbr.rel (0) target = $region37
  $region36: #{cab_forward.1} parent=0 // pred_region
    _
  $region37: #{cab_forward.1} parent=0 // pred_fallthru
    _
  %32 = vst [vmem:[#allocation2] sm:$0xff] 0.0
  %33 = vst [vmem:[#allocation2 + $0x8] sm:$0xff] 0.0
  %34 = vst [vmem:[#allocation2 + $0x10] sm:$0x3] 0.0
  %35 = vst [vmem:[#allocation2 + $0x1b0] sm:$0xff] 0.0
  %36 = vst [vmem:[#allocation2 + $0x1b8] sm:$0xff] 0.0
  %37 = vst [vmem:[#allocation2 + $0x1c0] sm:$0x3] 0.0
  %s38 = scalar_lea.vmem [#allocation2], 408
  %39 = vst [vmem:[%s38] sm:$0xff] 0.0
  %40 = vst [vmem:[%s38 + $0x8] sm:$0xff] 0.0
  %41 = vst [vmem:[%s38 + $0x10] sm:$0x3] 0.0
  %42 = vst [vmem:[%s38 + $0x1b0] sm:$0xff] 0.0
  %43 = vst [vmem:[%s38 + $0x1b8] sm:$0xff] 0.0
  %44 = vst [vmem:[%s38 + $0x1c0] sm:$0x3] 0.0
  %s45 = scalar_lea.vmem [#allocation2], 24
  %46 = vst [vmem:[%s45] sm:$0x1] 0.0
  %47 = vst [vmem:[%s45 + $0x18] sm:$0x1] 0.0
  %48 = vst [vmem:[%s45 + $0x30] sm:$0x1] 0.0
  %49 = vst [vmem:[%s45 + $0x48] sm:$0x1] 0.0
  %50 = vst [vmem:[%s45 + $0x60] sm:$0x1] 0.0
  %51 = vst [vmem:[%s45 + $0x78] sm:$0x1] 0.0
  %52 = vst [vmem:[%s45 + $0x90] sm:$0x1] 0.0
  %53 = vst [vmem:[%s45 + $0xa8] sm:$0x1] 0.0
  %54 = vst [vmem:[%s45 + $0xc0] sm:$0x1] 0.0
  %55 = vst [vmem:[%s45 + $0xd8] sm:$0x1] 0.0
  %56 = vst [vmem:[%s45 + $0xf0] sm:$0x1] 0.0
  %57 = vst [vmem:[%s45 + $0x108] sm:$0x1] 0.0
  %58 = vst [vmem:[%s45 + $0x120] sm:$0x1] 0.0
  %59 = vst [vmem:[%s45 + $0x138] sm:$0x1] 0.0
  %60 = vst [vmem:[%s45 + $0x150] sm:$0x1] 0.0
  %61 = vst [vmem:[%s45 + $0x168] sm:$0x1] 0.0
  %62 = vst [vmem:[%s45 + $0x1b0] sm:$0x1] 0.0
  %63 = vst [vmem:[%s45 + $0x1c8] sm:$0x1] 0.0
  %64 = vst [vmem:[%s45 + $0x1e0] sm:$0x1] 0.0
  %65 = vst [vmem:[%s45 + $0x1f8] sm:$0x1] 0.0
  %66 = vst [vmem:[%s45 + $0x210] sm:$0x1] 0.0
  %67 = vst [vmem:[%s45 + $0x228] sm:$0x1] 0.0
  %68 = vst [vmem:[%s45 + $0x240] sm:$0x1] 0.0
  %69 = vst [vmem:[%s45 + $0x258] sm:$0x1] 0.0
  %70 = vst [vmem:[%s45 + $0x270] sm:$0x1] 0.0
  %71 = vst [vmem:[%s45 + $0x288] sm:$0x1] 0.0
  %72 = vst [vmem:[%s45 + $0x2a0] sm:$0x1] 0.0
  %73 = vst [vmem:[%s45 + $0x2b8] sm:$0x1] 0.0
  %74 = vst [vmem:[%s45 + $0x2d0] sm:$0x1] 0.0
  %75 = vst [vmem:[%s45 + $0x2e8] sm:$0x1] 0.0
  %76 = vst [vmem:[%s45 + $0x300] sm:$0x1] 0.0
  %77 = vst [vmem:[%s45 + $0x318] sm:$0x1] 0.0
  %78 = vst [vmem:[%s45 + $0x11] sm:$0x1] 0.0
  %79 = vst [vmem:[%s45 + $0x29] sm:$0x1] 0.0
  %80 = vst [vmem:[%s45 + $0x41] sm:$0x1] 0.0
  %81 = vst [vmem:[%s45 + $0x59] sm:$0x1] 0.0
  %82 = vst [vmem:[%s45 + $0x71] sm:$0x1] 0.0
  %83 = vst [vmem:[%s45 + $0x89] sm:$0x1] 0.0
  %84 = vst [vmem:[%s45 + $0xa1] sm:$0x1] 0.0
  %85 = vst [vmem:[%s45 + $0xb9] sm:$0x1] 0.0
  %86 = vst [vmem:[%s45 + $0xd1] sm:$0x1] 0.0
  %87 = vst [vmem:[%s45 + $0xe9] sm:$0x1] 0.0
  %88 = vst [vmem:[%s45 + $0x101] sm:$0x1] 0.0
  %89 = vst [vmem:[%s45 + $0x119] sm:$0x1] 0.0
  %90 = vst [vmem:[%s45 + $0x131] sm:$0x1] 0.0
  %91 = vst [vmem:[%s45 + $0x149] sm:$0x1] 0.0
  %92 = vst [vmem:[%s45 + $0x161] sm:$0x1] 0.0
  %93 = vst [vmem:[%s45 + $0x179] sm:$0x1] 0.0
  %94 = vst [vmem:[%s45 + $0x1c1] sm:$0x1] 0.0
  %95 = vst [vmem:[%s45 + $0x1d9] sm:$0x1] 0.0
  %96 = vst [vmem:[%s45 + $0x1f1] sm:$0x1] 0.0
  %97 = vst [vmem:[%s45 + $0x209] sm:$0x1] 0.0
  %98 = vst [vmem:[%s45 + $0x221] sm:$0x1] 0.0
  %99 = vst [vmem:[%s45 + $0x239] sm:$0x1] 0.0
  %100 = vst [vmem:[%s45 + $0x251] sm:$0x1] 0.0
  %101 = vst [vmem:[%s45 + $0x269] sm:$0x1] 0.0
  %102 = vst [vmem:[%s45 + $0x281] sm:$0x1] 0.0
  %103 = vst [vmem:[%s45 + $0x299] sm:$0x1] 0.0
  %104 = vst [vmem:[%s45 + $0x2b1] sm:$0x1] 0.0
  %105 = vst [vmem:[%s45 + $0x2c9] sm:$0x1] 0.0
  %106 = vst [vmem:[%s45 + $0x2e1] sm:$0x1] 0.0
  %107 = vst [vmem:[%s45 + $0x2f9] sm:$0x1] 0.0
  %108 = vst [vmem:[%s45 + $0x311] sm:$0x1] 0.0
  %109 = vst [vmem:[%s45 + $0x329] sm:$0x1] 0.0
  %110 = vst [vmem:[#allocation4] sm:$0xff] 0.0
  %111 = vst [vmem:[#allocation4 + $0x8] sm:$0xff] 0.0
  %112 = vst [vmem:[#allocation4 + $0x10] sm:$0x3] 0.0
  %113 = vst [vmem:[#allocation4 + $0x1b0] sm:$0xff] 0.0
  %114 = vst [vmem:[#allocation4 + $0x1b8] sm:$0xff] 0.0
  %115 = vst [vmem:[#allocation4 + $0x1c0] sm:$0x3] 0.0
  %s116 = scalar_lea.vmem [#allocation4], 408
  %117 = vst [vmem:[%s116] sm:$0xff] 0.0
  %118 = vst [vmem:[%s116 + $0x8] sm:$0xff] 0.0
  %119 = vst [vmem:[%s116 + $0x10] sm:$0x3] 0.0
  %120 = vst [vmem:[%s116 + $0x1b0] sm:$0xff] 0.0
  %121 = vst [vmem:[%s116 + $0x1b8] sm:$0xff] 0.0
  %122 = vst [vmem:[%s116 + $0x1c0] sm:$0x3] 0.0
  %s123 = scalar_lea.vmem [#allocation4], 24
  %124 = vst [vmem:[%s123] sm:$0x1] 0.0
  %125 = vst [vmem:[%s123 + $0x18] sm:$0x1] 0.0
  %126 = vst [vmem:[%s123 + $0x30] sm:$0x1] 0.0
  %127 = vst [vmem:[%s123 + $0x48] sm:$0x1] 0.0
  %128 = vst [vmem:[%s123 + $0x60] sm:$0x1] 0.0
  %129 = vst [vmem:[%s123 + $0x78] sm:$0x1] 0.0
  %130 = vst [vmem:[%s123 + $0x90] sm:$0x1] 0.0
  %131 = vst [vmem:[%s123 + $0xa8] sm:$0x1] 0.0
  %132 = vst [vmem:[%s123 + $0xc0] sm:$0x1] 0.0
  %133 = vst [vmem:[%s123 + $0xd8] sm:$0x1] 0.0
  %134 = vst [vmem:[%s123 + $0xf0] sm:$0x1] 0.0
  %135 = vst [vmem:[%s123 + $0x108] sm:$0x1] 0.0
  %136 = vst [vmem:[%s123 + $0x120] sm:$0x1] 0.0
  %137 = vst [vmem:[%s123 + $0x138] sm:$0x1] 0.0
  %138 = vst [vmem:[%s123 + $0x150] sm:$0x1] 0.0
  %139 = vst [vmem:[%s123 + $0x168] sm:$0x1] 0.0
  %140 = vst [vmem:[%s123 + $0x1b0] sm:$0x1] 0.0
  %141 = vst [vmem:[%s123 + $0x1c8] sm:$0x1] 0.0
  %142 = vst [vmem:[%s123 + $0x1e0] sm:$0x1] 0.0
  %143 = vst [vmem:[%s123 + $0x1f8] sm:$0x1] 0.0
  %144 = vst [vmem:[%s123 + $0x210] sm:$0x1] 0.0
  %145 = vst [vmem:[%s123 + $0x228] sm:$0x1] 0.0
  %146 = vst [vmem:[%s123 + $0x240] sm:$0x1] 0.0
  %147 = vst [vmem:[%s123 + $0x258] sm:$0x1] 0.0
  %148 = vst [vmem:[%s123 + $0x270] sm:$0x1] 0.0
  %149 = vst [vmem:[%s123 + $0x288] sm:$0x1] 0.0
  %150 = vst [vmem:[%s123 + $0x2a0] sm:$0x1] 0.0
  %151 = vst [vmem:[%s123 + $0x2b8] sm:$0x1] 0.0
  %152 = vst [vmem:[%s123 + $0x2d0] sm:$0x1] 0.0
  %153 = vst [vmem:[%s123 + $0x2e8] sm:$0x1] 0.0
  %154 = vst [vmem:[%s123 + $0x300] sm:$0x1] 0.0
  %155 = vst [vmem:[%s123 + $0x318] sm:$0x1] 0.0
  %156 = vst [vmem:[%s123 + $0x11] sm:$0x1] 0.0
  %157 = vst [vmem:[%s123 + $0x29] sm:$0x1] 0.0
  %158 = vst [vmem:[%s123 + $0x41] sm:$0x1] 0.0
  %159 = vst [vmem:[%s123 + $0x59] sm:$0x1] 0.0
  %160 = vst [vmem:[%s123 + $0x71] sm:$0x1] 0.0
  %161 = vst [vmem:[%s123 + $0x89] sm:$0x1] 0.0
  %162 = vst [vmem:[%s123 + $0xa1] sm:$0x1] 0.0
  %163 = vst [vmem:[%s123 + $0xb9] sm:$0x1] 0.0
  %164 = vst [vmem:[%s123 + $0xd1] sm:$0x1] 0.0
  %165 = vst [vmem:[%s123 + $0xe9] sm:$0x1] 0.0
  %166 = vst [vmem:[%s123 + $0x101] sm:$0x1] 0.0
  %167 = vst [vmem:[%s123 + $0x119] sm:$0x1] 0.0
  %168 = vst [vmem:[%s123 + $0x131] sm:$0x1] 0.0
  %169 = vst [vmem:[%s123 + $0x149] sm:$0x1] 0.0
  %170 = vst [vmem:[%s123 + $0x161] sm:$0x1] 0.0
  %171 = vst [vmem:[%s123 + $0x179] sm:$0x1] 0.0
  %172 = vst [vmem:[%s123 + $0x1c1] sm:$0x1] 0.0
  %173 = vst [vmem:[%s123 + $0x1d9] sm:$0x1] 0.0
  %174 = vst [vmem:[%s123 + $0x1f1] sm:$0x1] 0.0
  %175 = vst [vmem:[%s123 + $0x209] sm:$0x1] 0.0
  %176 = vst [vmem:[%s123 + $0x221] sm:$0x1] 0.0
  %177 = vst [vmem:[%s123 + $0x239] sm:$0x1] 0.0
  %178 = vst [vmem:[%s123 + $0x251] sm:$0x1] 0.0
  %179 = vst [vmem:[%s123 + $0x269] sm:$0x1] 0.0
  %180 = vst [vmem:[%s123 + $0x281] sm:$0x1] 0.0
  %181 = vst [vmem:[%s123 + $0x299] sm:$0x1] 0.0
  %182 = vst [vmem:[%s123 + $0x2b1] sm:$0x1] 0.0
  %183 = vst [vmem:[%s123 + $0x2c9] sm:$0x1] 0.0
  %184 = vst [vmem:[%s123 + $0x2e1] sm:$0x1] 0.0
  %185 = vst [vmem:[%s123 + $0x2f9] sm:$0x1] 0.0
  %186 = vst [vmem:[%s123 + $0x311] sm:$0x1] 0.0
  %187 = vst [vmem:[%s123 + $0x329] sm:$0x1] 0.0
  %v188 = vld [vmem:[%s0] sm:$0xff]
  %v189 = vld [vmem:[%s0 + $0x8] sm:$0xff]
  %v190 = vld [vmem:[%s0 + $0x10] sm:$0xff]
  %v191 = vld [vmem:[%s0 + $0x18] sm:$0xff]
  %v192 = vld [vmem:[%s0 + $0x20] sm:$0xff]
  %v193 = vld [vmem:[%s0 + $0x28] sm:$0xff]
  %v194 = vld [vmem:[%s0 + $0x30] sm:$0xff]
  %v195 = vld [vmem:[%s0 + $0x38] sm:$0xff]
  %v196 = vld [vmem:[%s0 + $0x40] sm:$0xff]
  %v197 = vld [vmem:[%s0 + $0x48] sm:$0xff]
  %v198 = vld [vmem:[%s0 + $0x50] sm:$0xff]
  %v199 = vld [vmem:[%s0 + $0x58] sm:$0xff]
  %v200 = vld [vmem:[%s0 + $0x60] sm:$0xff]
  %v201 = vld [vmem:[%s0 + $0x68] sm:$0xff]
  %v202 = vld [vmem:[%s0 + $0x70] sm:$0xff]
  %v203 = vld [vmem:[%s0 + $0x78] sm:$0xff]
  %v204 = vld [vmem:[%s0 + $0x80] sm:$0xff]
  %v205 = vld [vmem:[%s0 + $0x88] sm:$0xff]
  %v206 = vld [vmem:[%s0 + $0x90] sm:$0xff]
  %v207 = vld [vmem:[%s0 + $0x98] sm:$0xff]
  %v208 = vld [vmem:[%s0 + $0xa0] sm:$0xff]
  %v209 = vld [vmem:[%s0 + $0xa8] sm:$0xff]
  %v210 = vld [vmem:[%s0 + $0xb0] sm:$0xff]
  %v211 = vld [vmem:[%s0 + $0xb8] sm:$0xff]
  %v212 = vld [vmem:[%s0 + $0xc0] sm:$0xff]
  %v213 = vld [vmem:[%s0 + $0xc8] sm:$0xff]
  %v214 = vld [vmem:[%s0 + $0xd0] sm:$0xff]
  %v215 = vld [vmem:[%s0 + $0xd8] sm:$0xff]
  %v216 = vld [vmem:[%s0 + $0xe0] sm:$0xff]
  %v217 = vld [vmem:[%s0 + $0xe8] sm:$0xff]
  %v218 = vld [vmem:[%s0 + $0xf0] sm:$0xff]
  %v219 = vld [vmem:[%s0 + $0xf8] sm:$0xff]
  %v220 = vld [vmem:[%s0 + $0x100] sm:$0xff]
  %v221 = vld [vmem:[%s0 + $0x108] sm:$0xff]
  %v222 = vld [vmem:[%s0 + $0x110] sm:$0xff]
  %v223 = vld [vmem:[%s0 + $0x118] sm:$0xff]
  %v224 = vld [vmem:[%s0 + $0x120] sm:$0xff]
  %v225 = vld [vmem:[%s0 + $0x128] sm:$0xff]
  %v226 = vld [vmem:[%s0 + $0x130] sm:$0xff]
  %v227 = vld [vmem:[%s0 + $0x138] sm:$0xff]
  %v228 = vld [vmem:[%s0 + $0x140] sm:$0xff]
  %v229 = vld [vmem:[%s0 + $0x148] sm:$0xff]
  %v230 = vld [vmem:[%s0 + $0x150] sm:$0xff]
  %v231 = vld [vmem:[%s0 + $0x158] sm:$0xff]
  %v232 = vld [vmem:[%s0 + $0x160] sm:$0xff]
  %v233 = vld [vmem:[%s0 + $0x168] sm:$0xff]
  %v234 = vld [vmem:[%s0 + $0x170] sm:$0xff]
  %v235 = vld [vmem:[%s0 + $0x178] sm:$0xff]
  %v236 = vld [vmem:[%s0 + $0x180] sm:$0xff]
  %v237 = vld [vmem:[%s0 + $0x188] sm:$0xff]
  %v238 = vld [vmem:[%s0 + $0x190] sm:$0xff]
  %v239 = vld [vmem:[%s0 + $0x198] sm:$0xff]
  %v240 = vld [vmem:[%s0 + $0x1a0] sm:$0xff]
  %v241 = vld [vmem:[%s0 + $0x1a8] sm:$0xff]
  %v242 = vld [vmem:[%s0 + $0x1b0] sm:$0xff]
  %v243 = vld [vmem:[%s0 + $0x1b8] sm:$0xff]
  %v244 = vld [vmem:[%s0 + $0x1c0] sm:$0xff]
  %v245 = vld [vmem:[%s0 + $0x1c8] sm:$0xff]
  %v246 = vld [vmem:[%s0 + $0x1d0] sm:$0xff]
  %v247 = vld [vmem:[%s0 + $0x1d8] sm:$0xff]
  %v248 = vld [vmem:[%s0 + $0x1e0] sm:$0xff]
  %v249 = vld [vmem:[%s0 + $0x1e8] sm:$0xff]
  %v250 = vld [vmem:[%s0 + $0x1f0] sm:$0xff]
  %v251 = vld [vmem:[%s0 + $0x1f8] sm:$0xff]
  %252 = vst [vmem:[%s45 + $0x1] sm:$0xff] %v188
  %253 = vst [vmem:[%s45 + $0x9] sm:$0xff] %v189
  %254 = vst [vmem:[%s45 + $0x19] sm:$0xff] %v190
  %255 = vst [vmem:[%s45 + $0x21] sm:$0xff] %v191
  %256 = vst [vmem:[%s45 + $0x31] sm:$0xff] %v192
  %257 = vst [vmem:[%s45 + $0x39] sm:$0xff] %v193
  %258 = vst [vmem:[%s45 + $0x49] sm:$0xff] %v194
  %259 = vst [vmem:[%s45 + $0x51] sm:$0xff] %v195
  %260 = vst [vmem:[%s45 + $0x61] sm:$0xff] %v196
  %261 = vst [vmem:[%s45 + $0x69] sm:$0xff] %v197
  %262 = vst [vmem:[%s45 + $0x79] sm:$0xff] %v198
  %263 = vst [vmem:[%s45 + $0x81] sm:$0xff] %v199
  %264 = vst [vmem:[%s45 + $0x91] sm:$0xff] %v200
  %265 = vst [vmem:[%s45 + $0x99] sm:$0xff] %v201
  %266 = vst [vmem:[%s45 + $0xa9] sm:$0xff] %v202
  %267 = vst [vmem:[%s45 + $0xb1] sm:$0xff] %v203
  %268 = vst [vmem:[%s45 + $0xc1] sm:$0xff] %v204
  %269 = vst [vmem:[%s45 + $0xc9] sm:$0xff] %v205
  %270 = vst [vmem:[%s45 + $0xd9] sm:$0xff] %v206
  %271 = vst [vmem:[%s45 + $0xe1] sm:$0xff] %v207
  %272 = vst [vmem:[%s45 + $0xf1] sm:$0xff] %v208
  %273 = vst [vmem:[%s45 + $0xf9] sm:$0xff] %v209
  %274 = vst [vmem:[%s45 + $0x109] sm:$0xff] %v210
  %275 = vst [vmem:[%s45 + $0x111] sm:$0xff] %v211
  %276 = vst [vmem:[%s45 + $0x121] sm:$0xff] %v212
  %277 = vst [vmem:[%s45 + $0x129] sm:$0xff] %v213
  %278 = vst [vmem:[%s45 + $0x139] sm:$0xff] %v214
  %279 = vst [vmem:[%s45 + $0x141] sm:$0xff] %v215
  %280 = vst [vmem:[%s45 + $0x151] sm:$0xff] %v216
  %281 = vst [vmem:[%s45 + $0x159] sm:$0xff] %v217
  %282 = vst [vmem:[%s45 + $0x169] sm:$0xff] %v218
  %283 = vst [vmem:[%s45 + $0x171] sm:$0xff] %v219
  %284 = vst [vmem:[%s45 + $0x1b1] sm:$0xff] %v220
  %285 = vst [vmem:[%s45 + $0x1b9] sm:$0xff] %v221
  %286 = vst [vmem:[%s45 + $0x1c9] sm:$0xff] %v222
  %287 = vst [vmem:[%s45 + $0x1d1] sm:$0xff] %v223
  %288 = vst [vmem:[%s45 + $0x1e1] sm:$0xff] %v224
  %289 = vst [vmem:[%s45 + $0x1e9] sm:$0xff] %v225
  %290 = vst [vmem:[%s45 + $0x1f9] sm:$0xff] %v226
  %291 = vst [vmem:[%s45 + $0x201] sm:$0xff] %v227
  %292 = vst [vmem:[%s45 + $0x211] sm:$0xff] %v228
  %293 = vst [vmem:[%s45 + $0x219] sm:$0xff] %v229
  %294 = vst [vmem:[%s45 + $0x229] sm:$0xff] %v230
  %295 = vst [vmem:[%s45 + $0x231] sm:$0xff] %v231
  %296 = vst [vmem:[%s45 + $0x241] sm:$0xff] %v232
  %297 = vst [vmem:[%s45 + $0x249] sm:$0xff] %v233
  %298 = vst [vmem:[%s45 + $0x259] sm:$0xff] %v234
  %299 = vst [vmem:[%s45 + $0x261] sm:$0xff] %v235
  %300 = vst [vmem:[%s45 + $0x271] sm:$0xff] %v236
  %301 = vst [vmem:[%s45 + $0x279] sm:$0xff] %v237
  %302 = vst [vmem:[%s45 + $0x289] sm:$0xff] %v238
  %303 = vst [vmem:[%s45 + $0x291] sm:$0xff] %v239
  %304 = vst [vmem:[%s45 + $0x2a1] sm:$0xff] %v240
  %305 = vst [vmem:[%s45 + $0x2a9] sm:$0xff] %v241
  %306 = vst [vmem:[%s45 + $0x2b9] sm:$0xff] %v242
  %307 = vst [vmem:[%s45 + $0x2c1] sm:$0xff] %v243
  %308 = vst [vmem:[%s45 + $0x2d1] sm:$0xff] %v244
  %309 = vst [vmem:[%s45 + $0x2d9] sm:$0xff] %v245
  %310 = vst [vmem:[%s45 + $0x2e9] sm:$0xff] %v246
  %311 = vst [vmem:[%s45 + $0x2f1] sm:$0xff] %v247
  %312 = vst [vmem:[%s45 + $0x301] sm:$0xff] %v248
  %313 = vst [vmem:[%s45 + $0x309] sm:$0xff] %v249
  %314 = vst [vmem:[%s45 + $0x319] sm:$0xff] %v250
  %315 = vst [vmem:[%s45 + $0x321] sm:$0xff] %v251
  %v316 = vld [vmem:[#allocation2] sm:$0xff]
  %v317 = vld [vmem:[#allocation2 + $0x8] sm:$0xff]
  %v318 = vld [vmem:[#allocation2 + $0x18] sm:$0xff]
  %v319 = vld [vmem:[#allocation2 + $0x20] sm:$0xff]
  %v320 = vld [vmem:[#allocation2 + $0x30] sm:$0xff]
  %v321 = vld [vmem:[#allocation2 + $0x38] sm:$0xff]
  %v322 = vld [vmem:[#allocation2 + $0x48] sm:$0xff]
  %v323 = vld [vmem:[#allocation2 + $0x50] sm:$0xff]
  %v324 = vld [vmem:[#allocation2 + $0x60] sm:$0xff]
  %v325 = vld [vmem:[#allocation2 + $0x68] sm:$0xff]
  %v326 = vld [vmem:[#allocation2 + $0x78] sm:$0xff]
  %v327 = vld [vmem:[#allocation2 + $0x80] sm:$0xff]
  %v328 = vld [vmem:[#allocation2 + $0x90] sm:$0xff]
  %v329 = vld [vmem:[#allocation2 + $0x98] sm:$0xff]
  %v330 = vld [vmem:[#allocation2 + $0xa8] sm:$0xff]
  %v331 = vld [vmem:[#allocation2 + $0xb0] sm:$0xff]
  %v332 = vld [vmem:[#allocation2 + $0xc0] sm:$0xff]
  %v333 = vld [vmem:[#allocation2 + $0xc8] sm:$0xff]
  %v334 = vld [vmem:[#allocation2 + $0xd8] sm:$0xff]
  %v335 = vld [vmem:[#allocation2 + $0xe0] sm:$0xff]
  %v336 = vld [vmem:[#allocation2 + $0xf0] sm:$0xff]
  %v337 = vld [vmem:[#allocation2 + $0xf8] sm:$0xff]
  %v338 = vld [vmem:[#allocation2 + $0x108] sm:$0xff]
  %v339 = vld [vmem:[#allocation2 + $0x110] sm:$0xff]
  %v340 = vld [vmem:[#allocation2 + $0x120] sm:$0xff]
  %v341 = vld [vmem:[#allocation2 + $0x128] sm:$0xff]
  %v342 = vld [vmem:[#allocation2 + $0x138] sm:$0xff]
  %v343 = vld [vmem:[#allocation2 + $0x140] sm:$0xff]
  %v344 = vld [vmem:[#allocation2 + $0x150] sm:$0xff]
  %v345 = vld [vmem:[#allocation2 + $0x158] sm:$0xff]
  %v346 = vld [vmem:[#allocation2 + $0x168] sm:$0xff]
  %v347 = vld [vmem:[#allocation2 + $0x170] sm:$0xff]
  %v348 = vld [vmem:[#allocation2 + $0x1b0] sm:$0xff]
  %v349 = vld [vmem:[#allocation2 + $0x1b8] sm:$0xff]
  %v350 = vld [vmem:[#allocation2 + $0x1c8] sm:$0xff]
  %v351 = vld [vmem:[#allocation2 + $0x1d0] sm:$0xff]
  %v352 = vld [vmem:[#allocation2 + $0x1e0] sm:$0xff]
  %v353 = vld [vmem:[#allocation2 + $0x1e8] sm:$0xff]
  %v354 = vld [vmem:[#allocation2 + $0x1f8] sm:$0xff]
  %v355 = vld [vmem:[#allocation2 + $0x200] sm:$0xff]
  %v356 = vld [vmem:[#allocation2 + $0x210] sm:$0xff]
  %v357 = vld [vmem:[#allocation2 + $0x218] sm:$0xff]
  %v358 = vld [vmem:[#allocation2 + $0x228] sm:$0xff]
  %v359 = vld [vmem:[#allocation2 + $0x230] sm:$0xff]
  %v360 = vld [vmem:[#allocation2 + $0x240] sm:$0xff]
  %v361 = vld [vmem:[#allocation2 + $0x248] sm:$0xff]
  %v362 = vld [vmem:[#allocation2 + $0x258] sm:$0xff]
  %v363 = vld [vmem:[#allocation2 + $0x260] sm:$0xff]
  %v364 = vld [vmem:[#allocation2 + $0x270] sm:$0xff]
  %v365 = vld [vmem:[#allocation2 + $0x278] sm:$0xff]
  %v366 = vld [vmem:[#allocation2 + $0x288] sm:$0xff]
  %v367 = vld [vmem:[#allocation2 + $0x290] sm:$0xff]
  %v368 = vld [vmem:[#allocation2 + $0x2a0] sm:$0xff]
  %v369 = vld [vmem:[#allocation2 + $0x2a8] sm:$0xff]
  %v370 = vld [vmem:[#allocation2 + $0x2b8] sm:$0xff]
  %v371 = vld [vmem:[#allocation2 + $0x2c0] sm:$0xff]
  %v372 = vld [vmem:[#allocation2 + $0x2d0] sm:$0xff]
  %v373 = vld [vmem:[#allocation2 + $0x2d8] sm:$0xff]
  %v374 = vld [vmem:[#allocation2 + $0x2e8] sm:$0xff]
  %v375 = vld [vmem:[#allocation2 + $0x2f0] sm:$0xff]
  %v376 = vld [vmem:[#allocation2 + $0x300] sm:$0xff]
  %v377 = vld [vmem:[#allocation2 + $0x308] sm:$0xff]
  %v378 = vld [vmem:[#allocation2 + $0x318] sm:$0xff]
  %v379 = vld [vmem:[#allocation2 + $0x320] sm:$0xff]
  %380 = vst [vmem:[#allocation3] sm:$0xff] %v316
  %381 = vst [vmem:[#allocation3 + $0x48] sm:$0xff] %v317
  %382 = vst [vmem:[#allocation3 + $0x90] sm:$0xff] %v318
  %383 = vst [vmem:[#allocation3 + $0xd8] sm:$0xff] %v319
  %384 = vst [vmem:[#allocation3 + $0x120] sm:$0xff] %v320
  %385 = vst [vmem:[#allocation3 + $0x168] sm:$0xff] %v321
  %386 = vst [vmem:[#allocation3 + $0x1b0] sm:$0xff] %v322
  %387 = vst [vmem:[#allocation3 + $0x1f8] sm:$0xff] %v323
  %388 = vst [vmem:[#allocation3 + $0x240] sm:$0xff] %v324
  %389 = vst [vmem:[#allocation3 + $0x288] sm:$0xff] %v325
  %390 = vst [vmem:[#allocation3 + $0x2d0] sm:$0xff] %v326
  %391 = vst [vmem:[#allocation3 + $0x318] sm:$0xff] %v327
  %392 = vst [vmem:[#allocation3 + $0x360] sm:$0xff] %v328
  %393 = vst [vmem:[#allocation3 + $0x3a8] sm:$0xff] %v329
  %394 = vst [vmem:[#allocation3 + $0x3f0] sm:$0xff] %v330
  %395 = vst [vmem:[#allocation3 + $0x438] sm:$0xff] %v331
  %396 = vst [vmem:[#allocation3 + $0x480] sm:$0xff] %v332
  %397 = vst [vmem:[#allocation3 + $0x4c8] sm:$0xff] %v333
  %398 = vst [vmem:[#allocation3 + $0x510] sm:$0xff] %v334
  %399 = vst [vmem:[#allocation3 + $0x558] sm:$0xff] %v335
  %400 = vst [vmem:[#allocation3 + $0x5a0] sm:$0xff] %v336
  %401 = vst [vmem:[#allocation3 + $0x5e8] sm:$0xff] %v337
  %402 = vst [vmem:[#allocation3 + $0x630] sm:$0xff] %v338
  %403 = vst [vmem:[#allocation3 + $0x678] sm:$0xff] %v339
  %404 = vst [vmem:[#allocation3 + $0x6c0] sm:$0xff] %v340
  %405 = vst [vmem:[#allocation3 + $0x708] sm:$0xff] %v341
  %406 = vst [vmem:[#allocation3 + $0x750] sm:$0xff] %v342
  %407 = vst [vmem:[#allocation3 + $0x798] sm:$0xff] %v343
  %408 = vst [vmem:[#allocation3 + $0x7e0] sm:$0xff] %v344
  %409 = vst [vmem:[#allocation3 + $0x828] sm:$0xff] %v345
  %410 = vst [vmem:[#allocation3 + $0x870] sm:$0xff] %v346
  %411 = vst [vmem:[#allocation3 + $0x8b8] sm:$0xff] %v347
  %412 = vst [vmem:[#allocation3 + $0x900] sm:$0xff] %v348
  %413 = vst [vmem:[#allocation3 + $0x948] sm:$0xff] %v349
  %414 = vst [vmem:[#allocation3 + $0x990] sm:$0xff] %v350
  %415 = vst [vmem:[#allocation3 + $0x9d8] sm:$0xff] %v351
  %416 = vst [vmem:[#allocation3 + $0xa20] sm:$0xff] %v352
  %417 = vst [vmem:[#allocation3 + $0xa68] sm:$0xff] %v353
  %418 = vst [vmem:[#allocation3 + $0xab0] sm:$0xff] %v354
  %419 = vst [vmem:[#allocation3 + $0xaf8] sm:$0xff] %v355
  %420 = vst [vmem:[#allocation3 + $0xb40] sm:$0xff] %v356
  %421 = vst [vmem:[#allocation3 + $0xb88] sm:$0xff] %v357
  %422 = vst [vmem:[#allocation3 + $0xbd0] sm:$0xff] %v358
  %423 = vst [vmem:[#allocation3 + $0xc18] sm:$0xff] %v359
  %424 = vst [vmem:[#allocation3 + $0xc60] sm:$0xff] %v360
  %425 = vst [vmem:[#allocation3 + $0xca8] sm:$0xff] %v361
  %426 = vst [vmem:[#allocation3 + $0xcf0] sm:$0xff] %v362
  %427 = vst [vmem:[#allocation3 + $0xd38] sm:$0xff] %v363
  %428 = vst [vmem:[#allocation3 + $0xd80] sm:$0xff] %v364
  %429 = vst [vmem:[#allocation3 + $0xdc8] sm:$0xff] %v365
  %430 = vst [vmem:[#allocation3 + $0xe10] sm:$0xff] %v366
  %431 = vst [vmem:[#allocation3 + $0xe58] sm:$0xff] %v367
  %432 = vst [vmem:[#allocation3 + $0xea0] sm:$0xff] %v368
  %433 = vst [vmem:[#allocation3 + $0xee8] sm:$0xff] %v369
  %434 = vst [vmem:[#allocation3 + $0xf30] sm:$0xff] %v370
  %435 = vst [vmem:[#allocation3 + $0xf78] sm:$0xff] %v371
  %436 = vst [vmem:[#allocation3 + $0xfc0] sm:$0xff] %v372
  %437 = vst [vmem:[#allocation3 + $0x1008] sm:$0xff] %v373
  %438 = vst [vmem:[#allocation3 + $0x1050] sm:$0xff] %v374
  %439 = vst [vmem:[#allocation3 + $0x1098] sm:$0xff] %v375
  %440 = vst [vmem:[#allocation3 + $0x10e0] sm:$0xff] %v376
  %441 = vst [vmem:[#allocation3 + $0x1128] sm:$0xff] %v377
  %442 = vst [vmem:[#allocation3 + $0x1170] sm:$0xff] %v378
  %443 = vst [vmem:[#allocation3 + $0x11b8] sm:$0xff] %v379
  %v444 = vld [vmem:[#allocation2 + $0x1] sm:$0xff]
  %v445 = vld [vmem:[#allocation2 + $0x9] sm:$0xff]
  %v446 = vld [vmem:[#allocation2 + $0x19] sm:$0xff]
  %v447 = vld [vmem:[#allocation2 + $0x21] sm:$0xff]
  %v448 = vld [vmem:[#allocation2 + $0x31] sm:$0xff]
  %v449 = vld [vmem:[#allocation2 + $0x39] sm:$0xff]
  %v450 = vld [vmem:[#allocation2 + $0x49] sm:$0xff]
  %v451 = vld [vmem:[#allocation2 + $0x51] sm:$0xff]
  %v452 = vld [vmem:[#allocation2 + $0x61] sm:$0xff]
  %v453 = vld [vmem:[#allocation2 + $0x69] sm:$0xff]
  %v454 = vld [vmem:[#allocation2 + $0x79] sm:$0xff]
  %v455 = vld [vmem:[#allocation2 + $0x81] sm:$0xff]
  %v456 = vld [vmem:[#allocation2 + $0x91] sm:$0xff]
  %v457 = vld [vmem:[#allocation2 + $0x99] sm:$0xff]
  %v458 = vld [vmem:[#allocation2 + $0xa9] sm:$0xff]
  %v459 = vld [vmem:[#allocation2 + $0xb1] sm:$0xff]
  %v460 = vld [vmem:[#allocation2 + $0xc1] sm:$0xff]
  %v461 = vld [vmem:[#allocation2 + $0xc9] sm:$0xff]
  %v462 = vld [vmem:[#allocation2 + $0xd9] sm:$0xff]
  %v463 = vld [vmem:[#allocation2 + $0xe1] sm:$0xff]
  %v464 = vld [vmem:[#allocation2 + $0xf1] sm:$0xff]
  %v465 = vld [vmem:[#allocation2 + $0xf9] sm:$0xff]
  %v466 = vld [vmem:[#allocation2 + $0x109] sm:$0xff]
  %v467 = vld [vmem:[#allocation2 + $0x111] sm:$0xff]
  %v468 = vld [vmem:[#allocation2 + $0x121] sm:$0xff]
  %v469 = vld [vmem:[#allocation2 + $0x129] sm:$0xff]
  %v470 = vld [vmem:[#allocation2 + $0x139] sm:$0xff]
  %v471 = vld [vmem:[#allocation2 + $0x141] sm:$0xff]
  %v472 = vld [vmem:[#allocation2 + $0x151] sm:$0xff]
  %v473 = vld [vmem:[#allocation2 + $0x159] sm:$0xff]
  %v474 = vld [vmem:[#allocation2 + $0x169] sm:$0xff]
  %v475 = vld [vmem:[#allocation2 + $0x171] sm:$0xff]
  %v476 = vld [vmem:[#allocation2 + $0x1b1] sm:$0xff]
  %v477 = vld [vmem:[#allocation2 + $0x1b9] sm:$0xff]
  %v478 = vld [vmem:[#allocation2 + $0x1c9] sm:$0xff]
  %v479 = vld [vmem:[#allocation2 + $0x1d1] sm:$0xff]
  %v480 = vld [vmem:[#allocation2 + $0x1e1] sm:$0xff]
  %v481 = vld [vmem:[#allocation2 + $0x1e9] sm:$0xff]
  %v482 = vld [vmem:[#allocation2 + $0x1f9] sm:$0xff]
  %v483 = vld [vmem:[#allocation2 + $0x201] sm:$0xff]
  %v484 = vld [vmem:[#allocation2 + $0x211] sm:$0xff]
  %v485 = vld [vmem:[#allocation2 + $0x219] sm:$0xff]
  %v486 = vld [vmem:[#allocation2 + $0x229] sm:$0xff]
  %v487 = vld [vmem:[#allocation2 + $0x231] sm:$0xff]
  %v488 = vld [vmem:[#allocation2 + $0x241] sm:$0xff]
  %v489 = vld [vmem:[#allocation2 + $0x249] sm:$0xff]
  %v490 = vld [vmem:[#allocation2 + $0x259] sm:$0xff]
  %v491 = vld [vmem:[#allocation2 + $0x261] sm:$0xff]
  %v492 = vld [vmem:[#allocation2 + $0x271] sm:$0xff]
  %v493 = vld [vmem:[#allocation2 + $0x279] sm:$0xff]
  %v494 = vld [vmem:[#allocation2 + $0x289] sm:$0xff]
  %v495 = vld [vmem:[#allocation2 + $0x291] sm:$0xff]
  %v496 = vld [vmem:[#allocation2 + $0x2a1] sm:$0xff]
  %v497 = vld [vmem:[#allocation2 + $0x2a9] sm:$0xff]
  %v498 = vld [vmem:[#allocation2 + $0x2b9] sm:$0xff]
  %v499 = vld [vmem:[#allocation2 + $0x2c1] sm:$0xff]
  %v500 = vld [vmem:[#allocation2 + $0x2d1] sm:$0xff]
  %v501 = vld [vmem:[#allocation2 + $0x2d9] sm:$0xff]
  %v502 = vld [vmem:[#allocation2 + $0x2e9] sm:$0xff]
  %v503 = vld [vmem:[#allocation2 + $0x2f1] sm:$0xff]
  %v504 = vld [vmem:[#allocation2 + $0x301] sm:$0xff]
  %v505 = vld [vmem:[#allocation2 + $0x309] sm:$0xff]
  %v506 = vld [vmem:[#allocation2 + $0x319] sm:$0xff]
  %v507 = vld [vmem:[#allocation2 + $0x321] sm:$0xff]
  %508 = vst [vmem:[#allocation3 + $0x8] sm:$0xff] %v444
  %509 = vst [vmem:[#allocation3 + $0x50] sm:$0xff] %v445
  %510 = vst [vmem:[#allocation3 + $0x98] sm:$0xff] %v446
  %511 = vst [vmem:[#allocation3 + $0xe0] sm:$0xff] %v447
  %512 = vst [vmem:[#allocation3 + $0x128] sm:$0xff] %v448
  %513 = vst [vmem:[#allocation3 + $0x170] sm:$0xff] %v449
  %514 = vst [vmem:[#allocation3 + $0x1b8] sm:$0xff] %v450
  %515 = vst [vmem:[#allocation3 + $0x200] sm:$0xff] %v451
  %516 = vst [vmem:[#allocation3 + $0x248] sm:$0xff] %v452
  %517 = vst [vmem:[#allocation3 + $0x290] sm:$0xff] %v453
  %518 = vst [vmem:[#allocation3 + $0x2d8] sm:$0xff] %v454
  %519 = vst [vmem:[#allocation3 + $0x320] sm:$0xff] %v455
  %520 = vst [vmem:[#allocation3 + $0x368] sm:$0xff] %v456
  %521 = vst [vmem:[#allocation3 + $0x3b0] sm:$0xff] %v457
  %522 = vst [vmem:[#allocation3 + $0x3f8] sm:$0xff] %v458
  %523 = vst [vmem:[#allocation3 + $0x440] sm:$0xff] %v459
  %524 = vst [vmem:[#allocation3 + $0x488] sm:$0xff] %v460
  %525 = vst [vmem:[#allocation3 + $0x4d0] sm:$0xff] %v461
  %526 = vst [vmem:[#allocation3 + $0x518] sm:$0xff] %v462
  %527 = vst [vmem:[#allocation3 + $0x560] sm:$0xff] %v463
  %528 = vst [vmem:[#allocation3 + $0x5a8] sm:$0xff] %v464
  %529 = vst [vmem:[#allocation3 + $0x5f0] sm:$0xff] %v465
  %530 = vst [vmem:[#allocation3 + $0x638] sm:$0xff] %v466
  %531 = vst [vmem:[#allocation3 + $0x680] sm:$0xff] %v467
  %532 = vst [vmem:[#allocation3 + $0x6c8] sm:$0xff] %v468
  %533 = vst [vmem:[#allocation3 + $0x710] sm:$0xff] %v469
  %534 = vst [vmem:[#allocation3 + $0x758] sm:$0xff] %v470
  %535 = vst [vmem:[#allocation3 + $0x7a0] sm:$0xff] %v471
  %536 = vst [vmem:[#allocation3 + $0x7e8] sm:$0xff] %v472
  %537 = vst [vmem:[#allocation3 + $0x830] sm:$0xff] %v473
  %538 = vst [vmem:[#allocation3 + $0x878] sm:$0xff] %v474
  %539 = vst [vmem:[#allocation3 + $0x8c0] sm:$0xff] %v475
  %540 = vst [vmem:[#allocation3 + $0x908] sm:$0xff] %v476
  %541 = vst [vmem:[#allocation3 + $0x950] sm:$0xff] %v477
  %542 = vst [vmem:[#allocation3 + $0x998] sm:$0xff] %v478
  %543 = vst [vmem:[#allocation3 + $0x9e0] sm:$0xff] %v479
  %544 = vst [vmem:[#allocation3 + $0xa28] sm:$0xff] %v480
  %545 = vst [vmem:[#allocation3 + $0xa70] sm:$0xff] %v481
  %546 = vst [vmem:[#allocation3 + $0xab8] sm:$0xff] %v482
  %547 = vst [vmem:[#allocation3 + $0xb00] sm:$0xff] %v483
  %548 = vst [vmem:[#allocation3 + $0xb48] sm:$0xff] %v484
  %549 = vst [vmem:[#allocation3 + $0xb90] sm:$0xff] %v485
  %550 = vst [vmem:[#allocation3 + $0xbd8] sm:$0xff] %v486
  %551 = vst [vmem:[#allocation3 + $0xc20] sm:$0xff] %v487
  %552 = vst [vmem:[#allocation3 + $0xc68] sm:$0xff] %v488
  %553 = vst [vmem:[#allocation3 + $0xcb0] sm:$0xff] %v489
  %554 = vst [vmem:[#allocation3 + $0xcf8] sm:$0xff] %v490
  %555 = vst [vmem:[#allocation3 + $0xd40] sm:$0xff] %v491
  %556 = vst [vmem:[#allocation3 + $0xd88] sm:$0xff] %v492
  %557 = vst [vmem:[#allocation3 + $0xdd0] sm:$0xff] %v493
  %558 = vst [vmem:[#allocation3 + $0xe18] sm:$0xff] %v494
  %559 = vst [vmem:[#allocation3 + $0xe60] sm:$0xff] %v495
  %560 = vst [vmem:[#allocation3 + $0xea8] sm:$0xff] %v496
  %561 = vst [vmem:[#allocation3 + $0xef0] sm:$0xff] %v497
  %562 = vst [vmem:[#allocation3 + $0xf38] sm:$0xff] %v498
  %563 = vst [vmem:[#allocation3 + $0xf80] sm:$0xff] %v499
  %564 = vst [vmem:[#allocation3 + $0xfc8] sm:$0xff] %v500
  %565 = vst [vmem:[#allocation3 + $0x1010] sm:$0xff] %v501
  %566 = vst [vmem:[#allocation3 + $0x1058] sm:$0xff] %v502
  %567 = vst [vmem:[#allocation3 + $0x10a0] sm:$0xff] %v503
  %568 = vst [vmem:[#allocation3 + $0x10e8] sm:$0xff] %v504
  %569 = vst [vmem:[#allocation3 + $0x1130] sm:$0xff] %v505
  %570 = vst [vmem:[#allocation3 + $0x1178] sm:$0xff] %v506
  %571 = vst [vmem:[#allocation3 + $0x11c0] sm:$0xff] %v507
  %v572 = vld [vmem:[#allocation2 + $0x2] sm:$0xff]
  %v573 = vld [vmem:[#allocation2 + $0xa] sm:$0xff]
  %v574 = vld [vmem:[#allocation2 + $0x1a] sm:$0xff]
  %v575 = vld [vmem:[#allocation2 + $0x22] sm:$0xff]
  %v576 = vld [vmem:[#allocation2 + $0x32] sm:$0xff]
  %v577 = vld [vmem:[#allocation2 + $0x3a] sm:$0xff]
  %v578 = vld [vmem:[#allocation2 + $0x4a] sm:$0xff]
  %v579 = vld [vmem:[#allocation2 + $0x52] sm:$0xff]
  %v580 = vld [vmem:[#allocation2 + $0x62] sm:$0xff]
  %v581 = vld [vmem:[#allocation2 + $0x6a] sm:$0xff]
  %v582 = vld [vmem:[#allocation2 + $0x7a] sm:$0xff]
  %v583 = vld [vmem:[#allocation2 + $0x82] sm:$0xff]
  %v584 = vld [vmem:[#allocation2 + $0x92] sm:$0xff]
  %v585 = vld [vmem:[#allocation2 + $0x9a] sm:$0xff]
  %v586 = vld [vmem:[#allocation2 + $0xaa] sm:$0xff]
  %v587 = vld [vmem:[#allocation2 + $0xb2] sm:$0xff]
  %v588 = vld [vmem:[#allocation2 + $0xc2] sm:$0xff]
  %v589 = vld [vmem:[#allocation2 + $0xca] sm:$0xff]
  %v590 = vld [vmem:[#allocation2 + $0xda] sm:$0xff]
  %v591 = vld [vmem:[#allocation2 + $0xe2] sm:$0xff]
  %v592 = vld [vmem:[#allocation2 + $0xf2] sm:$0xff]
  %v593 = vld [vmem:[#allocation2 + $0xfa] sm:$0xff]
  %v594 = vld [vmem:[#allocation2 + $0x10a] sm:$0xff]
  %v595 = vld [vmem:[#allocation2 + $0x112] sm:$0xff]
  %v596 = vld [vmem:[#allocation2 + $0x122] sm:$0xff]
  %v597 = vld [vmem:[#allocation2 + $0x12a] sm:$0xff]
  %v598 = vld [vmem:[#allocation2 + $0x13a] sm:$0xff]
  %v599 = vld [vmem:[#allocation2 + $0x142] sm:$0xff]
  %v600 = vld [vmem:[#allocation2 + $0x152] sm:$0xff]
  %v601 = vld [vmem:[#allocation2 + $0x15a] sm:$0xff]
  %v602 = vld [vmem:[#allocation2 + $0x16a] sm:$0xff]
  %v603 = vld [vmem:[#allocation2 + $0x172] sm:$0xff]
  %v604 = vld [vmem:[#allocation2 + $0x1b2] sm:$0xff]
  %v605 = vld [vmem:[#allocation2 + $0x1ba] sm:$0xff]
  %v606 = vld [vmem:[#allocation2 + $0x1ca] sm:$0xff]
  %v607 = vld [vmem:[#allocation2 + $0x1d2] sm:$0xff]
  %v608 = vld [vmem:[#allocation2 + $0x1e2] sm:$0xff]
  %v609 = vld [vmem:[#allocation2 + $0x1ea] sm:$0xff]
  %v610 = vld [vmem:[#allocation2 + $0x1fa] sm:$0xff]
  %v611 = vld [vmem:[#allocation2 + $0x202] sm:$0xff]
  %v612 = vld [vmem:[#allocation2 + $0x212] sm:$0xff]
  %v613 = vld [vmem:[#allocation2 + $0x21a] sm:$0xff]
  %v614 = vld [vmem:[#allocation2 + $0x22a] sm:$0xff]
  %v615 = vld [vmem:[#allocation2 + $0x232] sm:$0xff]
  %v616 = vld [vmem:[#allocation2 + $0x242] sm:$0xff]
  %v617 = vld [vmem:[#allocation2 + $0x24a] sm:$0xff]
  %v618 = vld [vmem:[#allocation2 + $0x25a] sm:$0xff]
  %v619 = vld [vmem:[#allocation2 + $0x262] sm:$0xff]
  %v620 = vld [vmem:[#allocation2 + $0x272] sm:$0xff]
  %v621 = vld [vmem:[#allocation2 + $0x27a] sm:$0xff]
  %v622 = vld [vmem:[#allocation2 + $0x28a] sm:$0xff]
  %v623 = vld [vmem:[#allocation2 + $0x292] sm:$0xff]
  %v624 = vld [vmem:[#allocation2 + $0x2a2] sm:$0xff]
  %v625 = vld [vmem:[#allocation2 + $0x2aa] sm:$0xff]
  %v626 = vld [vmem:[#allocation2 + $0x2ba] sm:$0xff]
  %v627 = vld [vmem:[#allocation2 + $0x2c2] sm:$0xff]
  %v628 = vld [vmem:[#allocation2 + $0x2d2] sm:$0xff]
  %v629 = vld [vmem:[#allocation2 + $0x2da] sm:$0xff]
  %v630 = vld [vmem:[#allocation2 + $0x2ea] sm:$0xff]
  %v631 = vld [vmem:[#allocation2 + $0x2f2] sm:$0xff]
  %v632 = vld [vmem:[#allocation2 + $0x302] sm:$0xff]
  %v633 = vld [vmem:[#allocation2 + $0x30a] sm:$0xff]
  %v634 = vld [vmem:[#allocation2 + $0x31a] sm:$0xff]
  %v635 = vld [vmem:[#allocation2 + $0x322] sm:$0xff]
  %636 = vst [vmem:[#allocation3 + $0x10] sm:$0xff] %v572
  %637 = vst [vmem:[#allocation3 + $0x58] sm:$0xff] %v573
  %638 = vst [vmem:[#allocation3 + $0xa0] sm:$0xff] %v574
  %639 = vst [vmem:[#allocation3 + $0xe8] sm:$0xff] %v575
  %640 = vst [vmem:[#allocation3 + $0x130] sm:$0xff] %v576
  %641 = vst [vmem:[#allocation3 + $0x178] sm:$0xff] %v577
  %642 = vst [vmem:[#allocation3 + $0x1c0] sm:$0xff] %v578
  %643 = vst [vmem:[#allocation3 + $0x208] sm:$0xff] %v579
  %644 = vst [vmem:[#allocation3 + $0x250] sm:$0xff] %v580
  %645 = vst [vmem:[#allocation3 + $0x298] sm:$0xff] %v581
  %646 = vst [vmem:[#allocation3 + $0x2e0] sm:$0xff] %v582
  %647 = vst [vmem:[#allocation3 + $0x328] sm:$0xff] %v583
  %648 = vst [vmem:[#allocation3 + $0x370] sm:$0xff] %v584
  %649 = vst [vmem:[#allocation3 + $0x3b8] sm:$0xff] %v585
  %650 = vst [vmem:[#allocation3 + $0x400] sm:$0xff] %v586
  %651 = vst [vmem:[#allocation3 + $0x448] sm:$0xff] %v587
  %652 = vst [vmem:[#allocation3 + $0x490] sm:$0xff] %v588
  %653 = vst [vmem:[#allocation3 + $0x4d8] sm:$0xff] %v589
  %654 = vst [vmem:[#allocation3 + $0x520] sm:$0xff] %v590
  %655 = vst [vmem:[#allocation3 + $0x568] sm:$0xff] %v591
  %656 = vst [vmem:[#allocation3 + $0x5b0] sm:$0xff] %v592
  %657 = vst [vmem:[#allocation3 + $0x5f8] sm:$0xff] %v593
  %658 = vst [vmem:[#allocation3 + $0x640] sm:$0xff] %v594
  %659 = vst [vmem:[#allocation3 + $0x688] sm:$0xff] %v595
  %660 = vst [vmem:[#allocation3 + $0x6d0] sm:$0xff] %v596
  %661 = vst [vmem:[#allocation3 + $0x718] sm:$0xff] %v597
  %662 = vst [vmem:[#allocation3 + $0x760] sm:$0xff] %v598
  %663 = vst [vmem:[#allocation3 + $0x7a8] sm:$0xff] %v599
  %664 = vst [vmem:[#allocation3 + $0x7f0] sm:$0xff] %v600
  %665 = vst [vmem:[#allocation3 + $0x838] sm:$0xff] %v601
  %666 = vst [vmem:[#allocation3 + $0x880] sm:$0xff] %v602
  %667 = vst [vmem:[#allocation3 + $0x8c8] sm:$0xff] %v603
  %668 = vst [vmem:[#allocation3 + $0x910] sm:$0xff] %v604
  %669 = vst [vmem:[#allocation3 + $0x958] sm:$0xff] %v605
  %670 = vst [vmem:[#allocation3 + $0x9a0] sm:$0xff] %v606
  %671 = vst [vmem:[#allocation3 + $0x9e8] sm:$0xff] %v607
  %672 = vst [vmem:[#allocation3 + $0xa30] sm:$0xff] %v608
  %673 = vst [vmem:[#allocation3 + $0xa78] sm:$0xff] %v609
  %674 = vst [vmem:[#allocation3 + $0xac0] sm:$0xff] %v610
  %675 = vst [vmem:[#allocation3 + $0xb08] sm:$0xff] %v611
  %676 = vst [vmem:[#allocation3 + $0xb50] sm:$0xff] %v612
  %677 = vst [vmem:[#allocation3 + $0xb98] sm:$0xff] %v613
  %678 = vst [vmem:[#allocation3 + $0xbe0] sm:$0xff] %v614
  %679 = vst [vmem:[#allocation3 + $0xc28] sm:$0xff] %v615
  %680 = vst [vmem:[#allocation3 + $0xc70] sm:$0xff] %v616
  %681 = vst [vmem:[#allocation3 + $0xcb8] sm:$0xff] %v617
  %682 = vst [vmem:[#allocation3 + $0xd00] sm:$0xff] %v618
  %683 = vst [vmem:[#allocation3 + $0xd48] sm:$0xff] %v619
  %684 = vst [vmem:[#allocation3 + $0xd90] sm:$0xff] %v620
  %685 = vst [vmem:[#allocation3 + $0xdd8] sm:$0xff] %v621
  %686 = vst [vmem:[#allocation3 + $0xe20] sm:$0xff] %v622
  %687 = vst [vmem:[#allocation3 + $0xe68] sm:$0xff] %v623
  %688 = vst [vmem:[#allocation3 + $0xeb0] sm:$0xff] %v624
  %689 = vst [vmem:[#allocation3 + $0xef8] sm:$0xff] %v625
  %690 = vst [vmem:[#allocation3 + $0xf40] sm:$0xff] %v626
  %691 = vst [vmem:[#allocation3 + $0xf88] sm:$0xff] %v627
  %692 = vst [vmem:[#allocation3 + $0xfd0] sm:$0xff] %v628
  %693 = vst [vmem:[#allocation3 + $0x1018] sm:$0xff] %v629
  %694 = vst [vmem:[#allocation3 + $0x1060] sm:$0xff] %v630
  %695 = vst [vmem:[#allocation3 + $0x10a8] sm:$0xff] %v631
  %696 = vst [vmem:[#allocation3 + $0x10f0] sm:$0xff] %v632
  %697 = vst [vmem:[#allocation3 + $0x1138] sm:$0xff] %v633
  %698 = vst [vmem:[#allocation3 + $0x1180] sm:$0xff] %v634
  %699 = vst [vmem:[#allocation3 + $0x11c8] sm:$0xff] %v635
  %v700 = vld [vmem:[%s45] sm:$0xff]
  %v701 = vld [vmem:[%s45 + $0x8] sm:$0xff]
  %v702 = vld [vmem:[%s45 + $0x18] sm:$0xff]
  %v703 = vld [vmem:[%s45 + $0x20] sm:$0xff]
  %v704 = vld [vmem:[%s45 + $0x30] sm:$0xff]
  %v705 = vld [vmem:[%s45 + $0x38] sm:$0xff]
  %v706 = vld [vmem:[%s45 + $0x48] sm:$0xff]
  %v707 = vld [vmem:[%s45 + $0x50] sm:$0xff]
  %v708 = vld [vmem:[%s45 + $0x60] sm:$0xff]
  %v709 = vld [vmem:[%s45 + $0x68] sm:$0xff]
  %v710 = vld [vmem:[%s45 + $0x78] sm:$0xff]
  %v711 = vld [vmem:[%s45 + $0x80] sm:$0xff]
  %v712 = vld [vmem:[%s45 + $0x90] sm:$0xff]
  %v713 = vld [vmem:[%s45 + $0x98] sm:$0xff]
  %v714 = vld [vmem:[%s45 + $0xa8] sm:$0xff]
  %v715 = vld [vmem:[%s45 + $0xb0] sm:$0xff]
  %v716 = vld [vmem:[%s45 + $0xc0] sm:$0xff]
  %v717 = vld [vmem:[%s45 + $0xc8] sm:$0xff]
  %v718 = vld [vmem:[%s45 + $0xd8] sm:$0xff]
  %v719 = vld [vmem:[%s45 + $0xe0] sm:$0xff]
  %v720 = vld [vmem:[%s45 + $0xf0] sm:$0xff]
  %v721 = vld [vmem:[%s45 + $0xf8] sm:$0xff]
  %v722 = vld [vmem:[%s45 + $0x108] sm:$0xff]
  %v723 = vld [vmem:[%s45 + $0x110] sm:$0xff]
  %v724 = vld [vmem:[%s45 + $0x120] sm:$0xff]
  %v725 = vld [vmem:[%s45 + $0x128] sm:$0xff]
  %v726 = vld [vmem:[%s45 + $0x138] sm:$0xff]
  %v727 = vld [vmem:[%s45 + $0x140] sm:$0xff]
  %v728 = vld [vmem:[%s45 + $0x150] sm:$0xff]
  %v729 = vld [vmem:[%s45 + $0x158] sm:$0xff]
  %v730 = vld [vmem:[%s45 + $0x168] sm:$0xff]
  %v731 = vld [vmem:[%s45 + $0x170] sm:$0xff]
  %v732 = vld [vmem:[%s45 + $0x1b0] sm:$0xff]
  %v733 = vld [vmem:[%s45 + $0x1b8] sm:$0xff]
  %v734 = vld [vmem:[%s45 + $0x1c8] sm:$0xff]
  %v735 = vld [vmem:[%s45 + $0x1d0] sm:$0xff]
  %v736 = vld [vmem:[%s45 + $0x1e0] sm:$0xff]
  %v737 = vld [vmem:[%s45 + $0x1e8] sm:$0xff]
  %v738 = vld [vmem:[%s45 + $0x1f8] sm:$0xff]
  %v739 = vld [vmem:[%s45 + $0x200] sm:$0xff]
  %v740 = vld [vmem:[%s45 + $0x210] sm:$0xff]
  %v741 = vld [vmem:[%s45 + $0x218] sm:$0xff]
  %v742 = vld [vmem:[%s45 + $0x228] sm:$0xff]
  %v743 = vld [vmem:[%s45 + $0x230] sm:$0xff]
  %v744 = vld [vmem:[%s45 + $0x240] sm:$0xff]
  %v745 = vld [vmem:[%s45 + $0x248] sm:$0xff]
  %v746 = vld [vmem:[%s45 + $0x258] sm:$0xff]
  %v747 = vld [vmem:[%s45 + $0x260] sm:$0xff]
  %v748 = vld [vmem:[%s45 + $0x270] sm:$0xff]
  %v749 = vld [vmem:[%s45 + $0x278] sm:$0xff]
  %v750 = vld [vmem:[%s45 + $0x288] sm:$0xff]
  %v751 = vld [vmem:[%s45 + $0x290] sm:$0xff]
  %v752 = vld [vmem:[%s45 + $0x2a0] sm:$0xff]
  %v753 = vld [vmem:[%s45 + $0x2a8] sm:$0xff]
  %v754 = vld [vmem:[%s45 + $0x2b8] sm:$0xff]
  %v755 = vld [vmem:[%s45 + $0x2c0] sm:$0xff]
  %v756 = vld [vmem:[%s45 + $0x2d0] sm:$0xff]
  %v757 = vld [vmem:[%s45 + $0x2d8] sm:$0xff]
  %v758 = vld [vmem:[%s45 + $0x2e8] sm:$0xff]
  %v759 = vld [vmem:[%s45 + $0x2f0] sm:$0xff]
  %v760 = vld [vmem:[%s45 + $0x300] sm:$0xff]
  %v761 = vld [vmem:[%s45 + $0x308] sm:$0xff]
  %v762 = vld [vmem:[%s45 + $0x318] sm:$0xff]
  %v763 = vld [vmem:[%s45 + $0x320] sm:$0xff]
  %764 = vst [vmem:[#allocation3 + $0x18] sm:$0xff] %v700
  %765 = vst [vmem:[#allocation3 + $0x60] sm:$0xff] %v701
  %766 = vst [vmem:[#allocation3 + $0xa8] sm:$0xff] %v702
  %767 = vst [vmem:[#allocation3 + $0xf0] sm:$0xff] %v703
  %768 = vst [vmem:[#allocation3 + $0x138] sm:$0xff] %v704
  %769 = vst [vmem:[#allocation3 + $0x180] sm:$0xff] %v705
  %770 = vst [vmem:[#allocation3 + $0x1c8] sm:$0xff] %v706
  %771 = vst [vmem:[#allocation3 + $0x210] sm:$0xff] %v707
  %772 = vst [vmem:[#allocation3 + $0x258] sm:$0xff] %v708
  %773 = vst [vmem:[#allocation3 + $0x2a0] sm:$0xff] %v709
  %774 = vst [vmem:[#allocation3 + $0x2e8] sm:$0xff] %v710
  %775 = vst [vmem:[#allocation3 + $0x330] sm:$0xff] %v711
  %776 = vst [vmem:[#allocation3 + $0x378] sm:$0xff] %v712
  %777 = vst [vmem:[#allocation3 + $0x3c0] sm:$0xff] %v713
  %778 = vst [vmem:[#allocation3 + $0x408] sm:$0xff] %v714
  %779 = vst [vmem:[#allocation3 + $0x450] sm:$0xff] %v715
  %780 = vst [vmem:[#allocation3 + $0x498] sm:$0xff] %v716
  %781 = vst [vmem:[#allocation3 + $0x4e0] sm:$0xff] %v717
  %782 = vst [vmem:[#allocation3 + $0x528] sm:$0xff] %v718
  %783 = vst [vmem:[#allocation3 + $0x570] sm:$0xff] %v719
  %784 = vst [vmem:[#allocation3 + $0x5b8] sm:$0xff] %v720
  %785 = vst [vmem:[#allocation3 + $0x600] sm:$0xff] %v721
  %786 = vst [vmem:[#allocation3 + $0x648] sm:$0xff] %v722
  %787 = vst [vmem:[#allocation3 + $0x690] sm:$0xff] %v723
  %788 = vst [vmem:[#allocation3 + $0x6d8] sm:$0xff] %v724
  %789 = vst [vmem:[#allocation3 + $0x720] sm:$0xff] %v725
  %790 = vst [vmem:[#allocation3 + $0x768] sm:$0xff] %v726
  %791 = vst [vmem:[#allocation3 + $0x7b0] sm:$0xff] %v727
  %792 = vst [vmem:[#allocation3 + $0x7f8] sm:$0xff] %v728
  %793 = vst [vmem:[#allocation3 + $0x840] sm:$0xff] %v729
  %794 = vst [vmem:[#allocation3 + $0x888] sm:$0xff] %v730
  %795 = vst [vmem:[#allocation3 + $0x8d0] sm:$0xff] %v731
  %796 = vst [vmem:[#allocation3 + $0x918] sm:$0xff] %v732
  %797 = vst [vmem:[#allocation3 + $0x960] sm:$0xff] %v733
  %798 = vst [vmem:[#allocation3 + $0x9a8] sm:$0xff] %v734
  %799 = vst [vmem:[#allocation3 + $0x9f0] sm:$0xff] %v735
  %800 = vst [vmem:[#allocation3 + $0xa38] sm:$0xff] %v736
  %801 = vst [vmem:[#allocation3 + $0xa80] sm:$0xff] %v737
  %802 = vst [vmem:[#allocation3 + $0xac8] sm:$0xff] %v738
  %803 = vst [vmem:[#allocation3 + $0xb10] sm:$0xff] %v739
  %804 = vst [vmem:[#allocation3 + $0xb58] sm:$0xff] %v740
  %805 = vst [vmem:[#allocation3 + $0xba0] sm:$0xff] %v741
  %806 = vst [vmem:[#allocation3 + $0xbe8] sm:$0xff] %v742
  %807 = vst [vmem:[#allocation3 + $0xc30] sm:$0xff] %v743
  %808 = vst [vmem:[#allocation3 + $0xc78] sm:$0xff] %v744
  %809 = vst [vmem:[#allocation3 + $0xcc0] sm:$0xff] %v745
  %810 = vst [vmem:[#allocation3 + $0xd08] sm:$0xff] %v746
  %811 = vst [vmem:[#allocation3 + $0xd50] sm:$0xff] %v747
  %812 = vst [vmem:[#allocation3 + $0xd98] sm:$0xff] %v748
  %813 = vst [vmem:[#allocation3 + $0xde0] sm:$0xff] %v749
  %814 = vst [vmem:[#allocation3 + $0xe28] sm:$0xff] %v750
  %815 = vst [vmem:[#allocation3 + $0xe70] sm:$0xff] %v751
  %816 = vst [vmem:[#allocation3 + $0xeb8] sm:$0xff] %v752
  %817 = vst [vmem:[#allocation3 + $0xf00] sm:$0xff] %v753
  %818 = vst [vmem:[#allocation3 + $0xf48] sm:$0xff] %v754
  %819 = vst [vmem:[#allocation3 + $0xf90] sm:$0xff] %v755
  %820 = vst [vmem:[#allocation3 + $0xfd8] sm:$0xff] %v756
  %821 = vst [vmem:[#allocation3 + $0x1020] sm:$0xff] %v757
  %822 = vst [vmem:[#allocation3 + $0x1068] sm:$0xff] %v758
  %823 = vst [vmem:[#allocation3 + $0x10b0] sm:$0xff] %v759
  %824 = vst [vmem:[#allocation3 + $0x10f8] sm:$0xff] %v760
  %825 = vst [vmem:[#allocation3 + $0x1140] sm:$0xff] %v761
  %826 = vst [vmem:[#allocation3 + $0x1188] sm:$0xff] %v762
  %827 = vst [vmem:[#allocation3 + $0x11d0] sm:$0xff] %v763
  %v828 = vld [vmem:[%s45 + $0x1] sm:$0xff]
  %v829 = vld [vmem:[%s45 + $0x9] sm:$0xff]
  %v830 = vld [vmem:[%s45 + $0x19] sm:$0xff]
  %v831 = vld [vmem:[%s45 + $0x21] sm:$0xff]
  %v832 = vld [vmem:[%s45 + $0x31] sm:$0xff]
  %v833 = vld [vmem:[%s45 + $0x39] sm:$0xff]
  %v834 = vld [vmem:[%s45 + $0x49] sm:$0xff]
  %v835 = vld [vmem:[%s45 + $0x51] sm:$0xff]
  %v836 = vld [vmem:[%s45 + $0x61] sm:$0xff]
  %v837 = vld [vmem:[%s45 + $0x69] sm:$0xff]
  %v838 = vld [vmem:[%s45 + $0x79] sm:$0xff]
  %v839 = vld [vmem:[%s45 + $0x81] sm:$0xff]
  %v840 = vld [vmem:[%s45 + $0x91] sm:$0xff]
  %v841 = vld [vmem:[%s45 + $0x99] sm:$0xff]
  %v842 = vld [vmem:[%s45 + $0xa9] sm:$0xff]
  %v843 = vld [vmem:[%s45 + $0xb1] sm:$0xff]
  %v844 = vld [vmem:[%s45 + $0xc1] sm:$0xff]
  %v845 = vld [vmem:[%s45 + $0xc9] sm:$0xff]
  %v846 = vld [vmem:[%s45 + $0xd9] sm:$0xff]
  %v847 = vld [vmem:[%s45 + $0xe1] sm:$0xff]
  %v848 = vld [vmem:[%s45 + $0xf1] sm:$0xff]
  %v849 = vld [vmem:[%s45 + $0xf9] sm:$0xff]
  %v850 = vld [vmem:[%s45 + $0x109] sm:$0xff]
  %v851 = vld [vmem:[%s45 + $0x111] sm:$0xff]
  %v852 = vld [vmem:[%s45 + $0x121] sm:$0xff]
  %v853 = vld [vmem:[%s45 + $0x129] sm:$0xff]
  %v854 = vld [vmem:[%s45 + $0x139] sm:$0xff]
  %v855 = vld [vmem:[%s45 + $0x141] sm:$0xff]
  %v856 = vld [vmem:[%s45 + $0x151] sm:$0xff]
  %v857 = vld [vmem:[%s45 + $0x159] sm:$0xff]
  %v858 = vld [vmem:[%s45 + $0x169] sm:$0xff]
  %v859 = vld [vmem:[%s45 + $0x171] sm:$0xff]
  %v860 = vld [vmem:[%s45 + $0x1b1] sm:$0xff]
  %v861 = vld [vmem:[%s45 + $0x1b9] sm:$0xff]
  %v862 = vld [vmem:[%s45 + $0x1c9] sm:$0xff]
  %v863 = vld [vmem:[%s45 + $0x1d1] sm:$0xff]
  %v864 = vld [vmem:[%s45 + $0x1e1] sm:$0xff]
  %v865 = vld [vmem:[%s45 + $0x1e9] sm:$0xff]
  %v866 = vld [vmem:[%s45 + $0x1f9] sm:$0xff]
  %v867 = vld [vmem:[%s45 + $0x201] sm:$0xff]
  %v868 = vld [vmem:[%s45 + $0x211] sm:$0xff]
  %v869 = vld [vmem:[%s45 + $0x219] sm:$0xff]
  %v870 = vld [vmem:[%s45 + $0x229] sm:$0xff]
  %v871 = vld [vmem:[%s45 + $0x231] sm:$0xff]
  %v872 = vld [vmem:[%s45 + $0x241] sm:$0xff]
  %v873 = vld [vmem:[%s45 + $0x249] sm:$0xff]
  %v874 = vld [vmem:[%s45 + $0x259] sm:$0xff]
  %v875 = vld [vmem:[%s45 + $0x261] sm:$0xff]
  %v876 = vld [vmem:[%s45 + $0x271] sm:$0xff]
  %v877 = vld [vmem:[%s45 + $0x279] sm:$0xff]
  %v878 = vld [vmem:[%s45 + $0x289] sm:$0xff]
  %v879 = vld [vmem:[%s45 + $0x291] sm:$0xff]
  %v880 = vld [vmem:[%s45 + $0x2a1] sm:$0xff]
  %v881 = vld [vmem:[%s45 + $0x2a9] sm:$0xff]
  %v882 = vld [vmem:[%s45 + $0x2b9] sm:$0xff]
  %v883 = vld [vmem:[%s45 + $0x2c1] sm:$0xff]
  %v884 = vld [vmem:[%s45 + $0x2d1] sm:$0xff]
  %v885 = vld [vmem:[%s45 + $0x2d9] sm:$0xff]
  %v886 = vld [vmem:[%s45 + $0x2e9] sm:$0xff]
  %v887 = vld [vmem:[%s45 + $0x2f1] sm:$0xff]
  %v888 = vld [vmem:[%s45 + $0x301] sm:$0xff]
  %v889 = vld [vmem:[%s45 + $0x309] sm:$0xff]
  %v890 = vld [vmem:[%s45 + $0x319] sm:$0xff]
  %v891 = vld [vmem:[%s45 + $0x321] sm:$0xff]
  %892 = vst [vmem:[#allocation3 + $0x20] sm:$0xff] %v828
  %893 = vst [vmem:[#allocation3 + $0x68] sm:$0xff] %v829
  %894 = vst [vmem:[#allocation3 + $0xb0] sm:$0xff] %v830
  %895 = vst [vmem:[#allocation3 + $0xf8] sm:$0xff] %v831
  %896 = vst [vmem:[#allocation3 + $0x140] sm:$0xff] %v832
  %897 = vst [vmem:[#allocation3 + $0x188] sm:$0xff] %v833
  %898 = vst [vmem:[#allocation3 + $0x1d0] sm:$0xff] %v834
  %899 = vst [vmem:[#allocation3 + $0x218] sm:$0xff] %v835
  %900 = vst [vmem:[#allocation3 + $0x260] sm:$0xff] %v836
  %901 = vst [vmem:[#allocation3 + $0x2a8] sm:$0xff] %v837
  %902 = vst [vmem:[#allocation3 + $0x2f0] sm:$0xff] %v838
  %903 = vst [vmem:[#allocation3 + $0x338] sm:$0xff] %v839
  %904 = vst [vmem:[#allocation3 + $0x380] sm:$0xff] %v840
  %905 = vst [vmem:[#allocation3 + $0x3c8] sm:$0xff] %v841
  %906 = vst [vmem:[#allocation3 + $0x410] sm:$0xff] %v842
  %907 = vst [vmem:[#allocation3 + $0x458] sm:$0xff] %v843
  %908 = vst [vmem:[#allocation3 + $0x4a0] sm:$0xff] %v844
  %909 = vst [vmem:[#allocation3 + $0x4e8] sm:$0xff] %v845
  %910 = vst [vmem:[#allocation3 + $0x530] sm:$0xff] %v846
  %911 = vst [vmem:[#allocation3 + $0x578] sm:$0xff] %v847
  %912 = vst [vmem:[#allocation3 + $0x5c0] sm:$0xff] %v848
  %913 = vst [vmem:[#allocation3 + $0x608] sm:$0xff] %v849
  %914 = vst [vmem:[#allocation3 + $0x650] sm:$0xff] %v850
  %915 = vst [vmem:[#allocation3 + $0x698] sm:$0xff] %v851
  %916 = vst [vmem:[#allocation3 + $0x6e0] sm:$0xff] %v852
  %917 = vst [vmem:[#allocation3 + $0x728] sm:$0xff] %v853
  %918 = vst [vmem:[#allocation3 + $0x770] sm:$0xff] %v854
  %919 = vst [vmem:[#allocation3 + $0x7b8] sm:$0xff] %v855
  %920 = vst [vmem:[#allocation3 + $0x800] sm:$0xff] %v856
  %921 = vst [vmem:[#allocation3 + $0x848] sm:$0xff] %v857
  %922 = vst [vmem:[#allocation3 + $0x890] sm:$0xff] %v858
  %923 = vst [vmem:[#allocation3 + $0x8d8] sm:$0xff] %v859
  %924 = vst [vmem:[#allocation3 + $0x920] sm:$0xff] %v860
  %925 = vst [vmem:[#allocation3 + $0x968] sm:$0xff] %v861
  %926 = vst [vmem:[#allocation3 + $0x9b0] sm:$0xff] %v862
  %927 = vst [vmem:[#allocation3 + $0x9f8] sm:$0xff] %v863
  %928 = vst [vmem:[#allocation3 + $0xa40] sm:$0xff] %v864
  %929 = vst [vmem:[#allocation3 + $0xa88] sm:$0xff] %v865
  %930 = vst [vmem:[#allocation3 + $0xad0] sm:$0xff] %v866
  %931 = vst [vmem:[#allocation3 + $0xb18] sm:$0xff] %v867
  %932 = vst [vmem:[#allocation3 + $0xb60] sm:$0xff] %v868
  %933 = vst [vmem:[#allocation3 + $0xba8] sm:$0xff] %v869
  %934 = vst [vmem:[#allocation3 + $0xbf0] sm:$0xff] %v870
  %935 = vst [vmem:[#allocation3 + $0xc38] sm:$0xff] %v871
  %936 = vst [vmem:[#allocation3 + $0xc80] sm:$0xff] %v872
  %937 = vst [vmem:[#allocation3 + $0xcc8] sm:$0xff] %v873
  %938 = vst [vmem:[#allocation3 + $0xd10] sm:$0xff] %v874
  %939 = vst [vmem:[#allocation3 + $0xd58] sm:$0xff] %v875
  %940 = vst [vmem:[#allocation3 + $0xda0] sm:$0xff] %v876
  %941 = vst [vmem:[#allocation3 + $0xde8] sm:$0xff] %v877
  %942 = vst [vmem:[#allocation3 + $0xe30] sm:$0xff] %v878
  %943 = vst [vmem:[#allocation3 + $0xe78] sm:$0xff] %v879
  %944 = vst [vmem:[#allocation3 + $0xec0] sm:$0xff] %v880
  %945 = vst [vmem:[#allocation3 + $0xf08] sm:$0xff] %v881
  %946 = vst [vmem:[#allocation3 + $0xf50] sm:$0xff] %v882
  %947 = vst [vmem:[#allocation3 + $0xf98] sm:$0xff] %v883
  %948 = vst [vmem:[#allocation3 + $0xfe0] sm:$0xff] %v884
  %949 = vst [vmem:[#allocation3 + $0x1028] sm:$0xff] %v885
  %950 = vst [vmem:[#allocation3 + $0x1070] sm:$0xff] %v886
  %951 = vst [vmem:[#allocation3 + $0x10b8] sm:$0xff] %v887
  %952 = vst [vmem:[#allocation3 + $0x1100] sm:$0xff] %v888
  %953 = vst [vmem:[#allocation3 + $0x1148] sm:$0xff] %v889
  %954 = vst [vmem:[#allocation3 + $0x1190] sm:$0xff] %v890
  %955 = vst [vmem:[#allocation3 + $0x11d8] sm:$0xff] %v891
  %v956 = vld [vmem:[%s45 + $0x2] sm:$0xff]
  %v957 = vld [vmem:[%s45 + $0xa] sm:$0xff]
  %v958 = vld [vmem:[%s45 + $0x1a] sm:$0xff]
  %v959 = vld [vmem:[%s45 + $0x22] sm:$0xff]
  %v960 = vld [vmem:[%s45 + $0x32] sm:$0xff]
  %v961 = vld [vmem:[%s45 + $0x3a] sm:$0xff]
  %v962 = vld [vmem:[%s45 + $0x4a] sm:$0xff]
  %v963 = vld [vmem:[%s45 + $0x52] sm:$0xff]
  %v964 = vld [vmem:[%s45 + $0x62] sm:$0xff]
  %v965 = vld [vmem:[%s45 + $0x6a] sm:$0xff]
  %v966 = vld [vmem:[%s45 + $0x7a] sm:$0xff]
  %v967 = vld [vmem:[%s45 + $0x82] sm:$0xff]
  %v968 = vld [vmem:[%s45 + $0x92] sm:$0xff]
  %v969 = vld [vmem:[%s45 + $0x9a] sm:$0xff]
  %v970 = vld [vmem:[%s45 + $0xaa] sm:$0xff]
  %v971 = vld [vmem:[%s45 + $0xb2] sm:$0xff]
  %v972 = vld [vmem:[%s45 + $0xc2] sm:$0xff]
  %v973 = vld [vmem:[%s45 + $0xca] sm:$0xff]
  %v974 = vld [vmem:[%s45 + $0xda] sm:$0xff]
  %v975 = vld [vmem:[%s45 + $0xe2] sm:$0xff]
  %v976 = vld [vmem:[%s45 + $0xf2] sm:$0xff]
  %v977 = vld [vmem:[%s45 + $0xfa] sm:$0xff]
  %v978 = vld [vmem:[%s45 + $0x10a] sm:$0xff]
  %v979 = vld [vmem:[%s45 + $0x112] sm:$0xff]
  %v980 = vld [vmem:[%s45 + $0x122] sm:$0xff]
  %v981 = vld [vmem:[%s45 + $0x12a] sm:$0xff]
  %v982 = vld [vmem:[%s45 + $0x13a] sm:$0xff]
  %v983 = vld [vmem:[%s45 + $0x142] sm:$0xff]
  %v984 = vld [vmem:[%s45 + $0x152] sm:$0xff]
  %v985 = vld [vmem:[%s45 + $0x15a] sm:$0xff]
  %v986 = vld [vmem:[%s45 + $0x16a] sm:$0xff]
  %v987 = vld [vmem:[%s45 + $0x172] sm:$0xff]
  %v988 = vld [vmem:[%s45 + $0x1b2] sm:$0xff]
  %v989 = vld [vmem:[%s45 + $0x1ba] sm:$0xff]
  %v990 = vld [vmem:[%s45 + $0x1ca] sm:$0xff]
  %v991 = vld [vmem:[%s45 + $0x1d2] sm:$0xff]
  %v992 = vld [vmem:[%s45 + $0x1e2] sm:$0xff]
  %v993 = vld [vmem:[%s45 + $0x1ea] sm:$0xff]
  %v994 = vld [vmem:[%s45 + $0x1fa] sm:$0xff]
  %v995 = vld [vmem:[%s45 + $0x202] sm:$0xff]
  %v996 = vld [vmem:[%s45 + $0x212] sm:$0xff]
  %v997 = vld [vmem:[%s45 + $0x21a] sm:$0xff]
  %v998 = vld [vmem:[%s45 + $0x22a] sm:$0xff]
  %v999 = vld [vmem:[%s45 + $0x232] sm:$0xff]
  %v1000 = vld [vmem:[%s45 + $0x242] sm:$0xff]
  %v1001 = vld [vmem:[%s45 + $0x24a] sm:$0xff]
  %v1002 = vld [vmem:[%s45 + $0x25a] sm:$0xff]
  %v1003 = vld [vmem:[%s45 + $0x262] sm:$0xff]
  %v1004 = vld [vmem:[%s45 + $0x272] sm:$0xff]
  %v1005 = vld [vmem:[%s45 + $0x27a] sm:$0xff]
  %v1006 = vld [vmem:[%s45 + $0x28a] sm:$0xff]
  %v1007 = vld [vmem:[%s45 + $0x292] sm:$0xff]
  %v1008 = vld [vmem:[%s45 + $0x2a2] sm:$0xff]
  %v1009 = vld [vmem:[%s45 + $0x2aa] sm:$0xff]
  %v1010 = vld [vmem:[%s45 + $0x2ba] sm:$0xff]
  %v1011 = vld [vmem:[%s45 + $0x2c2] sm:$0xff]
  %v1012 = vld [vmem:[%s45 + $0x2d2] sm:$0xff]
  %v1013 = vld [vmem:[%s45 + $0x2da] sm:$0xff]
  %v1014 = vld [vmem:[%s45 + $0x2ea] sm:$0xff]
  %v1015 = vld [vmem:[%s45 + $0x2f2] sm:$0xff]
  %v1016 = vld [vmem:[%s45 + $0x302] sm:$0xff]
  %v1017 = vld [vmem:[%s45 + $0x30a] sm:$0xff]
  %v1018 = vld [vmem:[%s45 + $0x31a] sm:$0xff]
  %v1019 = vld [vmem:[%s45 + $0x322] sm:$0xff]
  %1020 = vst [vmem:[#allocation3 + $0x28] sm:$0xff] %v956
  %1021 = vst [vmem:[#allocation3 + $0x70] sm:$0xff] %v957
  %1022 = vst [vmem:[#allocation3 + $0xb8] sm:$0xff] %v958
  %1023 = vst [vmem:[#allocation3 + $0x100] sm:$0xff] %v959
  %1024 = vst [vmem:[#allocation3 + $0x148] sm:$0xff] %v960
  %1025 = vst [vmem:[#allocation3 + $0x190] sm:$0xff] %v961
  %1026 = vst [vmem:[#allocation3 + $0x1d8] sm:$0xff] %v962
  %1027 = vst [vmem:[#allocation3 + $0x220] sm:$0xff] %v963
  %1028 = vst [vmem:[#allocation3 + $0x268] sm:$0xff] %v964
  %1029 = vst [vmem:[#allocation3 + $0x2b0] sm:$0xff] %v965
  %1030 = vst [vmem:[#allocation3 + $0x2f8] sm:$0xff] %v966
  %1031 = vst [vmem:[#allocation3 + $0x340] sm:$0xff] %v967
  %1032 = vst [vmem:[#allocation3 + $0x388] sm:$0xff] %v968
  %1033 = vst [vmem:[#allocation3 + $0x3d0] sm:$0xff] %v969
  %1034 = vst [vmem:[#allocation3 + $0x418] sm:$0xff] %v970
  %1035 = vst [vmem:[#allocation3 + $0x460] sm:$0xff] %v971
  %1036 = vst [vmem:[#allocation3 + $0x4a8] sm:$0xff] %v972
  %1037 = vst [vmem:[#allocation3 + $0x4f0] sm:$0xff] %v973
  %1038 = vst [vmem:[#allocation3 + $0x538] sm:$0xff] %v974
  %1039 = vst [vmem:[#allocation3 + $0x580] sm:$0xff] %v975
  %1040 = vst [vmem:[#allocation3 + $0x5c8] sm:$0xff] %v976
  %1041 = vst [vmem:[#allocation3 + $0x610] sm:$0xff] %v977
  %1042 = vst [vmem:[#allocation3 + $0x658] sm:$0xff] %v978
  %1043 = vst [vmem:[#allocation3 + $0x6a0] sm:$0xff] %v979
  %1044 = vst [vmem:[#allocation3 + $0x6e8] sm:$0xff] %v980
  %1045 = vst [vmem:[#allocation3 + $0x730] sm:$0xff] %v981
  %1046 = vst [vmem:[#allocation3 + $0x778] sm:$0xff] %v982
  %1047 = vst [vmem:[#allocation3 + $0x7c0] sm:$0xff] %v983
  %1048 = vst [vmem:[#allocation3 + $0x808] sm:$0xff] %v984
  %1049 = vst [vmem:[#allocation3 + $0x850] sm:$0xff] %v985
  %1050 = vst [vmem:[#allocation3 + $0x898] sm:$0xff] %v986
  %1051 = vst [vmem:[#allocation3 + $0x8e0] sm:$0xff] %v987
  %1052 = vst [vmem:[#allocation3 + $0x928] sm:$0xff] %v988
  %1053 = vst [vmem:[#allocation3 + $0x970] sm:$0xff] %v989
  %1054 = vst [vmem:[#allocation3 + $0x9b8] sm:$0xff] %v990
  %1055 = vst [vmem:[#allocation3 + $0xa00] sm:$0xff] %v991
  %1056 = vst [vmem:[#allocation3 + $0xa48] sm:$0xff] %v992
  %1057 = vst [vmem:[#allocation3 + $0xa90] sm:$0xff] %v993
  %1058 = vst [vmem:[#allocation3 + $0xad8] sm:$0xff] %v994
  %1059 = vst [vmem:[#allocation3 + $0xb20] sm:$0xff] %v995
  %1060 = vst [vmem:[#allocation3 + $0xb68] sm:$0xff] %v996
  %1061 = vst [vmem:[#allocation3 + $0xbb0] sm:$0xff] %v997
  %1062 = vst [vmem:[#allocation3 + $0xbf8] sm:$0xff] %v998
  %1063 = vst [vmem:[#allocation3 + $0xc40] sm:$0xff] %v999
  %1064 = vst [vmem:[#allocation3 + $0xc88] sm:$0xff] %v1000
  %1065 = vst [vmem:[#allocation3 + $0xcd0] sm:$0xff] %v1001
  %1066 = vst [vmem:[#allocation3 + $0xd18] sm:$0xff] %v1002
  %1067 = vst [vmem:[#allocation3 + $0xd60] sm:$0xff] %v1003
  %1068 = vst [vmem:[#allocation3 + $0xda8] sm:$0xff] %v1004
  %1069 = vst [vmem:[#allocation3 + $0xdf0] sm:$0xff] %v1005
  %1070 = vst [vmem:[#allocation3 + $0xe38] sm:$0xff] %v1006
  %1071 = vst [vmem:[#allocation3 + $0xe80] sm:$0xff] %v1007
  %1072 = vst [vmem:[#allocation3 + $0xec8] sm:$0xff] %v1008
  %1073 = vst [vmem:[#allocation3 + $0xf10] sm:$0xff] %v1009
  %1074 = vst [vmem:[#allocation3 + $0xf58] sm:$0xff] %v1010
  %1075 = vst [vmem:[#allocation3 + $0xfa0] sm:$0xff] %v1011
  %1076 = vst [vmem:[#allocation3 + $0xfe8] sm:$0xff] %v1012
  %1077 = vst [vmem:[#allocation3 + $0x1030] sm:$0xff] %v1013
  %1078 = vst [vmem:[#allocation3 + $0x1078] sm:$0xff] %v1014
  %1079 = vst [vmem:[#allocation3 + $0x10c0] sm:$0xff] %v1015
  %1080 = vst [vmem:[#allocation3 + $0x1108] sm:$0xff] %v1016
  %1081 = vst [vmem:[#allocation3 + $0x1150] sm:$0xff] %v1017
  %1082 = vst [vmem:[#allocation3 + $0x1198] sm:$0xff] %v1018
  %1083 = vst [vmem:[#allocation3 + $0x11e0] sm:$0xff] %v1019
  %s1084 = scalar_lea.vmem [#allocation2], 48
  %v1085 = vld [vmem:[%s1084] sm:$0xff]
  %v1086 = vld [vmem:[%s1084 + $0x8] sm:$0xff]
  %v1087 = vld [vmem:[%s1084 + $0x18] sm:$0xff]
  %v1088 = vld [vmem:[%s1084 + $0x20] sm:$0xff]
  %v1089 = vld [vmem:[%s1084 + $0x30] sm:$0xff]
  %v1090 = vld [vmem:[%s1084 + $0x38] sm:$0xff]
  %v1091 = vld [vmem:[%s1084 + $0x48] sm:$0xff]
  %v1092 = vld [vmem:[%s1084 + $0x50] sm:$0xff]
  %v1093 = vld [vmem:[%s1084 + $0x60] sm:$0xff]
  %v1094 = vld [vmem:[%s1084 + $0x68] sm:$0xff]
  %v1095 = vld [vmem:[%s1084 + $0x78] sm:$0xff]
  %v1096 = vld [vmem:[%s1084 + $0x80] sm:$0xff]
  %v1097 = vld [vmem:[%s1084 + $0x90] sm:$0xff]
  %v1098 = vld [vmem:[%s1084 + $0x98] sm:$0xff]
  %v1099 = vld [vmem:[%s1084 + $0xa8] sm:$0xff]
  %v1100 = vld [vmem:[%s1084 + $0xb0] sm:$0xff]
  %v1101 = vld [vmem:[%s1084 + $0xc0] sm:$0xff]
  %v1102 = vld [vmem:[%s1084 + $0xc8] sm:$0xff]
  %v1103 = vld [vmem:[%s1084 + $0xd8] sm:$0xff]
  %v1104 = vld [vmem:[%s1084 + $0xe0] sm:$0xff]
  %v1105 = vld [vmem:[%s1084 + $0xf0] sm:$0xff]
  %v1106 = vld [vmem:[%s1084 + $0xf8] sm:$0xff]
  %v1107 = vld [vmem:[%s1084 + $0x108] sm:$0xff]
  %v1108 = vld [vmem:[%s1084 + $0x110] sm:$0xff]
  %v1109 = vld [vmem:[%s1084 + $0x120] sm:$0xff]
  %v1110 = vld [vmem:[%s1084 + $0x128] sm:$0xff]
  %v1111 = vld [vmem:[%s1084 + $0x138] sm:$0xff]
  %v1112 = vld [vmem:[%s1084 + $0x140] sm:$0xff]
  %v1113 = vld [vmem:[%s1084 + $0x150] sm:$0xff]
  %v1114 = vld [vmem:[%s1084 + $0x158] sm:$0xff]
  %v1115 = vld [vmem:[%s1084 + $0x168] sm:$0xff]
  %v1116 = vld [vmem:[%s1084 + $0x170] sm:$0xff]
  %v1117 = vld [vmem:[%s1084 + $0x1b0] sm:$0xff]
  %v1118 = vld [vmem:[%s1084 + $0x1b8] sm:$0xff]
  %v1119 = vld [vmem:[%s1084 + $0x1c8] sm:$0xff]
  %v1120 = vld [vmem:[%s1084 + $0x1d0] sm:$0xff]
  %v1121 = vld [vmem:[%s1084 + $0x1e0] sm:$0xff]
  %v1122 = vld [vmem:[%s1084 + $0x1e8] sm:$0xff]
  %v1123 = vld [vmem:[%s1084 + $0x1f8] sm:$0xff]
  %v1124 = vld [vmem:[%s1084 + $0x200] sm:$0xff]
  %v1125 = vld [vmem:[%s1084 + $0x210] sm:$0xff]
  %v1126 = vld [vmem:[%s1084 + $0x218] sm:$0xff]
  %v1127 = vld [vmem:[%s1084 + $0x228] sm:$0xff]
  %v1128 = vld [vmem:[%s1084 + $0x230] sm:$0xff]
  %v1129 = vld [vmem:[%s1084 + $0x240] sm:$0xff]
  %v1130 = vld [vmem:[%s1084 + $0x248] sm:$0xff]
  %v1131 = vld [vmem:[%s1084 + $0x258] sm:$0xff]
  %v1132 = vld [vmem:[%s1084 + $0x260] sm:$0xff]
  %v1133 = vld [vmem:[%s1084 + $0x270] sm:$0xff]
  %v1134 = vld [vmem:[%s1084 + $0x278] sm:$0xff]
  %v1135 = vld [vmem:[%s1084 + $0x288] sm:$0xff]
  %v1136 = vld [vmem:[%s1084 + $0x290] sm:$0xff]
  %v1137 = vld [vmem:[%s1084 + $0x2a0] sm:$0xff]
  %v1138 = vld [vmem:[%s1084 + $0x2a8] sm:$0xff]
  %v1139 = vld [vmem:[%s1084 + $0x2b8] sm:$0xff]
  %v1140 = vld [vmem:[%s1084 + $0x2c0] sm:$0xff]
  %v1141 = vld [vmem:[%s1084 + $0x2d0] sm:$0xff]
  %v1142 = vld [vmem:[%s1084 + $0x2d8] sm:$0xff]
  %v1143 = vld [vmem:[%s1084 + $0x2e8] sm:$0xff]
  %v1144 = vld [vmem:[%s1084 + $0x2f0] sm:$0xff]
  %v1145 = vld [vmem:[%s1084 + $0x300] sm:$0xff]
  %v1146 = vld [vmem:[%s1084 + $0x308] sm:$0xff]
  %v1147 = vld [vmem:[%s1084 + $0x318] sm:$0xff]
  %v1148 = vld [vmem:[%s1084 + $0x320] sm:$0xff]
  %1149 = vst [vmem:[#allocation3 + $0x30] sm:$0xff] %v1085
  %1150 = vst [vmem:[#allocation3 + $0x78] sm:$0xff] %v1086
  %1151 = vst [vmem:[#allocation3 + $0xc0] sm:$0xff] %v1087
  %1152 = vst [vmem:[#allocation3 + $0x108] sm:$0xff] %v1088
  %1153 = vst [vmem:[#allocation3 + $0x150] sm:$0xff] %v1089
  %1154 = vst [vmem:[#allocation3 + $0x198] sm:$0xff] %v1090
  %1155 = vst [vmem:[#allocation3 + $0x1e0] sm:$0xff] %v1091
  %1156 = vst [vmem:[#allocation3 + $0x228] sm:$0xff] %v1092
  %1157 = vst [vmem:[#allocation3 + $0x270] sm:$0xff] %v1093
  %1158 = vst [vmem:[#allocation3 + $0x2b8] sm:$0xff] %v1094
  %1159 = vst [vmem:[#allocation3 + $0x300] sm:$0xff] %v1095
  %1160 = vst [vmem:[#allocation3 + $0x348] sm:$0xff] %v1096
  %1161 = vst [vmem:[#allocation3 + $0x390] sm:$0xff] %v1097
  %1162 = vst [vmem:[#allocation3 + $0x3d8] sm:$0xff] %v1098
  %1163 = vst [vmem:[#allocation3 + $0x420] sm:$0xff] %v1099
  %1164 = vst [vmem:[#allocation3 + $0x468] sm:$0xff] %v1100
  %1165 = vst [vmem:[#allocation3 + $0x4b0] sm:$0xff] %v1101
  %1166 = vst [vmem:[#allocation3 + $0x4f8] sm:$0xff] %v1102
  %1167 = vst [vmem:[#allocation3 + $0x540] sm:$0xff] %v1103
  %1168 = vst [vmem:[#allocation3 + $0x588] sm:$0xff] %v1104
  %1169 = vst [vmem:[#allocation3 + $0x5d0] sm:$0xff] %v1105
  %1170 = vst [vmem:[#allocation3 + $0x618] sm:$0xff] %v1106
  %1171 = vst [vmem:[#allocation3 + $0x660] sm:$0xff] %v1107
  %1172 = vst [vmem:[#allocation3 + $0x6a8] sm:$0xff] %v1108
  %1173 = vst [vmem:[#allocation3 + $0x6f0] sm:$0xff] %v1109
  %1174 = vst [vmem:[#allocation3 + $0x738] sm:$0xff] %v1110
  %1175 = vst [vmem:[#allocation3 + $0x780] sm:$0xff] %v1111
  %1176 = vst [vmem:[#allocation3 + $0x7c8] sm:$0xff] %v1112
  %1177 = vst [vmem:[#allocation3 + $0x810] sm:$0xff] %v1113
  %1178 = vst [vmem:[#allocation3 + $0x858] sm:$0xff] %v1114
  %1179 = vst [vmem:[#allocation3 + $0x8a0] sm:$0xff] %v1115
  %1180 = vst [vmem:[#allocation3 + $0x8e8] sm:$0xff] %v1116
  %1181 = vst [vmem:[#allocation3 + $0x930] sm:$0xff] %v1117
  %1182 = vst [vmem:[#allocation3 + $0x978] sm:$0xff] %v1118
  %1183 = vst [vmem:[#allocation3 + $0x9c0] sm:$0xff] %v1119
  %1184 = vst [vmem:[#allocation3 + $0xa08] sm:$0xff] %v1120
  %1185 = vst [vmem:[#allocation3 + $0xa50] sm:$0xff] %v1121
  %1186 = vst [vmem:[#allocation3 + $0xa98] sm:$0xff] %v1122
  %1187 = vst [vmem:[#allocation3 + $0xae0] sm:$0xff] %v1123
  %1188 = vst [vmem:[#allocation3 + $0xb28] sm:$0xff] %v1124
  %1189 = vst [vmem:[#allocation3 + $0xb70] sm:$0xff] %v1125
  %1190 = vst [vmem:[#allocation3 + $0xbb8] sm:$0xff] %v1126
  %1191 = vst [vmem:[#allocation3 + $0xc00] sm:$0xff] %v1127
  %1192 = vst [vmem:[#allocation3 + $0xc48] sm:$0xff] %v1128
  %1193 = vst [vmem:[#allocation3 + $0xc90] sm:$0xff] %v1129
  %1194 = vst [vmem:[#allocation3 + $0xcd8] sm:$0xff] %v1130
  %1195 = vst [vmem:[#allocation3 + $0xd20] sm:$0xff] %v1131
  %1196 = vst [vmem:[#allocation3 + $0xd68] sm:$0xff] %v1132
  %1197 = vst [vmem:[#allocation3 + $0xdb0] sm:$0xff] %v1133
  %1198 = vst [vmem:[#allocation3 + $0xdf8] sm:$0xff] %v1134
  %1199 = vst [vmem:[#allocation3 + $0xe40] sm:$0xff] %v1135
  %1200 = vst [vmem:[#allocation3 + $0xe88] sm:$0xff] %v1136
  %1201 = vst [vmem:[#allocation3 + $0xed0] sm:$0xff] %v1137
  %1202 = vst [vmem:[#allocation3 + $0xf18] sm:$0xff] %v1138
  %1203 = vst [vmem:[#allocation3 + $0xf60] sm:$0xff] %v1139
  %1204 = vst [vmem:[#allocation3 + $0xfa8] sm:$0xff] %v1140
  %1205 = vst [vmem:[#allocation3 + $0xff0] sm:$0xff] %v1141
  %1206 = vst [vmem:[#allocation3 + $0x1038] sm:$0xff] %v1142
  %1207 = vst [vmem:[#allocation3 + $0x1080] sm:$0xff] %v1143
  %1208 = vst [vmem:[#allocation3 + $0x10c8] sm:$0xff] %v1144
  %1209 = vst [vmem:[#allocation3 + $0x1110] sm:$0xff] %v1145
  %1210 = vst [vmem:[#allocation3 + $0x1158] sm:$0xff] %v1146
  %1211 = vst [vmem:[#allocation3 + $0x11a0] sm:$0xff] %v1147
  %1212 = vst [vmem:[#allocation3 + $0x11e8] sm:$0xff] %v1148
  %v1213 = vld [vmem:[%s1084 + $0x1] sm:$0xff]
  %v1214 = vld [vmem:[%s1084 + $0x9] sm:$0xff]
  %v1215 = vld [vmem:[%s1084 + $0x19] sm:$0xff]
  %v1216 = vld [vmem:[%s1084 + $0x21] sm:$0xff]
  %v1217 = vld [vmem:[%s1084 + $0x31] sm:$0xff]
  %v1218 = vld [vmem:[%s1084 + $0x39] sm:$0xff]
  %v1219 = vld [vmem:[%s1084 + $0x49] sm:$0xff]
  %v1220 = vld [vmem:[%s1084 + $0x51] sm:$0xff]
  %v1221 = vld [vmem:[%s1084 + $0x61] sm:$0xff]
  %v1222 = vld [vmem:[%s1084 + $0x69] sm:$0xff]
  %v1223 = vld [vmem:[%s1084 + $0x79] sm:$0xff]
  %v1224 = vld [vmem:[%s1084 + $0x81] sm:$0xff]
  %v1225 = vld [vmem:[%s1084 + $0x91] sm:$0xff]
  %v1226 = vld [vmem:[%s1084 + $0x99] sm:$0xff]
  %v1227 = vld [vmem:[%s1084 + $0xa9] sm:$0xff]
  %v1228 = vld [vmem:[%s1084 + $0xb1] sm:$0xff]
  %v1229 = vld [vmem:[%s1084 + $0xc1] sm:$0xff]
  %v1230 = vld [vmem:[%s1084 + $0xc9] sm:$0xff]
  %v1231 = vld [vmem:[%s1084 + $0xd9] sm:$0xff]
  %v1232 = vld [vmem:[%s1084 + $0xe1] sm:$0xff]
  %v1233 = vld [vmem:[%s1084 + $0xf1] sm:$0xff]
  %v1234 = vld [vmem:[%s1084 + $0xf9] sm:$0xff]
  %v1235 = vld [vmem:[%s1084 + $0x109] sm:$0xff]
  %v1236 = vld [vmem:[%s1084 + $0x111] sm:$0xff]
  %v1237 = vld [vmem:[%s1084 + $0x121] sm:$0xff]
  %v1238 = vld [vmem:[%s1084 + $0x129] sm:$0xff]
  %v1239 = vld [vmem:[%s1084 + $0x139] sm:$0xff]
  %v1240 = vld [vmem:[%s1084 + $0x141] sm:$0xff]
  %v1241 = vld [vmem:[%s1084 + $0x151] sm:$0xff]
  %v1242 = vld [vmem:[%s1084 + $0x159] sm:$0xff]
  %v1243 = vld [vmem:[%s1084 + $0x169] sm:$0xff]
  %v1244 = vld [vmem:[%s1084 + $0x171] sm:$0xff]
  %v1245 = vld [vmem:[%s1084 + $0x1b1] sm:$0xff]
  %v1246 = vld [vmem:[%s1084 + $0x1b9] sm:$0xff]
  %v1247 = vld [vmem:[%s1084 + $0x1c9] sm:$0xff]
  %v1248 = vld [vmem:[%s1084 + $0x1d1] sm:$0xff]
  %v1249 = vld [vmem:[%s1084 + $0x1e1] sm:$0xff]
  %v1250 = vld [vmem:[%s1084 + $0x1e9] sm:$0xff]
  %v1251 = vld [vmem:[%s1084 + $0x1f9] sm:$0xff]
  %v1252 = vld [vmem:[%s1084 + $0x201] sm:$0xff]
  %v1253 = vld [vmem:[%s1084 + $0x211] sm:$0xff]
  %v1254 = vld [vmem:[%s1084 + $0x219] sm:$0xff]
  %v1255 = vld [vmem:[%s1084 + $0x229] sm:$0xff]
  %v1256 = vld [vmem:[%s1084 + $0x231] sm:$0xff]
  %v1257 = vld [vmem:[%s1084 + $0x241] sm:$0xff]
  %v1258 = vld [vmem:[%s1084 + $0x249] sm:$0xff]
  %v1259 = vld [vmem:[%s1084 + $0x259] sm:$0xff]
  %v1260 = vld [vmem:[%s1084 + $0x261] sm:$0xff]
  %v1261 = vld [vmem:[%s1084 + $0x271] sm:$0xff]
  %v1262 = vld [vmem:[%s1084 + $0x279] sm:$0xff]
  %v1263 = vld [vmem:[%s1084 + $0x289] sm:$0xff]
  %v1264 = vld [vmem:[%s1084 + $0x291] sm:$0xff]
  %v1265 = vld [vmem:[%s1084 + $0x2a1] sm:$0xff]
  %v1266 = vld [vmem:[%s1084 + $0x2a9] sm:$0xff]
  %v1267 = vld [vmem:[%s1084 + $0x2b9] sm:$0xff]
  %v1268 = vld [vmem:[%s1084 + $0x2c1] sm:$0xff]
  %v1269 = vld [vmem:[%s1084 + $0x2d1] sm:$0xff]
  %v1270 = vld [vmem:[%s1084 + $0x2d9] sm:$0xff]
  %v1271 = vld [vmem:[%s1084 + $0x2e9] sm:$0xff]
  %v1272 = vld [vmem:[%s1084 + $0x2f1] sm:$0xff]
  %v1273 = vld [vmem:[%s1084 + $0x301] sm:$0xff]
  %v1274 = vld [vmem:[%s1084 + $0x309] sm:$0xff]
  %v1275 = vld [vmem:[%s1084 + $0x319] sm:$0xff]
  %v1276 = vld [vmem:[%s1084 + $0x321] sm:$0xff]
  %1277 = vst [vmem:[#allocation3 + $0x38] sm:$0xff] %v1213
  %1278 = vst [vmem:[#allocation3 + $0x80] sm:$0xff] %v1214
  %1279 = vst [vmem:[#allocation3 + $0xc8] sm:$0xff] %v1215
  %1280 = vst [vmem:[#allocation3 + $0x110] sm:$0xff] %v1216
  %1281 = vst [vmem:[#allocation3 + $0x158] sm:$0xff] %v1217
  %1282 = vst [vmem:[#allocation3 + $0x1a0] sm:$0xff] %v1218
  %1283 = vst [vmem:[#allocation3 + $0x1e8] sm:$0xff] %v1219
  %1284 = vst [vmem:[#allocation3 + $0x230] sm:$0xff] %v1220
  %1285 = vst [vmem:[#allocation3 + $0x278] sm:$0xff] %v1221
  %1286 = vst [vmem:[#allocation3 + $0x2c0] sm:$0xff] %v1222
  %1287 = vst [vmem:[#allocation3 + $0x308] sm:$0xff] %v1223
  %1288 = vst [vmem:[#allocation3 + $0x350] sm:$0xff] %v1224
  %1289 = vst [vmem:[#allocation3 + $0x398] sm:$0xff] %v1225
  %1290 = vst [vmem:[#allocation3 + $0x3e0] sm:$0xff] %v1226
  %1291 = vst [vmem:[#allocation3 + $0x428] sm:$0xff] %v1227
  %1292 = vst [vmem:[#allocation3 + $0x470] sm:$0xff] %v1228
  %1293 = vst [vmem:[#allocation3 + $0x4b8] sm:$0xff] %v1229
  %1294 = vst [vmem:[#allocation3 + $0x500] sm:$0xff] %v1230
  %1295 = vst [vmem:[#allocation3 + $0x548] sm:$0xff] %v1231
  %1296 = vst [vmem:[#allocation3 + $0x590] sm:$0xff] %v1232
  %1297 = vst [vmem:[#allocation3 + $0x5d8] sm:$0xff] %v1233
  %1298 = vst [vmem:[#allocation3 + $0x620] sm:$0xff] %v1234
  %1299 = vst [vmem:[#allocation3 + $0x668] sm:$0xff] %v1235
  %1300 = vst [vmem:[#allocation3 + $0x6b0] sm:$0xff] %v1236
  %1301 = vst [vmem:[#allocation3 + $0x6f8] sm:$0xff] %v1237
  %1302 = vst [vmem:[#allocation3 + $0x740] sm:$0xff] %v1238
  %1303 = vst [vmem:[#allocation3 + $0x788] sm:$0xff] %v1239
  %1304 = vst [vmem:[#allocation3 + $0x7d0] sm:$0xff] %v1240
  %1305 = vst [vmem:[#allocation3 + $0x818] sm:$0xff] %v1241
  %1306 = vst [vmem:[#allocation3 + $0x860] sm:$0xff] %v1242
  %1307 = vst [vmem:[#allocation3 + $0x8a8] sm:$0xff] %v1243
  %1308 = vst [vmem:[#allocation3 + $0x8f0] sm:$0xff] %v1244
  %1309 = vst [vmem:[#allocation3 + $0x938] sm:$0xff] %v1245
  %1310 = vst [vmem:[#allocation3 + $0x980] sm:$0xff] %v1246
  %1311 = vst [vmem:[#allocation3 + $0x9c8] sm:$0xff] %v1247
  %1312 = vst [vmem:[#allocation3 + $0xa10] sm:$0xff] %v1248
  %1313 = vst [vmem:[#allocation3 + $0xa58] sm:$0xff] %v1249
  %1314 = vst [vmem:[#allocation3 + $0xaa0] sm:$0xff] %v1250
  %1315 = vst [vmem:[#allocation3 + $0xae8] sm:$0xff] %v1251
  %1316 = vst [vmem:[#allocation3 + $0xb30] sm:$0xff] %v1252
  %1317 = vst [vmem:[#allocation3 + $0xb78] sm:$0xff] %v1253
  %1318 = vst [vmem:[#allocation3 + $0xbc0] sm:$0xff] %v1254
  %1319 = vst [vmem:[#allocation3 + $0xc08] sm:$0xff] %v1255
  %1320 = vst [vmem:[#allocation3 + $0xc50] sm:$0xff] %v1256
  %1321 = vst [vmem:[#allocation3 + $0xc98] sm:$0xff] %v1257
  %1322 = vst [vmem:[#allocation3 + $0xce0] sm:$0xff] %v1258
  %1323 = vst [vmem:[#allocation3 + $0xd28] sm:$0xff] %v1259
  %1324 = vst [vmem:[#allocation3 + $0xd70] sm:$0xff] %v1260
  %1325 = vst [vmem:[#allocation3 + $0xdb8] sm:$0xff] %v1261
  %1326 = vst [vmem:[#allocation3 + $0xe00] sm:$0xff] %v1262
  %1327 = vst [vmem:[#allocation3 + $0xe48] sm:$0xff] %v1263
  %1328 = vst [vmem:[#allocation3 + $0xe90] sm:$0xff] %v1264
  %1329 = vst [vmem:[#allocation3 + $0xed8] sm:$0xff] %v1265
  %1330 = vst [vmem:[#allocation3 + $0xf20] sm:$0xff] %v1266
  %1331 = vst [vmem:[#allocation3 + $0xf68] sm:$0xff] %v1267
  %1332 = vst [vmem:[#allocation3 + $0xfb0] sm:$0xff] %v1268
  %1333 = vst [vmem:[#allocation3 + $0xff8] sm:$0xff] %v1269
  %1334 = vst [vmem:[#allocation3 + $0x1040] sm:$0xff] %v1270
  %1335 = vst [vmem:[#allocation3 + $0x1088] sm:$0xff] %v1271
  %1336 = vst [vmem:[#allocation3 + $0x10d0] sm:$0xff] %v1272
  %1337 = vst [vmem:[#allocation3 + $0x1118] sm:$0xff] %v1273
  %1338 = vst [vmem:[#allocation3 + $0x1160] sm:$0xff] %v1274
  %1339 = vst [vmem:[#allocation3 + $0x11a8] sm:$0xff] %v1275
  %1340 = vst [vmem:[#allocation3 + $0x11f0] sm:$0xff] %v1276
  %v1341 = vld [vmem:[%s1084 + $0x2] sm:$0xff]
  %v1342 = vld [vmem:[%s1084 + $0xa] sm:$0xff]
  %v1343 = vld [vmem:[%s1084 + $0x1a] sm:$0xff]
  %v1344 = vld [vmem:[%s1084 + $0x22] sm:$0xff]
  %v1345 = vld [vmem:[%s1084 + $0x32] sm:$0xff]
  %v1346 = vld [vmem:[%s1084 + $0x3a] sm:$0xff]
  %v1347 = vld [vmem:[%s1084 + $0x4a] sm:$0xff]
  %v1348 = vld [vmem:[%s1084 + $0x52] sm:$0xff]
  %v1349 = vld [vmem:[%s1084 + $0x62] sm:$0xff]
  %v1350 = vld [vmem:[%s1084 + $0x6a] sm:$0xff]
  %v1351 = vld [vmem:[%s1084 + $0x7a] sm:$0xff]
  %v1352 = vld [vmem:[%s1084 + $0x82] sm:$0xff]
  %v1353 = vld [vmem:[%s1084 + $0x92] sm:$0xff]
  %v1354 = vld [vmem:[%s1084 + $0x9a] sm:$0xff]
  %v1355 = vld [vmem:[%s1084 + $0xaa] sm:$0xff]
  %v1356 = vld [vmem:[%s1084 + $0xb2] sm:$0xff]
  %v1357 = vld [vmem:[%s1084 + $0xc2] sm:$0xff]
  %v1358 = vld [vmem:[%s1084 + $0xca] sm:$0xff]
  %v1359 = vld [vmem:[%s1084 + $0xda] sm:$0xff]
  %v1360 = vld [vmem:[%s1084 + $0xe2] sm:$0xff]
  %v1361 = vld [vmem:[%s1084 + $0xf2] sm:$0xff]
  %v1362 = vld [vmem:[%s1084 + $0xfa] sm:$0xff]
  %v1363 = vld [vmem:[%s1084 + $0x10a] sm:$0xff]
  %v1364 = vld [vmem:[%s1084 + $0x112] sm:$0xff]
  %v1365 = vld [vmem:[%s1084 + $0x122] sm:$0xff]
  %v1366 = vld [vmem:[%s1084 + $0x12a] sm:$0xff]
  %v1367 = vld [vmem:[%s1084 + $0x13a] sm:$0xff]
  %v1368 = vld [vmem:[%s1084 + $0x142] sm:$0xff]
  %v1369 = vld [vmem:[%s1084 + $0x152] sm:$0xff]
  %v1370 = vld [vmem:[%s1084 + $0x15a] sm:$0xff]
  %v1371 = vld [vmem:[%s1084 + $0x16a] sm:$0xff]
  %v1372 = vld [vmem:[%s1084 + $0x172] sm:$0xff]
  %v1373 = vld [vmem:[%s1084 + $0x1b2] sm:$0xff]
  %v1374 = vld [vmem:[%s1084 + $0x1ba] sm:$0xff]
  %v1375 = vld [vmem:[%s1084 + $0x1ca] sm:$0xff]
  %v1376 = vld [vmem:[%s1084 + $0x1d2] sm:$0xff]
  %v1377 = vld [vmem:[%s1084 + $0x1e2] sm:$0xff]
  %v1378 = vld [vmem:[%s1084 + $0x1ea] sm:$0xff]
  %v1379 = vld [vmem:[%s1084 + $0x1fa] sm:$0xff]
  %v1380 = vld [vmem:[%s1084 + $0x202] sm:$0xff]
  %v1381 = vld [vmem:[%s1084 + $0x212] sm:$0xff]
  %v1382 = vld [vmem:[%s1084 + $0x21a] sm:$0xff]
  %v1383 = vld [vmem:[%s1084 + $0x22a] sm:$0xff]
  %v1384 = vld [vmem:[%s1084 + $0x232] sm:$0xff]
  %v1385 = vld [vmem:[%s1084 + $0x242] sm:$0xff]
  %v1386 = vld [vmem:[%s1084 + $0x24a] sm:$0xff]
  %v1387 = vld [vmem:[%s1084 + $0x25a] sm:$0xff]
  %v1388 = vld [vmem:[%s1084 + $0x262] sm:$0xff]
  %v1389 = vld [vmem:[%s1084 + $0x272] sm:$0xff]
  %v1390 = vld [vmem:[%s1084 + $0x27a] sm:$0xff]
  %v1391 = vld [vmem:[%s1084 + $0x28a] sm:$0xff]
  %v1392 = vld [vmem:[%s1084 + $0x292] sm:$0xff]
  %v1393 = vld [vmem:[%s1084 + $0x2a2] sm:$0xff]
  %v1394 = vld [vmem:[%s1084 + $0x2aa] sm:$0xff]
  %v1395 = vld [vmem:[%s1084 + $0x2ba] sm:$0xff]
  %v1396 = vld [vmem:[%s1084 + $0x2c2] sm:$0xff]
  %v1397 = vld [vmem:[%s1084 + $0x2d2] sm:$0xff]
  %v1398 = vld [vmem:[%s1084 + $0x2da] sm:$0xff]
  %v1399 = vld [vmem:[%s1084 + $0x2ea] sm:$0xff]
  %v1400 = vld [vmem:[%s1084 + $0x2f2] sm:$0xff]
  %v1401 = vld [vmem:[%s1084 + $0x302] sm:$0xff]
  %v1402 = vld [vmem:[%s1084 + $0x30a] sm:$0xff]
  %v1403 = vld [vmem:[%s1084 + $0x31a] sm:$0xff]
  %v1404 = vld [vmem:[%s1084 + $0x322] sm:$0xff]
  %1405 = vst [vmem:[#allocation3 + $0x40] sm:$0xff] %v1341
  %1406 = vst [vmem:[#allocation3 + $0x88] sm:$0xff] %v1342
  %1407 = vst [vmem:[#allocation3 + $0xd0] sm:$0xff] %v1343
  %1408 = vst [vmem:[#allocation3 + $0x118] sm:$0xff] %v1344
  %1409 = vst [vmem:[#allocation3 + $0x160] sm:$0xff] %v1345
  %1410 = vst [vmem:[#allocation3 + $0x1a8] sm:$0xff] %v1346
  %1411 = vst [vmem:[#allocation3 + $0x1f0] sm:$0xff] %v1347
  %1412 = vst [vmem:[#allocation3 + $0x238] sm:$0xff] %v1348
  %1413 = vst [vmem:[#allocation3 + $0x280] sm:$0xff] %v1349
  %1414 = vst [vmem:[#allocation3 + $0x2c8] sm:$0xff] %v1350
  %1415 = vst [vmem:[#allocation3 + $0x310] sm:$0xff] %v1351
  %1416 = vst [vmem:[#allocation3 + $0x358] sm:$0xff] %v1352
  %1417 = vst [vmem:[#allocation3 + $0x3a0] sm:$0xff] %v1353
  %1418 = vst [vmem:[#allocation3 + $0x3e8] sm:$0xff] %v1354
  %1419 = vst [vmem:[#allocation3 + $0x430] sm:$0xff] %v1355
  %1420 = vst [vmem:[#allocation3 + $0x478] sm:$0xff] %v1356
  %1421 = vst [vmem:[#allocation3 + $0x4c0] sm:$0xff] %v1357
  %1422 = vst [vmem:[#allocation3 + $0x508] sm:$0xff] %v1358
  %1423 = vst [vmem:[#allocation3 + $0x550] sm:$0xff] %v1359
  %1424 = vst [vmem:[#allocation3 + $0x598] sm:$0xff] %v1360
  %1425 = vst [vmem:[#allocation3 + $0x5e0] sm:$0xff] %v1361
  %1426 = vst [vmem:[#allocation3 + $0x628] sm:$0xff] %v1362
  %1427 = vst [vmem:[#allocation3 + $0x670] sm:$0xff] %v1363
  %1428 = vst [vmem:[#allocation3 + $0x6b8] sm:$0xff] %v1364
  %1429 = vst [vmem:[#allocation3 + $0x700] sm:$0xff] %v1365
  %1430 = vst [vmem:[#allocation3 + $0x748] sm:$0xff] %v1366
  %1431 = vst [vmem:[#allocation3 + $0x790] sm:$0xff] %v1367
  %1432 = vst [vmem:[#allocation3 + $0x7d8] sm:$0xff] %v1368
  %1433 = vst [vmem:[#allocation3 + $0x820] sm:$0xff] %v1369
  %1434 = vst [vmem:[#allocation3 + $0x868] sm:$0xff] %v1370
  %1435 = vst [vmem:[#allocation3 + $0x8b0] sm:$0xff] %v1371
  %1436 = vst [vmem:[#allocation3 + $0x8f8] sm:$0xff] %v1372
  %1437 = vst [vmem:[#allocation3 + $0x940] sm:$0xff] %v1373
  %1438 = vst [vmem:[#allocation3 + $0x988] sm:$0xff] %v1374
  %1439 = vst [vmem:[#allocation3 + $0x9d0] sm:$0xff] %v1375
  %1440 = vst [vmem:[#allocation3 + $0xa18] sm:$0xff] %v1376
  %1441 = vst [vmem:[#allocation3 + $0xa60] sm:$0xff] %v1377
  %1442 = vst [vmem:[#allocation3 + $0xaa8] sm:$0xff] %v1378
  %1443 = vst [vmem:[#allocation3 + $0xaf0] sm:$0xff] %v1379
  %1444 = vst [vmem:[#allocation3 + $0xb38] sm:$0xff] %v1380
  %1445 = vst [vmem:[#allocation3 + $0xb80] sm:$0xff] %v1381
  %1446 = vst [vmem:[#allocation3 + $0xbc8] sm:$0xff] %v1382
  %1447 = vst [vmem:[#allocation3 + $0xc10] sm:$0xff] %v1383
  %1448 = vst [vmem:[#allocation3 + $0xc58] sm:$0xff] %v1384
  %1449 = vst [vmem:[#allocation3 + $0xca0] sm:$0xff] %v1385
  %1450 = vst [vmem:[#allocation3 + $0xce8] sm:$0xff] %v1386
  %1451 = vst [vmem:[#allocation3 + $0xd30] sm:$0xff] %v1387
  %1452 = vst [vmem:[#allocation3 + $0xd78] sm:$0xff] %v1388
  %1453 = vst [vmem:[#allocation3 + $0xdc0] sm:$0xff] %v1389
  %1454 = vst [vmem:[#allocation3 + $0xe08] sm:$0xff] %v1390
  %1455 = vst [vmem:[#allocation3 + $0xe50] sm:$0xff] %v1391
  %1456 = vst [vmem:[#allocation3 + $0xe98] sm:$0xff] %v1392
  %1457 = vst [vmem:[#allocation3 + $0xee0] sm:$0xff] %v1393
  %1458 = vst [vmem:[#allocation3 + $0xf28] sm:$0xff] %v1394
  %1459 = vst [vmem:[#allocation3 + $0xf70] sm:$0xff] %v1395
  %1460 = vst [vmem:[#allocation3 + $0xfb8] sm:$0xff] %v1396
  %1461 = vst [vmem:[#allocation3 + $0x1000] sm:$0xff] %v1397
  %1462 = vst [vmem:[#allocation3 + $0x1048] sm:$0xff] %v1398
  %1463 = vst [vmem:[#allocation3 + $0x1090] sm:$0xff] %v1399
  %1464 = vst [vmem:[#allocation3 + $0x10d8] sm:$0xff] %v1400
  %1465 = vst [vmem:[#allocation3 + $0x1120] sm:$0xff] %v1401
  %1466 = vst [vmem:[#allocation3 + $0x1168] sm:$0xff] %v1402
  %1467 = vst [vmem:[#allocation3 + $0x11b0] sm:$0xff] %v1403
  %1468 = vst [vmem:[#allocation3 + $0x11f8] sm:$0xff] %v1404
  %v1469 = vld [vmem:[#allocation3] sm:$0xff]
  %v1470 = vld [vmem:[#allocation3 + $0x8] sm:$0xff]
  %v1471 = vld [vmem:[#allocation3 + $0x10] sm:$0xff]
  %v1472 = vld [vmem:[#allocation3 + $0x18] sm:$0xff]
  %v1473 = vld [vmem:[#allocation3 + $0x20] sm:$0xff]
  %v1474 = vld [vmem:[#allocation3 + $0x28] sm:$0xff]
  %v1475 = vld [vmem:[#allocation3 + $0x30] sm:$0xff]
  %v1476 = vld [vmem:[#allocation3 + $0x38] sm:$0xff]
  %v1477 = vld [vmem:[#allocation3 + $0x40] sm:$0xff]
  %v1478 = vld [vmem:[#allocation3 + $0x48] sm:$0xff]
  %v1479 = vld [vmem:[#allocation3 + $0x50] sm:$0xff]
  %v1480 = vld [vmem:[#allocation3 + $0x58] sm:$0xff]
  %v1481 = vld [vmem:[#allocation3 + $0x60] sm:$0xff]
  %v1482 = vld [vmem:[#allocation3 + $0x68] sm:$0xff]
  %v1483 = vld [vmem:[#allocation3 + $0x70] sm:$0xff]
  %v1484 = vld [vmem:[#allocation3 + $0x78] sm:$0xff]
  %v1485 = vld [vmem:[#allocation3 + $0x80] sm:$0xff]
  %v1486 = vld [vmem:[#allocation3 + $0x88] sm:$0xff]
  %v1487 = vld [vmem:[#allocation3 + $0x90] sm:$0xff]
  %v1488 = vld [vmem:[#allocation3 + $0x98] sm:$0xff]
  %v1489 = vld [vmem:[#allocation3 + $0xa0] sm:$0xff]
  %v1490 = vld [vmem:[#allocation3 + $0xa8] sm:$0xff]
  %v1491 = vld [vmem:[#allocation3 + $0xb0] sm:$0xff]
  %v1492 = vld [vmem:[#allocation3 + $0xb8] sm:$0xff]
  %v1493 = vld [vmem:[#allocation3 + $0xc0] sm:$0xff]
  %v1494 = vld [vmem:[#allocation3 + $0xc8] sm:$0xff]
  %v1495 = vld [vmem:[#allocation3 + $0xd0] sm:$0xff]
  %v1496 = vld [vmem:[#allocation3 + $0xd8] sm:$0xff]
  %v1497 = vld [vmem:[#allocation3 + $0xe0] sm:$0xff]
  %v1498 = vld [vmem:[#allocation3 + $0xe8] sm:$0xff]
  %v1499 = vld [vmem:[#allocation3 + $0xf0] sm:$0xff]
  %v1500 = vld [vmem:[#allocation3 + $0xf8] sm:$0xff]
  %v1501 = vld [vmem:[#allocation3 + $0x100] sm:$0xff]
  %v1502 = vld [vmem:[#allocation3 + $0x108] sm:$0xff]
  %v1503 = vld [vmem:[#allocation3 + $0x110] sm:$0xff]
  %v1504 = vld [vmem:[#allocation3 + $0x118] sm:$0xff]
  %v1505 = vld [vmem:[#allocation3 + $0x120] sm:$0xff]
  %v1506 = vld [vmem:[#allocation3 + $0x128] sm:$0xff]
  %v1507 = vld [vmem:[#allocation3 + $0x130] sm:$0xff]
  %v1508 = vld [vmem:[#allocation3 + $0x138] sm:$0xff]
  %v1509 = vld [vmem:[#allocation3 + $0x140] sm:$0xff]
  %v1510 = vld [vmem:[#allocation3 + $0x148] sm:$0xff]
  %v1511 = vld [vmem:[#allocation3 + $0x150] sm:$0xff]
  %v1512 = vld [vmem:[#allocation3 + $0x158] sm:$0xff]
  %v1513 = vld [vmem:[#allocation3 + $0x160] sm:$0xff]
  %v1514 = vld [vmem:[#allocation3 + $0x168] sm:$0xff]
  %v1515 = vld [vmem:[#allocation3 + $0x170] sm:$0xff]
  %v1516 = vld [vmem:[#allocation3 + $0x178] sm:$0xff]
  %v1517 = vld [vmem:[#allocation3 + $0x180] sm:$0xff]
  %v1518 = vld [vmem:[#allocation3 + $0x188] sm:$0xff]
  %v1519 = vld [vmem:[#allocation3 + $0x190] sm:$0xff]
  %v1520 = vld [vmem:[#allocation3 + $0x198] sm:$0xff]
  %v1521 = vld [vmem:[#allocation3 + $0x1a0] sm:$0xff]
  %v1522 = vld [vmem:[#allocation3 + $0x1a8] sm:$0xff]
  %v1523 = vld [vmem:[#allocation3 + $0x1b0] sm:$0xff]
  %v1524 = vld [vmem:[#allocation3 + $0x1b8] sm:$0xff]
  %v1525 = vld [vmem:[#allocation3 + $0x1c0] sm:$0xff]
  %v1526 = vld [vmem:[#allocation3 + $0x1c8] sm:$0xff]
  %v1527 = vld [vmem:[#allocation3 + $0x1d0] sm:$0xff]
  %v1528 = vld [vmem:[#allocation3 + $0x1d8] sm:$0xff]
  %v1529 = vld [vmem:[#allocation3 + $0x1e0] sm:$0xff]
  %v1530 = vld [vmem:[#allocation3 + $0x1e8] sm:$0xff]
  %v1531 = vld [vmem:[#allocation3 + $0x1f0] sm:$0xff]
  %v1532 = vld [vmem:[#allocation3 + $0x1f8] sm:$0xff]
  %v1533 = vld [vmem:[#allocation3 + $0x200] sm:$0xff]
  %v1534 = vld [vmem:[#allocation3 + $0x208] sm:$0xff]
  %v1535 = vld [vmem:[#allocation3 + $0x210] sm:$0xff]
  %v1536 = vld [vmem:[#allocation3 + $0x218] sm:$0xff]
  %v1537 = vld [vmem:[#allocation3 + $0x220] sm:$0xff]
  %v1538 = vld [vmem:[#allocation3 + $0x228] sm:$0xff]
  %v1539 = vld [vmem:[#allocation3 + $0x230] sm:$0xff]
  %v1540 = vld [vmem:[#allocation3 + $0x238] sm:$0xff]
  %v1541 = vld [vmem:[#allocation3 + $0x240] sm:$0xff]
  %v1542 = vld [vmem:[#allocation3 + $0x248] sm:$0xff]
  %v1543 = vld [vmem:[#allocation3 + $0x250] sm:$0xff]
  %v1544 = vld [vmem:[#allocation3 + $0x258] sm:$0xff]
  %v1545 = vld [vmem:[#allocation3 + $0x260] sm:$0xff]
  %v1546 = vld [vmem:[#allocation3 + $0x268] sm:$0xff]
  %v1547 = vld [vmem:[#allocation3 + $0x270] sm:$0xff]
  %v1548 = vld [vmem:[#allocation3 + $0x278] sm:$0xff]
  %v1549 = vld [vmem:[#allocation3 + $0x280] sm:$0xff]
  %v1550 = vld [vmem:[#allocation3 + $0x288] sm:$0xff]
  %v1551 = vld [vmem:[#allocation3 + $0x290] sm:$0xff]
  %v1552 = vld [vmem:[#allocation3 + $0x298] sm:$0xff]
  %v1553 = vld [vmem:[#allocation3 + $0x2a0] sm:$0xff]
  %v1554 = vld [vmem:[#allocation3 + $0x2a8] sm:$0xff]
  %v1555 = vld [vmem:[#allocation3 + $0x2b0] sm:$0xff]
  %v1556 = vld [vmem:[#allocation3 + $0x2b8] sm:$0xff]
  %v1557 = vld [vmem:[#allocation3 + $0x2c0] sm:$0xff]
  %v1558 = vld [vmem:[#allocation3 + $0x2c8] sm:$0xff]
  %v1559 = vld [vmem:[#allocation3 + $0x2d0] sm:$0xff]
  %v1560 = vld [vmem:[#allocation3 + $0x2d8] sm:$0xff]
  %v1561 = vld [vmem:[#allocation3 + $0x2e0] sm:$0xff]
  %v1562 = vld [vmem:[#allocation3 + $0x2e8] sm:$0xff]
  %v1563 = vld [vmem:[#allocation3 + $0x2f0] sm:$0xff]
  %v1564 = vld [vmem:[#allocation3 + $0x2f8] sm:$0xff]
  %v1565 = vld [vmem:[#allocation3 + $0x300] sm:$0xff]
  %v1566 = vld [vmem:[#allocation3 + $0x308] sm:$0xff]
  %v1567 = vld [vmem:[#allocation3 + $0x310] sm:$0xff]
  %v1568 = vld [vmem:[#allocation3 + $0x318] sm:$0xff]
  %v1569 = vld [vmem:[#allocation3 + $0x320] sm:$0xff]
  %v1570 = vld [vmem:[#allocation3 + $0x328] sm:$0xff]
  %v1571 = vld [vmem:[#allocation3 + $0x330] sm:$0xff]
  %v1572 = vld [vmem:[#allocation3 + $0x338] sm:$0xff]
  %v1573 = vld [vmem:[#allocation3 + $0x340] sm:$0xff]
  %v1574 = vld [vmem:[#allocation3 + $0x348] sm:$0xff]
  %v1575 = vld [vmem:[#allocation3 + $0x350] sm:$0xff]
  %v1576 = vld [vmem:[#allocation3 + $0x358] sm:$0xff]
  %v1577 = vld [vmem:[#allocation3 + $0x360] sm:$0xff]
  %v1578 = vld [vmem:[#allocation3 + $0x368] sm:$0xff]
  %v1579 = vld [vmem:[#allocation3 + $0x370] sm:$0xff]
  %v1580 = vld [vmem:[#allocation3 + $0x378] sm:$0xff]
  %v1581 = vld [vmem:[#allocation3 + $0x380] sm:$0xff]
  %v1582 = vld [vmem:[#allocation3 + $0x388] sm:$0xff]
  %v1583 = vld [vmem:[#allocation3 + $0x390] sm:$0xff]
  %v1584 = vld [vmem:[#allocation3 + $0x398] sm:$0xff]
  %v1585 = vld [vmem:[#allocation3 + $0x3a0] sm:$0xff]
  %v1586 = vld [vmem:[#allocation3 + $0x3a8] sm:$0xff]
  %v1587 = vld [vmem:[#allocation3 + $0x3b0] sm:$0xff]
  %v1588 = vld [vmem:[#allocation3 + $0x3b8] sm:$0xff]
  %v1589 = vld [vmem:[#allocation3 + $0x3c0] sm:$0xff]
  %v1590 = vld [vmem:[#allocation3 + $0x3c8] sm:$0xff]
  %v1591 = vld [vmem:[#allocation3 + $0x3d0] sm:$0xff]
  %v1592 = vld [vmem:[#allocation3 + $0x3d8] sm:$0xff]
  %v1593 = vld [vmem:[#allocation3 + $0x3e0] sm:$0xff]
  %v1594 = vld [vmem:[#allocation3 + $0x3e8] sm:$0xff]
  %v1595 = vld [vmem:[#allocation3 + $0x3f0] sm:$0xff]
  %v1596 = vld [vmem:[#allocation3 + $0x3f8] sm:$0xff]
  %v1597 = vld [vmem:[#allocation3 + $0x400] sm:$0xff]
  %v1598 = vld [vmem:[#allocation3 + $0x408] sm:$0xff]
  %v1599 = vld [vmem:[#allocation3 + $0x410] sm:$0xff]
  %v1600 = vld [vmem:[#allocation3 + $0x418] sm:$0xff]
  %v1601 = vld [vmem:[#allocation3 + $0x420] sm:$0xff]
  %v1602 = vld [vmem:[#allocation3 + $0x428] sm:$0xff]
  %v1603 = vld [vmem:[#allocation3 + $0x430] sm:$0xff]
  %v1604 = vld [vmem:[#allocation3 + $0x438] sm:$0xff]
  %v1605 = vld [vmem:[#allocation3 + $0x440] sm:$0xff]
  %v1606 = vld [vmem:[#allocation3 + $0x448] sm:$0xff]
  %v1607 = vld [vmem:[#allocation3 + $0x450] sm:$0xff]
  %v1608 = vld [vmem:[#allocation3 + $0x458] sm:$0xff]
  %v1609 = vld [vmem:[#allocation3 + $0x460] sm:$0xff]
  %v1610 = vld [vmem:[#allocation3 + $0x468] sm:$0xff]
  %v1611 = vld [vmem:[#allocation3 + $0x470] sm:$0xff]
  %v1612 = vld [vmem:[#allocation3 + $0x478] sm:$0xff]
  %v1613 = vld [vmem:[#allocation3 + $0x480] sm:$0xff]
  %v1614 = vld [vmem:[#allocation3 + $0x488] sm:$0xff]
  %v1615 = vld [vmem:[#allocation3 + $0x490] sm:$0xff]
  %v1616 = vld [vmem:[#allocation3 + $0x498] sm:$0xff]
  %v1617 = vld [vmem:[#allocation3 + $0x4a0] sm:$0xff]
  %v1618 = vld [vmem:[#allocation3 + $0x4a8] sm:$0xff]
  %v1619 = vld [vmem:[#allocation3 + $0x4b0] sm:$0xff]
  %v1620 = vld [vmem:[#allocation3 + $0x4b8] sm:$0xff]
  %v1621 = vld [vmem:[#allocation3 + $0x4c0] sm:$0xff]
  %v1622 = vld [vmem:[#allocation3 + $0x4c8] sm:$0xff]
  %v1623 = vld [vmem:[#allocation3 + $0x4d0] sm:$0xff]
  %v1624 = vld [vmem:[#allocation3 + $0x4d8] sm:$0xff]
  %v1625 = vld [vmem:[#allocation3 + $0x4e0] sm:$0xff]
  %v1626 = vld [vmem:[#allocation3 + $0x4e8] sm:$0xff]
  %v1627 = vld [vmem:[#allocation3 + $0x4f0] sm:$0xff]
  %v1628 = vld [vmem:[#allocation3 + $0x4f8] sm:$0xff]
  %v1629 = vld [vmem:[#allocation3 + $0x500] sm:$0xff]
  %v1630 = vld [vmem:[#allocation3 + $0x508] sm:$0xff]
  %v1631 = vld [vmem:[#allocation3 + $0x510] sm:$0xff]
  %v1632 = vld [vmem:[#allocation3 + $0x518] sm:$0xff]
  %v1633 = vld [vmem:[#allocation3 + $0x520] sm:$0xff]
  %v1634 = vld [vmem:[#allocation3 + $0x528] sm:$0xff]
  %v1635 = vld [vmem:[#allocation3 + $0x530] sm:$0xff]
  %v1636 = vld [vmem:[#allocation3 + $0x538] sm:$0xff]
  %v1637 = vld [vmem:[#allocation3 + $0x540] sm:$0xff]
  %v1638 = vld [vmem:[#allocation3 + $0x548] sm:$0xff]
  %v1639 = vld [vmem:[#allocation3 + $0x550] sm:$0xff]
  %v1640 = vld [vmem:[#allocation3 + $0x558] sm:$0xff]
  %v1641 = vld [vmem:[#allocation3 + $0x560] sm:$0xff]
  %v1642 = vld [vmem:[#allocation3 + $0x568] sm:$0xff]
  %v1643 = vld [vmem:[#allocation3 + $0x570] sm:$0xff]
  %v1644 = vld [vmem:[#allocation3 + $0x578] sm:$0xff]
  %v1645 = vld [vmem:[#allocation3 + $0x580] sm:$0xff]
  %v1646 = vld [vmem:[#allocation3 + $0x588] sm:$0xff]
  %v1647 = vld [vmem:[#allocation3 + $0x590] sm:$0xff]
  %v1648 = vld [vmem:[#allocation3 + $0x598] sm:$0xff]
  %v1649 = vld [vmem:[#allocation3 + $0x5a0] sm:$0xff]
  %v1650 = vld [vmem:[#allocation3 + $0x5a8] sm:$0xff]
  %v1651 = vld [vmem:[#allocation3 + $0x5b0] sm:$0xff]
  %v1652 = vld [vmem:[#allocation3 + $0x5b8] sm:$0xff]
  %v1653 = vld [vmem:[#allocation3 + $0x5c0] sm:$0xff]
  %v1654 = vld [vmem:[#allocation3 + $0x5c8] sm:$0xff]
  %v1655 = vld [vmem:[#allocation3 + $0x5d0] sm:$0xff]
  %v1656 = vld [vmem:[#allocation3 + $0x5d8] sm:$0xff]
  %v1657 = vld [vmem:[#allocation3 + $0x5e0] sm:$0xff]
  %v1658 = vld [vmem:[#allocation3 + $0x5e8] sm:$0xff]
  %v1659 = vld [vmem:[#allocation3 + $0x5f0] sm:$0xff]
  %v1660 = vld [vmem:[#allocation3 + $0x5f8] sm:$0xff]
  %v1661 = vld [vmem:[#allocation3 + $0x600] sm:$0xff]
  %v1662 = vld [vmem:[#allocation3 + $0x608] sm:$0xff]
  %v1663 = vld [vmem:[#allocation3 + $0x610] sm:$0xff]
  %v1664 = vld [vmem:[#allocation3 + $0x618] sm:$0xff]
  %v1665 = vld [vmem:[#allocation3 + $0x620] sm:$0xff]
  %v1666 = vld [vmem:[#allocation3 + $0x628] sm:$0xff]
  %v1667 = vld [vmem:[#allocation3 + $0x630] sm:$0xff]
  %v1668 = vld [vmem:[#allocation3 + $0x638] sm:$0xff]
  %v1669 = vld [vmem:[#allocation3 + $0x640] sm:$0xff]
  %v1670 = vld [vmem:[#allocation3 + $0x648] sm:$0xff]
  %v1671 = vld [vmem:[#allocation3 + $0x650] sm:$0xff]
  %v1672 = vld [vmem:[#allocation3 + $0x658] sm:$0xff]
  %v1673 = vld [vmem:[#allocation3 + $0x660] sm:$0xff]
  %v1674 = vld [vmem:[#allocation3 + $0x668] sm:$0xff]
  %v1675 = vld [vmem:[#allocation3 + $0x670] sm:$0xff]
  %v1676 = vld [vmem:[#allocation3 + $0x678] sm:$0xff]
  %v1677 = vld [vmem:[#allocation3 + $0x680] sm:$0xff]
  %v1678 = vld [vmem:[#allocation3 + $0x688] sm:$0xff]
  %v1679 = vld [vmem:[#allocation3 + $0x690] sm:$0xff]
  %v1680 = vld [vmem:[#allocation3 + $0x698] sm:$0xff]
  %v1681 = vld [vmem:[#allocation3 + $0x6a0] sm:$0xff]
  %v1682 = vld [vmem:[#allocation3 + $0x6a8] sm:$0xff]
  %v1683 = vld [vmem:[#allocation3 + $0x6b0] sm:$0xff]
  %v1684 = vld [vmem:[#allocation3 + $0x6b8] sm:$0xff]
  %v1685 = vld [vmem:[#allocation3 + $0x6c0] sm:$0xff]
  %v1686 = vld [vmem:[#allocation3 + $0x6c8] sm:$0xff]
  %v1687 = vld [vmem:[#allocation3 + $0x6d0] sm:$0xff]
  %v1688 = vld [vmem:[#allocation3 + $0x6d8] sm:$0xff]
  %v1689 = vld [vmem:[#allocation3 + $0x6e0] sm:$0xff]
  %v1690 = vld [vmem:[#allocation3 + $0x6e8] sm:$0xff]
  %v1691 = vld [vmem:[#allocation3 + $0x6f0] sm:$0xff]
  %v1692 = vld [vmem:[#allocation3 + $0x6f8] sm:$0xff]
  %v1693 = vld [vmem:[#allocation3 + $0x700] sm:$0xff]
  %v1694 = vld [vmem:[#allocation3 + $0x708] sm:$0xff]
  %v1695 = vld [vmem:[#allocation3 + $0x710] sm:$0xff]
  %v1696 = vld [vmem:[#allocation3 + $0x718] sm:$0xff]
  %v1697 = vld [vmem:[#allocation3 + $0x720] sm:$0xff]
  %v1698 = vld [vmem:[#allocation3 + $0x728] sm:$0xff]
  %v1699 = vld [vmem:[#allocation3 + $0x730] sm:$0xff]
  %v1700 = vld [vmem:[#allocation3 + $0x738] sm:$0xff]
  %v1701 = vld [vmem:[#allocation3 + $0x740] sm:$0xff]
  %v1702 = vld [vmem:[#allocation3 + $0x748] sm:$0xff]
  %v1703 = vld [vmem:[#allocation3 + $0x750] sm:$0xff]
  %v1704 = vld [vmem:[#allocation3 + $0x758] sm:$0xff]
  %v1705 = vld [vmem:[#allocation3 + $0x760] sm:$0xff]
  %v1706 = vld [vmem:[#allocation3 + $0x768] sm:$0xff]
  %v1707 = vld [vmem:[#allocation3 + $0x770] sm:$0xff]
  %v1708 = vld [vmem:[#allocation3 + $0x778] sm:$0xff]
  %v1709 = vld [vmem:[#allocation3 + $0x780] sm:$0xff]
  %v1710 = vld [vmem:[#allocation3 + $0x788] sm:$0xff]
  %v1711 = vld [vmem:[#allocation3 + $0x790] sm:$0xff]
  %v1712 = vld [vmem:[#allocation3 + $0x798] sm:$0xff]
  %v1713 = vld [vmem:[#allocation3 + $0x7a0] sm:$0xff]
  %v1714 = vld [vmem:[#allocation3 + $0x7a8] sm:$0xff]
  %v1715 = vld [vmem:[#allocation3 + $0x7b0] sm:$0xff]
  %v1716 = vld [vmem:[#allocation3 + $0x7b8] sm:$0xff]
  %v1717 = vld [vmem:[#allocation3 + $0x7c0] sm:$0xff]
  %v1718 = vld [vmem:[#allocation3 + $0x7c8] sm:$0xff]
  %v1719 = vld [vmem:[#allocation3 + $0x7d0] sm:$0xff]
  %v1720 = vld [vmem:[#allocation3 + $0x7d8] sm:$0xff]
  %v1721 = vld [vmem:[#allocation3 + $0x7e0] sm:$0xff]
  %v1722 = vld [vmem:[#allocation3 + $0x7e8] sm:$0xff]
  %v1723 = vld [vmem:[#allocation3 + $0x7f0] sm:$0xff]
  %v1724 = vld [vmem:[#allocation3 + $0x7f8] sm:$0xff]
  %v1725 = vld [vmem:[#allocation3 + $0x800] sm:$0xff]
  %v1726 = vld [vmem:[#allocation3 + $0x808] sm:$0xff]
  %v1727 = vld [vmem:[#allocation3 + $0x810] sm:$0xff]
  %v1728 = vld [vmem:[#allocation3 + $0x818] sm:$0xff]
  %v1729 = vld [vmem:[#allocation3 + $0x820] sm:$0xff]
  %v1730 = vld [vmem:[#allocation3 + $0x828] sm:$0xff]
  %v1731 = vld [vmem:[#allocation3 + $0x830] sm:$0xff]
  %v1732 = vld [vmem:[#allocation3 + $0x838] sm:$0xff]
  %v1733 = vld [vmem:[#allocation3 + $0x840] sm:$0xff]
  %v1734 = vld [vmem:[#allocation3 + $0x848] sm:$0xff]
  %v1735 = vld [vmem:[#allocation3 + $0x850] sm:$0xff]
  %v1736 = vld [vmem:[#allocation3 + $0x858] sm:$0xff]
  %v1737 = vld [vmem:[#allocation3 + $0x860] sm:$0xff]
  %v1738 = vld [vmem:[#allocation3 + $0x868] sm:$0xff]
  %v1739 = vld [vmem:[#allocation3 + $0x870] sm:$0xff]
  %v1740 = vld [vmem:[#allocation3 + $0x878] sm:$0xff]
  %v1741 = vld [vmem:[#allocation3 + $0x880] sm:$0xff]
  %v1742 = vld [vmem:[#allocation3 + $0x888] sm:$0xff]
  %v1743 = vld [vmem:[#allocation3 + $0x890] sm:$0xff]
  %v1744 = vld [vmem:[#allocation3 + $0x898] sm:$0xff]
  %v1745 = vld [vmem:[#allocation3 + $0x8a0] sm:$0xff]
  %v1746 = vld [vmem:[#allocation3 + $0x8a8] sm:$0xff]
  %v1747 = vld [vmem:[#allocation3 + $0x8b0] sm:$0xff]
  %v1748 = vld [vmem:[#allocation3 + $0x8b8] sm:$0xff]
  %v1749 = vld [vmem:[#allocation3 + $0x8c0] sm:$0xff]
  %v1750 = vld [vmem:[#allocation3 + $0x8c8] sm:$0xff]
  %v1751 = vld [vmem:[#allocation3 + $0x8d0] sm:$0xff]
  %v1752 = vld [vmem:[#allocation3 + $0x8d8] sm:$0xff]
  %v1753 = vld [vmem:[#allocation3 + $0x8e0] sm:$0xff]
  %v1754 = vld [vmem:[#allocation3 + $0x8e8] sm:$0xff]
  %v1755 = vld [vmem:[#allocation3 + $0x8f0] sm:$0xff]
  %v1756 = vld [vmem:[#allocation3 + $0x8f8] sm:$0xff]
  %v1757 = vld [vmem:[#allocation3 + $0x900] sm:$0xff]
  %v1758 = vld [vmem:[#allocation3 + $0x908] sm:$0xff]
  %v1759 = vld [vmem:[#allocation3 + $0x910] sm:$0xff]
  %v1760 = vld [vmem:[#allocation3 + $0x918] sm:$0xff]
  %v1761 = vld [vmem:[#allocation3 + $0x920] sm:$0xff]
  %v1762 = vld [vmem:[#allocation3 + $0x928] sm:$0xff]
  %v1763 = vld [vmem:[#allocation3 + $0x930] sm:$0xff]
  %v1764 = vld [vmem:[#allocation3 + $0x938] sm:$0xff]
  %v1765 = vld [vmem:[#allocation3 + $0x940] sm:$0xff]
  %v1766 = vld [vmem:[#allocation3 + $0x948] sm:$0xff]
  %v1767 = vld [vmem:[#allocation3 + $0x950] sm:$0xff]
  %v1768 = vld [vmem:[#allocation3 + $0x958] sm:$0xff]
  %v1769 = vld [vmem:[#allocation3 + $0x960] sm:$0xff]
  %v1770 = vld [vmem:[#allocation3 + $0x968] sm:$0xff]
  %v1771 = vld [vmem:[#allocation3 + $0x970] sm:$0xff]
  %v1772 = vld [vmem:[#allocation3 + $0x978] sm:$0xff]
  %v1773 = vld [vmem:[#allocation3 + $0x980] sm:$0xff]
  %v1774 = vld [vmem:[#allocation3 + $0x988] sm:$0xff]
  %v1775 = vld [vmem:[#allocation3 + $0x990] sm:$0xff]
  %v1776 = vld [vmem:[#allocation3 + $0x998] sm:$0xff]
  %v1777 = vld [vmem:[#allocation3 + $0x9a0] sm:$0xff]
  %v1778 = vld [vmem:[#allocation3 + $0x9a8] sm:$0xff]
  %v1779 = vld [vmem:[#allocation3 + $0x9b0] sm:$0xff]
  %v1780 = vld [vmem:[#allocation3 + $0x9b8] sm:$0xff]
  %v1781 = vld [vmem:[#allocation3 + $0x9c0] sm:$0xff]
  %v1782 = vld [vmem:[#allocation3 + $0x9c8] sm:$0xff]
  %v1783 = vld [vmem:[#allocation3 + $0x9d0] sm:$0xff]
  %v1784 = vld [vmem:[#allocation3 + $0x9d8] sm:$0xff]
  %v1785 = vld [vmem:[#allocation3 + $0x9e0] sm:$0xff]
  %v1786 = vld [vmem:[#allocation3 + $0x9e8] sm:$0xff]
  %v1787 = vld [vmem:[#allocation3 + $0x9f0] sm:$0xff]
  %v1788 = vld [vmem:[#allocation3 + $0x9f8] sm:$0xff]
  %v1789 = vld [vmem:[#allocation3 + $0xa00] sm:$0xff]
  %v1790 = vld [vmem:[#allocation3 + $0xa08] sm:$0xff]
  %v1791 = vld [vmem:[#allocation3 + $0xa10] sm:$0xff]
  %v1792 = vld [vmem:[#allocation3 + $0xa18] sm:$0xff]
  %v1793 = vld [vmem:[#allocation3 + $0xa20] sm:$0xff]
  %v1794 = vld [vmem:[#allocation3 + $0xa28] sm:$0xff]
  %v1795 = vld [vmem:[#allocation3 + $0xa30] sm:$0xff]
  %v1796 = vld [vmem:[#allocation3 + $0xa38] sm:$0xff]
  %v1797 = vld [vmem:[#allocation3 + $0xa40] sm:$0xff]
  %v1798 = vld [vmem:[#allocation3 + $0xa48] sm:$0xff]
  %v1799 = vld [vmem:[#allocation3 + $0xa50] sm:$0xff]
  %v1800 = vld [vmem:[#allocation3 + $0xa58] sm:$0xff]
  %v1801 = vld [vmem:[#allocation3 + $0xa60] sm:$0xff]
  %v1802 = vld [vmem:[#allocation3 + $0xa68] sm:$0xff]
  %v1803 = vld [vmem:[#allocation3 + $0xa70] sm:$0xff]
  %v1804 = vld [vmem:[#allocation3 + $0xa78] sm:$0xff]
  %v1805 = vld [vmem:[#allocation3 + $0xa80] sm:$0xff]
  %v1806 = vld [vmem:[#allocation3 + $0xa88] sm:$0xff]
  %v1807 = vld [vmem:[#allocation3 + $0xa90] sm:$0xff]
  %v1808 = vld [vmem:[#allocation3 + $0xa98] sm:$0xff]
  %v1809 = vld [vmem:[#allocation3 + $0xaa0] sm:$0xff]
  %v1810 = vld [vmem:[#allocation3 + $0xaa8] sm:$0xff]
  %v1811 = vld [vmem:[#allocation3 + $0xab0] sm:$0xff]
  %v1812 = vld [vmem:[#allocation3 + $0xab8] sm:$0xff]
  %v1813 = vld [vmem:[#allocation3 + $0xac0] sm:$0xff]
  %v1814 = vld [vmem:[#allocation3 + $0xac8] sm:$0xff]
  %v1815 = vld [vmem:[#allocation3 + $0xad0] sm:$0xff]
  %v1816 = vld [vmem:[#allocation3 + $0xad8] sm:$0xff]
  %v1817 = vld [vmem:[#allocation3 + $0xae0] sm:$0xff]
  %v1818 = vld [vmem:[#allocation3 + $0xae8] sm:$0xff]
  %v1819 = vld [vmem:[#allocation3 + $0xaf0] sm:$0xff]
  %v1820 = vld [vmem:[#allocation3 + $0xaf8] sm:$0xff]
  %v1821 = vld [vmem:[#allocation3 + $0xb00] sm:$0xff]
  %v1822 = vld [vmem:[#allocation3 + $0xb08] sm:$0xff]
  %v1823 = vld [vmem:[#allocation3 + $0xb10] sm:$0xff]
  %v1824 = vld [vmem:[#allocation3 + $0xb18] sm:$0xff]
  %v1825 = vld [vmem:[#allocation3 + $0xb20] sm:$0xff]
  %v1826 = vld [vmem:[#allocation3 + $0xb28] sm:$0xff]
  %v1827 = vld [vmem:[#allocation3 + $0xb30] sm:$0xff]
  %v1828 = vld [vmem:[#allocation3 + $0xb38] sm:$0xff]
  %v1829 = vld [vmem:[#allocation3 + $0xb40] sm:$0xff]
  %v1830 = vld [vmem:[#allocation3 + $0xb48] sm:$0xff]
  %v1831 = vld [vmem:[#allocation3 + $0xb50] sm:$0xff]
  %v1832 = vld [vmem:[#allocation3 + $0xb58] sm:$0xff]
  %v1833 = vld [vmem:[#allocation3 + $0xb60] sm:$0xff]
  %v1834 = vld [vmem:[#allocation3 + $0xb68] sm:$0xff]
  %v1835 = vld [vmem:[#allocation3 + $0xb70] sm:$0xff]
  %v1836 = vld [vmem:[#allocation3 + $0xb78] sm:$0xff]
  %v1837 = vld [vmem:[#allocation3 + $0xb80] sm:$0xff]
  %v1838 = vld [vmem:[#allocation3 + $0xb88] sm:$0xff]
  %v1839 = vld [vmem:[#allocation3 + $0xb90] sm:$0xff]
  %v1840 = vld [vmem:[#allocation3 + $0xb98] sm:$0xff]
  %v1841 = vld [vmem:[#allocation3 + $0xba0] sm:$0xff]
  %v1842 = vld [vmem:[#allocation3 + $0xba8] sm:$0xff]
  %v1843 = vld [vmem:[#allocation3 + $0xbb0] sm:$0xff]
  %v1844 = vld [vmem:[#allocation3 + $0xbb8] sm:$0xff]
  %v1845 = vld [vmem:[#allocation3 + $0xbc0] sm:$0xff]
  %v1846 = vld [vmem:[#allocation3 + $0xbc8] sm:$0xff]
  %v1847 = vld [vmem:[#allocation3 + $0xbd0] sm:$0xff]
  %v1848 = vld [vmem:[#allocation3 + $0xbd8] sm:$0xff]
  %v1849 = vld [vmem:[#allocation3 + $0xbe0] sm:$0xff]
  %v1850 = vld [vmem:[#allocation3 + $0xbe8] sm:$0xff]
  %v1851 = vld [vmem:[#allocation3 + $0xbf0] sm:$0xff]
  %v1852 = vld [vmem:[#allocation3 + $0xbf8] sm:$0xff]
  %v1853 = vld [vmem:[#allocation3 + $0xc00] sm:$0xff]
  %v1854 = vld [vmem:[#allocation3 + $0xc08] sm:$0xff]
  %v1855 = vld [vmem:[#allocation3 + $0xc10] sm:$0xff]
  %v1856 = vld [vmem:[#allocation3 + $0xc18] sm:$0xff]
  %v1857 = vld [vmem:[#allocation3 + $0xc20] sm:$0xff]
  %v1858 = vld [vmem:[#allocation3 + $0xc28] sm:$0xff]
  %v1859 = vld [vmem:[#allocation3 + $0xc30] sm:$0xff]
  %v1860 = vld [vmem:[#allocation3 + $0xc38] sm:$0xff]
  %v1861 = vld [vmem:[#allocation3 + $0xc40] sm:$0xff]
  %v1862 = vld [vmem:[#allocation3 + $0xc48] sm:$0xff]
  %v1863 = vld [vmem:[#allocation3 + $0xc50] sm:$0xff]
  %v1864 = vld [vmem:[#allocation3 + $0xc58] sm:$0xff]
  %v1865 = vld [vmem:[#allocation3 + $0xc60] sm:$0xff]
  %v1866 = vld [vmem:[#allocation3 + $0xc68] sm:$0xff]
  %v1867 = vld [vmem:[#allocation3 + $0xc70] sm:$0xff]
  %v1868 = vld [vmem:[#allocation3 + $0xc78] sm:$0xff]
  %v1869 = vld [vmem:[#allocation3 + $0xc80] sm:$0xff]
  %v1870 = vld [vmem:[#allocation3 + $0xc88] sm:$0xff]
  %v1871 = vld [vmem:[#allocation3 + $0xc90] sm:$0xff]
  %v1872 = vld [vmem:[#allocation3 + $0xc98] sm:$0xff]
  %v1873 = vld [vmem:[#allocation3 + $0xca0] sm:$0xff]
  %v1874 = vld [vmem:[#allocation3 + $0xca8] sm:$0xff]
  %v1875 = vld [vmem:[#allocation3 + $0xcb0] sm:$0xff]
  %v1876 = vld [vmem:[#allocation3 + $0xcb8] sm:$0xff]
  %v1877 = vld [vmem:[#allocation3 + $0xcc0] sm:$0xff]
  %v1878 = vld [vmem:[#allocation3 + $0xcc8] sm:$0xff]
  %v1879 = vld [vmem:[#allocation3 + $0xcd0] sm:$0xff]
  %v1880 = vld [vmem:[#allocation3 + $0xcd8] sm:$0xff]
  %v1881 = vld [vmem:[#allocation3 + $0xce0] sm:$0xff]
  %v1882 = vld [vmem:[#allocation3 + $0xce8] sm:$0xff]
  %v1883 = vld [vmem:[#allocation3 + $0xcf0] sm:$0xff]
  %v1884 = vld [vmem:[#allocation3 + $0xcf8] sm:$0xff]
  %v1885 = vld [vmem:[#allocation3 + $0xd00] sm:$0xff]
  %v1886 = vld [vmem:[#allocation3 + $0xd08] sm:$0xff]
  %v1887 = vld [vmem:[#allocation3 + $0xd10] sm:$0xff]
  %v1888 = vld [vmem:[#allocation3 + $0xd18] sm:$0xff]
  %v1889 = vld [vmem:[#allocation3 + $0xd20] sm:$0xff]
  %v1890 = vld [vmem:[#allocation3 + $0xd28] sm:$0xff]
  %v1891 = vld [vmem:[#allocation3 + $0xd30] sm:$0xff]
  %v1892 = vld [vmem:[#allocation3 + $0xd38] sm:$0xff]
  %v1893 = vld [vmem:[#allocation3 + $0xd40] sm:$0xff]
  %v1894 = vld [vmem:[#allocation3 + $0xd48] sm:$0xff]
  %v1895 = vld [vmem:[#allocation3 + $0xd50] sm:$0xff]
  %v1896 = vld [vmem:[#allocation3 + $0xd58] sm:$0xff]
  %v1897 = vld [vmem:[#allocation3 + $0xd60] sm:$0xff]
  %v1898 = vld [vmem:[#allocation3 + $0xd68] sm:$0xff]
  %v1899 = vld [vmem:[#allocation3 + $0xd70] sm:$0xff]
  %v1900 = vld [vmem:[#allocation3 + $0xd78] sm:$0xff]
  %v1901 = vld [vmem:[#allocation3 + $0xd80] sm:$0xff]
  %v1902 = vld [vmem:[#allocation3 + $0xd88] sm:$0xff]
  %v1903 = vld [vmem:[#allocation3 + $0xd90] sm:$0xff]
  %v1904 = vld [vmem:[#allocation3 + $0xd98] sm:$0xff]
  %v1905 = vld [vmem:[#allocation3 + $0xda0] sm:$0xff]
  %v1906 = vld [vmem:[#allocation3 + $0xda8] sm:$0xff]
  %v1907 = vld [vmem:[#allocation3 + $0xdb0] sm:$0xff]
  %v1908 = vld [vmem:[#allocation3 + $0xdb8] sm:$0xff]
  %v1909 = vld [vmem:[#allocation3 + $0xdc0] sm:$0xff]
  %v1910 = vld [vmem:[#allocation3 + $0xdc8] sm:$0xff]
  %v1911 = vld [vmem:[#allocation3 + $0xdd0] sm:$0xff]
  %v1912 = vld [vmem:[#allocation3 + $0xdd8] sm:$0xff]
  %v1913 = vld [vmem:[#allocation3 + $0xde0] sm:$0xff]
  %v1914 = vld [vmem:[#allocation3 + $0xde8] sm:$0xff]
  %v1915 = vld [vmem:[#allocation3 + $0xdf0] sm:$0xff]
  %v1916 = vld [vmem:[#allocation3 + $0xdf8] sm:$0xff]
  %v1917 = vld [vmem:[#allocation3 + $0xe00] sm:$0xff]
  %v1918 = vld [vmem:[#allocation3 + $0xe08] sm:$0xff]
  %v1919 = vld [vmem:[#allocation3 + $0xe10] sm:$0xff]
  %v1920 = vld [vmem:[#allocation3 + $0xe18] sm:$0xff]
  %v1921 = vld [vmem:[#allocation3 + $0xe20] sm:$0xff]
  %v1922 = vld [vmem:[#allocation3 + $0xe28] sm:$0xff]
  %v1923 = vld [vmem:[#allocation3 + $0xe30] sm:$0xff]
  %v1924 = vld [vmem:[#allocation3 + $0xe38] sm:$0xff]
  %v1925 = vld [vmem:[#allocation3 + $0xe40] sm:$0xff]
  %v1926 = vld [vmem:[#allocation3 + $0xe48] sm:$0xff]
  %v1927 = vld [vmem:[#allocation3 + $0xe50] sm:$0xff]
  %v1928 = vld [vmem:[#allocation3 + $0xe58] sm:$0xff]
  %v1929 = vld [vmem:[#allocation3 + $0xe60] sm:$0xff]
  %v1930 = vld [vmem:[#allocation3 + $0xe68] sm:$0xff]
  %v1931 = vld [vmem:[#allocation3 + $0xe70] sm:$0xff]
  %v1932 = vld [vmem:[#allocation3 + $0xe78] sm:$0xff]
  %v1933 = vld [vmem:[#allocation3 + $0xe80] sm:$0xff]
  %v1934 = vld [vmem:[#allocation3 + $0xe88] sm:$0xff]
  %v1935 = vld [vmem:[#allocation3 + $0xe90] sm:$0xff]
  %v1936 = vld [vmem:[#allocation3 + $0xe98] sm:$0xff]
  %v1937 = vld [vmem:[#allocation3 + $0xea0] sm:$0xff]
  %v1938 = vld [vmem:[#allocation3 + $0xea8] sm:$0xff]
  %v1939 = vld [vmem:[#allocation3 + $0xeb0] sm:$0xff]
  %v1940 = vld [vmem:[#allocation3 + $0xeb8] sm:$0xff]
  %v1941 = vld [vmem:[#allocation3 + $0xec0] sm:$0xff]
  %v1942 = vld [vmem:[#allocation3 + $0xec8] sm:$0xff]
  %v1943 = vld [vmem:[#allocation3 + $0xed0] sm:$0xff]
  %v1944 = vld [vmem:[#allocation3 + $0xed8] sm:$0xff]
  %v1945 = vld [vmem:[#allocation3 + $0xee0] sm:$0xff]
  %v1946 = vld [vmem:[#allocation3 + $0xee8] sm:$0xff]
  %v1947 = vld [vmem:[#allocation3 + $0xef0] sm:$0xff]
  %v1948 = vld [vmem:[#allocation3 + $0xef8] sm:$0xff]
  %v1949 = vld [vmem:[#allocation3 + $0xf00] sm:$0xff]
  %v1950 = vld [vmem:[#allocation3 + $0xf08] sm:$0xff]
  %v1951 = vld [vmem:[#allocation3 + $0xf10] sm:$0xff]
  %v1952 = vld [vmem:[#allocation3 + $0xf18] sm:$0xff]
  %v1953 = vld [vmem:[#allocation3 + $0xf20] sm:$0xff]
  %v1954 = vld [vmem:[#allocation3 + $0xf28] sm:$0xff]
  %v1955 = vld [vmem:[#allocation3 + $0xf30] sm:$0xff]
  %v1956 = vld [vmem:[#allocation3 + $0xf38] sm:$0xff]
  %v1957 = vld [vmem:[#allocation3 + $0xf40] sm:$0xff]
  %v1958 = vld [vmem:[#allocation3 + $0xf48] sm:$0xff]
  %v1959 = vld [vmem:[#allocation3 + $0xf50] sm:$0xff]
  %v1960 = vld [vmem:[#allocation3 + $0xf58] sm:$0xff]
  %v1961 = vld [vmem:[#allocation3 + $0xf60] sm:$0xff]
  %v1962 = vld [vmem:[#allocation3 + $0xf68] sm:$0xff]
  %v1963 = vld [vmem:[#allocation3 + $0xf70] sm:$0xff]
  %v1964 = vld [vmem:[#allocation3 + $0xf78] sm:$0xff]
  %v1965 = vld [vmem:[#allocation3 + $0xf80] sm:$0xff]
  %v1966 = vld [vmem:[#allocation3 + $0xf88] sm:$0xff]
  %v1967 = vld [vmem:[#allocation3 + $0xf90] sm:$0xff]
  %v1968 = vld [vmem:[#allocation3 + $0xf98] sm:$0xff]
  %v1969 = vld [vmem:[#allocation3 + $0xfa0] sm:$0xff]
  %v1970 = vld [vmem:[#allocation3 + $0xfa8] sm:$0xff]
  %v1971 = vld [vmem:[#allocation3 + $0xfb0] sm:$0xff]
  %v1972 = vld [vmem:[#allocation3 + $0xfb8] sm:$0xff]
  %v1973 = vld [vmem:[#allocation3 + $0xfc0] sm:$0xff]
  %v1974 = vld [vmem:[#allocation3 + $0xfc8] sm:$0xff]
  %v1975 = vld [vmem:[#allocation3 + $0xfd0] sm:$0xff]
  %v1976 = vld [vmem:[#allocation3 + $0xfd8] sm:$0xff]
  %v1977 = vld [vmem:[#allocation3 + $0xfe0] sm:$0xff]
  %v1978 = vld [vmem:[#allocation3 + $0xfe8] sm:$0xff]
  %v1979 = vld [vmem:[#allocation3 + $0xff0] sm:$0xff]
  %v1980 = vld [vmem:[#allocation3 + $0xff8] sm:$0xff]
  %v1981 = vld [vmem:[#allocation3 + $0x1000] sm:$0xff]
  %v1982 = vld [vmem:[#allocation3 + $0x1008] sm:$0xff]
  %v1983 = vld [vmem:[#allocation3 + $0x1010] sm:$0xff]
  %v1984 = vld [vmem:[#allocation3 + $0x1018] sm:$0xff]
  %v1985 = vld [vmem:[#allocation3 + $0x1020] sm:$0xff]
  %v1986 = vld [vmem:[#allocation3 + $0x1028] sm:$0xff]
  %v1987 = vld [vmem:[#allocation3 + $0x1030] sm:$0xff]
  %v1988 = vld [vmem:[#allocation3 + $0x1038] sm:$0xff]
  %v1989 = vld [vmem:[#allocation3 + $0x1040] sm:$0xff]
  %v1990 = vld [vmem:[#allocation3 + $0x1048] sm:$0xff]
  %v1991 = vld [vmem:[#allocation3 + $0x1050] sm:$0xff]
  %v1992 = vld [vmem:[#allocation3 + $0x1058] sm:$0xff]
  %v1993 = vld [vmem:[#allocation3 + $0x1060] sm:$0xff]
  %v1994 = vld [vmem:[#allocation3 + $0x1068] sm:$0xff]
  %v1995 = vld [vmem:[#allocation3 + $0x1070] sm:$0xff]
  %v1996 = vld [vmem:[#allocation3 + $0x1078] sm:$0xff]
  %v1997 = vld [vmem:[#allocation3 + $0x1080] sm:$0xff]
  %v1998 = vld [vmem:[#allocation3 + $0x1088] sm:$0xff]
  %v1999 = vld [vmem:[#allocation3 + $0x1090] sm:$0xff]
  %v2000 = vld [vmem:[#allocation3 + $0x1098] sm:$0xff]
  %v2001 = vld [vmem:[#allocation3 + $0x10a0] sm:$0xff]
  %v2002 = vld [vmem:[#allocation3 + $0x10a8] sm:$0xff]
  %v2003 = vld [vmem:[#allocation3 + $0x10b0] sm:$0xff]
  %v2004 = vld [vmem:[#allocation3 + $0x10b8] sm:$0xff]
  %v2005 = vld [vmem:[#allocation3 + $0x10c0] sm:$0xff]
  %v2006 = vld [vmem:[#allocation3 + $0x10c8] sm:$0xff]
  %v2007 = vld [vmem:[#allocation3 + $0x10d0] sm:$0xff]
  %v2008 = vld [vmem:[#allocation3 + $0x10d8] sm:$0xff]
  %v2009 = vld [vmem:[#allocation3 + $0x10e0] sm:$0xff]
  %v2010 = vld [vmem:[#allocation3 + $0x10e8] sm:$0xff]
  %v2011 = vld [vmem:[#allocation3 + $0x10f0] sm:$0xff]
  %v2012 = vld [vmem:[#allocation3 + $0x10f8] sm:$0xff]
  %v2013 = vld [vmem:[#allocation3 + $0x1100] sm:$0xff]
  %v2014 = vld [vmem:[#allocation3 + $0x1108] sm:$0xff]
  %v2015 = vld [vmem:[#allocation3 + $0x1110] sm:$0xff]
  %v2016 = vld [vmem:[#allocation3 + $0x1118] sm:$0xff]
  %v2017 = vld [vmem:[#allocation3 + $0x1120] sm:$0xff]
  %v2018 = vld [vmem:[#allocation3 + $0x1128] sm:$0xff]
  %v2019 = vld [vmem:[#allocation3 + $0x1130] sm:$0xff]
  %v2020 = vld [vmem:[#allocation3 + $0x1138] sm:$0xff]
  %v2021 = vld [vmem:[#allocation3 + $0x1140] sm:$0xff]
  %v2022 = vld [vmem:[#allocation3 + $0x1148] sm:$0xff]
  %v2023 = vld [vmem:[#allocation3 + $0x1150] sm:$0xff]
  %v2024 = vld [vmem:[#allocation3 + $0x1158] sm:$0xff]
  %v2025 = vld [vmem:[#allocation3 + $0x1160] sm:$0xff]
  %v2026 = vld [vmem:[#allocation3 + $0x1168] sm:$0xff]
  %v2027 = vld [vmem:[#allocation3 + $0x1170] sm:$0xff]
  %v2028 = vld [vmem:[#allocation3 + $0x1178] sm:$0xff]
  %v2029 = vld [vmem:[#allocation3 + $0x1180] sm:$0xff]
  %v2030 = vld [vmem:[#allocation3 + $0x1188] sm:$0xff]
  %v2031 = vld [vmem:[#allocation3 + $0x1190] sm:$0xff]
  %v2032 = vld [vmem:[#allocation3 + $0x1198] sm:$0xff]
  %v2033 = vld [vmem:[#allocation3 + $0x11a0] sm:$0xff]
  %v2034 = vld [vmem:[#allocation3 + $0x11a8] sm:$0xff]
  %v2035 = vld [vmem:[#allocation3 + $0x11b0] sm:$0xff]
  %v2036 = vld [vmem:[#allocation3 + $0x11b8] sm:$0xff]
  %v2037 = vld [vmem:[#allocation3 + $0x11c0] sm:$0xff]
  %v2038 = vld [vmem:[#allocation3 + $0x11c8] sm:$0xff]
  %v2039 = vld [vmem:[#allocation3 + $0x11d0] sm:$0xff]
  %v2040 = vld [vmem:[#allocation3 + $0x11d8] sm:$0xff]
  %v2041 = vld [vmem:[#allocation3 + $0x11e0] sm:$0xff]
  %v2042 = vld [vmem:[#allocation3 + $0x11e8] sm:$0xff]
  %v2043 = vld [vmem:[#allocation3 + $0x11f0] sm:$0xff]
  %v2044 = vld [vmem:[#allocation3 + $0x11f8] sm:$0xff]
  %v2045 = vld [vmem:[%s1] sm:$0xff]
  %v2046 = vld [vmem:[%s1 + $0x8] sm:$0xff]
  %v2047 = vld [vmem:[%s1 + $0x10] sm:$0xff]
  %v2048 = vld [vmem:[%s1 + $0x18] sm:$0xff]
  %v2049 = vld [vmem:[%s1 + $0x20] sm:$0xff]
  %v2050 = vld [vmem:[%s1 + $0x28] sm:$0xff]
  %v2051 = vld [vmem:[%s1 + $0x30] sm:$0xff]
  %v2052 = vld [vmem:[%s1 + $0x38] sm:$0xff]
  %v2053 = vld [vmem:[%s1 + $0x40] sm:$0xff]
  %v2054 = vld [vmem:[%s1 + $0x48] sm:$0xff]
  %v2055 = vld [vmem:[%s1 + $0x50] sm:$0xff]
  %v2056 = vld [vmem:[%s1 + $0x58] sm:$0xff]
  %v2057 = vld [vmem:[%s1 + $0x60] sm:$0xff]
  %v2058 = vld [vmem:[%s1 + $0x68] sm:$0xff]
  %v2059 = vld [vmem:[%s1 + $0x70] sm:$0xff]
  %v2060 = vld [vmem:[%s1 + $0x78] sm:$0xff]
  %v2061 = vld [vmem:[%s1 + $0x80] sm:$0xff]
  %v2062 = vld [vmem:[%s1 + $0x88] sm:$0xff]
  %v2063 = vld [vmem:[%s1 + $0x90] sm:$0xff]
  %v2064 = vld [vmem:[%s1 + $0x98] sm:$0xff]
  %v2065 = vld [vmem:[%s1 + $0xa0] sm:$0xff]
  %v2066 = vld [vmem:[%s1 + $0xa8] sm:$0xff]
  %v2067 = vld [vmem:[%s1 + $0xb0] sm:$0xff]
  %v2068 = vld [vmem:[%s1 + $0xb8] sm:$0xff]
  %v2069 = vld [vmem:[%s1 + $0xc0] sm:$0xff]
  %v2070 = vld [vmem:[%s1 + $0xc8] sm:$0xff]
  %v2071 = vld [vmem:[%s1 + $0xd0] sm:$0xff]
  %v2072 = vld [vmem:[%s1 + $0xd8] sm:$0xff]
  %v2073 = vld [vmem:[%s1 + $0xe0] sm:$0xff]
  %v2074 = vld [vmem:[%s1 + $0xe8] sm:$0xff]
  %v2075 = vld [vmem:[%s1 + $0xf0] sm:$0xff]
  %v2076 = vld [vmem:[%s1 + $0xf8] sm:$0xff]
  %v2077 = vld [vmem:[%s1 + $0x100] sm:$0xff]
  %v2078 = vld [vmem:[%s1 + $0x108] sm:$0xff]
  %v2079 = vld [vmem:[%s1 + $0x110] sm:$0xff]
  %v2080 = vld [vmem:[%s1 + $0x118] sm:$0xff]
  %v2081 = vld [vmem:[%s1 + $0x120] sm:$0xff]
  %v2082 = vld [vmem:[%s1 + $0x128] sm:$0xff]
  %v2083 = vld [vmem:[%s1 + $0x130] sm:$0xff]
  %v2084 = vld [vmem:[%s1 + $0x138] sm:$0xff]
  %v2085 = vld [vmem:[%s1 + $0x140] sm:$0xff]
  %v2086 = vld [vmem:[%s1 + $0x148] sm:$0xff]
  %v2087 = vld [vmem:[%s1 + $0x150] sm:$0xff]
  %v2088 = vld [vmem:[%s1 + $0x158] sm:$0xff]
  %v2089 = vld [vmem:[%s1 + $0x160] sm:$0xff]
  %v2090 = vld [vmem:[%s1 + $0x168] sm:$0xff]
  %v2091 = vld [vmem:[%s1 + $0x170] sm:$0xff]
  %v2092 = vld [vmem:[%s1 + $0x178] sm:$0xff]
  %v2093 = vld [vmem:[%s1 + $0x180] sm:$0xff]
  %v2094 = vld [vmem:[%s1 + $0x188] sm:$0xff]
  %v2095 = vld [vmem:[%s1 + $0x190] sm:$0xff]
  %v2096 = vld [vmem:[%s1 + $0x198] sm:$0xff]
  %v2097 = vld [vmem:[%s1 + $0x1a0] sm:$0xff]
  %v2098 = vld [vmem:[%s1 + $0x1a8] sm:$0xff]
  %v2099 = vld [vmem:[%s1 + $0x1b0] sm:$0xff]
  %v2100 = vld [vmem:[%s1 + $0x1b8] sm:$0xff]
  %v2101 = vld [vmem:[%s1 + $0x1c0] sm:$0xff]
  %v2102 = vld [vmem:[%s1 + $0x1c8] sm:$0xff]
  %v2103 = vld [vmem:[%s1 + $0x1d0] sm:$0xff]
  %v2104 = vld [vmem:[%s1 + $0x1d8] sm:$0xff]
  %v2105 = vld [vmem:[%s1 + $0x1e0] sm:$0xff]
  %v2106 = vld [vmem:[%s1 + $0x1e8] sm:$0xff]
  %v2107 = vld [vmem:[%s1 + $0x1f0] sm:$0xff]
  %v2108 = vld [vmem:[%s1 + $0x1f8] sm:$0xff]
  %v2109 = vld [vmem:[%s1 + $0x200] sm:$0xff]
  %v2110 = vld [vmem:[%s1 + $0x208] sm:$0xff]
  %v2111 = vld [vmem:[%s1 + $0x210] sm:$0xff]
  %v2112 = vld [vmem:[%s1 + $0x218] sm:$0xff]
  %v2113 = vld [vmem:[%s1 + $0x220] sm:$0xff]
  %v2114 = vld [vmem:[%s1 + $0x228] sm:$0xff]
  %v2115 = vld [vmem:[%s1 + $0x230] sm:$0xff]
  %v2116 = vld [vmem:[%s1 + $0x238] sm:$0xff]
  %v2117 = vld [vmem:[%s1 + $0x240] sm:$0xff]
  %v2118 = vld [vmem:[%s1 + $0x248] sm:$0xff]
  %v2119 = vld [vmem:[%s1 + $0x250] sm:$0xff]
  %v2120 = vld [vmem:[%s1 + $0x258] sm:$0xff]
  %v2121 = vld [vmem:[%s1 + $0x260] sm:$0xff]
  %v2122 = vld [vmem:[%s1 + $0x268] sm:$0xff]
  %v2123 = vld [vmem:[%s1 + $0x270] sm:$0xff]
  %v2124 = vld [vmem:[%s1 + $0x278] sm:$0xff]
  %v2125 = vld [vmem:[%s1 + $0x280] sm:$0xff]
  %v2126 = vld [vmem:[%s1 + $0x288] sm:$0xff]
  %v2127 = vld [vmem:[%s1 + $0x290] sm:$0xff]
  %v2128 = vld [vmem:[%s1 + $0x298] sm:$0xff]
  %v2129 = vld [vmem:[%s1 + $0x2a0] sm:$0xff]
  %v2130 = vld [vmem:[%s1 + $0x2a8] sm:$0xff]
  %v2131 = vld [vmem:[%s1 + $0x2b0] sm:$0xff]
  %v2132 = vld [vmem:[%s1 + $0x2b8] sm:$0xff]
  %v2133 = vld [vmem:[%s1 + $0x2c0] sm:$0xff]
  %v2134 = vld [vmem:[%s1 + $0x2c8] sm:$0xff]
  %v2135 = vld [vmem:[%s1 + $0x2d0] sm:$0xff]
  %v2136 = vld [vmem:[%s1 + $0x2d8] sm:$0xff]
  %v2137 = vld [vmem:[%s1 + $0x2e0] sm:$0xff]
  %v2138 = vld [vmem:[%s1 + $0x2e8] sm:$0xff]
  %v2139 = vld [vmem:[%s1 + $0x2f0] sm:$0xff]
  %v2140 = vld [vmem:[%s1 + $0x2f8] sm:$0xff]
  %v2141 = vld [vmem:[%s1 + $0x300] sm:$0xff]
  %v2142 = vld [vmem:[%s1 + $0x308] sm:$0xff]
  %v2143 = vld [vmem:[%s1 + $0x310] sm:$0xff]
  %v2144 = vld [vmem:[%s1 + $0x318] sm:$0xff]
  %v2145 = vld [vmem:[%s1 + $0x320] sm:$0xff]
  %v2146 = vld [vmem:[%s1 + $0x328] sm:$0xff]
  %v2147 = vld [vmem:[%s1 + $0x330] sm:$0xff]
  %v2148 = vld [vmem:[%s1 + $0x338] sm:$0xff]
  %v2149 = vld [vmem:[%s1 + $0x340] sm:$0xff]
  %v2150 = vld [vmem:[%s1 + $0x348] sm:$0xff]
  %v2151 = vld [vmem:[%s1 + $0x350] sm:$0xff]
  %v2152 = vld [vmem:[%s1 + $0x358] sm:$0xff]
  %v2153 = vld [vmem:[%s1 + $0x360] sm:$0xff]
  %v2154 = vld [vmem:[%s1 + $0x368] sm:$0xff]
  %v2155 = vld [vmem:[%s1 + $0x370] sm:$0xff]
  %v2156 = vld [vmem:[%s1 + $0x378] sm:$0xff]
  %v2157 = vld [vmem:[%s1 + $0x380] sm:$0xff]
  %v2158 = vld [vmem:[%s1 + $0x388] sm:$0xff]
  %v2159 = vld [vmem:[%s1 + $0x390] sm:$0xff]
  %v2160 = vld [vmem:[%s1 + $0x398] sm:$0xff]
  %v2161 = vld [vmem:[%s1 + $0x3a0] sm:$0xff]
  %v2162 = vld [vmem:[%s1 + $0x3a8] sm:$0xff]
  %v2163 = vld [vmem:[%s1 + $0x3b0] sm:$0xff]
  %v2164 = vld [vmem:[%s1 + $0x3b8] sm:$0xff]
  %v2165 = vld [vmem:[%s1 + $0x3c0] sm:$0xff]
  %v2166 = vld [vmem:[%s1 + $0x3c8] sm:$0xff]
  %v2167 = vld [vmem:[%s1 + $0x3d0] sm:$0xff]
  %v2168 = vld [vmem:[%s1 + $0x3d8] sm:$0xff]
  %v2169 = vld [vmem:[%s1 + $0x3e0] sm:$0xff]
  %v2170 = vld [vmem:[%s1 + $0x3e8] sm:$0xff]
  %v2171 = vld [vmem:[%s1 + $0x3f0] sm:$0xff]
  %v2172 = vld [vmem:[%s1 + $0x3f8] sm:$0xff]
  %v2173 = vld [vmem:[%s1 + $0x400] sm:$0xff]
  %v2174 = vld [vmem:[%s1 + $0x408] sm:$0xff]
  %v2175 = vld [vmem:[%s1 + $0x410] sm:$0xff]
  %v2176 = vld [vmem:[%s1 + $0x418] sm:$0xff]
  %v2177 = vld [vmem:[%s1 + $0x420] sm:$0xff]
  %v2178 = vld [vmem:[%s1 + $0x428] sm:$0xff]
  %v2179 = vld [vmem:[%s1 + $0x430] sm:$0xff]
  %v2180 = vld [vmem:[%s1 + $0x438] sm:$0xff]
  %v2181 = vld [vmem:[%s1 + $0x440] sm:$0xff]
  %v2182 = vld [vmem:[%s1 + $0x448] sm:$0xff]
  %v2183 = vld [vmem:[%s1 + $0x450] sm:$0xff]
  %v2184 = vld [vmem:[%s1 + $0x458] sm:$0xff]
  %v2185 = vld [vmem:[%s1 + $0x460] sm:$0xff]
  %v2186 = vld [vmem:[%s1 + $0x468] sm:$0xff]
  %v2187 = vld [vmem:[%s1 + $0x470] sm:$0xff]
  %v2188 = vld [vmem:[%s1 + $0x478] sm:$0xff]
  %v2189 = vld [vmem:[%s2] sm:$0x1]
  %v2191 = vlaneseq
  %v2192 = vshrl.u32 %v2191, 7
  %v2193 = vsub.s32 0, %v2192
  %v2194 = vrot.slane %v2189, %v2193
  %2196 = vmatprep.subr.mxu0 0.0
  %2197 = vmatpush1.msra.mxu0 %v2045
  %2198 = vmatprep.subr.mxu0 0.0
  %2199 = vmatpush1.msra.mxu0 %v2046
  %2200 = vmatprep.subr.mxu0 0.0
  %2201 = vmatpush1.msra.mxu0 %v2047
  %2202 = vmatprep.subr.mxu0 0.0
  %2203 = vmatpush1.msra.mxu0 %v2048
  %2204 = vmatprep.subr.mxu0 0.0
  %2205 = vmatpush1.msra.mxu0 %v2049
  %2206 = vmatprep.subr.mxu0 0.0
  %2207 = vmatpush1.msra.mxu0 %v2050
  %2208 = vmatprep.subr.mxu0 0.0
  %2209 = vmatpush1.msra.mxu0 %v2051
  %2210 = vmatprep.subr.mxu0 0.0
  %2211 = vmatpush1.msra.mxu0 %v2052
  %2212 = vmatprep.subr.mxu0 0.0
  %2213 = vmatpush1.msra.mxu0 %v2053
  %2214 = vmatprep.subr.mxu0 0.0
  %2215 = vmatpush1.msra.mxu0 %v2054
  %2216 = vmatprep.subr.mxu0 0.0
  %2217 = vmatpush1.msra.mxu0 %v2055
  %2218 = vmatprep.subr.mxu0 0.0
  %2219 = vmatpush1.msra.mxu0 %v2056
  %2220 = vmatprep.subr.mxu0 0.0
  %2221 = vmatpush1.msra.mxu0 %v2057
  %2222 = vmatprep.subr.mxu0 0.0
  %2223 = vmatpush1.msra.mxu0 %v2058
  %2224 = vmatprep.subr.mxu0 0.0
  %2225 = vmatpush1.msra.mxu0 %v2059
  %2226 = vmatprep.subr.mxu0 0.0
  %2227 = vmatpush1.msra.mxu0 %v2060
  %2228 = vmatprep.subr.mxu0 0.0
  %2229 = vmatpush1.msra.mxu0 %v2061
  %2230 = vmatprep.subr.mxu0 0.0
  %2231 = vmatpush1.msra.mxu0 %v2062
  %2232 = vmatprep.subr.mxu0 0.0
  %2233 = vmatpush1.msra.mxu0 %v2063
  %2234 = vmatprep.subr.mxu0 0.0
  %2235 = vmatpush1.msra.mxu0 %v2064
  %2236 = vmatprep.subr.mxu0 0.0
  %2237 = vmatpush1.msra.mxu0 %v2065
  %2238 = vmatprep.subr.mxu0 0.0
  %2239 = vmatpush1.msra.mxu0 %v2066
  %2240 = vmatprep.subr.mxu0 0.0
  %2241 = vmatpush1.msra.mxu0 %v2067
  %2242 = vmatprep.subr.mxu0 0.0
  %2243 = vmatpush1.msra.mxu0 %v2068
  %2244 = vmatprep.subr.mxu0 0.0
  %2245 = vmatpush1.msra.mxu0 %v2069
  %2246 = vmatprep.subr.mxu0 0.0
  %2247 = vmatpush1.msra.mxu0 %v2070
  %2248 = vmatprep.subr.mxu0 0.0
  %2249 = vmatpush1.msra.mxu0 %v2071
  %2250 = vmatprep.subr.mxu0 0.0
  %2251 = vmatpush1.msra.mxu0 %v2072
  %2252 = vmatprep.subr.mxu0 0.0
  %2253 = vmatpush1.msra.mxu0 %v2073
  %2254 = vmatprep.subr.mxu0 0.0
  %2255 = vmatpush1.msra.mxu0 %v2074
  %2256 = vmatprep.subr.mxu0 0.0
  %2257 = vmatpush1.msra.mxu0 %v2075
  %2258 = vmatprep.subr.mxu0 0.0
  %2259 = vmatpush1.msra.mxu0 %v2076
  %2260 = vmatprep.mubr.f32.mxu0 %v1470
  %2261 = vmatmul.mubr.f32.gmra.mrb[0].mxu0 %v1469
  %v2262 = vpop.f32.mrb[0].mxu0
  %v2263 = vadd.f32 %v2194, %v2262
  %v2264 = vpop.f32.mrb[0].mxu0
  %2265 = vmatprep.mubr.f32.mxu0 %v1479
  %2266 = vmatmul.mubr.f32.gmra.mrb[0].mxu0 %v1478
  %v2267 = vpop.f32.mrb[0].mxu0
  %v2268 = vadd.f32 %v2194, %v2267
  %v2269 = vpop.f32.mrb[0].mxu0
  %2270 = vmatprep.mubr.f32.mxu0 %v1488
  %2271 = vmatmul.mubr.f32.gmra.mrb[0].mxu0 %v1487
  %v2272 = vpop.f32.mrb[0].mxu0
  %v2273 = vadd.f32 %v2194, %v2272
  %v2274 = vpop.f32.mrb[0].mxu0
  %2275 = vmatprep.mubr.f32.mxu0 %v1497
  %2276 = vmatmul.mubr.f32.gmra.mrb[0].mxu0 %v1496
  %v2277 = vpop.f32.mrb[0].mxu0
  %v2278 = vadd.f32 %v2194, %v2277
  %v2279 = vpop.f32.mrb[0].mxu0
  %2280 = vmatprep.mubr.f32.mxu0 %v1506
  %2281 = vmatmul.mubr.f32.gmra.mrb[0].mxu0 %v1505
  %v2282 = vpop.f32.mrb[0].mxu0
  %v2283 = vadd.f32 %v2194, %v2282
  %v2284 = vpop.f32.mrb[0].mxu0
  %2285 = vmatprep.mubr.f32.mxu0 %v1515
  %2286 = vmatmul.mubr.f32.gmra.mrb[0].mxu0 %v1514
  %v2287 = vpop.f32.mrb[0].mxu0
  %v2288 = vadd.f32 %v2194, %v2287
  %v2289 = vpop.f32.mrb[0].mxu0
  %2290 = vmatprep.mubr.f32.mxu0 %v1524
  %2291 = vmatmul.mubr.f32.gmra.mrb[0].mxu0 %v1523
  %v2292 = vpop.f32.mrb[0].mxu0
  %v2293 = vadd.f32 %v2194, %v2292
  %v2294 = vpop.f32.mrb[0].mxu0
  %2295 = vmatprep.mubr.f32.mxu0 %v1533
  %2296 = vmatmul.mubr.f32.gmra.mrb[0].mxu0 %v1532
  %v2297 = vpop.f32.mrb[0].mxu0
  %v2298 = vadd.f32 %v2194, %v2297
  %v2299 = vpop.f32.mrb[0].mxu0
  %2300 = vmatprep.mubr.f32.mxu0 %v1542
  %2301 = vmatmul.mubr.f32.gmra.mrb[0].mxu0 %v1541
  %v2302 = vpop.f32.mrb[0].mxu0
  %v2303 = vadd.f32 %v2194, %v2302
  %v2304 = vpop.f32.mrb[0].mxu0
  %2305 = vmatprep.mubr.f32.mxu0 %v1551
  %2306 = vmatmul.mubr.f32.gmra.mrb[0].mxu0 %v1550
  %v2307 = vpop.f32.mrb[0].mxu0
  %v2308 = vadd.f32 %v2194, %v2307
  %v2309 = vpop.f32.mrb[0].mxu0
  %2310 = vmatprep.mubr.f32.mxu0 %v1560
  %2311 = vmatmul.mubr.f32.gmra.mrb[0].mxu0 %v1559
  %v2312 = vpop.f32.mrb[0].mxu0
  %v2313 = vadd.f32 %v2194, %v2312
  %v2314 = vpop.f32.mrb[0].mxu0
  %2315 = vmatprep.mubr.f32.mxu0 %v1569
  %2316 = vmatmul.mubr.f32.gmra.mrb[0].mxu0 %v1568
  %v2317 = vpop.f32.mrb[0].mxu0
  %v2318 = vadd.f32 %v2194, %v2317
  %v2319 = vpop.f32.mrb[0].mxu0
  %2320 = vmatprep.mubr.f32.mxu0 %v1578
  %2321 = vmatmul.mubr.f32.gmra.mrb[0].mxu0 %v1577
  %v2322 = vpop.f32.mrb[0].mxu0
  %v2323 = vadd.f32 %v2194, %v2322
  %v2324 = vpop.f32.mrb[0].mxu0
  %2325 = vmatprep.mubr.f32.mxu0 %v1587
  %2326 = vmatmul.mubr.f32.gmra.mrb[0].mxu0 %v1586
  %v2327 = vpop.f32.mrb[0].mxu0
  %v2328 = vadd.f32 %v2194, %v2327
  %v2329 = vpop.f32.mrb[0].mxu0
  %2330 = vmatprep.mubr.f32.mxu0 %v1596
  %2331 = vmatmul.mubr.f32.gmra.mrb[0].mxu0 %v1595
  %v2332 = vpop.f32.mrb[0].mxu0
  %v2333 = vadd.f32 %v2194, %v2332
  %v2334 = vpop.f32.mrb[0].mxu0
  %2335 = vmatprep.mubr.f32.mxu0 %v1605
  %2336 = vmatmul.mubr.f32.gmra.mrb[0].mxu0 %v1604
  %v2337 = vpop.f32.mrb[0].mxu0
  %v2338 = vadd.f32 %v2194, %v2337
  %v2339 = vpop.f32.mrb[0].mxu0
  %2340 = vmatprep.mubr.f32.mxu0 %v1614
  %2341 = vmatmul.mubr.f32.gmra.mrb[0].mxu0 %v1613
  %v2342 = vpop.f32.mrb[0].mxu0
  %v2343 = vadd.f32 %v2194, %v2342
  %v2344 = vpop.f32.mrb[0].mxu0
  %2345 = vmatprep.mubr.f32.mxu0 %v1623
  %2346 = vmatmul.mubr.f32.gmra.mrb[0].mxu0 %v1622
  %v2347 = vpop.f32.mrb[0].mxu0
  %v2348 = vadd.f32 %v2194, %v2347
  %v2349 = vpop.f32.mrb[0].mxu0
  %2350 = vmatprep.mubr.f32.mxu0 %v1632
  %2351 = vmatmul.mubr.f32.gmra.mrb[0].mxu0 %v1631
  %v2352 = vpop.f32.mrb[0].mxu0
  %v2353 = vadd.f32 %v2194, %v2352
  %v2354 = vpop.f32.mrb[0].mxu0
  %2355 = vmatprep.mubr.f32.mxu0 %v1641
  %2356 = vmatmul.mubr.f32.gmra.mrb[0].mxu0 %v1640
  %v2357 = vpop.f32.mrb[0].mxu0
  %v2358 = vadd.f32 %v2194, %v2357
  %v2359 = vpop.f32.mrb[0].mxu0
  %2360 = vmatprep.mubr.f32.mxu0 %v1650
  %2361 = vmatmul.mubr.f32.gmra.mrb[0].mxu0 %v1649
  %v2362 = vpop.f32.mrb[0].mxu0
  %v2363 = vadd.f32 %v2194, %v2362
  %v2364 = vpop.f32.mrb[0].mxu0
  %2365 = vmatprep.mubr.f32.mxu0 %v1659
  %2366 = vmatmul.mubr.f32.gmra.mrb[0].mxu0 %v1658
  %v2367 = vpop.f32.mrb[0].mxu0
  %v2368 = vadd.f32 %v2194, %v2367
  %v2369 = vpop.f32.mrb[0].mxu0
  %2370 = vmatprep.mubr.f32.mxu0 %v1668
  %2371 = vmatmul.mubr.f32.gmra.mrb[0].mxu0 %v1667
  %v2372 = vpop.f32.mrb[0].mxu0
  %v2373 = vadd.f32 %v2194, %v2372
  %v2374 = vpop.f32.mrb[0].mxu0
  %2375 = vmatprep.mubr.f32.mxu0 %v1677
  %2376 = vmatmul.mubr.f32.gmra.mrb[0].mxu0 %v1676
  %v2377 = vpop.f32.mrb[0].mxu0
  %v2378 = vadd.f32 %v2194, %v2377
  %v2379 = vpop.f32.mrb[0].mxu0
  %2380 = vmatprep.mubr.f32.mxu0 %v1686
  %2381 = vmatmul.mubr.f32.gmra.mrb[0].mxu0 %v1685
  %v2382 = vpop.f32.mrb[0].mxu0
  %v2383 = vadd.f32 %v2194, %v2382
  %v2384 = vpop.f32.mrb[0].mxu0
  %2385 = vmatprep.mubr.f32.mxu0 %v1695
  %2386 = vmatmul.mubr.f32.gmra.mrb[0].mxu0 %v1694
  %v2387 = vpop.f32.mrb[0].mxu0
  %v2388 = vadd.f32 %v2194, %v2387
  %v2389 = vpop.f32.mrb[0].mxu0
  %2390 = vmatprep.mubr.f32.mxu0 %v1704
  %2391 = vmatmul.mubr.f32.gmra.mrb[0].mxu0 %v1703
  %v2392 = vpop.f32.mrb[0].mxu0
  %v2393 = vadd.f32 %v2194, %v2392
  %v2394 = vpop.f32.mrb[0].mxu0
  %2395 = vmatprep.mubr.f32.mxu0 %v1713
  %2396 = vmatmul.mubr.f32.gmra.mrb[0].mxu0 %v1712
  %v2397 = vpop.f32.mrb[0].mxu0
  %v2398 = vadd.f32 %v2194, %v2397
  %v2399 = vpop.f32.mrb[0].mxu0
  %2400 = vmatprep.mubr.f32.mxu0 %v1722
  %2401 = vmatmul.mubr.f32.gmra.mrb[0].mxu0 %v1721
  %v2402 = vpop.f32.mrb[0].mxu0
  %v2403 = vadd.f32 %v2194, %v2402
  %v2404 = vpop.f32.mrb[0].mxu0
  %2405 = vmatprep.mubr.f32.mxu0 %v1731
  %2406 = vmatmul.mubr.f32.gmra.mrb[0].mxu0 %v1730
  %v2407 = vpop.f32.mrb[0].mxu0
  %v2408 = vadd.f32 %v2194, %v2407
  %v2409 = vpop.f32.mrb[0].mxu0
  %2410 = vmatprep.mubr.f32.mxu0 %v1740
  %2411 = vmatmul.mubr.f32.gmra.mrb[0].mxu0 %v1739
  %v2412 = vpop.f32.mrb[0].mxu0
  %v2413 = vadd.f32 %v2194, %v2412
  %v2414 = vpop.f32.mrb[0].mxu0
  %2415 = vmatprep.mubr.f32.mxu0 %v1749
  %2416 = vmatmul.mubr.f32.gmra.mrb[0].mxu0 %v1748
  %v2417 = vpop.f32.mrb[0].mxu0
  %v2418 = vadd.f32 %v2194, %v2417
  %v2419 = vpop.f32.mrb[0].mxu0
  %2420 = vmatprep.mubr.f32.mxu0 %v1758
  %2421 = vmatmul.mubr.f32.gmra.mrb[0].mxu0 %v1757
  %v2422 = vpop.f32.mrb[0].mxu0
  %v2423 = vadd.f32 %v2194, %v2422
  %v2424 = vpop.f32.mrb[0].mxu0
  %2425 = vmatprep.mubr.f32.mxu0 %v1767
  %2426 = vmatmul.mubr.f32.gmra.mrb[0].mxu0 %v1766
  %v2427 = vpop.f32.mrb[0].mxu0
  %v2428 = vadd.f32 %v2194, %v2427
  %v2429 = vpop.f32.mrb[0].mxu0
  %2430 = vmatprep.mubr.f32.mxu0 %v1776
  %2431 = vmatmul.mubr.f32.gmra.mrb[0].mxu0 %v1775
  %v2432 = vpop.f32.mrb[0].mxu0
  %v2433 = vadd.f32 %v2194, %v2432
  %v2434 = vpop.f32.mrb[0].mxu0
  %2435 = vmatprep.mubr.f32.mxu0 %v1785
  %2436 = vmatmul.mubr.f32.gmra.mrb[0].mxu0 %v1784
  %v2437 = vpop.f32.mrb[0].mxu0
  %v2438 = vadd.f32 %v2194, %v2437
  %v2439 = vpop.f32.mrb[0].mxu0
  %2440 = vmatprep.mubr.f32.mxu0 %v1794
  %2441 = vmatmul.mubr.f32.gmra.mrb[0].mxu0 %v1793
  %v2442 = vpop.f32.mrb[0].mxu0
  %v2443 = vadd.f32 %v2194, %v2442
  %v2444 = vpop.f32.mrb[0].mxu0
  %2445 = vmatprep.mubr.f32.mxu0 %v1803
  %2446 = vmatmul.mubr.f32.gmra.mrb[0].mxu0 %v1802
  %v2447 = vpop.f32.mrb[0].mxu0
  %v2448 = vadd.f32 %v2194, %v2447
  %v2449 = vpop.f32.mrb[0].mxu0
  %2450 = vmatprep.mubr.f32.mxu0 %v1812
  %2451 = vmatmul.mubr.f32.gmra.mrb[0].mxu0 %v1811
  %v2452 = vpop.f32.mrb[0].mxu0
  %v2453 = vadd.f32 %v2194, %v2452
  %v2454 = vpop.f32.mrb[0].mxu0
  %2455 = vmatprep.mubr.f32.mxu0 %v1821
  %2456 = vmatmul.mubr.f32.gmra.mrb[0].mxu0 %v1820
  %v2457 = vpop.f32.mrb[0].mxu0
  %v2458 = vadd.f32 %v2194, %v2457
  %v2459 = vpop.f32.mrb[0].mxu0
  %2460 = vmatprep.mubr.f32.mxu0 %v1830
  %2461 = vmatmul.mubr.f32.gmra.mrb[0].mxu0 %v1829
  %v2462 = vpop.f32.mrb[0].mxu0
  %v2463 = vadd.f32 %v2194, %v2462
  %v2464 = vpop.f32.mrb[0].mxu0
  %2465 = vmatprep.mubr.f32.mxu0 %v1839
  %2466 = vmatmul.mubr.f32.gmra.mrb[0].mxu0 %v1838
  %v2467 = vpop.f32.mrb[0].mxu0
  %v2468 = vadd.f32 %v2194, %v2467
  %v2469 = vpop.f32.mrb[0].mxu0
  %2470 = vmatprep.mubr.f32.mxu0 %v1848
  %2471 = vmatmul.mubr.f32.gmra.mrb[0].mxu0 %v1847
  %v2472 = vpop.f32.mrb[0].mxu0
  %v2473 = vadd.f32 %v2194, %v2472
  %v2474 = vpop.f32.mrb[0].mxu0
  %2475 = vmatprep.mubr.f32.mxu0 %v1857
  %2476 = vmatmul.mubr.f32.gmra.mrb[0].mxu0 %v1856
  %v2477 = vpop.f32.mrb[0].mxu0
  %v2478 = vadd.f32 %v2194, %v2477
  %v2479 = vpop.f32.mrb[0].mxu0
  %2480 = vmatprep.mubr.f32.mxu0 %v1866
  %2481 = vmatmul.mubr.f32.gmra.mrb[0].mxu0 %v1865
  %v2482 = vpop.f32.mrb[0].mxu0
  %v2483 = vadd.f32 %v2194, %v2482
  %v2484 = vpop.f32.mrb[0].mxu0
  %2485 = vmatprep.mubr.f32.mxu0 %v1875
  %2486 = vmatmul.mubr.f32.gmra.mrb[0].mxu0 %v1874
  %v2487 = vpop.f32.mrb[0].mxu0
  %v2488 = vadd.f32 %v2194, %v2487
  %v2489 = vpop.f32.mrb[0].mxu0
  %2490 = vmatprep.mubr.f32.mxu0 %v1884
  %2491 = vmatmul.mubr.f32.gmra.mrb[0].mxu0 %v1883
  %v2492 = vpop.f32.mrb[0].mxu0
  %v2493 = vadd.f32 %v2194, %v2492
  %v2494 = vpop.f32.mrb[0].mxu0
  %2495 = vmatprep.mubr.f32.mxu0 %v1893
  %2496 = vmatmul.mubr.f32.gmra.mrb[0].mxu0 %v1892
  %v2497 = vpop.f32.mrb[0].mxu0
  %v2498 = vadd.f32 %v2194, %v2497
  %v2499 = vpop.f32.mrb[0].mxu0
  %2500 = vmatprep.mubr.f32.mxu0 %v1902
  %2501 = vmatmul.mubr.f32.gmra.mrb[0].mxu0 %v1901
  %v2502 = vpop.f32.mrb[0].mxu0
  %v2503 = vadd.f32 %v2194, %v2502
  %v2504 = vpop.f32.mrb[0].mxu0
  %2505 = vmatprep.mubr.f32.mxu0 %v1911
  %2506 = vmatmul.mubr.f32.gmra.mrb[0].mxu0 %v1910
  %v2507 = vpop.f32.mrb[0].mxu0
  %v2508 = vadd.f32 %v2194, %v2507
  %v2509 = vpop.f32.mrb[0].mxu0
  %2510 = vmatprep.mubr.f32.mxu0 %v1920
  %2511 = vmatmul.mubr.f32.gmra.mrb[0].mxu0 %v1919
  %v2512 = vpop.f32.mrb[0].mxu0
  %v2513 = vadd.f32 %v2194, %v2512
  %v2514 = vpop.f32.mrb[0].mxu0
  %2515 = vmatprep.mubr.f32.mxu0 %v1929
  %2516 = vmatmul.mubr.f32.gmra.mrb[0].mxu0 %v1928
  %v2517 = vpop.f32.mrb[0].mxu0
  %v2518 = vadd.f32 %v2194, %v2517
  %v2519 = vpop.f32.mrb[0].mxu0
  %2520 = vmatprep.mubr.f32.mxu0 %v1938
  %2521 = vmatmul.mubr.f32.gmra.mrb[0].mxu0 %v1937
  %v2522 = vpop.f32.mrb[0].mxu0
  %v2523 = vadd.f32 %v2194, %v2522
  %v2524 = vpop.f32.mrb[0].mxu0
  %2525 = vmatprep.mubr.f32.mxu0 %v1947
  %2526 = vmatmul.mubr.f32.gmra.mrb[0].mxu0 %v1946
  %v2527 = vpop.f32.mrb[0].mxu0
  %v2528 = vadd.f32 %v2194, %v2527
  %v2529 = vpop.f32.mrb[0].mxu0
  %2530 = vmatprep.mubr.f32.mxu0 %v1956
  %2531 = vmatmul.mubr.f32.gmra.mrb[0].mxu0 %v1955
  %v2532 = vpop.f32.mrb[0].mxu0
  %v2533 = vadd.f32 %v2194, %v2532
  %v2534 = vpop.f32.mrb[0].mxu0
  %2535 = vmatprep.mubr.f32.mxu0 %v1965
  %2536 = vmatmul.mubr.f32.gmra.mrb[0].mxu0 %v1964
  %v2537 = vpop.f32.mrb[0].mxu0
  %v2538 = vadd.f32 %v2194, %v2537
  %v2539 = vpop.f32.mrb[0].mxu0
  %2540 = vmatprep.mubr.f32.mxu0 %v1974
  %2541 = vmatmul.mubr.f32.gmra.mrb[0].mxu0 %v1973
  %v2542 = vpop.f32.mrb[0].mxu0
  %v2543 = vadd.f32 %v2194, %v2542
  %v2544 = vpop.f32.mrb[0].mxu0
  %2545 = vmatprep.mubr.f32.mxu0 %v1983
  %2546 = vmatmul.mubr.f32.gmra.mrb[0].mxu0 %v1982
  %v2547 = vpop.f32.mrb[0].mxu0
  %v2548 = vadd.f32 %v2194, %v2547
  %v2549 = vpop.f32.mrb[0].mxu0
  %2550 = vmatprep.mubr.f32.mxu0 %v1992
  %2551 = vmatmul.mubr.f32.gmra.mrb[0].mxu0 %v1991
  %v2552 = vpop.f32.mrb[0].mxu0
  %v2553 = vadd.f32 %v2194, %v2552
  %v2554 = vpop.f32.mrb[0].mxu0
  %2555 = vmatprep.mubr.f32.mxu0 %v2001
  %2556 = vmatmul.mubr.f32.gmra.mrb[0].mxu0 %v2000
  %v2557 = vpop.f32.mrb[0].mxu0
  %v2558 = vadd.f32 %v2194, %v2557
  %v2559 = vpop.f32.mrb[0].mxu0
  %2560 = vmatprep.mubr.f32.mxu0 %v2010
  %2561 = vmatmul.mubr.f32.gmra.mrb[0].mxu0 %v2009
  %v2562 = vpop.f32.mrb[0].mxu0
  %v2563 = vadd.f32 %v2194, %v2562
  %v2564 = vpop.f32.mrb[0].mxu0
  %2565 = vmatprep.mubr.f32.mxu0 %v2019
  %2566 = vmatmul.mubr.f32.gmra.mrb[0].mxu0 %v2018
  %v2567 = vpop.f32.mrb[0].mxu0
  %v2568 = vadd.f32 %v2194, %v2567
  %v2569 = vpop.f32.mrb[0].mxu0
  %2570 = vmatprep.mubr.f32.mxu0 %v2028
  %2571 = vmatmul.mubr.f32.gmra.mrb[0].mxu0 %v2027
  %v2572 = vpop.f32.mrb[0].mxu0
  %v2573 = vadd.f32 %v2194, %v2572
  %v2574 = vpop.f32.mrb[0].mxu0
  %2575 = vmatprep.mubr.f32.mxu0 %v2037
  %2576 = vmatmul.mubr.f32.gmra.mrb[0].mxu0 %v2036
  %v2577 = vpop.f32.mrb[0].mxu0
  %v2578 = vadd.f32 %v2194, %v2577
  %v2579 = vpop.f32.mrb[0].mxu0
  %2580 = vdwg.mxu0
  %2581 = vmatprep.subr.mxu0 0.0
  %2582 = vmatpush1.msra.mxu0 %v2077
  %2583 = vmatprep.subr.mxu0 0.0
  %2584 = vmatpush1.msra.mxu0 %v2078
  %2585 = vmatprep.subr.mxu0 0.0
  %2586 = vmatpush1.msra.mxu0 %v2079
  %2587 = vmatprep.subr.mxu0 0.0
  %2588 = vmatpush1.msra.mxu0 %v2080
  %2589 = vmatprep.subr.mxu0 0.0
  %2590 = vmatpush1.msra.mxu0 %v2081
  %2591 = vmatprep.subr.mxu0 0.0
  %2592 = vmatpush1.msra.mxu0 %v2082
  %2593 = vmatprep.subr.mxu0 0.0
  %2594 = vmatpush1.msra.mxu0 %v2083
  %2595 = vmatprep.subr.mxu0 0.0
  %2596 = vmatpush1.msra.mxu0 %v2084
  %2597 = vmatprep.subr.mxu0 0.0
  %2598 = vmatpush1.msra.mxu0 %v2085
  %2599 = vmatprep.subr.mxu0 0.0
  %2600 = vmatpush1.msra.mxu0 %v2086
  %2601 = vmatprep.subr.mxu0 0.0
  %2602 = vmatpush1.msra.mxu0 %v2087
  %2603 = vmatprep.subr.mxu0 0.0
  %2604 = vmatpush1.msra.mxu0 %v2088
  %2605 = vmatprep.subr.mxu0 0.0
  %2606 = vmatpush1.msra.mxu0 %v2089
  %2607 = vmatprep.subr.mxu0 0.0
  %2608 = vmatpush1.msra.mxu0 %v2090
  %2609 = vmatprep.subr.mxu0 0.0
  %2610 = vmatpush1.msra.mxu0 %v2091
  %2611 = vmatprep.subr.mxu0 0.0
  %2612 = vmatpush1.msra.mxu0 %v2092
  %2613 = vmatprep.subr.mxu0 0.0
  %2614 = vmatpush1.msra.mxu0 %v2093
  %2615 = vmatprep.subr.mxu0 0.0
  %2616 = vmatpush1.msra.mxu0 %v2094
  %2617 = vmatprep.subr.mxu0 0.0
  %2618 = vmatpush1.msra.mxu0 %v2095
  %2619 = vmatprep.subr.mxu0 0.0
  %2620 = vmatpush1.msra.mxu0 %v2096
  %2621 = vmatprep.subr.mxu0 0.0
  %2622 = vmatpush1.msra.mxu0 %v2097
  %2623 = vmatprep.subr.mxu0 0.0
  %2624 = vmatpush1.msra.mxu0 %v2098
  %2625 = vmatprep.subr.mxu0 0.0
  %2626 = vmatpush1.msra.mxu0 %v2099
  %2627 = vmatprep.subr.mxu0 0.0
  %2628 = vmatpush1.msra.mxu0 %v2100
  %2629 = vmatprep.subr.mxu0 0.0
  %2630 = vmatpush1.msra.mxu0 %v2101
  %2631 = vmatprep.subr.mxu0 0.0
  %2632 = vmatpush1.msra.mxu0 %v2102
  %2633 = vmatprep.subr.mxu0 0.0
  %2634 = vmatpush1.msra.mxu0 %v2103
  %2635 = vmatprep.subr.mxu0 0.0
  %2636 = vmatpush1.msra.mxu0 %v2104
  %2637 = vmatprep.subr.mxu0 0.0
  %2638 = vmatpush1.msra.mxu0 %v2105
  %2639 = vmatprep.subr.mxu0 0.0
  %2640 = vmatpush1.msra.mxu0 %v2106
  %2641 = vmatprep.subr.mxu0 0.0
  %2642 = vmatpush1.msra.mxu0 %v2107
  %2643 = vmatprep.subr.mxu0 0.0
  %2644 = vmatpush1.msra.mxu0 %v2108
  %2645 = vmatprep.mubr.f32.mxu0 %v1472
  %2646 = vmatmul.mubr.f32.gmra.mrb[0].mxu0 %v1471
  %v2647 = vpop.f32.mrb[0].mxu0
  %v2648 = vadd.f32 %v2263, %v2647
  %v2649 = vpop.f32.mrb[0].mxu0
  %2650 = vmatprep.mubr.f32.mxu0 %v1481
  %2651 = vmatmul.mubr.f32.gmra.mrb[0].mxu0 %v1480
  %v2652 = vpop.f32.mrb[0].mxu0
  %v2653 = vadd.f32 %v2268, %v2652
  %v2654 = vpop.f32.mrb[0].mxu0
  %2655 = vmatprep.mubr.f32.mxu0 %v1490
  %2656 = vmatmul.mubr.f32.gmra.mrb[0].mxu0 %v1489
  %v2657 = vpop.f32.mrb[0].mxu0
  %v2658 = vadd.f32 %v2273, %v2657
  %v2659 = vpop.f32.mrb[0].mxu0
  %2660 = vmatprep.mubr.f32.mxu0 %v1499
  %2661 = vmatmul.mubr.f32.gmra.mrb[0].mxu0 %v1498
  %v2662 = vpop.f32.mrb[0].mxu0
  %v2663 = vadd.f32 %v2278, %v2662
  %v2664 = vpop.f32.mrb[0].mxu0
  %2665 = vmatprep.mubr.f32.mxu0 %v1508
  %2666 = vmatmul.mubr.f32.gmra.mrb[0].mxu0 %v1507
  %v2667 = vpop.f32.mrb[0].mxu0
  %v2668 = vadd.f32 %v2283, %v2667
  %v2669 = vpop.f32.mrb[0].mxu0
  %2670 = vmatprep.mubr.f32.mxu0 %v1517
  %2671 = vmatmul.mubr.f32.gmra.mrb[0].mxu0 %v1516
  %v2672 = vpop.f32.mrb[0].mxu0
  %v2673 = vadd.f32 %v2288, %v2672
  %v2674 = vpop.f32.mrb[0].mxu0
  %2675 = vmatprep.mubr.f32.mxu0 %v1526
  %2676 = vmatmul.mubr.f32.gmra.mrb[0].mxu0 %v1525
  %v2677 = vpop.f32.mrb[0].mxu0
  %v2678 = vadd.f32 %v2293, %v2677
  %v2679 = vpop.f32.mrb[0].mxu0
  %2680 = vmatprep.mubr.f32.mxu0 %v1535
  %2681 = vmatmul.mubr.f32.gmra.mrb[0].mxu0 %v1534
  %v2682 = vpop.f32.mrb[0].mxu0
  %v2683 = vadd.f32 %v2298, %v2682
  %v2684 = vpop.f32.mrb[0].mxu0
  %2685 = vmatprep.mubr.f32.mxu0 %v1544
  %2686 = vmatmul.mubr.f32.gmra.mrb[0].mxu0 %v1543
  %v2687 = vpop.f32.mrb[0].mxu0
  %v2688 = vadd.f32 %v2303, %v2687
  %v2689 = vpop.f32.mrb[0].mxu0
  %2690 = vmatprep.mubr.f32.mxu0 %v1553
  %2691 = vmatmul.mubr.f32.gmra.mrb[0].mxu0 %v1552
  %v2692 = vpop.f32.mrb[0].mxu0
  %v2693 = vadd.f32 %v2308, %v2692
  %v2694 = vpop.f32.mrb[0].mxu0
  %2695 = vmatprep.mubr.f32.mxu0 %v1562
  %2696 = vmatmul.mubr.f32.gmra.mrb[0].mxu0 %v1561
  %v2697 = vpop.f32.mrb[0].mxu0
  %v2698 = vadd.f32 %v2313, %v2697
  %v2699 = vpop.f32.mrb[0].mxu0
  %2700 = vmatprep.mubr.f32.mxu0 %v1571
  %2701 = vmatmul.mubr.f32.gmra.mrb[0].mxu0 %v1570
  %v2702 = vpop.f32.mrb[0].mxu0
  %v2703 = vadd.f32 %v2318, %v2702
  %v2704 = vpop.f32.mrb[0].mxu0
  %2705 = vmatprep.mubr.f32.mxu0 %v1580
  %2706 = vmatmul.mubr.f32.gmra.mrb[0].mxu0 %v1579
  %v2707 = vpop.f32.mrb[0].mxu0
  %v2708 = vadd.f32 %v2323, %v2707
  %v2709 = vpop.f32.mrb[0].mxu0
  %2710 = vmatprep.mubr.f32.mxu0 %v1589
  %2711 = vmatmul.mubr.f32.gmra.mrb[0].mxu0 %v1588
  %v2712 = vpop.f32.mrb[0].mxu0
  %v2713 = vadd.f32 %v2328, %v2712
  %v2714 = vpop.f32.mrb[0].mxu0
  %2715 = vmatprep.mubr.f32.mxu0 %v1598
  %2716 = vmatmul.mubr.f32.gmra.mrb[0].mxu0 %v1597
  %v2717 = vpop.f32.mrb[0].mxu0
  %v2718 = vadd.f32 %v2333, %v2717
  %v2719 = vpop.f32.mrb[0].mxu0
  %2720 = vmatprep.mubr.f32.mxu0 %v1607
  %2721 = vmatmul.mubr.f32.gmra.mrb[0].mxu0 %v1606
  %v2722 = vpop.f32.mrb[0].mxu0
  %v2723 = vadd.f32 %v2338, %v2722
  %v2724 = vpop.f32.mrb[0].mxu0
  %2725 = vmatprep.mubr.f32.mxu0 %v1616
  %2726 = vmatmul.mubr.f32.gmra.mrb[0].mxu0 %v1615
  %v2727 = vpop.f32.mrb[0].mxu0
  %v2728 = vadd.f32 %v2343, %v2727
  %v2729 = vpop.f32.mrb[0].mxu0
  %2730 = vmatprep.mubr.f32.mxu0 %v1625
  %2731 = vmatmul.mubr.f32.gmra.mrb[0].mxu0 %v1624
  %v2732 = vpop.f32.mrb[0].mxu0
  %v2733 = vadd.f32 %v2348, %v2732
  %v2734 = vpop.f32.mrb[0].mxu0
  %2735 = vmatprep.mubr.f32.mxu0 %v1634
  %2736 = vmatmul.mubr.f32.gmra.mrb[0].mxu0 %v1633
  %v2737 = vpop.f32.mrb[0].mxu0
  %v2738 = vadd.f32 %v2353, %v2737
  %v2739 = vpop.f32.mrb[0].mxu0
  %2740 = vmatprep.mubr.f32.mxu0 %v1643
  %2741 = vmatmul.mubr.f32.gmra.mrb[0].mxu0 %v1642
  %v2742 = vpop.f32.mrb[0].mxu0
  %v2743 = vadd.f32 %v2358, %v2742
  %v2744 = vpop.f32.mrb[0].mxu0
  %2745 = vmatprep.mubr.f32.mxu0 %v1652
  %2746 = vmatmul.mubr.f32.gmra.mrb[0].mxu0 %v1651
  %v2747 = vpop.f32.mrb[0].mxu0
  %v2748 = vadd.f32 %v2363, %v2747
  %v2749 = vpop.f32.mrb[0].mxu0
  %2750 = vmatprep.mubr.f32.mxu0 %v1661
  %2751 = vmatmul.mubr.f32.gmra.mrb[0].mxu0 %v1660
  %v2752 = vpop.f32.mrb[0].mxu0
  %v2753 = vadd.f32 %v2368, %v2752
  %v2754 = vpop.f32.mrb[0].mxu0
  %2755 = vmatprep.mubr.f32.mxu0 %v1670
  %2756 = vmatmul.mubr.f32.gmra.mrb[0].mxu0 %v1669
  %v2757 = vpop.f32.mrb[0].mxu0
  %v2758 = vadd.f32 %v2373, %v2757
  %v2759 = vpop.f32.mrb[0].mxu0
  %2760 = vmatprep.mubr.f32.mxu0 %v1679
  %2761 = vmatmul.mubr.f32.gmra.mrb[0].mxu0 %v1678
  %v2762 = vpop.f32.mrb[0].mxu0
  %v2763 = vadd.f32 %v2378, %v2762
  %v2764 = vpop.f32.mrb[0].mxu0
  %2765 = vmatprep.mubr.f32.mxu0 %v1688
  %2766 = vmatmul.mubr.f32.gmra.mrb[0].mxu0 %v1687
  %v2767 = vpop.f32.mrb[0].mxu0
  %v2768 = vadd.f32 %v2383, %v2767
  %v2769 = vpop.f32.mrb[0].mxu0
  %2770 = vmatprep.mubr.f32.mxu0 %v1697
  %2771 = vmatmul.mubr.f32.gmra.mrb[0].mxu0 %v1696
  %v2772 = vpop.f32.mrb[0].mxu0
  %v2773 = vadd.f32 %v2388, %v2772
  %v2774 = vpop.f32.mrb[0].mxu0
  %2775 = vmatprep.mubr.f32.mxu0 %v1706
  %2776 = vmatmul.mubr.f32.gmra.mrb[0].mxu0 %v1705
  %v2777 = vpop.f32.mrb[0].mxu0
  %v2778 = vadd.f32 %v2393, %v2777
  %v2779 = vpop.f32.mrb[0].mxu0
  %2780 = vmatprep.mubr.f32.mxu0 %v1715
  %2781 = vmatmul.mubr.f32.gmra.mrb[0].mxu0 %v1714
  %v2782 = vpop.f32.mrb[0].mxu0
  %v2783 = vadd.f32 %v2398, %v2782
  %v2784 = vpop.f32.mrb[0].mxu0
  %2785 = vmatprep.mubr.f32.mxu0 %v1724
  %2786 = vmatmul.mubr.f32.gmra.mrb[0].mxu0 %v1723
  %v2787 = vpop.f32.mrb[0].mxu0
  %v2788 = vadd.f32 %v2403, %v2787
  %v2789 = vpop.f32.mrb[0].mxu0
  %2790 = vmatprep.mubr.f32.mxu0 %v1733
  %2791 = vmatmul.mubr.f32.gmra.mrb[0].mxu0 %v1732
  %v2792 = vpop.f32.mrb[0].mxu0
  %v2793 = vadd.f32 %v2408, %v2792
  %v2794 = vpop.f32.mrb[0].mxu0
  %2795 = vmatprep.mubr.f32.mxu0 %v1742
  %2796 = vmatmul.mubr.f32.gmra.mrb[0].mxu0 %v1741
  %v2797 = vpop.f32.mrb[0].mxu0
  %v2798 = vadd.f32 %v2413, %v2797
  %v2799 = vpop.f32.mrb[0].mxu0
  %2800 = vmatprep.mubr.f32.mxu0 %v1751
  %2801 = vmatmul.mubr.f32.gmra.mrb[0].mxu0 %v1750
  %v2802 = vpop.f32.mrb[0].mxu0
  %v2803 = vadd.f32 %v2418, %v2802
  %v2804 = vpop.f32.mrb[0].mxu0
  %2805 = vmatprep.mubr.f32.mxu0 %v1760
  %2806 = vmatmul.mubr.f32.gmra.mrb[0].mxu0 %v1759
  %v2807 = vpop.f32.mrb[0].mxu0
  %v2808 = vadd.f32 %v2423, %v2807
  %v2809 = vpop.f32.mrb[0].mxu0
  %2810 = vmatprep.mubr.f32.mxu0 %v1769
  %2811 = vmatmul.mubr.f32.gmra.mrb[0].mxu0 %v1768
  %v2812 = vpop.f32.mrb[0].mxu0
  %v2813 = vadd.f32 %v2428, %v2812
  %v2814 = vpop.f32.mrb[0].mxu0
  %2815 = vmatprep.mubr.f32.mxu0 %v1778
  %2816 = vmatmul.mubr.f32.gmra.mrb[0].mxu0 %v1777
  %v2817 = vpop.f32.mrb[0].mxu0
  %v2818 = vadd.f32 %v2433, %v2817
  %v2819 = vpop.f32.mrb[0].mxu0
  %2820 = vmatprep.mubr.f32.mxu0 %v1787
  %2821 = vmatmul.mubr.f32.gmra.mrb[0].mxu0 %v1786
  %v2822 = vpop.f32.mrb[0].mxu0
  %v2823 = vadd.f32 %v2438, %v2822
  %v2824 = vpop.f32.mrb[0].mxu0
  %2825 = vmatprep.mubr.f32.mxu0 %v1796
  %2826 = vmatmul.mubr.f32.gmra.mrb[0].mxu0 %v1795
  %v2827 = vpop.f32.mrb[0].mxu0
  %v2828 = vadd.f32 %v2443, %v2827
  %v2829 = vpop.f32.mrb[0].mxu0
  %2830 = vmatprep.mubr.f32.mxu0 %v1805
  %2831 = vmatmul.mubr.f32.gmra.mrb[0].mxu0 %v1804
  %v2832 = vpop.f32.mrb[0].mxu0
  %v2833 = vadd.f32 %v2448, %v2832
  %v2834 = vpop.f32.mrb[0].mxu0
  %2835 = vmatprep.mubr.f32.mxu0 %v1814
  %2836 = vmatmul.mubr.f32.gmra.mrb[0].mxu0 %v1813
  %v2837 = vpop.f32.mrb[0].mxu0
  %v2838 = vadd.f32 %v2453, %v2837
  %v2839 = vpop.f32.mrb[0].mxu0
  %2840 = vmatprep.mubr.f32.mxu0 %v1823
  %2841 = vmatmul.mubr.f32.gmra.mrb[0].mxu0 %v1822
  %v2842 = vpop.f32.mrb[0].mxu0
  %v2843 = vadd.f32 %v2458, %v2842
  %v2844 = vpop.f32.mrb[0].mxu0
  %2845 = vmatprep.mubr.f32.mxu0 %v1832
  %2846 = vmatmul.mubr.f32.gmra.mrb[0].mxu0 %v1831
  %v2847 = vpop.f32.mrb[0].mxu0
  %v2848 = vadd.f32 %v2463, %v2847
  %v2849 = vpop.f32.mrb[0].mxu0
  %2850 = vmatprep.mubr.f32.mxu0 %v1841
  %2851 = vmatmul.mubr.f32.gmra.mrb[0].mxu0 %v1840
  %v2852 = vpop.f32.mrb[0].mxu0
  %v2853 = vadd.f32 %v2468, %v2852
  %v2854 = vpop.f32.mrb[0].mxu0
  %2855 = vmatprep.mubr.f32.mxu0 %v1850
  %2856 = vmatmul.mubr.f32.gmra.mrb[0].mxu0 %v1849
  %v2857 = vpop.f32.mrb[0].mxu0
  %v2858 = vadd.f32 %v2473, %v2857
  %v2859 = vpop.f32.mrb[0].mxu0
  %2860 = vmatprep.mubr.f32.mxu0 %v1859
  %2861 = vmatmul.mubr.f32.gmra.mrb[0].mxu0 %v1858
  %v2862 = vpop.f32.mrb[0].mxu0
  %v2863 = vadd.f32 %v2478, %v2862
  %v2864 = vpop.f32.mrb[0].mxu0
  %2865 = vmatprep.mubr.f32.mxu0 %v1868
  %2866 = vmatmul.mubr.f32.gmra.mrb[0].mxu0 %v1867
  %v2867 = vpop.f32.mrb[0].mxu0
  %v2868 = vadd.f32 %v2483, %v2867
  %v2869 = vpop.f32.mrb[0].mxu0
  %2870 = vmatprep.mubr.f32.mxu0 %v1877
  %2871 = vmatmul.mubr.f32.gmra.mrb[0].mxu0 %v1876
  %v2872 = vpop.f32.mrb[0].mxu0
  %v2873 = vadd.f32 %v2488, %v2872
  %v2874 = vpop.f32.mrb[0].mxu0
  %2875 = vmatprep.mubr.f32.mxu0 %v1886
  %2876 = vmatmul.mubr.f32.gmra.mrb[0].mxu0 %v1885
  %v2877 = vpop.f32.mrb[0].mxu0
  %v2878 = vadd.f32 %v2493, %v2877
  %v2879 = vpop.f32.mrb[0].mxu0
  %2880 = vmatprep.mubr.f32.mxu0 %v1895
  %2881 = vmatmul.mubr.f32.gmra.mrb[0].mxu0 %v1894
  %v2882 = vpop.f32.mrb[0].mxu0
  %v2883 = vadd.f32 %v2498, %v2882
  %v2884 = vpop.f32.mrb[0].mxu0
  %2885 = vmatprep.mubr.f32.mxu0 %v1904
  %2886 = vmatmul.mubr.f32.gmra.mrb[0].mxu0 %v1903
  %v2887 = vpop.f32.mrb[0].mxu0
  %v2888 = vadd.f32 %v2503, %v2887
  %v2889 = vpop.f32.mrb[0].mxu0
  %2890 = vmatprep.mubr.f32.mxu0 %v1913
  %2891 = vmatmul.mubr.f32.gmra.mrb[0].mxu0 %v1912
  %v2892 = vpop.f32.mrb[0].mxu0
  %v2893 = vadd.f32 %v2508, %v2892
  %v2894 = vpop.f32.mrb[0].mxu0
  %2895 = vmatprep.mubr.f32.mxu0 %v1922
  %2896 = vmatmul.mubr.f32.gmra.mrb[0].mxu0 %v1921
  %v2897 = vpop.f32.mrb[0].mxu0
  %v2898 = vadd.f32 %v2513, %v2897
  %v2899 = vpop.f32.mrb[0].mxu0
  %2900 = vmatprep.mubr.f32.mxu0 %v1931
  %2901 = vmatmul.mubr.f32.gmra.mrb[0].mxu0 %v1930
  %v2902 = vpop.f32.mrb[0].mxu0
  %v2903 = vadd.f32 %v2518, %v2902
  %v2904 = vpop.f32.mrb[0].mxu0
  %2905 = vmatprep.mubr.f32.mxu0 %v1940
  %2906 = vmatmul.mubr.f32.gmra.mrb[0].mxu0 %v1939
  %v2907 = vpop.f32.mrb[0].mxu0
  %v2908 = vadd.f32 %v2523, %v2907
  %v2909 = vpop.f32.mrb[0].mxu0
  %2910 = vmatprep.mubr.f32.mxu0 %v1949
  %2911 = vmatmul.mubr.f32.gmra.mrb[0].mxu0 %v1948
  %v2912 = vpop.f32.mrb[0].mxu0
  %v2913 = vadd.f32 %v2528, %v2912
  %v2914 = vpop.f32.mrb[0].mxu0
  %2915 = vmatprep.mubr.f32.mxu0 %v1958
  %2916 = vmatmul.mubr.f32.gmra.mrb[0].mxu0 %v1957
  %v2917 = vpop.f32.mrb[0].mxu0
  %v2918 = vadd.f32 %v2533, %v2917
  %v2919 = vpop.f32.mrb[0].mxu0
  %2920 = vmatprep.mubr.f32.mxu0 %v1967
  %2921 = vmatmul.mubr.f32.gmra.mrb[0].mxu0 %v1966
  %v2922 = vpop.f32.mrb[0].mxu0
  %v2923 = vadd.f32 %v2538, %v2922
  %v2924 = vpop.f32.mrb[0].mxu0
  %2925 = vmatprep.mubr.f32.mxu0 %v1976
  %2926 = vmatmul.mubr.f32.gmra.mrb[0].mxu0 %v1975
  %v2927 = vpop.f32.mrb[0].mxu0
  %v2928 = vadd.f32 %v2543, %v2927
  %v2929 = vpop.f32.mrb[0].mxu0
  %2930 = vmatprep.mubr.f32.mxu0 %v1985
  %2931 = vmatmul.mubr.f32.gmra.mrb[0].mxu0 %v1984
  %v2932 = vpop.f32.mrb[0].mxu0
  %v2933 = vadd.f32 %v2548, %v2932
  %v2934 = vpop.f32.mrb[0].mxu0
  %2935 = vmatprep.mubr.f32.mxu0 %v1994
  %2936 = vmatmul.mubr.f32.gmra.mrb[0].mxu0 %v1993
  %v2937 = vpop.f32.mrb[0].mxu0
  %v2938 = vadd.f32 %v2553, %v2937
  %v2939 = vpop.f32.mrb[0].mxu0
  %2940 = vmatprep.mubr.f32.mxu0 %v2003
  %2941 = vmatmul.mubr.f32.gmra.mrb[0].mxu0 %v2002
  %v2942 = vpop.f32.mrb[0].mxu0
  %v2943 = vadd.f32 %v2558, %v2942
  %v2944 = vpop.f32.mrb[0].mxu0
  %2945 = vmatprep.mubr.f32.mxu0 %v2012
  %2946 = vmatmul.mubr.f32.gmra.mrb[0].mxu0 %v2011
  %v2947 = vpop.f32.mrb[0].mxu0
  %v2948 = vadd.f32 %v2563, %v2947
  %v2949 = vpop.f32.mrb[0].mxu0
  %2950 = vmatprep.mubr.f32.mxu0 %v2021
  %2951 = vmatmul.mubr.f32.gmra.mrb[0].mxu0 %v2020
  %v2952 = vpop.f32.mrb[0].mxu0
  %v2953 = vadd.f32 %v2568, %v2952
  %v2954 = vpop.f32.mrb[0].mxu0
  %2955 = vmatprep.mubr.f32.mxu0 %v2030
  %2956 = vmatmul.mubr.f32.gmra.mrb[0].mxu0 %v2029
  %v2957 = vpop.f32.mrb[0].mxu0
  %v2958 = vadd.f32 %v2573, %v2957
  %v2959 = vpop.f32.mrb[0].mxu0
  %2960 = vmatprep.mubr.f32.mxu0 %v2039
  %2961 = vmatmul.mubr.f32.gmra.mrb[0].mxu0 %v2038
  %v2962 = vpop.f32.mrb[0].mxu0
  %v2963 = vadd.f32 %v2578, %v2962
  %v2964 = vpop.f32.mrb[0].mxu0
  %2965 = vdwg.mxu0
  %2966 = vmatprep.subr.mxu0 0.0
  %2967 = vmatpush1.msra.mxu0 %v2109
  %2968 = vmatprep.subr.mxu0 0.0
  %2969 = vmatpush1.msra.mxu0 %v2110
  %2970 = vmatprep.subr.mxu0 0.0
  %2971 = vmatpush1.msra.mxu0 %v2111
  %2972 = vmatprep.subr.mxu0 0.0
  %2973 = vmatpush1.msra.mxu0 %v2112
  %2974 = vmatprep.subr.mxu0 0.0
  %2975 = vmatpush1.msra.mxu0 %v2113
  %2976 = vmatprep.subr.mxu0 0.0
  %2977 = vmatpush1.msra.mxu0 %v2114
  %2978 = vmatprep.subr.mxu0 0.0
  %2979 = vmatpush1.msra.mxu0 %v2115
  %2980 = vmatprep.subr.mxu0 0.0
  %2981 = vmatpush1.msra.mxu0 %v2116
  %2982 = vmatprep.subr.mxu0 0.0
  %2983 = vmatpush1.msra.mxu0 %v2117
  %2984 = vmatprep.subr.mxu0 0.0
  %2985 = vmatpush1.msra.mxu0 %v2118
  %2986 = vmatprep.subr.mxu0 0.0
  %2987 = vmatpush1.msra.mxu0 %v2119
  %2988 = vmatprep.subr.mxu0 0.0
  %2989 = vmatpush1.msra.mxu0 %v2120
  %2990 = vmatprep.subr.mxu0 0.0
  %2991 = vmatpush1.msra.mxu0 %v2121
  %2992 = vmatprep.subr.mxu0 0.0
  %2993 = vmatpush1.msra.mxu0 %v2122
  %2994 = vmatprep.subr.mxu0 0.0
  %2995 = vmatpush1.msra.mxu0 %v2123
  %2996 = vmatprep.subr.mxu0 0.0
  %2997 = vmatpush1.msra.mxu0 %v2124
  %2998 = vmatprep.subr.mxu0 0.0
  %2999 = vmatpush1.msra.mxu0 %v2125
  %3000 = vmatprep.subr.mxu0 0.0
  %3001 = vmatpush1.msra.mxu0 %v2126
  %3002 = vmatprep.subr.mxu0 0.0
  %3003 = vmatpush1.msra.mxu0 %v2127
  %3004 = vmatprep.subr.mxu0 0.0
  %3005 = vmatpush1.msra.mxu0 %v2128
  %3006 = vmatprep.subr.mxu0 0.0
  %3007 = vmatpush1.msra.mxu0 %v2129
  %3008 = vmatprep.subr.mxu0 0.0
  %3009 = vmatpush1.msra.mxu0 %v2130
  %3010 = vmatprep.subr.mxu0 0.0
  %3011 = vmatpush1.msra.mxu0 %v2131
  %3012 = vmatprep.subr.mxu0 0.0
  %3013 = vmatpush1.msra.mxu0 %v2132
  %3014 = vmatprep.subr.mxu0 0.0
  %3015 = vmatpush1.msra.mxu0 %v2133
  %3016 = vmatprep.subr.mxu0 0.0
  %3017 = vmatpush1.msra.mxu0 %v2134
  %3018 = vmatprep.subr.mxu0 0.0
  %3019 = vmatpush1.msra.mxu0 %v2135
  %3020 = vmatprep.subr.mxu0 0.0
  %3021 = vmatpush1.msra.mxu0 %v2136
  %3022 = vmatprep.subr.mxu0 0.0
  %3023 = vmatpush1.msra.mxu0 %v2137
  %3024 = vmatprep.subr.mxu0 0.0
  %3025 = vmatpush1.msra.mxu0 %v2138
  %3026 = vmatprep.subr.mxu0 0.0
  %3027 = vmatpush1.msra.mxu0 %v2139
  %3028 = vmatprep.subr.mxu0 0.0
  %3029 = vmatpush1.msra.mxu0 %v2140
  %3030 = vmatprep.mubr.f32.mxu0 %v1474
  %3031 = vmatmul.mubr.f32.gmra.mrb[0].mxu0 %v1473
  %v3032 = vpop.f32.mrb[0].mxu0
  %v3033 = vadd.f32 %v2648, %v3032
  %v3034 = vpop.f32.mrb[0].mxu0
  %3035 = vmatprep.mubr.f32.mxu0 %v1483
  %3036 = vmatmul.mubr.f32.gmra.mrb[0].mxu0 %v1482
  %v3037 = vpop.f32.mrb[0].mxu0
  %v3038 = vadd.f32 %v2653, %v3037
  %v3039 = vpop.f32.mrb[0].mxu0
  %3040 = vmatprep.mubr.f32.mxu0 %v1492
  %3041 = vmatmul.mubr.f32.gmra.mrb[0].mxu0 %v1491
  %v3042 = vpop.f32.mrb[0].mxu0
  %v3043 = vadd.f32 %v2658, %v3042
  %v3044 = vpop.f32.mrb[0].mxu0
  %3045 = vmatprep.mubr.f32.mxu0 %v1501
  %3046 = vmatmul.mubr.f32.gmra.mrb[0].mxu0 %v1500
  %v3047 = vpop.f32.mrb[0].mxu0
  %v3048 = vadd.f32 %v2663, %v3047
  %v3049 = vpop.f32.mrb[0].mxu0
  %3050 = vmatprep.mubr.f32.mxu0 %v1510
  %3051 = vmatmul.mubr.f32.gmra.mrb[0].mxu0 %v1509
  %v3052 = vpop.f32.mrb[0].mxu0
  %v3053 = vadd.f32 %v2668, %v3052
  %v3054 = vpop.f32.mrb[0].mxu0
  %3055 = vmatprep.mubr.f32.mxu0 %v1519
  %3056 = vmatmul.mubr.f32.gmra.mrb[0].mxu0 %v1518
  %v3057 = vpop.f32.mrb[0].mxu0
  %v3058 = vadd.f32 %v2673, %v3057
  %v3059 = vpop.f32.mrb[0].mxu0
  %3060 = vmatprep.mubr.f32.mxu0 %v1528
  %3061 = vmatmul.mubr.f32.gmra.mrb[0].mxu0 %v1527
  %v3062 = vpop.f32.mrb[0].mxu0
  %v3063 = vadd.f32 %v2678, %v3062
  %v3064 = vpop.f32.mrb[0].mxu0
  %3065 = vmatprep.mubr.f32.mxu0 %v1537
  %3066 = vmatmul.mubr.f32.gmra.mrb[0].mxu0 %v1536
  %v3067 = vpop.f32.mrb[0].mxu0
  %v3068 = vadd.f32 %v2683, %v3067
  %v3069 = vpop.f32.mrb[0].mxu0
  %3070 = vmatprep.mubr.f32.mxu0 %v1546
  %3071 = vmatmul.mubr.f32.gmra.mrb[0].mxu0 %v1545
  %v3072 = vpop.f32.mrb[0].mxu0
  %v3073 = vadd.f32 %v2688, %v3072
  %v3074 = vpop.f32.mrb[0].mxu0
  %3075 = vmatprep.mubr.f32.mxu0 %v1555
  %3076 = vmatmul.mubr.f32.gmra.mrb[0].mxu0 %v1554
  %v3077 = vpop.f32.mrb[0].mxu0
  %v3078 = vadd.f32 %v2693, %v3077
  %v3079 = vpop.f32.mrb[0].mxu0
  %3080 = vmatprep.mubr.f32.mxu0 %v1564
  %3081 = vmatmul.mubr.f32.gmra.mrb[0].mxu0 %v1563
  %v3082 = vpop.f32.mrb[0].mxu0
  %v3083 = vadd.f32 %v2698, %v3082
  %v3084 = vpop.f32.mrb[0].mxu0
  %3085 = vmatprep.mubr.f32.mxu0 %v1573
  %3086 = vmatmul.mubr.f32.gmra.mrb[0].mxu0 %v1572
  %v3087 = vpop.f32.mrb[0].mxu0
  %v3088 = vadd.f32 %v2703, %v3087
  %v3089 = vpop.f32.mrb[0].mxu0
  %3090 = vmatprep.mubr.f32.mxu0 %v1582
  %3091 = vmatmul.mubr.f32.gmra.mrb[0].mxu0 %v1581
  %v3092 = vpop.f32.mrb[0].mxu0
  %v3093 = vadd.f32 %v2708, %v3092
  %v3094 = vpop.f32.mrb[0].mxu0
  %3095 = vmatprep.mubr.f32.mxu0 %v1591
  %3096 = vmatmul.mubr.f32.gmra.mrb[0].mxu0 %v1590
  %v3097 = vpop.f32.mrb[0].mxu0
  %v3098 = vadd.f32 %v2713, %v3097
  %v3099 = vpop.f32.mrb[0].mxu0
  %3100 = vmatprep.mubr.f32.mxu0 %v1600
  %3101 = vmatmul.mubr.f32.gmra.mrb[0].mxu0 %v1599
  %v3102 = vpop.f32.mrb[0].mxu0
  %v3103 = vadd.f32 %v2718, %v3102
  %v3104 = vpop.f32.mrb[0].mxu0
  %3105 = vmatprep.mubr.f32.mxu0 %v1609
  %3106 = vmatmul.mubr.f32.gmra.mrb[0].mxu0 %v1608
  %v3107 = vpop.f32.mrb[0].mxu0
  %v3108 = vadd.f32 %v2723, %v3107
  %v3109 = vpop.f32.mrb[0].mxu0
  %3110 = vmatprep.mubr.f32.mxu0 %v1618
  %3111 = vmatmul.mubr.f32.gmra.mrb[0].mxu0 %v1617
  %v3112 = vpop.f32.mrb[0].mxu0
  %v3113 = vadd.f32 %v2728, %v3112
  %v3114 = vpop.f32.mrb[0].mxu0
  %3115 = vmatprep.mubr.f32.mxu0 %v1627
  %3116 = vmatmul.mubr.f32.gmra.mrb[0].mxu0 %v1626
  %v3117 = vpop.f32.mrb[0].mxu0
  %v3118 = vadd.f32 %v2733, %v3117
  %v3119 = vpop.f32.mrb[0].mxu0
  %3120 = vmatprep.mubr.f32.mxu0 %v1636
  %3121 = vmatmul.mubr.f32.gmra.mrb[0].mxu0 %v1635
  %v3122 = vpop.f32.mrb[0].mxu0
  %v3123 = vadd.f32 %v2738, %v3122
  %v3124 = vpop.f32.mrb[0].mxu0
  %3125 = vmatprep.mubr.f32.mxu0 %v1645
  %3126 = vmatmul.mubr.f32.gmra.mrb[0].mxu0 %v1644
  %v3127 = vpop.f32.mrb[0].mxu0
  %v3128 = vadd.f32 %v2743, %v3127
  %v3129 = vpop.f32.mrb[0].mxu0
  %3130 = vmatprep.mubr.f32.mxu0 %v1654
  %3131 = vmatmul.mubr.f32.gmra.mrb[0].mxu0 %v1653
  %v3132 = vpop.f32.mrb[0].mxu0
  %v3133 = vadd.f32 %v2748, %v3132
  %v3134 = vpop.f32.mrb[0].mxu0
  %3135 = vmatprep.mubr.f32.mxu0 %v1663
  %3136 = vmatmul.mubr.f32.gmra.mrb[0].mxu0 %v1662
  %v3137 = vpop.f32.mrb[0].mxu0
  %v3138 = vadd.f32 %v2753, %v3137
  %v3139 = vpop.f32.mrb[0].mxu0
  %3140 = vmatprep.mubr.f32.mxu0 %v1672
  %3141 = vmatmul.mubr.f32.gmra.mrb[0].mxu0 %v1671
  %v3142 = vpop.f32.mrb[0].mxu0
  %v3143 = vadd.f32 %v2758, %v3142
  %v3144 = vpop.f32.mrb[0].mxu0
  %3145 = vmatprep.mubr.f32.mxu0 %v1681
  %3146 = vmatmul.mubr.f32.gmra.mrb[0].mxu0 %v1680
  %v3147 = vpop.f32.mrb[0].mxu0
  %v3148 = vadd.f32 %v2763, %v3147
  %v3149 = vpop.f32.mrb[0].mxu0
  %3150 = vmatprep.mubr.f32.mxu0 %v1690
  %3151 = vmatmul.mubr.f32.gmra.mrb[0].mxu0 %v1689
  %v3152 = vpop.f32.mrb[0].mxu0
  %v3153 = vadd.f32 %v2768, %v3152
  %v3154 = vpop.f32.mrb[0].mxu0
  %3155 = vmatprep.mubr.f32.mxu0 %v1699
  %3156 = vmatmul.mubr.f32.gmra.mrb[0].mxu0 %v1698
  %v3157 = vpop.f32.mrb[0].mxu0
  %v3158 = vadd.f32 %v2773, %v3157
  %v3159 = vpop.f32.mrb[0].mxu0
  %3160 = vmatprep.mubr.f32.mxu0 %v1708
  %3161 = vmatmul.mubr.f32.gmra.mrb[0].mxu0 %v1707
  %v3162 = vpop.f32.mrb[0].mxu0
  %v3163 = vadd.f32 %v2778, %v3162
  %v3164 = vpop.f32.mrb[0].mxu0
  %3165 = vmatprep.mubr.f32.mxu0 %v1717
  %3166 = vmatmul.mubr.f32.gmra.mrb[0].mxu0 %v1716
  %v3167 = vpop.f32.mrb[0].mxu0
  %v3168 = vadd.f32 %v2783, %v3167
  %v3169 = vpop.f32.mrb[0].mxu0
  %3170 = vmatprep.mubr.f32.mxu0 %v1726
  %3171 = vmatmul.mubr.f32.gmra.mrb[0].mxu0 %v1725
  %v3172 = vpop.f32.mrb[0].mxu0
  %v3173 = vadd.f32 %v2788, %v3172
  %v3174 = vpop.f32.mrb[0].mxu0
  %3175 = vmatprep.mubr.f32.mxu0 %v1735
  %3176 = vmatmul.mubr.f32.gmra.mrb[0].mxu0 %v1734
  %v3177 = vpop.f32.mrb[0].mxu0
  %v3178 = vadd.f32 %v2793, %v3177
  %v3179 = vpop.f32.mrb[0].mxu0
  %3180 = vmatprep.mubr.f32.mxu0 %v1744
  %3181 = vmatmul.mubr.f32.gmra.mrb[0].mxu0 %v1743
  %v3182 = vpop.f32.mrb[0].mxu0
  %v3183 = vadd.f32 %v2798, %v3182
  %v3184 = vpop.f32.mrb[0].mxu0
  %3185 = vmatprep.mubr.f32.mxu0 %v1753
  %3186 = vmatmul.mubr.f32.gmra.mrb[0].mxu0 %v1752
  %v3187 = vpop.f32.mrb[0].mxu0
  %v3188 = vadd.f32 %v2803, %v3187
  %v3189 = vpop.f32.mrb[0].mxu0
  %3190 = vmatprep.mubr.f32.mxu0 %v1762
  %3191 = vmatmul.mubr.f32.gmra.mrb[0].mxu0 %v1761
  %v3192 = vpop.f32.mrb[0].mxu0
  %v3193 = vadd.f32 %v2808, %v3192
  %v3194 = vpop.f32.mrb[0].mxu0
  %3195 = vmatprep.mubr.f32.mxu0 %v1771
  %3196 = vmatmul.mubr.f32.gmra.mrb[0].mxu0 %v1770
  %v3197 = vpop.f32.mrb[0].mxu0
  %v3198 = vadd.f32 %v2813, %v3197
  %v3199 = vpop.f32.mrb[0].mxu0
  %3200 = vmatprep.mubr.f32.mxu0 %v1780
  %3201 = vmatmul.mubr.f32.gmra.mrb[0].mxu0 %v1779
  %v3202 = vpop.f32.mrb[0].mxu0
  %v3203 = vadd.f32 %v2818, %v3202
  %v3204 = vpop.f32.mrb[0].mxu0
  %3205 = vmatprep.mubr.f32.mxu0 %v1789
  %3206 = vmatmul.mubr.f32.gmra.mrb[0].mxu0 %v1788
  %v3207 = vpop.f32.mrb[0].mxu0
  %v3208 = vadd.f32 %v2823, %v3207
  %v3209 = vpop.f32.mrb[0].mxu0
  %3210 = vmatprep.mubr.f32.mxu0 %v1798
  %3211 = vmatmul.mubr.f32.gmra.mrb[0].mxu0 %v1797
  %v3212 = vpop.f32.mrb[0].mxu0
  %v3213 = vadd.f32 %v2828, %v3212
  %v3214 = vpop.f32.mrb[0].mxu0
  %3215 = vmatprep.mubr.f32.mxu0 %v1807
  %3216 = vmatmul.mubr.f32.gmra.mrb[0].mxu0 %v1806
  %v3217 = vpop.f32.mrb[0].mxu0
  %v3218 = vadd.f32 %v2833, %v3217
  %v3219 = vpop.f32.mrb[0].mxu0
  %3220 = vmatprep.mubr.f32.mxu0 %v1816
  %3221 = vmatmul.mubr.f32.gmra.mrb[0].mxu0 %v1815
  %v3222 = vpop.f32.mrb[0].mxu0
  %v3223 = vadd.f32 %v2838, %v3222
  %v3224 = vpop.f32.mrb[0].mxu0
  %3225 = vmatprep.mubr.f32.mxu0 %v1825
  %3226 = vmatmul.mubr.f32.gmra.mrb[0].mxu0 %v1824
  %v3227 = vpop.f32.mrb[0].mxu0
  %v3228 = vadd.f32 %v2843, %v3227
  %v3229 = vpop.f32.mrb[0].mxu0
  %3230 = vmatprep.mubr.f32.mxu0 %v1834
  %3231 = vmatmul.mubr.f32.gmra.mrb[0].mxu0 %v1833
  %v3232 = vpop.f32.mrb[0].mxu0
  %v3233 = vadd.f32 %v2848, %v3232
  %v3234 = vpop.f32.mrb[0].mxu0
  %3235 = vmatprep.mubr.f32.mxu0 %v1843
  %3236 = vmatmul.mubr.f32.gmra.mrb[0].mxu0 %v1842
  %v3237 = vpop.f32.mrb[0].mxu0
  %v3238 = vadd.f32 %v2853, %v3237
  %v3239 = vpop.f32.mrb[0].mxu0
  %3240 = vmatprep.mubr.f32.mxu0 %v1852
  %3241 = vmatmul.mubr.f32.gmra.mrb[0].mxu0 %v1851
  %v3242 = vpop.f32.mrb[0].mxu0
  %v3243 = vadd.f32 %v2858, %v3242
  %v3244 = vpop.f32.mrb[0].mxu0
  %3245 = vmatprep.mubr.f32.mxu0 %v1861
  %3246 = vmatmul.mubr.f32.gmra.mrb[0].mxu0 %v1860
  %v3247 = vpop.f32.mrb[0].mxu0
  %v3248 = vadd.f32 %v2863, %v3247
  %v3249 = vpop.f32.mrb[0].mxu0
  %3250 = vmatprep.mubr.f32.mxu0 %v1870
  %3251 = vmatmul.mubr.f32.gmra.mrb[0].mxu0 %v1869
  %v3252 = vpop.f32.mrb[0].mxu0
  %v3253 = vadd.f32 %v2868, %v3252
  %v3254 = vpop.f32.mrb[0].mxu0
  %3255 = vmatprep.mubr.f32.mxu0 %v1879
  %3256 = vmatmul.mubr.f32.gmra.mrb[0].mxu0 %v1878
  %v3257 = vpop.f32.mrb[0].mxu0
  %v3258 = vadd.f32 %v2873, %v3257
  %v3259 = vpop.f32.mrb[0].mxu0
  %3260 = vmatprep.mubr.f32.mxu0 %v1888
  %3261 = vmatmul.mubr.f32.gmra.mrb[0].mxu0 %v1887
  %v3262 = vpop.f32.mrb[0].mxu0
  %v3263 = vadd.f32 %v2878, %v3262
  %v3264 = vpop.f32.mrb[0].mxu0
  %3265 = vmatprep.mubr.f32.mxu0 %v1897
  %3266 = vmatmul.mubr.f32.gmra.mrb[0].mxu0 %v1896
  %v3267 = vpop.f32.mrb[0].mxu0
  %v3268 = vadd.f32 %v2883, %v3267
  %v3269 = vpop.f32.mrb[0].mxu0
  %3270 = vmatprep.mubr.f32.mxu0 %v1906
  %3271 = vmatmul.mubr.f32.gmra.mrb[0].mxu0 %v1905
  %v3272 = vpop.f32.mrb[0].mxu0
  %v3273 = vadd.f32 %v2888, %v3272
  %v3274 = vpop.f32.mrb[0].mxu0
  %3275 = vmatprep.mubr.f32.mxu0 %v1915
  %3276 = vmatmul.mubr.f32.gmra.mrb[0].mxu0 %v1914
  %v3277 = vpop.f32.mrb[0].mxu0
  %v3278 = vadd.f32 %v2893, %v3277
  %v3279 = vpop.f32.mrb[0].mxu0
  %3280 = vmatprep.mubr.f32.mxu0 %v1924
  %3281 = vmatmul.mubr.f32.gmra.mrb[0].mxu0 %v1923
  %v3282 = vpop.f32.mrb[0].mxu0
  %v3283 = vadd.f32 %v2898, %v3282
  %v3284 = vpop.f32.mrb[0].mxu0
  %3285 = vmatprep.mubr.f32.mxu0 %v1933
  %3286 = vmatmul.mubr.f32.gmra.mrb[0].mxu0 %v1932
  %v3287 = vpop.f32.mrb[0].mxu0
  %v3288 = vadd.f32 %v2903, %v3287
  %v3289 = vpop.f32.mrb[0].mxu0
  %3290 = vmatprep.mubr.f32.mxu0 %v1942
  %3291 = vmatmul.mubr.f32.gmra.mrb[0].mxu0 %v1941
  %v3292 = vpop.f32.mrb[0].mxu0
  %v3293 = vadd.f32 %v2908, %v3292
  %v3294 = vpop.f32.mrb[0].mxu0
  %3295 = vmatprep.mubr.f32.mxu0 %v1951
  %3296 = vmatmul.mubr.f32.gmra.mrb[0].mxu0 %v1950
  %v3297 = vpop.f32.mrb[0].mxu0
  %v3298 = vadd.f32 %v2913, %v3297
  %v3299 = vpop.f32.mrb[0].mxu0
  %3300 = vmatprep.mubr.f32.mxu0 %v1960
  %3301 = vmatmul.mubr.f32.gmra.mrb[0].mxu0 %v1959
  %v3302 = vpop.f32.mrb[0].mxu0
  %v3303 = vadd.f32 %v2918, %v3302
  %v3304 = vpop.f32.mrb[0].mxu0
  %3305 = vmatprep.mubr.f32.mxu0 %v1969
  %3306 = vmatmul.mubr.f32.gmra.mrb[0].mxu0 %v1968
  %v3307 = vpop.f32.mrb[0].mxu0
  %v3308 = vadd.f32 %v2923, %v3307
  %v3309 = vpop.f32.mrb[0].mxu0
  %3310 = vmatprep.mubr.f32.mxu0 %v1978
  %3311 = vmatmul.mubr.f32.gmra.mrb[0].mxu0 %v1977
  %v3312 = vpop.f32.mrb[0].mxu0
  %v3313 = vadd.f32 %v2928, %v3312
  %v3314 = vpop.f32.mrb[0].mxu0
  %3315 = vmatprep.mubr.f32.mxu0 %v1987
  %3316 = vmatmul.mubr.f32.gmra.mrb[0].mxu0 %v1986
  %v3317 = vpop.f32.mrb[0].mxu0
  %v3318 = vadd.f32 %v2933, %v3317
  %v3319 = vpop.f32.mrb[0].mxu0
  %3320 = vmatprep.mubr.f32.mxu0 %v1996
  %3321 = vmatmul.mubr.f32.gmra.mrb[0].mxu0 %v1995
  %v3322 = vpop.f32.mrb[0].mxu0
  %v3323 = vadd.f32 %v2938, %v3322
  %v3324 = vpop.f32.mrb[0].mxu0
  %3325 = vmatprep.mubr.f32.mxu0 %v2005
  %3326 = vmatmul.mubr.f32.gmra.mrb[0].mxu0 %v2004
  %v3327 = vpop.f32.mrb[0].mxu0
  %v3328 = vadd.f32 %v2943, %v3327
  %v3329 = vpop.f32.mrb[0].mxu0
  %3330 = vmatprep.mubr.f32.mxu0 %v2014
  %3331 = vmatmul.mubr.f32.gmra.mrb[0].mxu0 %v2013
  %v3332 = vpop.f32.mrb[0].mxu0
  %v3333 = vadd.f32 %v2948, %v3332
  %v3334 = vpop.f32.mrb[0].mxu0
  %3335 = vmatprep.mubr.f32.mxu0 %v2023
  %3336 = vmatmul.mubr.f32.gmra.mrb[0].mxu0 %v2022
  %v3337 = vpop.f32.mrb[0].mxu0
  %v3338 = vadd.f32 %v2953, %v3337
  %v3339 = vpop.f32.mrb[0].mxu0
  %3340 = vmatprep.mubr.f32.mxu0 %v2032
  %3341 = vmatmul.mubr.f32.gmra.mrb[0].mxu0 %v2031
  %v3342 = vpop.f32.mrb[0].mxu0
  %v3343 = vadd.f32 %v2958, %v3342
  %v3344 = vpop.f32.mrb[0].mxu0
  %3345 = vmatprep.mubr.f32.mxu0 %v2041
  %3346 = vmatmul.mubr.f32.gmra.mrb[0].mxu0 %v2040
  %v3347 = vpop.f32.mrb[0].mxu0
  %v3348 = vadd.f32 %v2963, %v3347
  %v3349 = vpop.f32.mrb[0].mxu0
  %3350 = vdwg.mxu0
  %3351 = vmatprep.subr.mxu0 0.0
  %3352 = vmatpush1.msra.mxu0 %v2141
  %3353 = vmatprep.subr.mxu0 0.0
  %3354 = vmatpush1.msra.mxu0 %v2142
  %3355 = vmatprep.subr.mxu0 0.0
  %3356 = vmatpush1.msra.mxu0 %v2143
  %3357 = vmatprep.subr.mxu0 0.0
  %3358 = vmatpush1.msra.mxu0 %v2144
  %3359 = vmatprep.subr.mxu0 0.0
  %3360 = vmatpush1.msra.mxu0 %v2145
  %3361 = vmatprep.subr.mxu0 0.0
  %3362 = vmatpush1.msra.mxu0 %v2146
  %3363 = vmatprep.subr.mxu0 0.0
  %3364 = vmatpush1.msra.mxu0 %v2147
  %3365 = vmatprep.subr.mxu0 0.0
  %3366 = vmatpush1.msra.mxu0 %v2148
  %3367 = vmatprep.subr.mxu0 0.0
  %3368 = vmatpush1.msra.mxu0 %v2149
  %3369 = vmatprep.subr.mxu0 0.0
  %3370 = vmatpush1.msra.mxu0 %v2150
  %3371 = vmatprep.subr.mxu0 0.0
  %3372 = vmatpush1.msra.mxu0 %v2151
  %3373 = vmatprep.subr.mxu0 0.0
  %3374 = vmatpush1.msra.mxu0 %v2152
  %3375 = vmatprep.subr.mxu0 0.0
  %3376 = vmatpush1.msra.mxu0 %v2153
  %3377 = vmatprep.subr.mxu0 0.0
  %3378 = vmatpush1.msra.mxu0 %v2154
  %3379 = vmatprep.subr.mxu0 0.0
  %3380 = vmatpush1.msra.mxu0 %v2155
  %3381 = vmatprep.subr.mxu0 0.0
  %3382 = vmatpush1.msra.mxu0 %v2156
  %3383 = vmatprep.subr.mxu0 0.0
  %3384 = vmatpush1.msra.mxu0 %v2157
  %3385 = vmatprep.subr.mxu0 0.0
  %3386 = vmatpush1.msra.mxu0 %v2158
  %3387 = vmatprep.subr.mxu0 0.0
  %3388 = vmatpush1.msra.mxu0 %v2159
  %3389 = vmatprep.subr.mxu0 0.0
  %3390 = vmatpush1.msra.mxu0 %v2160
  %3391 = vmatprep.subr.mxu0 0.0
  %3392 = vmatpush1.msra.mxu0 %v2161
  %3393 = vmatprep.subr.mxu0 0.0
  %3394 = vmatpush1.msra.mxu0 %v2162
  %3395 = vmatprep.subr.mxu0 0.0
  %3396 = vmatpush1.msra.mxu0 %v2163
  %3397 = vmatprep.subr.mxu0 0.0
  %3398 = vmatpush1.msra.mxu0 %v2164
  %3399 = vmatprep.subr.mxu0 0.0
  %3400 = vmatpush1.msra.mxu0 %v2165
  %3401 = vmatprep.subr.mxu0 0.0
  %3402 = vmatpush1.msra.mxu0 %v2166
  %3403 = vmatprep.subr.mxu0 0.0
  %3404 = vmatpush1.msra.mxu0 %v2167
  %3405 = vmatprep.subr.mxu0 0.0
  %3406 = vmatpush1.msra.mxu0 %v2168
  %3407 = vmatprep.subr.mxu0 0.0
  %3408 = vmatpush1.msra.mxu0 %v2169
  %3409 = vmatprep.subr.mxu0 0.0
  %3410 = vmatpush1.msra.mxu0 %v2170
  %3411 = vmatprep.subr.mxu0 0.0
  %3412 = vmatpush1.msra.mxu0 %v2171
  %3413 = vmatprep.subr.mxu0 0.0
  %3414 = vmatpush1.msra.mxu0 %v2172
  %3415 = vmatprep.mubr.f32.mxu0 %v1476
  %3416 = vmatmul.mubr.f32.gmra.mrb[0].mxu0 %v1475
  %v3417 = vpop.f32.mrb[0].mxu0
  %v3418 = vadd.f32 %v3033, %v3417
  %v3419 = vpop.f32.mrb[0].mxu0
  %3420 = vmatprep.mubr.f32.mxu0 %v1485
  %3421 = vmatmul.mubr.f32.gmra.mrb[0].mxu0 %v1484
  %v3422 = vpop.f32.mrb[0].mxu0
  %v3423 = vadd.f32 %v3038, %v3422
  %v3424 = vpop.f32.mrb[0].mxu0
  %3425 = vmatprep.mubr.f32.mxu0 %v1494
  %3426 = vmatmul.mubr.f32.gmra.mrb[0].mxu0 %v1493
  %v3427 = vpop.f32.mrb[0].mxu0
  %v3428 = vadd.f32 %v3043, %v3427
  %v3429 = vpop.f32.mrb[0].mxu0
  %3430 = vmatprep.mubr.f32.mxu0 %v1503
  %3431 = vmatmul.mubr.f32.gmra.mrb[0].mxu0 %v1502
  %v3432 = vpop.f32.mrb[0].mxu0
  %v3433 = vadd.f32 %v3048, %v3432
  %v3434 = vpop.f32.mrb[0].mxu0
  %3435 = vmatprep.mubr.f32.mxu0 %v1512
  %3436 = vmatmul.mubr.f32.gmra.mrb[0].mxu0 %v1511
  %v3437 = vpop.f32.mrb[0].mxu0
  %v3438 = vadd.f32 %v3053, %v3437
  %v3439 = vpop.f32.mrb[0].mxu0
  %3440 = vmatprep.mubr.f32.mxu0 %v1521
  %3441 = vmatmul.mubr.f32.gmra.mrb[0].mxu0 %v1520
  %v3442 = vpop.f32.mrb[0].mxu0
  %v3443 = vadd.f32 %v3058, %v3442
  %v3444 = vpop.f32.mrb[0].mxu0
  %3445 = vmatprep.mubr.f32.mxu0 %v1530
  %3446 = vmatmul.mubr.f32.gmra.mrb[0].mxu0 %v1529
  %v3447 = vpop.f32.mrb[0].mxu0
  %v3448 = vadd.f32 %v3063, %v3447
  %v3449 = vpop.f32.mrb[0].mxu0
  %3450 = vmatprep.mubr.f32.mxu0 %v1539
  %3451 = vmatmul.mubr.f32.gmra.mrb[0].mxu0 %v1538
  %v3452 = vpop.f32.mrb[0].mxu0
  %v3453 = vadd.f32 %v3068, %v3452
  %v3454 = vpop.f32.mrb[0].mxu0
  %3455 = vmatprep.mubr.f32.mxu0 %v1548
  %3456 = vmatmul.mubr.f32.gmra.mrb[0].mxu0 %v1547
  %v3457 = vpop.f32.mrb[0].mxu0
  %v3458 = vadd.f32 %v3073, %v3457
  %v3459 = vpop.f32.mrb[0].mxu0
  %3460 = vmatprep.mubr.f32.mxu0 %v1557
  %3461 = vmatmul.mubr.f32.gmra.mrb[0].mxu0 %v1556
  %v3462 = vpop.f32.mrb[0].mxu0
  %v3463 = vadd.f32 %v3078, %v3462
  %v3464 = vpop.f32.mrb[0].mxu0
  %3465 = vmatprep.mubr.f32.mxu0 %v1566
  %3466 = vmatmul.mubr.f32.gmra.mrb[0].mxu0 %v1565
  %v3467 = vpop.f32.mrb[0].mxu0
  %v3468 = vadd.f32 %v3083, %v3467
  %v3469 = vpop.f32.mrb[0].mxu0
  %3470 = vmatprep.mubr.f32.mxu0 %v1575
  %3471 = vmatmul.mubr.f32.gmra.mrb[0].mxu0 %v1574
  %v3472 = vpop.f32.mrb[0].mxu0
  %v3473 = vadd.f32 %v3088, %v3472
  %v3474 = vpop.f32.mrb[0].mxu0
  %3475 = vmatprep.mubr.f32.mxu0 %v1584
  %3476 = vmatmul.mubr.f32.gmra.mrb[0].mxu0 %v1583
  %v3477 = vpop.f32.mrb[0].mxu0
  %v3478 = vadd.f32 %v3093, %v3477
  %v3479 = vpop.f32.mrb[0].mxu0
  %3480 = vmatprep.mubr.f32.mxu0 %v1593
  %3481 = vmatmul.mubr.f32.gmra.mrb[0].mxu0 %v1592
  %v3482 = vpop.f32.mrb[0].mxu0
  %v3483 = vadd.f32 %v3098, %v3482
  %v3484 = vpop.f32.mrb[0].mxu0
  %3485 = vmatprep.mubr.f32.mxu0 %v1602
  %3486 = vmatmul.mubr.f32.gmra.mrb[0].mxu0 %v1601
  %v3487 = vpop.f32.mrb[0].mxu0
  %v3488 = vadd.f32 %v3103, %v3487
  %v3489 = vpop.f32.mrb[0].mxu0
  %3490 = vmatprep.mubr.f32.mxu0 %v1611
  %3491 = vmatmul.mubr.f32.gmra.mrb[0].mxu0 %v1610
  %v3492 = vpop.f32.mrb[0].mxu0
  %v3493 = vadd.f32 %v3108, %v3492
  %v3494 = vpop.f32.mrb[0].mxu0
  %3495 = vmatprep.mubr.f32.mxu0 %v1620
  %3496 = vmatmul.mubr.f32.gmra.mrb[0].mxu0 %v1619
  %v3497 = vpop.f32.mrb[0].mxu0
  %v3498 = vadd.f32 %v3113, %v3497
  %v3499 = vpop.f32.mrb[0].mxu0
  %3500 = vmatprep.mubr.f32.mxu0 %v1629
  %3501 = vmatmul.mubr.f32.gmra.mrb[0].mxu0 %v1628
  %v3502 = vpop.f32.mrb[0].mxu0
  %v3503 = vadd.f32 %v3118, %v3502
  %v3504 = vpop.f32.mrb[0].mxu0
  %3505 = vmatprep.mubr.f32.mxu0 %v1638
  %3506 = vmatmul.mubr.f32.gmra.mrb[0].mxu0 %v1637
  %v3507 = vpop.f32.mrb[0].mxu0
  %v3508 = vadd.f32 %v3123, %v3507
  %v3509 = vpop.f32.mrb[0].mxu0
  %3510 = vmatprep.mubr.f32.mxu0 %v1647
  %3511 = vmatmul.mubr.f32.gmra.mrb[0].mxu0 %v1646
  %v3512 = vpop.f32.mrb[0].mxu0
  %v3513 = vadd.f32 %v3128, %v3512
  %v3514 = vpop.f32.mrb[0].mxu0
  %3515 = vmatprep.mubr.f32.mxu0 %v1656
  %3516 = vmatmul.mubr.f32.gmra.mrb[0].mxu0 %v1655
  %v3517 = vpop.f32.mrb[0].mxu0
  %v3518 = vadd.f32 %v3133, %v3517
  %v3519 = vpop.f32.mrb[0].mxu0
  %3520 = vmatprep.mubr.f32.mxu0 %v1665
  %3521 = vmatmul.mubr.f32.gmra.mrb[0].mxu0 %v1664
  %v3522 = vpop.f32.mrb[0].mxu0
  %v3523 = vadd.f32 %v3138, %v3522
  %v3524 = vpop.f32.mrb[0].mxu0
  %3525 = vmatprep.mubr.f32.mxu0 %v1674
  %3526 = vmatmul.mubr.f32.gmra.mrb[0].mxu0 %v1673
  %v3527 = vpop.f32.mrb[0].mxu0
  %v3528 = vadd.f32 %v3143, %v3527
  %v3529 = vpop.f32.mrb[0].mxu0
  %3530 = vmatprep.mubr.f32.mxu0 %v1683
  %3531 = vmatmul.mubr.f32.gmra.mrb[0].mxu0 %v1682
  %v3532 = vpop.f32.mrb[0].mxu0
  %v3533 = vadd.f32 %v3148, %v3532
  %v3534 = vpop.f32.mrb[0].mxu0
  %3535 = vmatprep.mubr.f32.mxu0 %v1692
  %3536 = vmatmul.mubr.f32.gmra.mrb[0].mxu0 %v1691
  %v3537 = vpop.f32.mrb[0].mxu0
  %v3538 = vadd.f32 %v3153, %v3537
  %v3539 = vpop.f32.mrb[0].mxu0
  %3540 = vmatprep.mubr.f32.mxu0 %v1701
  %3541 = vmatmul.mubr.f32.gmra.mrb[0].mxu0 %v1700
  %v3542 = vpop.f32.mrb[0].mxu0
  %v3543 = vadd.f32 %v3158, %v3542
  %v3544 = vpop.f32.mrb[0].mxu0
  %3545 = vmatprep.mubr.f32.mxu0 %v1710
  %3546 = vmatmul.mubr.f32.gmra.mrb[0].mxu0 %v1709
  %v3547 = vpop.f32.mrb[0].mxu0
  %v3548 = vadd.f32 %v3163, %v3547
  %v3549 = vpop.f32.mrb[0].mxu0
  %3550 = vmatprep.mubr.f32.mxu0 %v1719
  %3551 = vmatmul.mubr.f32.gmra.mrb[0].mxu0 %v1718
  %v3552 = vpop.f32.mrb[0].mxu0
  %v3553 = vadd.f32 %v3168, %v3552
  %v3554 = vpop.f32.mrb[0].mxu0
  %3555 = vmatprep.mubr.f32.mxu0 %v1728
  %3556 = vmatmul.mubr.f32.gmra.mrb[0].mxu0 %v1727
  %v3557 = vpop.f32.mrb[0].mxu0
  %v3558 = vadd.f32 %v3173, %v3557
  %v3559 = vpop.f32.mrb[0].mxu0
  %3560 = vmatprep.mubr.f32.mxu0 %v1737
  %3561 = vmatmul.mubr.f32.gmra.mrb[0].mxu0 %v1736
  %v3562 = vpop.f32.mrb[0].mxu0
  %v3563 = vadd.f32 %v3178, %v3562
  %v3564 = vpop.f32.mrb[0].mxu0
  %3565 = vmatprep.mubr.f32.mxu0 %v1746
  %3566 = vmatmul.mubr.f32.gmra.mrb[0].mxu0 %v1745
  %v3567 = vpop.f32.mrb[0].mxu0
  %v3568 = vadd.f32 %v3183, %v3567
  %v3569 = vpop.f32.mrb[0].mxu0
  %3570 = vmatprep.mubr.f32.mxu0 %v1755
  %3571 = vmatmul.mubr.f32.gmra.mrb[0].mxu0 %v1754
  %v3572 = vpop.f32.mrb[0].mxu0
  %v3573 = vadd.f32 %v3188, %v3572
  %v3574 = vpop.f32.mrb[0].mxu0
  %3575 = vmatprep.mubr.f32.mxu0 %v1764
  %3576 = vmatmul.mubr.f32.gmra.mrb[0].mxu0 %v1763
  %v3577 = vpop.f32.mrb[0].mxu0
  %v3578 = vadd.f32 %v3193, %v3577
  %v3579 = vpop.f32.mrb[0].mxu0
  %3580 = vmatprep.mubr.f32.mxu0 %v1773
  %3581 = vmatmul.mubr.f32.gmra.mrb[0].mxu0 %v1772
  %v3582 = vpop.f32.mrb[0].mxu0
  %v3583 = vadd.f32 %v3198, %v3582
  %v3584 = vpop.f32.mrb[0].mxu0
  %3585 = vmatprep.mubr.f32.mxu0 %v1782
  %3586 = vmatmul.mubr.f32.gmra.mrb[0].mxu0 %v1781
  %v3587 = vpop.f32.mrb[0].mxu0
  %v3588 = vadd.f32 %v3203, %v3587
  %v3589 = vpop.f32.mrb[0].mxu0
  %3590 = vmatprep.mubr.f32.mxu0 %v1791
  %3591 = vmatmul.mubr.f32.gmra.mrb[0].mxu0 %v1790
  %v3592 = vpop.f32.mrb[0].mxu0
  %v3593 = vadd.f32 %v3208, %v3592
  %v3594 = vpop.f32.mrb[0].mxu0
  %3595 = vmatprep.mubr.f32.mxu0 %v1800
  %3596 = vmatmul.mubr.f32.gmra.mrb[0].mxu0 %v1799
  %v3597 = vpop.f32.mrb[0].mxu0
  %v3598 = vadd.f32 %v3213, %v3597
  %v3599 = vpop.f32.mrb[0].mxu0
  %3600 = vmatprep.mubr.f32.mxu0 %v1809
  %3601 = vmatmul.mubr.f32.gmra.mrb[0].mxu0 %v1808
  %v3602 = vpop.f32.mrb[0].mxu0
  %v3603 = vadd.f32 %v3218, %v3602
  %v3604 = vpop.f32.mrb[0].mxu0
  %3605 = vmatprep.mubr.f32.mxu0 %v1818
  %3606 = vmatmul.mubr.f32.gmra.mrb[0].mxu0 %v1817
  %v3607 = vpop.f32.mrb[0].mxu0
  %v3608 = vadd.f32 %v3223, %v3607
  %v3609 = vpop.f32.mrb[0].mxu0
  %3610 = vmatprep.mubr.f32.mxu0 %v1827
  %3611 = vmatmul.mubr.f32.gmra.mrb[0].mxu0 %v1826
  %v3612 = vpop.f32.mrb[0].mxu0
  %v3613 = vadd.f32 %v3228, %v3612
  %v3614 = vpop.f32.mrb[0].mxu0
  %3615 = vmatprep.mubr.f32.mxu0 %v1836
  %3616 = vmatmul.mubr.f32.gmra.mrb[0].mxu0 %v1835
  %v3617 = vpop.f32.mrb[0].mxu0
  %v3618 = vadd.f32 %v3233, %v3617
  %v3619 = vpop.f32.mrb[0].mxu0
  %3620 = vmatprep.mubr.f32.mxu0 %v1845
  %3621 = vmatmul.mubr.f32.gmra.mrb[0].mxu0 %v1844
  %v3622 = vpop.f32.mrb[0].mxu0
  %v3623 = vadd.f32 %v3238, %v3622
  %v3624 = vpop.f32.mrb[0].mxu0
  %3625 = vmatprep.mubr.f32.mxu0 %v1854
  %3626 = vmatmul.mubr.f32.gmra.mrb[0].mxu0 %v1853
  %v3627 = vpop.f32.mrb[0].mxu0
  %v3628 = vadd.f32 %v3243, %v3627
  %v3629 = vpop.f32.mrb[0].mxu0
  %3630 = vmatprep.mubr.f32.mxu0 %v1863
  %3631 = vmatmul.mubr.f32.gmra.mrb[0].mxu0 %v1862
  %v3632 = vpop.f32.mrb[0].mxu0
  %v3633 = vadd.f32 %v3248, %v3632
  %v3634 = vpop.f32.mrb[0].mxu0
  %3635 = vmatprep.mubr.f32.mxu0 %v1872
  %3636 = vmatmul.mubr.f32.gmra.mrb[0].mxu0 %v1871
  %v3637 = vpop.f32.mrb[0].mxu0
  %v3638 = vadd.f32 %v3253, %v3637
  %v3639 = vpop.f32.mrb[0].mxu0
  %3640 = vmatprep.mubr.f32.mxu0 %v1881
  %3641 = vmatmul.mubr.f32.gmra.mrb[0].mxu0 %v1880
  %v3642 = vpop.f32.mrb[0].mxu0
  %v3643 = vadd.f32 %v3258, %v3642
  %v3644 = vpop.f32.mrb[0].mxu0
  %3645 = vmatprep.mubr.f32.mxu0 %v1890
  %3646 = vmatmul.mubr.f32.gmra.mrb[0].mxu0 %v1889
  %v3647 = vpop.f32.mrb[0].mxu0
  %v3648 = vadd.f32 %v3263, %v3647
  %v3649 = vpop.f32.mrb[0].mxu0
  %3650 = vmatprep.mubr.f32.mxu0 %v1899
  %3651 = vmatmul.mubr.f32.gmra.mrb[0].mxu0 %v1898
  %v3652 = vpop.f32.mrb[0].mxu0
  %v3653 = vadd.f32 %v3268, %v3652
  %v3654 = vpop.f32.mrb[0].mxu0
  %3655 = vmatprep.mubr.f32.mxu0 %v1908
  %3656 = vmatmul.mubr.f32.gmra.mrb[0].mxu0 %v1907
  %v3657 = vpop.f32.mrb[0].mxu0
  %v3658 = vadd.f32 %v3273, %v3657
  %v3659 = vpop.f32.mrb[0].mxu0
  %3660 = vmatprep.mubr.f32.mxu0 %v1917
  %3661 = vmatmul.mubr.f32.gmra.mrb[0].mxu0 %v1916
  %v3662 = vpop.f32.mrb[0].mxu0
  %v3663 = vadd.f32 %v3278, %v3662
  %v3664 = vpop.f32.mrb[0].mxu0
  %3665 = vmatprep.mubr.f32.mxu0 %v1926
  %3666 = vmatmul.mubr.f32.gmra.mrb[0].mxu0 %v1925
  %v3667 = vpop.f32.mrb[0].mxu0
  %v3668 = vadd.f32 %v3283, %v3667
  %v3669 = vpop.f32.mrb[0].mxu0
  %3670 = vmatprep.mubr.f32.mxu0 %v1935
  %3671 = vmatmul.mubr.f32.gmra.mrb[0].mxu0 %v1934
  %v3672 = vpop.f32.mrb[0].mxu0
  %v3673 = vadd.f32 %v3288, %v3672
  %v3674 = vpop.f32.mrb[0].mxu0
  %3675 = vmatprep.mubr.f32.mxu0 %v1944
  %3676 = vmatmul.mubr.f32.gmra.mrb[0].mxu0 %v1943
  %v3677 = vpop.f32.mrb[0].mxu0
  %v3678 = vadd.f32 %v3293, %v3677
  %v3679 = vpop.f32.mrb[0].mxu0
  %3680 = vmatprep.mubr.f32.mxu0 %v1953
  %3681 = vmatmul.mubr.f32.gmra.mrb[0].mxu0 %v1952
  %v3682 = vpop.f32.mrb[0].mxu0
  %v3683 = vadd.f32 %v3298, %v3682
  %v3684 = vpop.f32.mrb[0].mxu0
  %3685 = vmatprep.mubr.f32.mxu0 %v1962
  %3686 = vmatmul.mubr.f32.gmra.mrb[0].mxu0 %v1961
  %v3687 = vpop.f32.mrb[0].mxu0
  %v3688 = vadd.f32 %v3303, %v3687
  %v3689 = vpop.f32.mrb[0].mxu0
  %3690 = vmatprep.mubr.f32.mxu0 %v1971
  %3691 = vmatmul.mubr.f32.gmra.mrb[0].mxu0 %v1970
  %v3692 = vpop.f32.mrb[0].mxu0
  %v3693 = vadd.f32 %v3308, %v3692
  %v3694 = vpop.f32.mrb[0].mxu0
  %3695 = vmatprep.mubr.f32.mxu0 %v1980
  %3696 = vmatmul.mubr.f32.gmra.mrb[0].mxu0 %v1979
  %v3697 = vpop.f32.mrb[0].mxu0
  %v3698 = vadd.f32 %v3313, %v3697
  %v3699 = vpop.f32.mrb[0].mxu0
  %3700 = vmatprep.mubr.f32.mxu0 %v1989
  %3701 = vmatmul.mubr.f32.gmra.mrb[0].mxu0 %v1988
  %v3702 = vpop.f32.mrb[0].mxu0
  %v3703 = vadd.f32 %v3318, %v3702
  %v3704 = vpop.f32.mrb[0].mxu0
  %3705 = vmatprep.mubr.f32.mxu0 %v1998
  %3706 = vmatmul.mubr.f32.gmra.mrb[0].mxu0 %v1997
  %v3707 = vpop.f32.mrb[0].mxu0
  %v3708 = vadd.f32 %v3323, %v3707
  %v3709 = vpop.f32.mrb[0].mxu0
  %3710 = vmatprep.mubr.f32.mxu0 %v2007
  %3711 = vmatmul.mubr.f32.gmra.mrb[0].mxu0 %v2006
  %v3712 = vpop.f32.mrb[0].mxu0
  %v3713 = vadd.f32 %v3328, %v3712
  %v3714 = vpop.f32.mrb[0].mxu0
  %3715 = vmatprep.mubr.f32.mxu0 %v2016
  %3716 = vmatmul.mubr.f32.gmra.mrb[0].mxu0 %v2015
  %v3717 = vpop.f32.mrb[0].mxu0
  %v3718 = vadd.f32 %v3333, %v3717
  %v3719 = vpop.f32.mrb[0].mxu0
  %3720 = vmatprep.mubr.f32.mxu0 %v2025
  %3721 = vmatmul.mubr.f32.gmra.mrb[0].mxu0 %v2024
  %v3722 = vpop.f32.mrb[0].mxu0
  %v3723 = vadd.f32 %v3338, %v3722
  %v3724 = vpop.f32.mrb[0].mxu0
  %3725 = vmatprep.mubr.f32.mxu0 %v2034
  %3726 = vmatmul.mubr.f32.gmra.mrb[0].mxu0 %v2033
  %v3727 = vpop.f32.mrb[0].mxu0
  %v3728 = vadd.f32 %v3343, %v3727
  %v3729 = vpop.f32.mrb[0].mxu0
  %3730 = vmatprep.mubr.f32.mxu0 %v2043
  %3731 = vmatmul.mubr.f32.gmra.mrb[0].mxu0 %v2042
  %v3732 = vpop.f32.mrb[0].mxu0
  %v3733 = vadd.f32 %v3348, %v3732
  %v3734 = vpop.f32.mrb[0].mxu0
  %3735 = vdwg.mxu0
  %3736 = vmatprep.subr.mxu0 0.0
  %3737 = vmatpush1.msra.mxu0 %v2173
  %3738 = vmatprep.subr.mxu0 0.0
  %3739 = vmatpush1.msra.mxu0 %v2174
  %3740 = vmatprep.subr.mxu0 0.0
  %3741 = vmatpush1.msra.mxu0 %v2175
  %3742 = vmatprep.subr.mxu0 0.0
  %3743 = vmatpush1.msra.mxu0 %v2176
  %3744 = vmatprep.subr.mxu0 0.0
  %3745 = vmatpush1.msra.mxu0 %v2177
  %3746 = vmatprep.subr.mxu0 0.0
  %3747 = vmatpush1.msra.mxu0 %v2178
  %3748 = vmatprep.subr.mxu0 0.0
  %3749 = vmatpush1.msra.mxu0 %v2179
  %3750 = vmatprep.subr.mxu0 0.0
  %3751 = vmatpush1.msra.mxu0 %v2180
  %3752 = vmatprep.subr.mxu0 0.0
  %3753 = vmatpush1.msra.mxu0 %v2181
  %3754 = vmatprep.subr.mxu0 0.0
  %3755 = vmatpush1.msra.mxu0 %v2182
  %3756 = vmatprep.subr.mxu0 0.0
  %3757 = vmatpush1.msra.mxu0 %v2183
  %3758 = vmatprep.subr.mxu0 0.0
  %3759 = vmatpush1.msra.mxu0 %v2184
  %3760 = vmatprep.subr.mxu0 0.0
  %3761 = vmatpush1.msra.mxu0 %v2185
  %3762 = vmatprep.subr.mxu0 0.0
  %3763 = vmatpush1.msra.mxu0 %v2186
  %3764 = vmatprep.subr.mxu0 0.0
  %3765 = vmatpush1.msra.mxu0 %v2187
  %3766 = vmatprep.subr.mxu0 0.0
  %3767 = vmatpush1.msra.mxu0 %v2188
  %3768 = vmatprep.subr.mxu0 0.0
  %3769 = vmatpush1.msra.mxu0 0.0
  %3770 = vmatprep.subr.mxu0 0.0
  %3771 = vmatpush1.msra.mxu0 0.0
  %3772 = vmatprep.subr.mxu0 0.0
  %3773 = vmatpush1.msra.mxu0 0.0
  %3774 = vmatprep.subr.mxu0 0.0
  %3775 = vmatpush1.msra.mxu0 0.0
  %3776 = vmatprep.subr.mxu0 0.0
  %3777 = vmatpush1.msra.mxu0 0.0
  %3778 = vmatprep.subr.mxu0 0.0
  %3779 = vmatpush1.msra.mxu0 0.0
  %3780 = vmatprep.subr.mxu0 0.0
  %3781 = vmatpush1.msra.mxu0 0.0
  %3782 = vmatprep.subr.mxu0 0.0
  %3783 = vmatpush1.msra.mxu0 0.0
  %3784 = vmatprep.subr.mxu0 0.0
  %3785 = vmatpush1.msra.mxu0 0.0
  %3786 = vmatprep.subr.mxu0 0.0
  %3787 = vmatpush1.msra.mxu0 0.0
  %3788 = vmatprep.subr.mxu0 0.0
  %3789 = vmatpush1.msra.mxu0 0.0
  %3790 = vmatprep.subr.mxu0 0.0
  %3791 = vmatpush1.msra.mxu0 0.0
  %3792 = vmatprep.subr.mxu0 0.0
  %3793 = vmatpush1.msra.mxu0 0.0
  %3794 = vmatprep.subr.mxu0 0.0
  %3795 = vmatpush1.msra.mxu0 0.0
  %3796 = vmatprep.subr.mxu0 0.0
  %3797 = vmatpush1.msra.mxu0 0.0
  %3798 = vmatprep.subr.mxu0 0.0
  %3799 = vmatpush1.msra.mxu0 0.0
  %3800 = vmatprep.mubr.f32.mxu0 0.0
  %3801 = vmatmul.mubr.f32.gmra.mrb[0].mxu0 %v1477
  %v3802 = vpop.f32.mrb[0].mxu0
  %v3803 = vadd.f32 %v3418, %v3802
  %v3804 = vpop.f32.mrb[0].mxu0
  %3805 = vmatprep.mubr.f32.mxu0 0.0
  %3806 = vmatmul.mubr.f32.gmra.mrb[0].mxu0 %v1486
  %v3807 = vpop.f32.mrb[0].mxu0
  %v3808 = vadd.f32 %v3423, %v3807
  %v3809 = vpop.f32.mrb[0].mxu0
  %3810 = vmatprep.mubr.f32.mxu0 0.0
  %3811 = vmatmul.mubr.f32.gmra.mrb[0].mxu0 %v1495
  %v3812 = vpop.f32.mrb[0].mxu0
  %v3813 = vadd.f32 %v3428, %v3812
  %v3814 = vpop.f32.mrb[0].mxu0
  %3815 = vmatprep.mubr.f32.mxu0 0.0
  %3816 = vmatmul.mubr.f32.gmra.mrb[0].mxu0 %v1504
  %v3817 = vpop.f32.mrb[0].mxu0
  %v3818 = vadd.f32 %v3433, %v3817
  %v3819 = vpop.f32.mrb[0].mxu0
  %3820 = vmatprep.mubr.f32.mxu0 0.0
  %3821 = vmatmul.mubr.f32.gmra.mrb[0].mxu0 %v1513
  %v3822 = vpop.f32.mrb[0].mxu0
  %v3823 = vadd.f32 %v3438, %v3822
  %v3824 = vpop.f32.mrb[0].mxu0
  %3825 = vmatprep.mubr.f32.mxu0 0.0
  %3826 = vmatmul.mubr.f32.gmra.mrb[0].mxu0 %v1522
  %v3827 = vpop.f32.mrb[0].mxu0
  %v3828 = vadd.f32 %v3443, %v3827
  %v3829 = vpop.f32.mrb[0].mxu0
  %3830 = vmatprep.mubr.f32.mxu0 0.0
  %3831 = vmatmul.mubr.f32.gmra.mrb[0].mxu0 %v1531
  %v3832 = vpop.f32.mrb[0].mxu0
  %v3833 = vadd.f32 %v3448, %v3832
  %v3834 = vpop.f32.mrb[0].mxu0
  %3835 = vmatprep.mubr.f32.mxu0 0.0
  %3836 = vmatmul.mubr.f32.gmra.mrb[0].mxu0 %v1540
  %v3837 = vpop.f32.mrb[0].mxu0
  %v3838 = vadd.f32 %v3453, %v3837
  %v3839 = vpop.f32.mrb[0].mxu0
  %3840 = vmatprep.mubr.f32.mxu0 0.0
  %3841 = vmatmul.mubr.f32.gmra.mrb[0].mxu0 %v1549
  %v3842 = vpop.f32.mrb[0].mxu0
  %v3843 = vadd.f32 %v3458, %v3842
  %v3844 = vpop.f32.mrb[0].mxu0
  %3845 = vmatprep.mubr.f32.mxu0 0.0
  %3846 = vmatmul.mubr.f32.gmra.mrb[0].mxu0 %v1558
  %v3847 = vpop.f32.mrb[0].mxu0
  %v3848 = vadd.f32 %v3463, %v3847
  %v3849 = vpop.f32.mrb[0].mxu0
  %3850 = vmatprep.mubr.f32.mxu0 0.0
  %3851 = vmatmul.mubr.f32.gmra.mrb[0].mxu0 %v1567
  %v3852 = vpop.f32.mrb[0].mxu0
  %v3853 = vadd.f32 %v3468, %v3852
  %v3854 = vpop.f32.mrb[0].mxu0
  %3855 = vmatprep.mubr.f32.mxu0 0.0
  %3856 = vmatmul.mubr.f32.gmra.mrb[0].mxu0 %v1576
  %v3857 = vpop.f32.mrb[0].mxu0
  %v3858 = vadd.f32 %v3473, %v3857
  %v3859 = vpop.f32.mrb[0].mxu0
  %3860 = vmatprep.mubr.f32.mxu0 0.0
  %3861 = vmatmul.mubr.f32.gmra.mrb[0].mxu0 %v1585
  %v3862 = vpop.f32.mrb[0].mxu0
  %v3863 = vadd.f32 %v3478, %v3862
  %v3864 = vpop.f32.mrb[0].mxu0
  %3865 = vmatprep.mubr.f32.mxu0 0.0
  %3866 = vmatmul.mubr.f32.gmra.mrb[0].mxu0 %v1594
  %v3867 = vpop.f32.mrb[0].mxu0
  %v3868 = vadd.f32 %v3483, %v3867
  %v3869 = vpop.f32.mrb[0].mxu0
  %3870 = vmatprep.mubr.f32.mxu0 0.0
  %3871 = vmatmul.mubr.f32.gmra.mrb[0].mxu0 %v1603
  %v3872 = vpop.f32.mrb[0].mxu0
  %v3873 = vadd.f32 %v3488, %v3872
  %v3874 = vpop.f32.mrb[0].mxu0
  %3875 = vmatprep.mubr.f32.mxu0 0.0
  %3876 = vmatmul.mubr.f32.gmra.mrb[0].mxu0 %v1612
  %v3877 = vpop.f32.mrb[0].mxu0
  %v3878 = vadd.f32 %v3493, %v3877
  %v3879 = vpop.f32.mrb[0].mxu0
  %3880 = vmatprep.mubr.f32.mxu0 0.0
  %3881 = vmatmul.mubr.f32.gmra.mrb[0].mxu0 %v1621
  %v3882 = vpop.f32.mrb[0].mxu0
  %v3883 = vadd.f32 %v3498, %v3882
  %v3884 = vpop.f32.mrb[0].mxu0
  %3885 = vmatprep.mubr.f32.mxu0 0.0
  %3886 = vmatmul.mubr.f32.gmra.mrb[0].mxu0 %v1630
  %v3887 = vpop.f32.mrb[0].mxu0
  %v3888 = vadd.f32 %v3503, %v3887
  %v3889 = vpop.f32.mrb[0].mxu0
  %3890 = vmatprep.mubr.f32.mxu0 0.0
  %3891 = vmatmul.mubr.f32.gmra.mrb[0].mxu0 %v1639
  %v3892 = vpop.f32.mrb[0].mxu0
  %v3893 = vadd.f32 %v3508, %v3892
  %v3894 = vpop.f32.mrb[0].mxu0
  %3895 = vmatprep.mubr.f32.mxu0 0.0
  %3896 = vmatmul.mubr.f32.gmra.mrb[0].mxu0 %v1648
  %v3897 = vpop.f32.mrb[0].mxu0
  %v3898 = vadd.f32 %v3513, %v3897
  %v3899 = vpop.f32.mrb[0].mxu0
  %3900 = vmatprep.mubr.f32.mxu0 0.0
  %3901 = vmatmul.mubr.f32.gmra.mrb[0].mxu0 %v1657
  %v3902 = vpop.f32.mrb[0].mxu0
  %v3903 = vadd.f32 %v3518, %v3902
  %v3904 = vpop.f32.mrb[0].mxu0
  %3905 = vmatprep.mubr.f32.mxu0 0.0
  %3906 = vmatmul.mubr.f32.gmra.mrb[0].mxu0 %v1666
  %v3907 = vpop.f32.mrb[0].mxu0
  %v3908 = vadd.f32 %v3523, %v3907
  %v3909 = vpop.f32.mrb[0].mxu0
  %3910 = vmatprep.mubr.f32.mxu0 0.0
  %3911 = vmatmul.mubr.f32.gmra.mrb[0].mxu0 %v1675
  %v3912 = vpop.f32.mrb[0].mxu0
  %v3913 = vadd.f32 %v3528, %v3912
  %v3914 = vpop.f32.mrb[0].mxu0
  %3915 = vmatprep.mubr.f32.mxu0 0.0
  %3916 = vmatmul.mubr.f32.gmra.mrb[0].mxu0 %v1684
  %v3917 = vpop.f32.mrb[0].mxu0
  %v3918 = vadd.f32 %v3533, %v3917
  %v3919 = vpop.f32.mrb[0].mxu0
  %3920 = vmatprep.mubr.f32.mxu0 0.0
  %3921 = vmatmul.mubr.f32.gmra.mrb[0].mxu0 %v1693
  %v3922 = vpop.f32.mrb[0].mxu0
  %v3923 = vadd.f32 %v3538, %v3922
  %v3924 = vpop.f32.mrb[0].mxu0
  %3925 = vmatprep.mubr.f32.mxu0 0.0
  %3926 = vmatmul.mubr.f32.gmra.mrb[0].mxu0 %v1702
  %v3927 = vpop.f32.mrb[0].mxu0
  %v3928 = vadd.f32 %v3543, %v3927
  %v3929 = vpop.f32.mrb[0].mxu0
  %3930 = vmatprep.mubr.f32.mxu0 0.0
  %3931 = vmatmul.mubr.f32.gmra.mrb[0].mxu0 %v1711
  %v3932 = vpop.f32.mrb[0].mxu0
  %v3933 = vadd.f32 %v3548, %v3932
  %v3934 = vpop.f32.mrb[0].mxu0
  %3935 = vmatprep.mubr.f32.mxu0 0.0
  %3936 = vmatmul.mubr.f32.gmra.mrb[0].mxu0 %v1720
  %v3937 = vpop.f32.mrb[0].mxu0
  %v3938 = vadd.f32 %v3553, %v3937
  %v3939 = vpop.f32.mrb[0].mxu0
  %3940 = vmatprep.mubr.f32.mxu0 0.0
  %3941 = vmatmul.mubr.f32.gmra.mrb[0].mxu0 %v1729
  %v3942 = vpop.f32.mrb[0].mxu0
  %v3943 = vadd.f32 %v3558, %v3942
  %v3944 = vpop.f32.mrb[0].mxu0
  %3945 = vmatprep.mubr.f32.mxu0 0.0
  %3946 = vmatmul.mubr.f32.gmra.mrb[0].mxu0 %v1738
  %v3947 = vpop.f32.mrb[0].mxu0
  %v3948 = vadd.f32 %v3563, %v3947
  %v3949 = vpop.f32.mrb[0].mxu0
  %3950 = vmatprep.mubr.f32.mxu0 0.0
  %3951 = vmatmul.mubr.f32.gmra.mrb[0].mxu0 %v1747
  %v3952 = vpop.f32.mrb[0].mxu0
  %v3953 = vadd.f32 %v3568, %v3952
  %v3954 = vpop.f32.mrb[0].mxu0
  %3955 = vmatprep.mubr.f32.mxu0 0.0
  %3956 = vmatmul.mubr.f32.gmra.mrb[0].mxu0 %v1756
  %v3957 = vpop.f32.mrb[0].mxu0
  %v3958 = vadd.f32 %v3573, %v3957
  %v3959 = vpop.f32.mrb[0].mxu0
  %3960 = vmatprep.mubr.f32.mxu0 0.0
  %3961 = vmatmul.mubr.f32.gmra.mrb[0].mxu0 %v1765
  %v3962 = vpop.f32.mrb[0].mxu0
  %v3963 = vadd.f32 %v3578, %v3962
  %v3964 = vpop.f32.mrb[0].mxu0
  %3965 = vmatprep.mubr.f32.mxu0 0.0
  %3966 = vmatmul.mubr.f32.gmra.mrb[0].mxu0 %v1774
  %v3967 = vpop.f32.mrb[0].mxu0
  %v3968 = vadd.f32 %v3583, %v3967
  %v3969 = vpop.f32.mrb[0].mxu0
  %3970 = vmatprep.mubr.f32.mxu0 0.0
  %3971 = vmatmul.mubr.f32.gmra.mrb[0].mxu0 %v1783
  %v3972 = vpop.f32.mrb[0].mxu0
  %v3973 = vadd.f32 %v3588, %v3972
  %v3974 = vpop.f32.mrb[0].mxu0
  %3975 = vmatprep.mubr.f32.mxu0 0.0
  %3976 = vmatmul.mubr.f32.gmra.mrb[0].mxu0 %v1792
  %v3977 = vpop.f32.mrb[0].mxu0
  %v3978 = vadd.f32 %v3593, %v3977
  %v3979 = vpop.f32.mrb[0].mxu0
  %3980 = vmatprep.mubr.f32.mxu0 0.0
  %3981 = vmatmul.mubr.f32.gmra.mrb[0].mxu0 %v1801
  %v3982 = vpop.f32.mrb[0].mxu0
  %v3983 = vadd.f32 %v3598, %v3982
  %v3984 = vpop.f32.mrb[0].mxu0
  %3985 = vmatprep.mubr.f32.mxu0 0.0
  %3986 = vmatmul.mubr.f32.gmra.mrb[0].mxu0 %v1810
  %v3987 = vpop.f32.mrb[0].mxu0
  %v3988 = vadd.f32 %v3603, %v3987
  %v3989 = vpop.f32.mrb[0].mxu0
  %3990 = vmatprep.mubr.f32.mxu0 0.0
  %3991 = vmatmul.mubr.f32.gmra.mrb[0].mxu0 %v1819
  %v3992 = vpop.f32.mrb[0].mxu0
  %v3993 = vadd.f32 %v3608, %v3992
  %v3994 = vpop.f32.mrb[0].mxu0
  %3995 = vmatprep.mubr.f32.mxu0 0.0
  %3996 = vmatmul.mubr.f32.gmra.mrb[0].mxu0 %v1828
  %v3997 = vpop.f32.mrb[0].mxu0
  %v3998 = vadd.f32 %v3613, %v3997
  %v3999 = vpop.f32.mrb[0].mxu0
  %4000 = vmatprep.mubr.f32.mxu0 0.0
  %4001 = vmatmul.mubr.f32.gmra.mrb[0].mxu0 %v1837
  %v4002 = vpop.f32.mrb[0].mxu0
  %v4003 = vadd.f32 %v3618, %v4002
  %v4004 = vpop.f32.mrb[0].mxu0
  %4005 = vmatprep.mubr.f32.mxu0 0.0
  %4006 = vmatmul.mubr.f32.gmra.mrb[0].mxu0 %v1846
  %v4007 = vpop.f32.mrb[0].mxu0
  %v4008 = vadd.f32 %v3623, %v4007
  %v4009 = vpop.f32.mrb[0].mxu0
  %4010 = vmatprep.mubr.f32.mxu0 0.0
  %4011 = vmatmul.mubr.f32.gmra.mrb[0].mxu0 %v1855
  %v4012 = vpop.f32.mrb[0].mxu0
  %v4013 = vadd.f32 %v3628, %v4012
  %v4014 = vpop.f32.mrb[0].mxu0
  %4015 = vmatprep.mubr.f32.mxu0 0.0
  %4016 = vmatmul.mubr.f32.gmra.mrb[0].mxu0 %v1864
  %v4017 = vpop.f32.mrb[0].mxu0
  %v4018 = vadd.f32 %v3633, %v4017
  %v4019 = vpop.f32.mrb[0].mxu0
  %4020 = vmatprep.mubr.f32.mxu0 0.0
  %4021 = vmatmul.mubr.f32.gmra.mrb[0].mxu0 %v1873
  %v4022 = vpop.f32.mrb[0].mxu0
  %v4023 = vadd.f32 %v3638, %v4022
  %v4024 = vpop.f32.mrb[0].mxu0
  %4025 = vmatprep.mubr.f32.mxu0 0.0
  %4026 = vmatmul.mubr.f32.gmra.mrb[0].mxu0 %v1882
  %v4027 = vpop.f32.mrb[0].mxu0
  %v4028 = vadd.f32 %v3643, %v4027
  %v4029 = vpop.f32.mrb[0].mxu0
  %4030 = vmatprep.mubr.f32.mxu0 0.0
  %4031 = vmatmul.mubr.f32.gmra.mrb[0].mxu0 %v1891
  %v4032 = vpop.f32.mrb[0].mxu0
  %v4033 = vadd.f32 %v3648, %v4032
  %v4034 = vpop.f32.mrb[0].mxu0
  %4035 = vmatprep.mubr.f32.mxu0 0.0
  %4036 = vmatmul.mubr.f32.gmra.mrb[0].mxu0 %v1900
  %v4037 = vpop.f32.mrb[0].mxu0
  %v4038 = vadd.f32 %v3653, %v4037
  %v4039 = vpop.f32.mrb[0].mxu0
  %4040 = vmatprep.mubr.f32.mxu0 0.0
  %4041 = vmatmul.mubr.f32.gmra.mrb[0].mxu0 %v1909
  %v4042 = vpop.f32.mrb[0].mxu0
  %v4043 = vadd.f32 %v3658, %v4042
  %v4044 = vpop.f32.mrb[0].mxu0
  %4045 = vmatprep.mubr.f32.mxu0 0.0
  %4046 = vmatmul.mubr.f32.gmra.mrb[0].mxu0 %v1918
  %v4047 = vpop.f32.mrb[0].mxu0
  %v4048 = vadd.f32 %v3663, %v4047
  %v4049 = vpop.f32.mrb[0].mxu0
  %4050 = vmatprep.mubr.f32.mxu0 0.0
  %4051 = vmatmul.mubr.f32.gmra.mrb[0].mxu0 %v1927
  %v4052 = vpop.f32.mrb[0].mxu0
  %v4053 = vadd.f32 %v3668, %v4052
  %v4054 = vpop.f32.mrb[0].mxu0
  %4055 = vmatprep.mubr.f32.mxu0 0.0
  %4056 = vmatmul.mubr.f32.gmra.mrb[0].mxu0 %v1936
  %v4057 = vpop.f32.mrb[0].mxu0
  %v4058 = vadd.f32 %v3673, %v4057
  %v4059 = vpop.f32.mrb[0].mxu0
  %4060 = vmatprep.mubr.f32.mxu0 0.0
  %4061 = vmatmul.mubr.f32.gmra.mrb[0].mxu0 %v1945
  %v4062 = vpop.f32.mrb[0].mxu0
  %v4063 = vadd.f32 %v3678, %v4062
  %v4064 = vpop.f32.mrb[0].mxu0
  %4065 = vmatprep.mubr.f32.mxu0 0.0
  %4066 = vmatmul.mubr.f32.gmra.mrb[0].mxu0 %v1954
  %v4067 = vpop.f32.mrb[0].mxu0
  %v4068 = vadd.f32 %v3683, %v4067
  %v4069 = vpop.f32.mrb[0].mxu0
  %4070 = vmatprep.mubr.f32.mxu0 0.0
  %4071 = vmatmul.mubr.f32.gmra.mrb[0].mxu0 %v1963
  %v4072 = vpop.f32.mrb[0].mxu0
  %v4073 = vadd.f32 %v3688, %v4072
  %v4074 = vpop.f32.mrb[0].mxu0
  %4075 = vmatprep.mubr.f32.mxu0 0.0
  %4076 = vmatmul.mubr.f32.gmra.mrb[0].mxu0 %v1972
  %v4077 = vpop.f32.mrb[0].mxu0
  %v4078 = vadd.f32 %v3693, %v4077
  %v4079 = vpop.f32.mrb[0].mxu0
  %4080 = vmatprep.mubr.f32.mxu0 0.0
  %4081 = vmatmul.mubr.f32.gmra.mrb[0].mxu0 %v1981
  %v4082 = vpop.f32.mrb[0].mxu0
  %v4083 = vadd.f32 %v3698, %v4082
  %v4084 = vpop.f32.mrb[0].mxu0
  %4085 = vmatprep.mubr.f32.mxu0 0.0
  %4086 = vmatmul.mubr.f32.gmra.mrb[0].mxu0 %v1990
  %v4087 = vpop.f32.mrb[0].mxu0
  %v4088 = vadd.f32 %v3703, %v4087
  %v4089 = vpop.f32.mrb[0].mxu0
  %4090 = vmatprep.mubr.f32.mxu0 0.0
  %4091 = vmatmul.mubr.f32.gmra.mrb[0].mxu0 %v1999
  %v4092 = vpop.f32.mrb[0].mxu0
  %v4093 = vadd.f32 %v3708, %v4092
  %v4094 = vpop.f32.mrb[0].mxu0
  %4095 = vmatprep.mubr.f32.mxu0 0.0
  %4096 = vmatmul.mubr.f32.gmra.mrb[0].mxu0 %v2008
  %v4097 = vpop.f32.mrb[0].mxu0
  %v4098 = vadd.f32 %v3713, %v4097
  %v4099 = vpop.f32.mrb[0].mxu0
  %4100 = vmatprep.mubr.f32.mxu0 0.0
  %4101 = vmatmul.mubr.f32.gmra.mrb[0].mxu0 %v2017
  %v4102 = vpop.f32.mrb[0].mxu0
  %v4103 = vadd.f32 %v3718, %v4102
  %v4104 = vpop.f32.mrb[0].mxu0
  %4105 = vmatprep.mubr.f32.mxu0 0.0
  %4106 = vmatmul.mubr.f32.gmra.mrb[0].mxu0 %v2026
  %v4107 = vpop.f32.mrb[0].mxu0
  %v4108 = vadd.f32 %v3723, %v4107
  %v4109 = vpop.f32.mrb[0].mxu0
  %4110 = vmatprep.mubr.f32.mxu0 0.0
  %4111 = vmatmul.mubr.f32.gmra.mrb[0].mxu0 %v2035
  %v4112 = vpop.f32.mrb[0].mxu0
  %v4113 = vadd.f32 %v3728, %v4112
  %v4114 = vpop.f32.mrb[0].mxu0
  %4115 = vmatprep.mubr.f32.mxu0 0.0
  %4116 = vmatmul.mubr.f32.gmra.mrb[0].mxu0 %v2044
  %v4117 = vpop.f32.mrb[0].mxu0
  %v4118 = vadd.f32 %v3733, %v4117
  %v4119 = vpop.f32.mrb[0].mxu0
  %4120 = vdwg.mxu0
  %v4121 = vmul.f32 %v3803, 0.5
  %v4122 = vmul.f32 %v3808, 0.5
  %v4123 = vmul.f32 %v3813, 0.5
  %v4124 = vmul.f32 %v3818, 0.5
  %v4125 = vmul.f32 %v3823, 0.5
  %v4126 = vmul.f32 %v3828, 0.5
  %v4127 = vmul.f32 %v3833, 0.5
  %v4128 = vmul.f32 %v3838, 0.5
  %v4129 = vmul.f32 %v3843, 0.5
  %v4130 = vmul.f32 %v3848, 0.5
  %v4131 = vmul.f32 %v3853, 0.5
  %v4132 = vmul.f32 %v3858, 0.5
  %v4133 = vmul.f32 %v3863, 0.5
  %v4134 = vmul.f32 %v3868, 0.5
  %v4135 = vmul.f32 %v3873, 0.5
  %v4136 = vmul.f32 %v3878, 0.5
  %v4137 = vmul.f32 %v3883, 0.5
  %v4138 = vmul.f32 %v3888, 0.5
  %v4139 = vmul.f32 %v3893, 0.5
  %v4140 = vmul.f32 %v3898, 0.5
  %v4141 = vmul.f32 %v3903, 0.5
  %v4142 = vmul.f32 %v3908, 0.5
  %v4143 = vmul.f32 %v3913, 0.5
  %v4144 = vmul.f32 %v3918, 0.5
  %v4145 = vmul.f32 %v3923, 0.5
  %v4146 = vmul.f32 %v3928, 0.5
  %v4147 = vmul.f32 %v3933, 0.5
  %v4148 = vmul.f32 %v3938, 0.5
  %v4149 = vmul.f32 %v3943, 0.5
  %v4150 = vmul.f32 %v3948, 0.5
  %v4151 = vmul.f32 %v3953, 0.5
  %v4152 = vmul.f32 %v3958, 0.5
  %v4153 = vmul.f32 %v3963, 0.5
  %v4154 = vmul.f32 %v3968, 0.5
  %v4155 = vmul.f32 %v3973, 0.5
  %v4156 = vmul.f32 %v3978, 0.5
  %v4157 = vmul.f32 %v3983, 0.5
  %v4158 = vmul.f32 %v3988, 0.5
  %v4159 = vmul.f32 %v3993, 0.5
  %v4160 = vmul.f32 %v3998, 0.5
  %v4161 = vmul.f32 %v4003, 0.5
  %v4162 = vmul.f32 %v4008, 0.5
  %v4163 = vmul.f32 %v4013, 0.5
  %v4164 = vmul.f32 %v4018, 0.5
  %v4165 = vmul.f32 %v4023, 0.5
  %v4166 = vmul.f32 %v4028, 0.5
  %v4167 = vmul.f32 %v4033, 0.5
  %v4168 = vmul.f32 %v4038, 0.5
  %v4169 = vmul.f32 %v4043, 0.5
  %v4170 = vmul.f32 %v4048, 0.5
  %v4171 = vmul.f32 %v4053, 0.5
  %v4172 = vmul.f32 %v4058, 0.5
  %v4173 = vmul.f32 %v4063, 0.5
  %v4174 = vmul.f32 %v4068, 0.5
  %v4175 = vmul.f32 %v4073, 0.5
  %v4176 = vmul.f32 %v4078, 0.5
  %v4177 = vmul.f32 %v4083, 0.5
  %v4178 = vmul.f32 %v4088, 0.5
  %v4179 = vmul.f32 %v4093, 0.5
  %v4180 = vmul.f32 %v4098, 0.5
  %v4181 = vmul.f32 %v4103, 0.5
  %v4182 = vmul.f32 %v4108, 0.5
  %v4183 = vmul.f32 %v4113, 0.5
  %v4184 = vmul.f32 %v4118, 0.5
  %v4185 = vmul.f32 %v3803, 0.70710677
  %v4186 = vmul.f32 %v3808, 0.70710677
  %v4187 = vmul.f32 %v3813, 0.70710677
  %v4188 = vmul.f32 %v3818, 0.70710677
  %v4189 = vmul.f32 %v3823, 0.70710677
  %v4190 = vmul.f32 %v3828, 0.70710677
  %v4191 = vmul.f32 %v3833, 0.70710677
  %v4192 = vmul.f32 %v3838, 0.70710677
  %v4193 = vmul.f32 %v3843, 0.70710677
  %v4194 = vmul.f32 %v3848, 0.70710677
  %v4195 = vmul.f32 %v3853, 0.70710677
  %v4196 = vmul.f32 %v3858, 0.70710677
  %v4197 = vmul.f32 %v3863, 0.70710677
  %v4198 = vmul.f32 %v3868, 0.70710677
  %v4199 = vmul.f32 %v3873, 0.70710677
  %v4200 = vmul.f32 %v3878, 0.70710677
  %v4201 = vmul.f32 %v3883, 0.70710677
  %v4202 = vmul.f32 %v3888, 0.70710677
  %v4203 = vmul.f32 %v3893, 0.70710677
  %v4204 = vmul.f32 %v3898, 0.70710677
  %v4205 = vmul.f32 %v3903, 0.70710677
  %v4206 = vmul.f32 %v3908, 0.70710677
  %v4207 = vmul.f32 %v3913, 0.70710677
  %v4208 = vmul.f32 %v3918, 0.70710677
  %v4209 = vmul.f32 %v3923, 0.70710677
  %v4210 = vmul.f32 %v3928, 0.70710677
  %v4211 = vmul.f32 %v3933, 0.70710677
  %v4212 = vmul.f32 %v3938, 0.70710677
  %v4213 = vmul.f32 %v3943, 0.70710677
  %v4214 = vmul.f32 %v3948, 0.70710677
  %v4215 = vmul.f32 %v3953, 0.70710677
  %v4216 = vmul.f32 %v3958, 0.70710677
  %v4217 = vmul.f32 %v3963, 0.70710677
  %v4218 = vmul.f32 %v3968, 0.70710677
  %v4219 = vmul.f32 %v3973, 0.70710677
  %v4220 = vmul.f32 %v3978, 0.70710677
  %v4221 = vmul.f32 %v3983, 0.70710677
  %v4222 = vmul.f32 %v3988, 0.70710677
  %v4223 = vmul.f32 %v3993, 0.70710677
  %v4224 = vmul.f32 %v3998, 0.70710677
  %v4225 = vmul.f32 %v4003, 0.70710677
  %v4226 = vmul.f32 %v4008, 0.70710677
  %v4227 = vmul.f32 %v4013, 0.70710677
  %v4228 = vmul.f32 %v4018, 0.70710677
  %v4229 = vmul.f32 %v4023, 0.70710677
  %v4230 = vmul.f32 %v4028, 0.70710677
  %v4231 = vmul.f32 %v4033, 0.70710677
  %v4232 = vmul.f32 %v4038, 0.70710677
  %v4233 = vmul.f32 %v4043, 0.70710677
  %v4234 = vmul.f32 %v4048, 0.70710677
  %v4235 = vmul.f32 %v4053, 0.70710677
  %v4236 = vmul.f32 %v4058, 0.70710677
  %v4237 = vmul.f32 %v4063, 0.70710677
  %v4238 = vmul.f32 %v4068, 0.70710677
  %v4239 = vmul.f32 %v4073, 0.70710677
  %v4240 = vmul.f32 %v4078, 0.70710677
  %v4241 = vmul.f32 %v4083, 0.70710677
  %v4242 = vmul.f32 %v4088, 0.70710677
  %v4243 = vmul.f32 %v4093, 0.70710677
  %v4244 = vmul.f32 %v4098, 0.70710677
  %v4245 = vmul.f32 %v4103, 0.70710677
  %v4246 = vmul.f32 %v4108, 0.70710677
  %v4247 = vmul.f32 %v4113, 0.70710677
  %v4248 = vmul.f32 %v4118, 0.70710677
  %v4249 = verf.f32.pop %v4185
  %v4250 = verf.f32.pop %v4186
  %v4251 = verf.f32.pop %v4187
  %v4252 = verf.f32.pop %v4188
  %v4253 = verf.f32.pop %v4189
  %v4254 = verf.f32.pop %v4190
  %v4255 = verf.f32.pop %v4191
  %v4256 = verf.f32.pop %v4192
  %v4257 = verf.f32.pop %v4193
  %v4258 = verf.f32.pop %v4194
  %v4259 = verf.f32.pop %v4195
  %v4260 = verf.f32.pop %v4196
  %v4261 = verf.f32.pop %v4197
  %v4262 = verf.f32.pop %v4198
  %v4263 = verf.f32.pop %v4199
  %v4264 = verf.f32.pop %v4200
  %v4265 = verf.f32.pop %v4201
  %v4266 = verf.f32.pop %v4202
  %v4267 = verf.f32.pop %v4203
  %v4268 = verf.f32.pop %v4204
  %v4269 = verf.f32.pop %v4205
  %v4270 = verf.f32.pop %v4206
  %v4271 = verf.f32.pop %v4207
  %v4272 = verf.f32.pop %v4208
  %v4273 = verf.f32.pop %v4209
  %v4274 = verf.f32.pop %v4210
  %v4275 = verf.f32.pop %v4211
  %v4276 = verf.f32.pop %v4212
  %v4277 = verf.f32.pop %v4213
  %v4278 = verf.f32.pop %v4214
  %v4279 = verf.f32.pop %v4215
  %v4280 = verf.f32.pop %v4216
  %v4281 = verf.f32.pop %v4217
  %v4282 = verf.f32.pop %v4218
  %v4283 = verf.f32.pop %v4219
  %v4284 = verf.f32.pop %v4220
  %v4285 = verf.f32.pop %v4221
  %v4286 = verf.f32.pop %v4222
  %v4287 = verf.f32.pop %v4223
  %v4288 = verf.f32.pop %v4224
  %v4289 = verf.f32.pop %v4225
  %v4290 = verf.f32.pop %v4226
  %v4291 = verf.f32.pop %v4227
  %v4292 = verf.f32.pop %v4228
  %v4293 = verf.f32.pop %v4229
  %v4294 = verf.f32.pop %v4230
  %v4295 = verf.f32.pop %v4231
  %v4296 = verf.f32.pop %v4232
  %v4297 = verf.f32.pop %v4233
  %v4298 = verf.f32.pop %v4234
  %v4299 = verf.f32.pop %v4235
  %v4300 = verf.f32.pop %v4236
  %v4301 = verf.f32.pop %v4237
  %v4302 = verf.f32.pop %v4238
  %v4303 = verf.f32.pop %v4239
  %v4304 = verf.f32.pop %v4240
  %v4305 = verf.f32.pop %v4241
  %v4306 = verf.f32.pop %v4242
  %v4307 = verf.f32.pop %v4243
  %v4308 = verf.f32.pop %v4244
  %v4309 = verf.f32.pop %v4245
  %v4310 = verf.f32.pop %v4246
  %v4311 = verf.f32.pop %v4247
  %v4312 = verf.f32.pop %v4248
  %v4313 = vadd.f32 %v4249, 1.0
  %v4314 = vadd.f32 %v4250, 1.0
  %v4315 = vadd.f32 %v4251, 1.0
  %v4316 = vadd.f32 %v4252, 1.0
  %v4317 = vadd.f32 %v4253, 1.0
  %v4318 = vadd.f32 %v4254, 1.0
  %v4319 = vadd.f32 %v4255, 1.0
  %v4320 = vadd.f32 %v4256, 1.0
  %v4321 = vadd.f32 %v4257, 1.0
  %v4322 = vadd.f32 %v4258, 1.0
  %v4323 = vadd.f32 %v4259, 1.0
  %v4324 = vadd.f32 %v4260, 1.0
  %v4325 = vadd.f32 %v4261, 1.0
  %v4326 = vadd.f32 %v4262, 1.0
  %v4327 = vadd.f32 %v4263, 1.0
  %v4328 = vadd.f32 %v4264, 1.0
  %v4329 = vadd.f32 %v4265, 1.0
  %v4330 = vadd.f32 %v4266, 1.0
  %v4331 = vadd.f32 %v4267, 1.0
  %v4332 = vadd.f32 %v4268, 1.0
  %v4333 = vadd.f32 %v4269, 1.0
  %v4334 = vadd.f32 %v4270, 1.0
  %v4335 = vadd.f32 %v4271, 1.0
  %v4336 = vadd.f32 %v4272, 1.0
  %v4337 = vadd.f32 %v4273, 1.0
  %v4338 = vadd.f32 %v4274, 1.0
  %v4339 = vadd.f32 %v4275, 1.0
  %v4340 = vadd.f32 %v4276, 1.0
  %v4341 = vadd.f32 %v4277, 1.0
  %v4342 = vadd.f32 %v4278, 1.0
  %v4343 = vadd.f32 %v4279, 1.0
  %v4344 = vadd.f32 %v4280, 1.0
  %v4345 = vadd.f32 %v4281, 1.0
  %v4346 = vadd.f32 %v4282, 1.0
  %v4347 = vadd.f32 %v4283, 1.0
  %v4348 = vadd.f32 %v4284, 1.0
  %v4349 = vadd.f32 %v4285, 1.0
  %v4350 = vadd.f32 %v4286, 1.0
  %v4351 = vadd.f32 %v4287, 1.0
  %v4352 = vadd.f32 %v4288, 1.0
  %v4353 = vadd.f32 %v4289, 1.0
  %v4354 = vadd.f32 %v4290, 1.0
  %v4355 = vadd.f32 %v4291, 1.0
  %v4356 = vadd.f32 %v4292, 1.0
  %v4357 = vadd.f32 %v4293, 1.0
  %v4358 = vadd.f32 %v4294, 1.0
  %v4359 = vadd.f32 %v4295, 1.0
  %v4360 = vadd.f32 %v4296, 1.0
  %v4361 = vadd.f32 %v4297, 1.0
  %v4362 = vadd.f32 %v4298, 1.0
  %v4363 = vadd.f32 %v4299, 1.0
  %v4364 = vadd.f32 %v4300, 1.0
  %v4365 = vadd.f32 %v4301, 1.0
  %v4366 = vadd.f32 %v4302, 1.0
  %v4367 = vadd.f32 %v4303, 1.0
  %v4368 = vadd.f32 %v4304, 1.0
  %v4369 = vadd.f32 %v4305, 1.0
  %v4370 = vadd.f32 %v4306, 1.0
  %v4371 = vadd.f32 %v4307, 1.0
  %v4372 = vadd.f32 %v4308, 1.0
  %v4373 = vadd.f32 %v4309, 1.0
  %v4374 = vadd.f32 %v4310, 1.0
  %v4375 = vadd.f32 %v4311, 1.0
  %v4376 = vadd.f32 %v4312, 1.0
  %v4377 = vmul.f32 %v4121, %v4313
  %v4378 = vmul.f32 %v4122, %v4314
  %v4379 = vmul.f32 %v4123, %v4315
  %v4380 = vmul.f32 %v4124, %v4316
  %v4381 = vmul.f32 %v4125, %v4317
  %v4382 = vmul.f32 %v4126, %v4318
  %v4383 = vmul.f32 %v4127, %v4319
  %v4384 = vmul.f32 %v4128, %v4320
  %v4385 = vmul.f32 %v4129, %v4321
  %v4386 = vmul.f32 %v4130, %v4322
  %v4387 = vmul.f32 %v4131, %v4323
  %v4388 = vmul.f32 %v4132, %v4324
  %v4389 = vmul.f32 %v4133, %v4325
  %v4390 = vmul.f32 %v4134, %v4326
  %v4391 = vmul.f32 %v4135, %v4327
  %v4392 = vmul.f32 %v4136, %v4328
  %v4393 = vmul.f32 %v4137, %v4329
  %v4394 = vmul.f32 %v4138, %v4330
  %v4395 = vmul.f32 %v4139, %v4331
  %v4396 = vmul.f32 %v4140, %v4332
  %v4397 = vmul.f32 %v4141, %v4333
  %v4398 = vmul.f32 %v4142, %v4334
  %v4399 = vmul.f32 %v4143, %v4335
  %v4400 = vmul.f32 %v4144, %v4336
  %v4401 = vmul.f32 %v4145, %v4337
  %v4402 = vmul.f32 %v4146, %v4338
  %v4403 = vmul.f32 %v4147, %v4339
  %v4404 = vmul.f32 %v4148, %v4340
  %v4405 = vmul.f32 %v4149, %v4341
  %v4406 = vmul.f32 %v4150, %v4342
  %v4407 = vmul.f32 %v4151, %v4343
  %v4408 = vmul.f32 %v4152, %v4344
  %v4409 = vmul.f32 %v4153, %v4345
  %v4410 = vmul.f32 %v4154, %v4346
  %v4411 = vmul.f32 %v4155, %v4347
  %v4412 = vmul.f32 %v4156, %v4348
  %v4413 = vmul.f32 %v4157, %v4349
  %v4414 = vmul.f32 %v4158, %v4350
  %v4415 = vmul.f32 %v4159, %v4351
  %v4416 = vmul.f32 %v4160, %v4352
  %v4417 = vmul.f32 %v4161, %v4353
  %v4418 = vmul.f32 %v4162, %v4354
  %v4419 = vmul.f32 %v4163, %v4355
  %v4420 = vmul.f32 %v4164, %v4356
  %v4421 = vmul.f32 %v4165, %v4357
  %v4422 = vmul.f32 %v4166, %v4358
  %v4423 = vmul.f32 %v4167, %v4359
  %v4424 = vmul.f32 %v4168, %v4360
  %v4425 = vmul.f32 %v4169, %v4361
  %v4426 = vmul.f32 %v4170, %v4362
  %v4427 = vmul.f32 %v4171, %v4363
  %v4428 = vmul.f32 %v4172, %v4364
  %v4429 = vmul.f32 %v4173, %v4365
  %v4430 = vmul.f32 %v4174, %v4366
  %v4431 = vmul.f32 %v4175, %v4367
  %v4432 = vmul.f32 %v4176, %v4368
  %v4433 = vmul.f32 %v4177, %v4369
  %v4434 = vmul.f32 %v4178, %v4370
  %v4435 = vmul.f32 %v4179, %v4371
  %v4436 = vmul.f32 %v4180, %v4372
  %v4437 = vmul.f32 %v4181, %v4373
  %v4438 = vmul.f32 %v4182, %v4374
  %v4439 = vmul.f32 %v4183, %v4375
  %v4440 = vmul.f32 %v4184, %v4376
  %4441 = vst [vmem:[%s123 + $0x1] sm:$0xff] %v4377
  %4442 = vst [vmem:[%s123 + $0x9] sm:$0xff] %v4378
  %4443 = vst [vmem:[%s123 + $0x19] sm:$0xff] %v4379
  %4444 = vst [vmem:[%s123 + $0x21] sm:$0xff] %v4380
  %4445 = vst [vmem:[%s123 + $0x31] sm:$0xff] %v4381
  %4446 = vst [vmem:[%s123 + $0x39] sm:$0xff] %v4382
  %4447 = vst [vmem:[%s123 + $0x49] sm:$0xff] %v4383
  %4448 = vst [vmem:[%s123 + $0x51] sm:$0xff] %v4384
  %4449 = vst [vmem:[%s123 + $0x61] sm:$0xff] %v4385
  %4450 = vst [vmem:[%s123 + $0x69] sm:$0xff] %v4386
  %4451 = vst [vmem:[%s123 + $0x79] sm:$0xff] %v4387
  %4452 = vst [vmem:[%s123 + $0x81] sm:$0xff] %v4388
  %4453 = vst [vmem:[%s123 + $0x91] sm:$0xff] %v4389
  %4454 = vst [vmem:[%s123 + $0x99] sm:$0xff] %v4390
  %4455 = vst [vmem:[%s123 + $0xa9] sm:$0xff] %v4391
  %4456 = vst [vmem:[%s123 + $0xb1] sm:$0xff] %v4392
  %4457 = vst [vmem:[%s123 + $0xc1] sm:$0xff] %v4393
  %4458 = vst [vmem:[%s123 + $0xc9] sm:$0xff] %v4394
  %4459 = vst [vmem:[%s123 + $0xd9] sm:$0xff] %v4395
  %4460 = vst [vmem:[%s123 + $0xe1] sm:$0xff] %v4396
  %4461 = vst [vmem:[%s123 + $0xf1] sm:$0xff] %v4397
  %4462 = vst [vmem:[%s123 + $0xf9] sm:$0xff] %v4398
  %4463 = vst [vmem:[%s123 + $0x109] sm:$0xff] %v4399
  %4464 = vst [vmem:[%s123 + $0x111] sm:$0xff] %v4400
  %4465 = vst [vmem:[%s123 + $0x121] sm:$0xff] %v4401
  %4466 = vst [vmem:[%s123 + $0x129] sm:$0xff] %v4402
  %4467 = vst [vmem:[%s123 + $0x139] sm:$0xff] %v4403
  %4468 = vst [vmem:[%s123 + $0x141] sm:$0xff] %v4404
  %4469 = vst [vmem:[%s123 + $0x151] sm:$0xff] %v4405
  %4470 = vst [vmem:[%s123 + $0x159] sm:$0xff] %v4406
  %4471 = vst [vmem:[%s123 + $0x169] sm:$0xff] %v4407
  %4472 = vst [vmem:[%s123 + $0x171] sm:$0xff] %v4408
  %4473 = vst [vmem:[%s123 + $0x1b1] sm:$0xff] %v4409
  %4474 = vst [vmem:[%s123 + $0x1b9] sm:$0xff] %v4410
  %4475 = vst [vmem:[%s123 + $0x1c9] sm:$0xff] %v4411
  %4476 = vst [vmem:[%s123 + $0x1d1] sm:$0xff] %v4412
  %4477 = vst [vmem:[%s123 + $0x1e1] sm:$0xff] %v4413
  %4478 = vst [vmem:[%s123 + $0x1e9] sm:$0xff] %v4414
  %4479 = vst [vmem:[%s123 + $0x1f9] sm:$0xff] %v4415
  %4480 = vst [vmem:[%s123 + $0x201] sm:$0xff] %v4416
  %4481 = vst [vmem:[%s123 + $0x211] sm:$0xff] %v4417
  %4482 = vst [vmem:[%s123 + $0x219] sm:$0xff] %v4418
  %4483 = vst [vmem:[%s123 + $0x229] sm:$0xff] %v4419
  %4484 = vst [vmem:[%s123 + $0x231] sm:$0xff] %v4420
  %4485 = vst [vmem:[%s123 + $0x241] sm:$0xff] %v4421
  %4486 = vst [vmem:[%s123 + $0x249] sm:$0xff] %v4422
  %4487 = vst [vmem:[%s123 + $0x259] sm:$0xff] %v4423
  %4488 = vst [vmem:[%s123 + $0x261] sm:$0xff] %v4424
  %4489 = vst [vmem:[%s123 + $0x271] sm:$0xff] %v4425
  %4490 = vst [vmem:[%s123 + $0x279] sm:$0xff] %v4426
  %4491 = vst [vmem:[%s123 + $0x289] sm:$0xff] %v4427
  %4492 = vst [vmem:[%s123 + $0x291] sm:$0xff] %v4428
  %4493 = vst [vmem:[%s123 + $0x2a1] sm:$0xff] %v4429
  %4494 = vst [vmem:[%s123 + $0x2a9] sm:$0xff] %v4430
  %4495 = vst [vmem:[%s123 + $0x2b9] sm:$0xff] %v4431
  %4496 = vst [vmem:[%s123 + $0x2c1] sm:$0xff] %v4432
  %4497 = vst [vmem:[%s123 + $0x2d1] sm:$0xff] %v4433
  %4498 = vst [vmem:[%s123 + $0x2d9] sm:$0xff] %v4434
  %4499 = vst [vmem:[%s123 + $0x2e9] sm:$0xff] %v4435
  %4500 = vst [vmem:[%s123 + $0x2f1] sm:$0xff] %v4436
  %4501 = vst [vmem:[%s123 + $0x301] sm:$0xff] %v4437
  %4502 = vst [vmem:[%s123 + $0x309] sm:$0xff] %v4438
  %4503 = vst [vmem:[%s123 + $0x319] sm:$0xff] %v4439
  %4504 = vst [vmem:[%s123 + $0x321] sm:$0xff] %v4440
  %v4505 = vld [vmem:[#allocation4] sm:$0xff]
  %v4506 = vld [vmem:[#allocation4 + $0x8] sm:$0xff]
  %v4507 = vld [vmem:[#allocation4 + $0x18] sm:$0xff]
  %v4508 = vld [vmem:[#allocation4 + $0x20] sm:$0xff]
  %v4509 = vld [vmem:[#allocation4 + $0x30] sm:$0xff]
  %v4510 = vld [vmem:[#allocation4 + $0x38] sm:$0xff]
  %v4511 = vld [vmem:[#allocation4 + $0x48] sm:$0xff]
  %v4512 = vld [vmem:[#allocation4 + $0x50] sm:$0xff]
  %v4513 = vld [vmem:[#allocation4 + $0x60] sm:$0xff]
  %v4514 = vld [vmem:[#allocation4 + $0x68] sm:$0xff]
  %v4515 = vld [vmem:[#allocation4 + $0x78] sm:$0xff]
  %v4516 = vld [vmem:[#allocation4 + $0x80] sm:$0xff]
  %v4517 = vld [vmem:[#allocation4 + $0x90] sm:$0xff]
  %v4518 = vld [vmem:[#allocation4 + $0x98] sm:$0xff]
  %v4519 = vld [vmem:[#allocation4 + $0xa8] sm:$0xff]
  %v4520 = vld [vmem:[#allocation4 + $0xb0] sm:$0xff]
  %v4521 = vld [vmem:[#allocation4 + $0xc0] sm:$0xff]
  %v4522 = vld [vmem:[#allocation4 + $0xc8] sm:$0xff]
  %v4523 = vld [vmem:[#allocation4 + $0xd8] sm:$0xff]
  %v4524 = vld [vmem:[#allocation4 + $0xe0] sm:$0xff]
  %v4525 = vld [vmem:[#allocation4 + $0xf0] sm:$0xff]
  %v4526 = vld [vmem:[#allocation4 + $0xf8] sm:$0xff]
  %v4527 = vld [vmem:[#allocation4 + $0x108] sm:$0xff]
  %v4528 = vld [vmem:[#allocation4 + $0x110] sm:$0xff]
  %v4529 = vld [vmem:[#allocation4 + $0x120] sm:$0xff]
  %v4530 = vld [vmem:[#allocation4 + $0x128] sm:$0xff]
  %v4531 = vld [vmem:[#allocation4 + $0x138] sm:$0xff]
  %v4532 = vld [vmem:[#allocation4 + $0x140] sm:$0xff]
  %v4533 = vld [vmem:[#allocation4 + $0x150] sm:$0xff]
  %v4534 = vld [vmem:[#allocation4 + $0x158] sm:$0xff]
  %v4535 = vld [vmem:[#allocation4 + $0x168] sm:$0xff]
  %v4536 = vld [vmem:[#allocation4 + $0x170] sm:$0xff]
  %v4537 = vld [vmem:[#allocation4 + $0x1b0] sm:$0xff]
  %v4538 = vld [vmem:[#allocation4 + $0x1b8] sm:$0xff]
  %v4539 = vld [vmem:[#allocation4 + $0x1c8] sm:$0xff]
  %v4540 = vld [vmem:[#allocation4 + $0x1d0] sm:$0xff]
  %v4541 = vld [vmem:[#allocation4 + $0x1e0] sm:$0xff]
  %v4542 = vld [vmem:[#allocation4 + $0x1e8] sm:$0xff]
  %v4543 = vld [vmem:[#allocation4 + $0x1f8] sm:$0xff]
  %v4544 = vld [vmem:[#allocation4 + $0x200] sm:$0xff]
  %v4545 = vld [vmem:[#allocation4 + $0x210] sm:$0xff]
  %v4546 = vld [vmem:[#allocation4 + $0x218] sm:$0xff]
  %v4547 = vld [vmem:[#allocation4 + $0x228] sm:$0xff]
  %v4548 = vld [vmem:[#allocation4 + $0x230] sm:$0xff]
  %v4549 = vld [vmem:[#allocation4 + $0x240] sm:$0xff]
  %v4550 = vld [vmem:[#allocation4 + $0x248] sm:$0xff]
  %v4551 = vld [vmem:[#allocation4 + $0x258] sm:$0xff]
  %v4552 = vld [vmem:[#allocation4 + $0x260] sm:$0xff]
  %v4553 = vld [vmem:[#allocation4 + $0x270] sm:$0xff]
  %v4554 = vld [vmem:[#allocation4 + $0x278] sm:$0xff]
  %v4555 = vld [vmem:[#allocation4 + $0x288] sm:$0xff]
  %v4556 = vld [vmem:[#allocation4 + $0x290] sm:$0xff]
  %v4557 = vld [vmem:[#allocation4 + $0x2a0] sm:$0xff]
  %v4558 = vld [vmem:[#allocation4 + $0x2a8] sm:$0xff]
  %v4559 = vld [vmem:[#allocation4 + $0x2b8] sm:$0xff]
  %v4560 = vld [vmem:[#allocation4 + $0x2c0] sm:$0xff]
  %v4561 = vld [vmem:[#allocation4 + $0x2d0] sm:$0xff]
  %v4562 = vld [vmem:[#allocation4 + $0x2d8] sm:$0xff]
  %v4563 = vld [vmem:[#allocation4 + $0x2e8] sm:$0xff]
  %v4564 = vld [vmem:[#allocation4 + $0x2f0] sm:$0xff]
  %v4565 = vld [vmem:[#allocation4 + $0x300] sm:$0xff]
  %v4566 = vld [vmem:[#allocation4 + $0x308] sm:$0xff]
  %v4567 = vld [vmem:[#allocation4 + $0x318] sm:$0xff]
  %v4568 = vld [vmem:[#allocation4 + $0x320] sm:$0xff]
  %4569 = vst [vmem:[#allocation5] sm:$0xff] %v4505
  %4570 = vst [vmem:[#allocation5 + $0x48] sm:$0xff] %v4506
  %4571 = vst [vmem:[#allocation5 + $0x90] sm:$0xff] %v4507
  %4572 = vst [vmem:[#allocation5 + $0xd8] sm:$0xff] %v4508
  %4573 = vst [vmem:[#allocation5 + $0x120] sm:$0xff] %v4509
  %4574 = vst [vmem:[#allocation5 + $0x168] sm:$0xff] %v4510
  %4575 = vst [vmem:[#allocation5 + $0x1b0] sm:$0xff] %v4511
  %4576 = vst [vmem:[#allocation5 + $0x1f8] sm:$0xff] %v4512
  %4577 = vst [vmem:[#allocation5 + $0x240] sm:$0xff] %v4513
  %4578 = vst [vmem:[#allocation5 + $0x288] sm:$0xff] %v4514
  %4579 = vst [vmem:[#allocation5 + $0x2d0] sm:$0xff] %v4515
  %4580 = vst [vmem:[#allocation5 + $0x318] sm:$0xff] %v4516
  %4581 = vst [vmem:[#allocation5 + $0x360] sm:$0xff] %v4517
  %4582 = vst [vmem:[#allocation5 + $0x3a8] sm:$0xff] %v4518
  %4583 = vst [vmem:[#allocation5 + $0x3f0] sm:$0xff] %v4519
  %4584 = vst [vmem:[#allocation5 + $0x438] sm:$0xff] %v4520
  %4585 = vst [vmem:[#allocation5 + $0x480] sm:$0xff] %v4521
  %4586 = vst [vmem:[#allocation5 + $0x4c8] sm:$0xff] %v4522
  %4587 = vst [vmem:[#allocation5 + $0x510] sm:$0xff] %v4523
  %4588 = vst [vmem:[#allocation5 + $0x558] sm:$0xff] %v4524
  %4589 = vst [vmem:[#allocation5 + $0x5a0] sm:$0xff] %v4525
  %4590 = vst [vmem:[#allocation5 + $0x5e8] sm:$0xff] %v4526
  %4591 = vst [vmem:[#allocation5 + $0x630] sm:$0xff] %v4527
  %4592 = vst [vmem:[#allocation5 + $0x678] sm:$0xff] %v4528
  %4593 = vst [vmem:[#allocation5 + $0x6c0] sm:$0xff] %v4529
  %4594 = vst [vmem:[#allocation5 + $0x708] sm:$0xff] %v4530
  %4595 = vst [vmem:[#allocation5 + $0x750] sm:$0xff] %v4531
  %4596 = vst [vmem:[#allocation5 + $0x798] sm:$0xff] %v4532
  %4597 = vst [vmem:[#allocation5 + $0x7e0] sm:$0xff] %v4533
  %4598 = vst [vmem:[#allocation5 + $0x828] sm:$0xff] %v4534
  %4599 = vst [vmem:[#allocation5 + $0x870] sm:$0xff] %v4535
  %4600 = vst [vmem:[#allocation5 + $0x8b8] sm:$0xff] %v4536
  %4601 = vst [vmem:[#allocation5 + $0x900] sm:$0xff] %v4537
  %4602 = vst [vmem:[#allocation5 + $0x948] sm:$0xff] %v4538
  %4603 = vst [vmem:[#allocation5 + $0x990] sm:$0xff] %v4539
  %4604 = vst [vmem:[#allocation5 + $0x9d8] sm:$0xff] %v4540
  %4605 = vst [vmem:[#allocation5 + $0xa20] sm:$0xff] %v4541
  %4606 = vst [vmem:[#allocation5 + $0xa68] sm:$0xff] %v4542
  %4607 = vst [vmem:[#allocation5 + $0xab0] sm:$0xff] %v4543
  %4608 = vst [vmem:[#allocation5 + $0xaf8] sm:$0xff] %v4544
  %4609 = vst [vmem:[#allocation5 + $0xb40] sm:$0xff] %v4545
  %4610 = vst [vmem:[#allocation5 + $0xb88] sm:$0xff] %v4546
  %4611 = vst [vmem:[#allocation5 + $0xbd0] sm:$0xff] %v4547
  %4612 = vst [vmem:[#allocation5 + $0xc18] sm:$0xff] %v4548
  %4613 = vst [vmem:[#allocation5 + $0xc60] sm:$0xff] %v4549
  %4614 = vst [vmem:[#allocation5 + $0xca8] sm:$0xff] %v4550
  %4615 = vst [vmem:[#allocation5 + $0xcf0] sm:$0xff] %v4551
  %4616 = vst [vmem:[#allocation5 + $0xd38] sm:$0xff] %v4552
  %4617 = vst [vmem:[#allocation5 + $0xd80] sm:$0xff] %v4553
  %4618 = vst [vmem:[#allocation5 + $0xdc8] sm:$0xff] %v4554
  %4619 = vst [vmem:[#allocation5 + $0xe10] sm:$0xff] %v4555
  %4620 = vst [vmem:[#allocation5 + $0xe58] sm:$0xff] %v4556
  %4621 = vst [vmem:[#allocation5 + $0xea0] sm:$0xff] %v4557
  %4622 = vst [vmem:[#allocation5 + $0xee8] sm:$0xff] %v4558
  %4623 = vst [vmem:[#allocation5 + $0xf30] sm:$0xff] %v4559
  %4624 = vst [vmem:[#allocation5 + $0xf78] sm:$0xff] %v4560
  %4625 = vst [vmem:[#allocation5 + $0xfc0] sm:$0xff] %v4561
  %4626 = vst [vmem:[#allocation5 + $0x1008] sm:$0xff] %v4562
  %4627 = vst [vmem:[#allocation5 + $0x1050] sm:$0xff] %v4563
  %4628 = vst [vmem:[#allocation5 + $0x1098] sm:$0xff] %v4564
  %4629 = vst [vmem:[#allocation5 + $0x10e0] sm:$0xff] %v4565
  %4630 = vst [vmem:[#allocation5 + $0x1128] sm:$0xff] %v4566
  %4631 = vst [vmem:[#allocation5 + $0x1170] sm:$0xff] %v4567
  %4632 = vst [vmem:[#allocation5 + $0x11b8] sm:$0xff] %v4568
  %v4633 = vld [vmem:[#allocation4 + $0x1] sm:$0xff]
  %v4634 = vld [vmem:[#allocation4 + $0x9] sm:$0xff]
  %v4635 = vld [vmem:[#allocation4 + $0x19] sm:$0xff]
  %v4636 = vld [vmem:[#allocation4 + $0x21] sm:$0xff]
  %v4637 = vld [vmem:[#allocation4 + $0x31] sm:$0xff]
  %v4638 = vld [vmem:[#allocation4 + $0x39] sm:$0xff]
  %v4639 = vld [vmem:[#allocation4 + $0x49] sm:$0xff]
  %v4640 = vld [vmem:[#allocation4 + $0x51] sm:$0xff]
  %v4641 = vld [vmem:[#allocation4 + $0x61] sm:$0xff]
  %v4642 = vld [vmem:[#allocation4 + $0x69] sm:$0xff]
  %v4643 = vld [vmem:[#allocation4 + $0x79] sm:$0xff]
  %v4644 = vld [vmem:[#allocation4 + $0x81] sm:$0xff]
  %v4645 = vld [vmem:[#allocation4 + $0x91] sm:$0xff]
  %v4646 = vld [vmem:[#allocation4 + $0x99] sm:$0xff]
  %v4647 = vld [vmem:[#allocation4 + $0xa9] sm:$0xff]
  %v4648 = vld [vmem:[#allocation4 + $0xb1] sm:$0xff]
  %v4649 = vld [vmem:[#allocation4 + $0xc1] sm:$0xff]
  %v4650 = vld [vmem:[#allocation4 + $0xc9] sm:$0xff]
  %v4651 = vld [vmem:[#allocation4 + $0xd9] sm:$0xff]
  %v4652 = vld [vmem:[#allocation4 + $0xe1] sm:$0xff]
  %v4653 = vld [vmem:[#allocation4 + $0xf1] sm:$0xff]
  %v4654 = vld [vmem:[#allocation4 + $0xf9] sm:$0xff]
  %v4655 = vld [vmem:[#allocation4 + $0x109] sm:$0xff]
  %v4656 = vld [vmem:[#allocation4 + $0x111] sm:$0xff]
  %v4657 = vld [vmem:[#allocation4 + $0x121] sm:$0xff]
  %v4658 = vld [vmem:[#allocation4 + $0x129] sm:$0xff]
  %v4659 = vld [vmem:[#allocation4 + $0x139] sm:$0xff]
  %v4660 = vld [vmem:[#allocation4 + $0x141] sm:$0xff]
  %v4661 = vld [vmem:[#allocation4 + $0x151] sm:$0xff]
  %v4662 = vld [vmem:[#allocation4 + $0x159] sm:$0xff]
  %v4663 = vld [vmem:[#allocation4 + $0x169] sm:$0xff]
  %v4664 = vld [vmem:[#allocation4 + $0x171] sm:$0xff]
  %v4665 = vld [vmem:[#allocation4 + $0x1b1] sm:$0xff]
  %v4666 = vld [vmem:[#allocation4 + $0x1b9] sm:$0xff]
  %v4667 = vld [vmem:[#allocation4 + $0x1c9] sm:$0xff]
  %v4668 = vld [vmem:[#allocation4 + $0x1d1] sm:$0xff]
  %v4669 = vld [vmem:[#allocation4 + $0x1e1] sm:$0xff]
  %v4670 = vld [vmem:[#allocation4 + $0x1e9] sm:$0xff]
  %v4671 = vld [vmem:[#allocation4 + $0x1f9] sm:$0xff]
  %v4672 = vld [vmem:[#allocation4 + $0x201] sm:$0xff]
  %v4673 = vld [vmem:[#allocation4 + $0x211] sm:$0xff]
  %v4674 = vld [vmem:[#allocation4 + $0x219] sm:$0xff]
  %v4675 = vld [vmem:[#allocation4 + $0x229] sm:$0xff]
  %v4676 = vld [vmem:[#allocation4 + $0x231] sm:$0xff]
  %v4677 = vld [vmem:[#allocation4 + $0x241] sm:$0xff]
  %v4678 = vld [vmem:[#allocation4 + $0x249] sm:$0xff]
  %v4679 = vld [vmem:[#allocation4 + $0x259] sm:$0xff]
  %v4680 = vld [vmem:[#allocation4 + $0x261] sm:$0xff]
  %v4681 = vld [vmem:[#allocation4 + $0x271] sm:$0xff]
  %v4682 = vld [vmem:[#allocation4 + $0x279] sm:$0xff]
  %v4683 = vld [vmem:[#allocation4 + $0x289] sm:$0xff]
  %v4684 = vld [vmem:[#allocation4 + $0x291] sm:$0xff]
  %v4685 = vld [vmem:[#allocation4 + $0x2a1] sm:$0xff]
  %v4686 = vld [vmem:[#allocation4 + $0x2a9] sm:$0xff]
  %v4687 = vld [vmem:[#allocation4 + $0x2b9] sm:$0xff]
  %v4688 = vld [vmem:[#allocation4 + $0x2c1] sm:$0xff]
  %v4689 = vld [vmem:[#allocation4 + $0x2d1] sm:$0xff]
  %v4690 = vld [vmem:[#allocation4 + $0x2d9] sm:$0xff]
  %v4691 = vld [vmem:[#allocation4 + $0x2e9] sm:$0xff]
  %v4692 = vld [vmem:[#allocation4 + $0x2f1] sm:$0xff]
  %v4693 = vld [vmem:[#allocation4 + $0x301] sm:$0xff]
  %v4694 = vld [vmem:[#allocation4 + $0x309] sm:$0xff]
  %v4695 = vld [vmem:[#allocation4 + $0x319] sm:$0xff]
  %v4696 = vld [vmem:[#allocation4 + $0x321] sm:$0xff]
  %4697 = vst [vmem:[#allocation5 + $0x8] sm:$0xff] %v4633
  %4698 = vst [vmem:[#allocation5 + $0x50] sm:$0xff] %v4634
  %4699 = vst [vmem:[#allocation5 + $0x98] sm:$0xff] %v4635
  %4700 = vst [vmem:[#allocation5 + $0xe0] sm:$0xff] %v4636
  %4701 = vst [vmem:[#allocation5 + $0x128] sm:$0xff] %v4637
  %4702 = vst [vmem:[#allocation5 + $0x170] sm:$0xff] %v4638
  %4703 = vst [vmem:[#allocation5 + $0x1b8] sm:$0xff] %v4639
  %4704 = vst [vmem:[#allocation5 + $0x200] sm:$0xff] %v4640
  %4705 = vst [vmem:[#allocation5 + $0x248] sm:$0xff] %v4641
  %4706 = vst [vmem:[#allocation5 + $0x290] sm:$0xff] %v4642
  %4707 = vst [vmem:[#allocation5 + $0x2d8] sm:$0xff] %v4643
  %4708 = vst [vmem:[#allocation5 + $0x320] sm:$0xff] %v4644
  %4709 = vst [vmem:[#allocation5 + $0x368] sm:$0xff] %v4645
  %4710 = vst [vmem:[#allocation5 + $0x3b0] sm:$0xff] %v4646
  %4711 = vst [vmem:[#allocation5 + $0x3f8] sm:$0xff] %v4647
  %4712 = vst [vmem:[#allocation5 + $0x440] sm:$0xff] %v4648
  %4713 = vst [vmem:[#allocation5 + $0x488] sm:$0xff] %v4649
  %4714 = vst [vmem:[#allocation5 + $0x4d0] sm:$0xff] %v4650
  %4715 = vst [vmem:[#allocation5 + $0x518] sm:$0xff] %v4651
  %4716 = vst [vmem:[#allocation5 + $0x560] sm:$0xff] %v4652
  %4717 = vst [vmem:[#allocation5 + $0x5a8] sm:$0xff] %v4653
  %4718 = vst [vmem:[#allocation5 + $0x5f0] sm:$0xff] %v4654
  %4719 = vst [vmem:[#allocation5 + $0x638] sm:$0xff] %v4655
  %4720 = vst [vmem:[#allocation5 + $0x680] sm:$0xff] %v4656
  %4721 = vst [vmem:[#allocation5 + $0x6c8] sm:$0xff] %v4657
  %4722 = vst [vmem:[#allocation5 + $0x710] sm:$0xff] %v4658
  %4723 = vst [vmem:[#allocation5 + $0x758] sm:$0xff] %v4659
  %4724 = vst [vmem:[#allocation5 + $0x7a0] sm:$0xff] %v4660
  %4725 = vst [vmem:[#allocation5 + $0x7e8] sm:$0xff] %v4661
  %4726 = vst [vmem:[#allocation5 + $0x830] sm:$0xff] %v4662
  %4727 = vst [vmem:[#allocation5 + $0x878] sm:$0xff] %v4663
  %4728 = vst [vmem:[#allocation5 + $0x8c0] sm:$0xff] %v4664
  %4729 = vst [vmem:[#allocation5 + $0x908] sm:$0xff] %v4665
  %4730 = vst [vmem:[#allocation5 + $0x950] sm:$0xff] %v4666
  %4731 = vst [vmem:[#allocation5 + $0x998] sm:$0xff] %v4667
  %4732 = vst [vmem:[#allocation5 + $0x9e0] sm:$0xff] %v4668
  %4733 = vst [vmem:[#allocation5 + $0xa28] sm:$0xff] %v4669
  %4734 = vst [vmem:[#allocation5 + $0xa70] sm:$0xff] %v4670
  %4735 = vst [vmem:[#allocation5 + $0xab8] sm:$0xff] %v4671
  %4736 = vst [vmem:[#allocation5 + $0xb00] sm:$0xff] %v4672
  %4737 = vst [vmem:[#allocation5 + $0xb48] sm:$0xff] %v4673
  %4738 = vst [vmem:[#allocation5 + $0xb90] sm:$0xff] %v4674
  %4739 = vst [vmem:[#allocation5 + $0xbd8] sm:$0xff] %v4675
  %4740 = vst [vmem:[#allocation5 + $0xc20] sm:$0xff] %v4676
  %4741 = vst [vmem:[#allocation5 + $0xc68] sm:$0xff] %v4677
  %4742 = vst [vmem:[#allocation5 + $0xcb0] sm:$0xff] %v4678
  %4743 = vst [vmem:[#allocation5 + $0xcf8] sm:$0xff] %v4679
  %4744 = vst [vmem:[#allocation5 + $0xd40] sm:$0xff] %v4680
  %4745 = vst [vmem:[#allocation5 + $0xd88] sm:$0xff] %v4681
  %4746 = vst [vmem:[#allocation5 + $0xdd0] sm:$0xff] %v4682
  %4747 = vst [vmem:[#allocation5 + $0xe18] sm:$0xff] %v4683
  %4748 = vst [vmem:[#allocation5 + $0xe60] sm:$0xff] %v4684
  %4749 = vst [vmem:[#allocation5 + $0xea8] sm:$0xff] %v4685
  %4750 = vst [vmem:[#allocation5 + $0xef0] sm:$0xff] %v4686
  %4751 = vst [vmem:[#allocation5 + $0xf38] sm:$0xff] %v4687
  %4752 = vst [vmem:[#allocation5 + $0xf80] sm:$0xff] %v4688
  %4753 = vst [vmem:[#allocation5 + $0xfc8] sm:$0xff] %v4689
  %4754 = vst [vmem:[#allocation5 + $0x1010] sm:$0xff] %v4690
  %4755 = vst [vmem:[#allocation5 + $0x1058] sm:$0xff] %v4691
  %4756 = vst [vmem:[#allocation5 + $0x10a0] sm:$0xff] %v4692
  %4757 = vst [vmem:[#allocation5 + $0x10e8] sm:$0xff] %v4693
  %4758 = vst [vmem:[#allocation5 + $0x1130] sm:$0xff] %v4694
  %4759 = vst [vmem:[#allocation5 + $0x1178] sm:$0xff] %v4695
  %4760 = vst [vmem:[#allocation5 + $0x11c0] sm:$0xff] %v4696
  %v4761 = vld [vmem:[#allocation4 + $0x2] sm:$0xff]
  %v4762 = vld [vmem:[#allocation4 + $0xa] sm:$0xff]
  %v4763 = vld [vmem:[#allocation4 + $0x1a] sm:$0xff]
  %v4764 = vld [vmem:[#allocation4 + $0x22] sm:$0xff]
  %v4765 = vld [vmem:[#allocation4 + $0x32] sm:$0xff]
  %v4766 = vld [vmem:[#allocation4 + $0x3a] sm:$0xff]
  %v4767 = vld [vmem:[#allocation4 + $0x4a] sm:$0xff]
  %v4768 = vld [vmem:[#allocation4 + $0x52] sm:$0xff]
  %v4769 = vld [vmem:[#allocation4 + $0x62] sm:$0xff]
  %v4770 = vld [vmem:[#allocation4 + $0x6a] sm:$0xff]
  %v4771 = vld [vmem:[#allocation4 + $0x7a] sm:$0xff]
  %v4772 = vld [vmem:[#allocation4 + $0x82] sm:$0xff]
  %v4773 = vld [vmem:[#allocation4 + $0x92] sm:$0xff]
  %v4774 = vld [vmem:[#allocation4 + $0x9a] sm:$0xff]
  %v4775 = vld [vmem:[#allocation4 + $0xaa] sm:$0xff]
  %v4776 = vld [vmem:[#allocation4 + $0xb2] sm:$0xff]
  %v4777 = vld [vmem:[#allocation4 + $0xc2] sm:$0xff]
  %v4778 = vld [vmem:[#allocation4 + $0xca] sm:$0xff]
  %v4779 = vld [vmem:[#allocation4 + $0xda] sm:$0xff]
  %v4780 = vld [vmem:[#allocation4 + $0xe2] sm:$0xff]
  %v4781 = vld [vmem:[#allocation4 + $0xf2] sm:$0xff]
  %v4782 = vld [vmem:[#allocation4 + $0xfa] sm:$0xff]
  %v4783 = vld [vmem:[#allocation4 + $0x10a] sm:$0xff]
  %v4784 = vld [vmem:[#allocation4 + $0x112] sm:$0xff]
  %v4785 = vld [vmem:[#allocation4 + $0x122] sm:$0xff]
  %v4786 = vld [vmem:[#allocation4 + $0x12a] sm:$0xff]
  %v4787 = vld [vmem:[#allocation4 + $0x13a] sm:$0xff]
  %v4788 = vld [vmem:[#allocation4 + $0x142] sm:$0xff]
  %v4789 = vld [vmem:[#allocation4 + $0x152] sm:$0xff]
  %v4790 = vld [vmem:[#allocation4 + $0x15a] sm:$0xff]
  %v4791 = vld [vmem:[#allocation4 + $0x16a] sm:$0xff]
  %v4792 = vld [vmem:[#allocation4 + $0x172] sm:$0xff]
  %v4793 = vld [vmem:[#allocation4 + $0x1b2] sm:$0xff]
  %v4794 = vld [vmem:[#allocation4 + $0x1ba] sm:$0xff]
  %v4795 = vld [vmem:[#allocation4 + $0x1ca] sm:$0xff]
  %v4796 = vld [vmem:[#allocation4 + $0x1d2] sm:$0xff]
  %v4797 = vld [vmem:[#allocation4 + $0x1e2] sm:$0xff]
  %v4798 = vld [vmem:[#allocation4 + $0x1ea] sm:$0xff]
  %v4799 = vld [vmem:[#allocation4 + $0x1fa] sm:$0xff]
  %v4800 = vld [vmem:[#allocation4 + $0x202] sm:$0xff]
  %v4801 = vld [vmem:[#allocation4 + $0x212] sm:$0xff]
  %v4802 = vld [vmem:[#allocation4 + $0x21a] sm:$0xff]
  %v4803 = vld [vmem:[#allocation4 + $0x22a] sm:$0xff]
  %v4804 = vld [vmem:[#allocation4 + $0x232] sm:$0xff]
  %v4805 = vld [vmem:[#allocation4 + $0x242] sm:$0xff]
  %v4806 = vld [vmem:[#allocation4 + $0x24a] sm:$0xff]
  %v4807 = vld [vmem:[#allocation4 + $0x25a] sm:$0xff]
  %v4808 = vld [vmem:[#allocation4 + $0x262] sm:$0xff]
  %v4809 = vld [vmem:[#allocation4 + $0x272] sm:$0xff]
  %v4810 = vld [vmem:[#allocation4 + $0x27a] sm:$0xff]
  %v4811 = vld [vmem:[#allocation4 + $0x28a] sm:$0xff]
  %v4812 = vld [vmem:[#allocation4 + $0x292] sm:$0xff]
  %v4813 = vld [vmem:[#allocation4 + $0x2a2] sm:$0xff]
  %v4814 = vld [vmem:[#allocation4 + $0x2aa] sm:$0xff]
  %v4815 = vld [vmem:[#allocation4 + $0x2ba] sm:$0xff]
  %v4816 = vld [vmem:[#allocation4 + $0x2c2] sm:$0xff]
  %v4817 = vld [vmem:[#allocation4 + $0x2d2] sm:$0xff]
  %v4818 = vld [vmem:[#allocation4 + $0x2da] sm:$0xff]
  %v4819 = vld [vmem:[#allocation4 + $0x2ea] sm:$0xff]
  %v4820 = vld [vmem:[#allocation4 + $0x2f2] sm:$0xff]
  %v4821 = vld [vmem:[#allocation4 + $0x302] sm:$0xff]
  %v4822 = vld [vmem:[#allocation4 + $0x30a] sm:$0xff]
  %v4823 = vld [vmem:[#allocation4 + $0x31a] sm:$0xff]
  %v4824 = vld [vmem:[#allocation4 + $0x322] sm:$0xff]
  %4825 = vst [vmem:[#allocation5 + $0x10] sm:$0xff] %v4761
  %4826 = vst [vmem:[#allocation5 + $0x58] sm:$0xff] %v4762
  %4827 = vst [vmem:[#allocation5 + $0xa0] sm:$0xff] %v4763
  %4828 = vst [vmem:[#allocation5 + $0xe8] sm:$0xff] %v4764
  %4829 = vst [vmem:[#allocation5 + $0x130] sm:$0xff] %v4765
  %4830 = vst [vmem:[#allocation5 + $0x178] sm:$0xff] %v4766
  %4831 = vst [vmem:[#allocation5 + $0x1c0] sm:$0xff] %v4767
  %4832 = vst [vmem:[#allocation5 + $0x208] sm:$0xff] %v4768
  %4833 = vst [vmem:[#allocation5 + $0x250] sm:$0xff] %v4769
  %4834 = vst [vmem:[#allocation5 + $0x298] sm:$0xff] %v4770
  %4835 = vst [vmem:[#allocation5 + $0x2e0] sm:$0xff] %v4771
  %4836 = vst [vmem:[#allocation5 + $0x328] sm:$0xff] %v4772
  %4837 = vst [vmem:[#allocation5 + $0x370] sm:$0xff] %v4773
  %4838 = vst [vmem:[#allocation5 + $0x3b8] sm:$0xff] %v4774
  %4839 = vst [vmem:[#allocation5 + $0x400] sm:$0xff] %v4775
  %4840 = vst [vmem:[#allocation5 + $0x448] sm:$0xff] %v4776
  %4841 = vst [vmem:[#allocation5 + $0x490] sm:$0xff] %v4777
  %4842 = vst [vmem:[#allocation5 + $0x4d8] sm:$0xff] %v4778
  %4843 = vst [vmem:[#allocation5 + $0x520] sm:$0xff] %v4779
  %4844 = vst [vmem:[#allocation5 + $0x568] sm:$0xff] %v4780
  %4845 = vst [vmem:[#allocation5 + $0x5b0] sm:$0xff] %v4781
  %4846 = vst [vmem:[#allocation5 + $0x5f8] sm:$0xff] %v4782
  %4847 = vst [vmem:[#allocation5 + $0x640] sm:$0xff] %v4783
  %4848 = vst [vmem:[#allocation5 + $0x688] sm:$0xff] %v4784
  %4849 = vst [vmem:[#allocation5 + $0x6d0] sm:$0xff] %v4785
  %4850 = vst [vmem:[#allocation5 + $0x718] sm:$0xff] %v4786
  %4851 = vst [vmem:[#allocation5 + $0x760] sm:$0xff] %v4787
  %4852 = vst [vmem:[#allocation5 + $0x7a8] sm:$0xff] %v4788
  %4853 = vst [vmem:[#allocation5 + $0x7f0] sm:$0xff] %v4789
  %4854 = vst [vmem:[#allocation5 + $0x838] sm:$0xff] %v4790
  %4855 = vst [vmem:[#allocation5 + $0x880] sm:$0xff] %v4791
  %4856 = vst [vmem:[#allocation5 + $0x8c8] sm:$0xff] %v4792
  %4857 = vst [vmem:[#allocation5 + $0x910] sm:$0xff] %v4793
  %4858 = vst [vmem:[#allocation5 + $0x958] sm:$0xff] %v4794
  %4859 = vst [vmem:[#allocation5 + $0x9a0] sm:$0xff] %v4795
  %4860 = vst [vmem:[#allocation5 + $0x9e8] sm:$0xff] %v4796
  %4861 = vst [vmem:[#allocation5 + $0xa30] sm:$0xff] %v4797
  %4862 = vst [vmem:[#allocation5 + $0xa78] sm:$0xff] %v4798
  %4863 = vst [vmem:[#allocation5 + $0xac0] sm:$0xff] %v4799
  %4864 = vst [vmem:[#allocation5 + $0xb08] sm:$0xff] %v4800
  %4865 = vst [vmem:[#allocation5 + $0xb50] sm:$0xff] %v4801
  %4866 = vst [vmem:[#allocation5 + $0xb98] sm:$0xff] %v4802
  %4867 = vst [vmem:[#allocation5 + $0xbe0] sm:$0xff] %v4803
  %4868 = vst [vmem:[#allocation5 + $0xc28] sm:$0xff] %v4804
  %4869 = vst [vmem:[#allocation5 + $0xc70] sm:$0xff] %v4805
  %4870 = vst [vmem:[#allocation5 + $0xcb8] sm:$0xff] %v4806
  %4871 = vst [vmem:[#allocation5 + $0xd00] sm:$0xff] %v4807
  %4872 = vst [vmem:[#allocation5 + $0xd48] sm:$0xff] %v4808
  %4873 = vst [vmem:[#allocation5 + $0xd90] sm:$0xff] %v4809
  %4874 = vst [vmem:[#allocation5 + $0xdd8] sm:$0xff] %v4810
  %4875 = vst [vmem:[#allocation5 + $0xe20] sm:$0xff] %v4811
  %4876 = vst [vmem:[#allocation5 + $0xe68] sm:$0xff] %v4812
  %4877 = vst [vmem:[#allocation5 + $0xeb0] sm:$0xff] %v4813
  %4878 = vst [vmem:[#allocation5 + $0xef8] sm:$0xff] %v4814
  %4879 = vst [vmem:[#allocation5 + $0xf40] sm:$0xff] %v4815
  %4880 = vst [vmem:[#allocation5 + $0xf88] sm:$0xff] %v4816
  %4881 = vst [vmem:[#allocation5 + $0xfd0] sm:$0xff] %v4817
  %4882 = vst [vmem:[#allocation5 + $0x1018] sm:$0xff] %v4818
  %4883 = vst [vmem:[#allocation5 + $0x1060] sm:$0xff] %v4819
  %4884 = vst [vmem:[#allocation5 + $0x10a8] sm:$0xff] %v4820
  %4885 = vst [vmem:[#allocation5 + $0x10f0] sm:$0xff] %v4821
  %4886 = vst [vmem:[#allocation5 + $0x1138] sm:$0xff] %v4822
  %4887 = vst [vmem:[#allocation5 + $0x1180] sm:$0xff] %v4823
  %4888 = vst [vmem:[#allocation5 + $0x11c8] sm:$0xff] %v4824
  %v4889 = vld [vmem:[%s123] sm:$0xff]
  %v4890 = vld [vmem:[%s123 + $0x8] sm:$0xff]
  %v4891 = vld [vmem:[%s123 + $0x18] sm:$0xff]
  %v4892 = vld [vmem:[%s123 + $0x20] sm:$0xff]
  %v4893 = vld [vmem:[%s123 + $0x30] sm:$0xff]
  %v4894 = vld [vmem:[%s123 + $0x38] sm:$0xff]
  %v4895 = vld [vmem:[%s123 + $0x48] sm:$0xff]
  %v4896 = vld [vmem:[%s123 + $0x50] sm:$0xff]
  %v4897 = vld [vmem:[%s123 + $0x60] sm:$0xff]
  %v4898 = vld [vmem:[%s123 + $0x68] sm:$0xff]
  %v4899 = vld [vmem:[%s123 + $0x78] sm:$0xff]
  %v4900 = vld [vmem:[%s123 + $0x80] sm:$0xff]
  %v4901 = vld [vmem:[%s123 + $0x90] sm:$0xff]
  %v4902 = vld [vmem:[%s123 + $0x98] sm:$0xff]
  %v4903 = vld [vmem:[%s123 + $0xa8] sm:$0xff]
  %v4904 = vld [vmem:[%s123 + $0xb0] sm:$0xff]
  %v4905 = vld [vmem:[%s123 + $0xc0] sm:$0xff]
  %v4906 = vld [vmem:[%s123 + $0xc8] sm:$0xff]
  %v4907 = vld [vmem:[%s123 + $0xd8] sm:$0xff]
  %v4908 = vld [vmem:[%s123 + $0xe0] sm:$0xff]
  %v4909 = vld [vmem:[%s123 + $0xf0] sm:$0xff]
  %v4910 = vld [vmem:[%s123 + $0xf8] sm:$0xff]
  %v4911 = vld [vmem:[%s123 + $0x108] sm:$0xff]
  %v4912 = vld [vmem:[%s123 + $0x110] sm:$0xff]
  %v4913 = vld [vmem:[%s123 + $0x120] sm:$0xff]
  %v4914 = vld [vmem:[%s123 + $0x128] sm:$0xff]
  %v4915 = vld [vmem:[%s123 + $0x138] sm:$0xff]
  %v4916 = vld [vmem:[%s123 + $0x140] sm:$0xff]
  %v4917 = vld [vmem:[%s123 + $0x150] sm:$0xff]
  %v4918 = vld [vmem:[%s123 + $0x158] sm:$0xff]
  %v4919 = vld [vmem:[%s123 + $0x168] sm:$0xff]
  %v4920 = vld [vmem:[%s123 + $0x170] sm:$0xff]
  %v4921 = vld [vmem:[%s123 + $0x1b0] sm:$0xff]
  %v4922 = vld [vmem:[%s123 + $0x1b8] sm:$0xff]
  %v4923 = vld [vmem:[%s123 + $0x1c8] sm:$0xff]
  %v4924 = vld [vmem:[%s123 + $0x1d0] sm:$0xff]
  %v4925 = vld [vmem:[%s123 + $0x1e0] sm:$0xff]
  %v4926 = vld [vmem:[%s123 + $0x1e8] sm:$0xff]
  %v4927 = vld [vmem:[%s123 + $0x1f8] sm:$0xff]
  %v4928 = vld [vmem:[%s123 + $0x200] sm:$0xff]
  %v4929 = vld [vmem:[%s123 + $0x210] sm:$0xff]
  %v4930 = vld [vmem:[%s123 + $0x218] sm:$0xff]
  %v4931 = vld [vmem:[%s123 + $0x228] sm:$0xff]
  %v4932 = vld [vmem:[%s123 + $0x230] sm:$0xff]
  %v4933 = vld [vmem:[%s123 + $0x240] sm:$0xff]
  %v4934 = vld [vmem:[%s123 + $0x248] sm:$0xff]
  %v4935 = vld [vmem:[%s123 + $0x258] sm:$0xff]
  %v4936 = vld [vmem:[%s123 + $0x260] sm:$0xff]
  %v4937 = vld [vmem:[%s123 + $0x270] sm:$0xff]
  %v4938 = vld [vmem:[%s123 + $0x278] sm:$0xff]
  %v4939 = vld [vmem:[%s123 + $0x288] sm:$0xff]
  %v4940 = vld [vmem:[%s123 + $0x290] sm:$0xff]
  %v4941 = vld [vmem:[%s123 + $0x2a0] sm:$0xff]
  %v4942 = vld [vmem:[%s123 + $0x2a8] sm:$0xff]
  %v4943 = vld [vmem:[%s123 + $0x2b8] sm:$0xff]
  %v4944 = vld [vmem:[%s123 + $0x2c0] sm:$0xff]
  %v4945 = vld [vmem:[%s123 + $0x2d0] sm:$0xff]
  %v4946 = vld [vmem:[%s123 + $0x2d8] sm:$0xff]
  %v4947 = vld [vmem:[%s123 + $0x2e8] sm:$0xff]
  %v4948 = vld [vmem:[%s123 + $0x2f0] sm:$0xff]
  %v4949 = vld [vmem:[%s123 + $0x300] sm:$0xff]
  %v4950 = vld [vmem:[%s123 + $0x308] sm:$0xff]
  %v4951 = vld [vmem:[%s123 + $0x318] sm:$0xff]
  %v4952 = vld [vmem:[%s123 + $0x320] sm:$0xff]
  %4953 = vst [vmem:[#allocation5 + $0x18] sm:$0xff] %v4889
  %4954 = vst [vmem:[#allocation5 + $0x60] sm:$0xff] %v4890
  %4955 = vst [vmem:[#allocation5 + $0xa8] sm:$0xff] %v4891
  %4956 = vst [vmem:[#allocation5 + $0xf0] sm:$0xff] %v4892
  %4957 = vst [vmem:[#allocation5 + $0x138] sm:$0xff] %v4893
  %4958 = vst [vmem:[#allocation5 + $0x180] sm:$0xff] %v4894
  %4959 = vst [vmem:[#allocation5 + $0x1c8] sm:$0xff] %v4895
  %4960 = vst [vmem:[#allocation5 + $0x210] sm:$0xff] %v4896
  %4961 = vst [vmem:[#allocation5 + $0x258] sm:$0xff] %v4897
  %4962 = vst [vmem:[#allocation5 + $0x2a0] sm:$0xff] %v4898
  %4963 = vst [vmem:[#allocation5 + $0x2e8] sm:$0xff] %v4899
  %4964 = vst [vmem:[#allocation5 + $0x330] sm:$0xff] %v4900
  %4965 = vst [vmem:[#allocation5 + $0x378] sm:$0xff] %v4901
  %4966 = vst [vmem:[#allocation5 + $0x3c0] sm:$0xff] %v4902
  %4967 = vst [vmem:[#allocation5 + $0x408] sm:$0xff] %v4903
  %4968 = vst [vmem:[#allocation5 + $0x450] sm:$0xff] %v4904
  %4969 = vst [vmem:[#allocation5 + $0x498] sm:$0xff] %v4905
  %4970 = vst [vmem:[#allocation5 + $0x4e0] sm:$0xff] %v4906
  %4971 = vst [vmem:[#allocation5 + $0x528] sm:$0xff] %v4907
  %4972 = vst [vmem:[#allocation5 + $0x570] sm:$0xff] %v4908
  %4973 = vst [vmem:[#allocation5 + $0x5b8] sm:$0xff] %v4909
  %4974 = vst [vmem:[#allocation5 + $0x600] sm:$0xff] %v4910
  %4975 = vst [vmem:[#allocation5 + $0x648] sm:$0xff] %v4911
  %4976 = vst [vmem:[#allocation5 + $0x690] sm:$0xff] %v4912
  %4977 = vst [vmem:[#allocation5 + $0x6d8] sm:$0xff] %v4913
  %4978 = vst [vmem:[#allocation5 + $0x720] sm:$0xff] %v4914
  %4979 = vst [vmem:[#allocation5 + $0x768] sm:$0xff] %v4915
  %4980 = vst [vmem:[#allocation5 + $0x7b0] sm:$0xff] %v4916
  %4981 = vst [vmem:[#allocation5 + $0x7f8] sm:$0xff] %v4917
  %4982 = vst [vmem:[#allocation5 + $0x840] sm:$0xff] %v4918
  %4983 = vst [vmem:[#allocation5 + $0x888] sm:$0xff] %v4919
  %4984 = vst [vmem:[#allocation5 + $0x8d0] sm:$0xff] %v4920
  %4985 = vst [vmem:[#allocation5 + $0x918] sm:$0xff] %v4921
  %4986 = vst [vmem:[#allocation5 + $0x960] sm:$0xff] %v4922
  %4987 = vst [vmem:[#allocation5 + $0x9a8] sm:$0xff] %v4923
  %4988 = vst [vmem:[#allocation5 + $0x9f0] sm:$0xff] %v4924
  %4989 = vst [vmem:[#allocation5 + $0xa38] sm:$0xff] %v4925
  %4990 = vst [vmem:[#allocation5 + $0xa80] sm:$0xff] %v4926
  %4991 = vst [vmem:[#allocation5 + $0xac8] sm:$0xff] %v4927
  %4992 = vst [vmem:[#allocation5 + $0xb10] sm:$0xff] %v4928
  %4993 = vst [vmem:[#allocation5 + $0xb58] sm:$0xff] %v4929
  %4994 = vst [vmem:[#allocation5 + $0xba0] sm:$0xff] %v4930
  %4995 = vst [vmem:[#allocation5 + $0xbe8] sm:$0xff] %v4931
  %4996 = vst [vmem:[#allocation5 + $0xc30] sm:$0xff] %v4932
  %4997 = vst [vmem:[#allocation5 + $0xc78] sm:$0xff] %v4933
  %4998 = vst [vmem:[#allocation5 + $0xcc0] sm:$0xff] %v4934
  %4999 = vst [vmem:[#allocation5 + $0xd08] sm:$0xff] %v4935
  %5000 = vst [vmem:[#allocation5 + $0xd50] sm:$0xff] %v4936
  %5001 = vst [vmem:[#allocation5 + $0xd98] sm:$0xff] %v4937
  %5002 = vst [vmem:[#allocation5 + $0xde0] sm:$0xff] %v4938
  %5003 = vst [vmem:[#allocation5 + $0xe28] sm:$0xff] %v4939
  %5004 = vst [vmem:[#allocation5 + $0xe70] sm:$0xff] %v4940
  %5005 = vst [vmem:[#allocation5 + $0xeb8] sm:$0xff] %v4941
  %5006 = vst [vmem:[#allocation5 + $0xf00] sm:$0xff] %v4942
  %5007 = vst [vmem:[#allocation5 + $0xf48] sm:$0xff] %v4943
  %5008 = vst [vmem:[#allocation5 + $0xf90] sm:$0xff] %v4944
  %5009 = vst [vmem:[#allocation5 + $0xfd8] sm:$0xff] %v4945
  %5010 = vst [vmem:[#allocation5 + $0x1020] sm:$0xff] %v4946
  %5011 = vst [vmem:[#allocation5 + $0x1068] sm:$0xff] %v4947
  %5012 = vst [vmem:[#allocation5 + $0x10b0] sm:$0xff] %v4948
  %5013 = vst [vmem:[#allocation5 + $0x10f8] sm:$0xff] %v4949
  %5014 = vst [vmem:[#allocation5 + $0x1140] sm:$0xff] %v4950
  %5015 = vst [vmem:[#allocation5 + $0x1188] sm:$0xff] %v4951
  %5016 = vst [vmem:[#allocation5 + $0x11d0] sm:$0xff] %v4952
  %v5017 = vld [vmem:[%s123 + $0x1] sm:$0xff]
  %v5018 = vld [vmem:[%s123 + $0x9] sm:$0xff]
  %v5019 = vld [vmem:[%s123 + $0x19] sm:$0xff]
  %v5020 = vld [vmem:[%s123 + $0x21] sm:$0xff]
  %v5021 = vld [vmem:[%s123 + $0x31] sm:$0xff]
  %v5022 = vld [vmem:[%s123 + $0x39] sm:$0xff]
  %v5023 = vld [vmem:[%s123 + $0x49] sm:$0xff]
  %v5024 = vld [vmem:[%s123 + $0x51] sm:$0xff]
  %v5025 = vld [vmem:[%s123 + $0x61] sm:$0xff]
  %v5026 = vld [vmem:[%s123 + $0x69] sm:$0xff]
  %v5027 = vld [vmem:[%s123 + $0x79] sm:$0xff]
  %v5028 = vld [vmem:[%s123 + $0x81] sm:$0xff]
  %v5029 = vld [vmem:[%s123 + $0x91] sm:$0xff]
  %v5030 = vld [vmem:[%s123 + $0x99] sm:$0xff]
  %v5031 = vld [vmem:[%s123 + $0xa9] sm:$0xff]
  %v5032 = vld [vmem:[%s123 + $0xb1] sm:$0xff]
  %v5033 = vld [vmem:[%s123 + $0xc1] sm:$0xff]
  %v5034 = vld [vmem:[%s123 + $0xc9] sm:$0xff]
  %v5035 = vld [vmem:[%s123 + $0xd9] sm:$0xff]
  %v5036 = vld [vmem:[%s123 + $0xe1] sm:$0xff]
  %v5037 = vld [vmem:[%s123 + $0xf1] sm:$0xff]
  %v5038 = vld [vmem:[%s123 + $0xf9] sm:$0xff]
  %v5039 = vld [vmem:[%s123 + $0x109] sm:$0xff]
  %v5040 = vld [vmem:[%s123 + $0x111] sm:$0xff]
  %v5041 = vld [vmem:[%s123 + $0x121] sm:$0xff]
  %v5042 = vld [vmem:[%s123 + $0x129] sm:$0xff]
  %v5043 = vld [vmem:[%s123 + $0x139] sm:$0xff]
  %v5044 = vld [vmem:[%s123 + $0x141] sm:$0xff]
  %v5045 = vld [vmem:[%s123 + $0x151] sm:$0xff]
  %v5046 = vld [vmem:[%s123 + $0x159] sm:$0xff]
  %v5047 = vld [vmem:[%s123 + $0x169] sm:$0xff]
  %v5048 = vld [vmem:[%s123 + $0x171] sm:$0xff]
  %v5049 = vld [vmem:[%s123 + $0x1b1] sm:$0xff]
  %v5050 = vld [vmem:[%s123 + $0x1b9] sm:$0xff]
  %v5051 = vld [vmem:[%s123 + $0x1c9] sm:$0xff]
  %v5052 = vld [vmem:[%s123 + $0x1d1] sm:$0xff]
  %v5053 = vld [vmem:[%s123 + $0x1e1] sm:$0xff]
  %v5054 = vld [vmem:[%s123 + $0x1e9] sm:$0xff]
  %v5055 = vld [vmem:[%s123 + $0x1f9] sm:$0xff]
  %v5056 = vld [vmem:[%s123 + $0x201] sm:$0xff]
  %v5057 = vld [vmem:[%s123 + $0x211] sm:$0xff]
  %v5058 = vld [vmem:[%s123 + $0x219] sm:$0xff]
  %v5059 = vld [vmem:[%s123 + $0x229] sm:$0xff]
  %v5060 = vld [vmem:[%s123 + $0x231] sm:$0xff]
  %v5061 = vld [vmem:[%s123 + $0x241] sm:$0xff]
  %v5062 = vld [vmem:[%s123 + $0x249] sm:$0xff]
  %v5063 = vld [vmem:[%s123 + $0x259] sm:$0xff]
  %v5064 = vld [vmem:[%s123 + $0x261] sm:$0xff]
  %v5065 = vld [vmem:[%s123 + $0x271] sm:$0xff]
  %v5066 = vld [vmem:[%s123 + $0x279] sm:$0xff]
  %v5067 = vld [vmem:[%s123 + $0x289] sm:$0xff]
  %v5068 = vld [vmem:[%s123 + $0x291] sm:$0xff]
  %v5069 = vld [vmem:[%s123 + $0x2a1] sm:$0xff]
  %v5070 = vld [vmem:[%s123 + $0x2a9] sm:$0xff]
  %v5071 = vld [vmem:[%s123 + $0x2b9] sm:$0xff]
  %v5072 = vld [vmem:[%s123 + $0x2c1] sm:$0xff]
  %v5073 = vld [vmem:[%s123 + $0x2d1] sm:$0xff]
  %v5074 = vld [vmem:[%s123 + $0x2d9] sm:$0xff]
  %v5075 = vld [vmem:[%s123 + $0x2e9] sm:$0xff]
  %v5076 = vld [vmem:[%s123 + $0x2f1] sm:$0xff]
  %v5077 = vld [vmem:[%s123 + $0x301] sm:$0xff]
  %v5078 = vld [vmem:[%s123 + $0x309] sm:$0xff]
  %v5079 = vld [vmem:[%s123 + $0x319] sm:$0xff]
  %v5080 = vld [vmem:[%s123 + $0x321] sm:$0xff]
  %5081 = vst [vmem:[#allocation5 + $0x20] sm:$0xff] %v5017
  %5082 = vst [vmem:[#allocation5 + $0x68] sm:$0xff] %v5018
  %5083 = vst [vmem:[#allocation5 + $0xb0] sm:$0xff] %v5019
  %5084 = vst [vmem:[#allocation5 + $0xf8] sm:$0xff] %v5020
  %5085 = vst [vmem:[#allocation5 + $0x140] sm:$0xff] %v5021
  %5086 = vst [vmem:[#allocation5 + $0x188] sm:$0xff] %v5022
  %5087 = vst [vmem:[#allocation5 + $0x1d0] sm:$0xff] %v5023
  %5088 = vst [vmem:[#allocation5 + $0x218] sm:$0xff] %v5024
  %5089 = vst [vmem:[#allocation5 + $0x260] sm:$0xff] %v5025
  %5090 = vst [vmem:[#allocation5 + $0x2a8] sm:$0xff] %v5026
  %5091 = vst [vmem:[#allocation5 + $0x2f0] sm:$0xff] %v5027
  %5092 = vst [vmem:[#allocation5 + $0x338] sm:$0xff] %v5028
  %5093 = vst [vmem:[#allocation5 + $0x380] sm:$0xff] %v5029
  %5094 = vst [vmem:[#allocation5 + $0x3c8] sm:$0xff] %v5030
  %5095 = vst [vmem:[#allocation5 + $0x410] sm:$0xff] %v5031
  %5096 = vst [vmem:[#allocation5 + $0x458] sm:$0xff] %v5032
  %5097 = vst [vmem:[#allocation5 + $0x4a0] sm:$0xff] %v5033
  %5098 = vst [vmem:[#allocation5 + $0x4e8] sm:$0xff] %v5034
  %5099 = vst [vmem:[#allocation5 + $0x530] sm:$0xff] %v5035
  %5100 = vst [vmem:[#allocation5 + $0x578] sm:$0xff] %v5036
  %5101 = vst [vmem:[#allocation5 + $0x5c0] sm:$0xff] %v5037
  %5102 = vst [vmem:[#allocation5 + $0x608] sm:$0xff] %v5038
  %5103 = vst [vmem:[#allocation5 + $0x650] sm:$0xff] %v5039
  %5104 = vst [vmem:[#allocation5 + $0x698] sm:$0xff] %v5040
  %5105 = vst [vmem:[#allocation5 + $0x6e0] sm:$0xff] %v5041
  %5106 = vst [vmem:[#allocation5 + $0x728] sm:$0xff] %v5042
  %5107 = vst [vmem:[#allocation5 + $0x770] sm:$0xff] %v5043
  %5108 = vst [vmem:[#allocation5 + $0x7b8] sm:$0xff] %v5044
  %5109 = vst [vmem:[#allocation5 + $0x800] sm:$0xff] %v5045
  %5110 = vst [vmem:[#allocation5 + $0x848] sm:$0xff] %v5046
  %5111 = vst [vmem:[#allocation5 + $0x890] sm:$0xff] %v5047
  %5112 = vst [vmem:[#allocation5 + $0x8d8] sm:$0xff] %v5048
  %5113 = vst [vmem:[#allocation5 + $0x920] sm:$0xff] %v5049
  %5114 = vst [vmem:[#allocation5 + $0x968] sm:$0xff] %v5050
  %5115 = vst [vmem:[#allocation5 + $0x9b0] sm:$0xff] %v5051
  %5116 = vst [vmem:[#allocation5 + $0x9f8] sm:$0xff] %v5052
  %5117 = vst [vmem:[#allocation5 + $0xa40] sm:$0xff] %v5053
  %5118 = vst [vmem:[#allocation5 + $0xa88] sm:$0xff] %v5054
  %5119 = vst [vmem:[#allocation5 + $0xad0] sm:$0xff] %v5055
  %5120 = vst [vmem:[#allocation5 + $0xb18] sm:$0xff] %v5056
  %5121 = vst [vmem:[#allocation5 + $0xb60] sm:$0xff] %v5057
  %5122 = vst [vmem:[#allocation5 + $0xba8] sm:$0xff] %v5058
  %5123 = vst [vmem:[#allocation5 + $0xbf0] sm:$0xff] %v5059
  %5124 = vst [vmem:[#allocation5 + $0xc38] sm:$0xff] %v5060
  %5125 = vst [vmem:[#allocation5 + $0xc80] sm:$0xff] %v5061
  %5126 = vst [vmem:[#allocation5 + $0xcc8] sm:$0xff] %v5062
  %5127 = vst [vmem:[#allocation5 + $0xd10] sm:$0xff] %v5063
  %5128 = vst [vmem:[#allocation5 + $0xd58] sm:$0xff] %v5064
  %5129 = vst [vmem:[#allocation5 + $0xda0] sm:$0xff] %v5065
  %5130 = vst [vmem:[#allocation5 + $0xde8] sm:$0xff] %v5066
  %5131 = vst [vmem:[#allocation5 + $0xe30] sm:$0xff] %v5067
  %5132 = vst [vmem:[#allocation5 + $0xe78] sm:$0xff] %v5068
  %5133 = vst [vmem:[#allocation5 + $0xec0] sm:$0xff] %v5069
  %5134 = vst [vmem:[#allocation5 + $0xf08] sm:$0xff] %v5070
  %5135 = vst [vmem:[#allocation5 + $0xf50] sm:$0xff] %v5071
  %5136 = vst [vmem:[#allocation5 + $0xf98] sm:$0xff] %v5072
  %5137 = vst [vmem:[#allocation5 + $0xfe0] sm:$0xff] %v5073
  %5138 = vst [vmem:[#allocation5 + $0x1028] sm:$0xff] %v5074
  %5139 = vst [vmem:[#allocation5 + $0x1070] sm:$0xff] %v5075
  %5140 = vst [vmem:[#allocation5 + $0x10b8] sm:$0xff] %v5076
  %5141 = vst [vmem:[#allocation5 + $0x1100] sm:$0xff] %v5077
  %5142 = vst [vmem:[#allocation5 + $0x1148] sm:$0xff] %v5078
  %5143 = vst [vmem:[#allocation5 + $0x1190] sm:$0xff] %v5079
  %5144 = vst [vmem:[#allocation5 + $0x11d8] sm:$0xff] %v5080
  %v5145 = vld [vmem:[%s123 + $0x2] sm:$0xff]
  %v5146 = vld [vmem:[%s123 + $0xa] sm:$0xff]
  %v5147 = vld [vmem:[%s123 + $0x1a] sm:$0xff]
  %v5148 = vld [vmem:[%s123 + $0x22] sm:$0xff]
  %v5149 = vld [vmem:[%s123 + $0x32] sm:$0xff]
  %v5150 = vld [vmem:[%s123 + $0x3a] sm:$0xff]
  %v5151 = vld [vmem:[%s123 + $0x4a] sm:$0xff]
  %v5152 = vld [vmem:[%s123 + $0x52] sm:$0xff]
  %v5153 = vld [vmem:[%s123 + $0x62] sm:$0xff]
  %v5154 = vld [vmem:[%s123 + $0x6a] sm:$0xff]
  %v5155 = vld [vmem:[%s123 + $0x7a] sm:$0xff]
  %v5156 = vld [vmem:[%s123 + $0x82] sm:$0xff]
  %v5157 = vld [vmem:[%s123 + $0x92] sm:$0xff]
  %v5158 = vld [vmem:[%s123 + $0x9a] sm:$0xff]
  %v5159 = vld [vmem:[%s123 + $0xaa] sm:$0xff]
  %v5160 = vld [vmem:[%s123 + $0xb2] sm:$0xff]
  %v5161 = vld [vmem:[%s123 + $0xc2] sm:$0xff]
  %v5162 = vld [vmem:[%s123 + $0xca] sm:$0xff]
  %v5163 = vld [vmem:[%s123 + $0xda] sm:$0xff]
  %v5164 = vld [vmem:[%s123 + $0xe2] sm:$0xff]
  %v5165 = vld [vmem:[%s123 + $0xf2] sm:$0xff]
  %v5166 = vld [vmem:[%s123 + $0xfa] sm:$0xff]
  %v5167 = vld [vmem:[%s123 + $0x10a] sm:$0xff]
  %v5168 = vld [vmem:[%s123 + $0x112] sm:$0xff]
  %v5169 = vld [vmem:[%s123 + $0x122] sm:$0xff]
  %v5170 = vld [vmem:[%s123 + $0x12a] sm:$0xff]
  %v5171 = vld [vmem:[%s123 + $0x13a] sm:$0xff]
  %v5172 = vld [vmem:[%s123 + $0x142] sm:$0xff]
  %v5173 = vld [vmem:[%s123 + $0x152] sm:$0xff]
  %v5174 = vld [vmem:[%s123 + $0x15a] sm:$0xff]
  %v5175 = vld [vmem:[%s123 + $0x16a] sm:$0xff]
  %v5176 = vld [vmem:[%s123 + $0x172] sm:$0xff]
  %v5177 = vld [vmem:[%s123 + $0x1b2] sm:$0xff]
  %v5178 = vld [vmem:[%s123 + $0x1ba] sm:$0xff]
  %v5179 = vld [vmem:[%s123 + $0x1ca] sm:$0xff]
  %v5180 = vld [vmem:[%s123 + $0x1d2] sm:$0xff]
  %v5181 = vld [vmem:[%s123 + $0x1e2] sm:$0xff]
  %v5182 = vld [vmem:[%s123 + $0x1ea] sm:$0xff]
  %v5183 = vld [vmem:[%s123 + $0x1fa] sm:$0xff]
  %v5184 = vld [vmem:[%s123 + $0x202] sm:$0xff]
  %v5185 = vld [vmem:[%s123 + $0x212] sm:$0xff]
  %v5186 = vld [vmem:[%s123 + $0x21a] sm:$0xff]
  %v5187 = vld [vmem:[%s123 + $0x22a] sm:$0xff]
  %v5188 = vld [vmem:[%s123 + $0x232] sm:$0xff]
  %v5189 = vld [vmem:[%s123 + $0x242] sm:$0xff]
  %v5190 = vld [vmem:[%s123 + $0x24a] sm:$0xff]
  %v5191 = vld [vmem:[%s123 + $0x25a] sm:$0xff]
  %v5192 = vld [vmem:[%s123 + $0x262] sm:$0xff]
  %v5193 = vld [vmem:[%s123 + $0x272] sm:$0xff]
  %v5194 = vld [vmem:[%s123 + $0x27a] sm:$0xff]
  %v5195 = vld [vmem:[%s123 + $0x28a] sm:$0xff]
  %v5196 = vld [vmem:[%s123 + $0x292] sm:$0xff]
  %v5197 = vld [vmem:[%s123 + $0x2a2] sm:$0xff]
  %v5198 = vld [vmem:[%s123 + $0x2aa] sm:$0xff]
  %v5199 = vld [vmem:[%s123 + $0x2ba] sm:$0xff]
  %v5200 = vld [vmem:[%s123 + $0x2c2] sm:$0xff]
  %v5201 = vld [vmem:[%s123 + $0x2d2] sm:$0xff]
  %v5202 = vld [vmem:[%s123 + $0x2da] sm:$0xff]
  %v5203 = vld [vmem:[%s123 + $0x2ea] sm:$0xff]
  %v5204 = vld [vmem:[%s123 + $0x2f2] sm:$0xff]
  %v5205 = vld [vmem:[%s123 + $0x302] sm:$0xff]
  %v5206 = vld [vmem:[%s123 + $0x30a] sm:$0xff]
  %v5207 = vld [vmem:[%s123 + $0x31a] sm:$0xff]
  %v5208 = vld [vmem:[%s123 + $0x322] sm:$0xff]
  %5209 = vst [vmem:[#allocation5 + $0x28] sm:$0xff] %v5145
  %5210 = vst [vmem:[#allocation5 + $0x70] sm:$0xff] %v5146
  %5211 = vst [vmem:[#allocation5 + $0xb8] sm:$0xff] %v5147
  %5212 = vst [vmem:[#allocation5 + $0x100] sm:$0xff] %v5148
  %5213 = vst [vmem:[#allocation5 + $0x148] sm:$0xff] %v5149
  %5214 = vst [vmem:[#allocation5 + $0x190] sm:$0xff] %v5150
  %5215 = vst [vmem:[#allocation5 + $0x1d8] sm:$0xff] %v5151
  %5216 = vst [vmem:[#allocation5 + $0x220] sm:$0xff] %v5152
  %5217 = vst [vmem:[#allocation5 + $0x268] sm:$0xff] %v5153
  %5218 = vst [vmem:[#allocation5 + $0x2b0] sm:$0xff] %v5154
  %5219 = vst [vmem:[#allocation5 + $0x2f8] sm:$0xff] %v5155
  %5220 = vst [vmem:[#allocation5 + $0x340] sm:$0xff] %v5156
  %5221 = vst [vmem:[#allocation5 + $0x388] sm:$0xff] %v5157
  %5222 = vst [vmem:[#allocation5 + $0x3d0] sm:$0xff] %v5158
  %5223 = vst [vmem:[#allocation5 + $0x418] sm:$0xff] %v5159
  %5224 = vst [vmem:[#allocation5 + $0x460] sm:$0xff] %v5160
  %5225 = vst [vmem:[#allocation5 + $0x4a8] sm:$0xff] %v5161
  %5226 = vst [vmem:[#allocation5 + $0x4f0] sm:$0xff] %v5162
  %5227 = vst [vmem:[#allocation5 + $0x538] sm:$0xff] %v5163
  %5228 = vst [vmem:[#allocation5 + $0x580] sm:$0xff] %v5164
  %5229 = vst [vmem:[#allocation5 + $0x5c8] sm:$0xff] %v5165
  %5230 = vst [vmem:[#allocation5 + $0x610] sm:$0xff] %v5166
  %5231 = vst [vmem:[#allocation5 + $0x658] sm:$0xff] %v5167
  %5232 = vst [vmem:[#allocation5 + $0x6a0] sm:$0xff] %v5168
  %5233 = vst [vmem:[#allocation5 + $0x6e8] sm:$0xff] %v5169
  %5234 = vst [vmem:[#allocation5 + $0x730] sm:$0xff] %v5170
  %5235 = vst [vmem:[#allocation5 + $0x778] sm:$0xff] %v5171
  %5236 = vst [vmem:[#allocation5 + $0x7c0] sm:$0xff] %v5172
  %5237 = vst [vmem:[#allocation5 + $0x808] sm:$0xff] %v5173
  %5238 = vst [vmem:[#allocation5 + $0x850] sm:$0xff] %v5174
  %5239 = vst [vmem:[#allocation5 + $0x898] sm:$0xff] %v5175
  %5240 = vst [vmem:[#allocation5 + $0x8e0] sm:$0xff] %v5176
  %5241 = vst [vmem:[#allocation5 + $0x928] sm:$0xff] %v5177
  %5242 = vst [vmem:[#allocation5 + $0x970] sm:$0xff] %v5178
  %5243 = vst [vmem:[#allocation5 + $0x9b8] sm:$0xff] %v5179
  %5244 = vst [vmem:[#allocation5 + $0xa00] sm:$0xff] %v5180
  %5245 = vst [vmem:[#allocation5 + $0xa48] sm:$0xff] %v5181
  %5246 = vst [vmem:[#allocation5 + $0xa90] sm:$0xff] %v5182
  %5247 = vst [vmem:[#allocation5 + $0xad8] sm:$0xff] %v5183
  %5248 = vst [vmem:[#allocation5 + $0xb20] sm:$0xff] %v5184
  %5249 = vst [vmem:[#allocation5 + $0xb68] sm:$0xff] %v5185
  %5250 = vst [vmem:[#allocation5 + $0xbb0] sm:$0xff] %v5186
  %5251 = vst [vmem:[#allocation5 + $0xbf8] sm:$0xff] %v5187
  %5252 = vst [vmem:[#allocation5 + $0xc40] sm:$0xff] %v5188
  %5253 = vst [vmem:[#allocation5 + $0xc88] sm:$0xff] %v5189
  %5254 = vst [vmem:[#allocation5 + $0xcd0] sm:$0xff] %v5190
  %5255 = vst [vmem:[#allocation5 + $0xd18] sm:$0xff] %v5191
  %5256 = vst [vmem:[#allocation5 + $0xd60] sm:$0xff] %v5192
  %5257 = vst [vmem:[#allocation5 + $0xda8] sm:$0xff] %v5193
  %5258 = vst [vmem:[#allocation5 + $0xdf0] sm:$0xff] %v5194
  %5259 = vst [vmem:[#allocation5 + $0xe38] sm:$0xff] %v5195
  %5260 = vst [vmem:[#allocation5 + $0xe80] sm:$0xff] %v5196
  %5261 = vst [vmem:[#allocation5 + $0xec8] sm:$0xff] %v5197
  %5262 = vst [vmem:[#allocation5 + $0xf10] sm:$0xff] %v5198
  %5263 = vst [vmem:[#allocation5 + $0xf58] sm:$0xff] %v5199
  %5264 = vst [vmem:[#allocation5 + $0xfa0] sm:$0xff] %v5200
  %5265 = vst [vmem:[#allocation5 + $0xfe8] sm:$0xff] %v5201
  %5266 = vst [vmem:[#allocation5 + $0x1030] sm:$0xff] %v5202
  %5267 = vst [vmem:[#allocation5 + $0x1078] sm:$0xff] %v5203
  %5268 = vst [vmem:[#allocation5 + $0x10c0] sm:$0xff] %v5204
  %5269 = vst [vmem:[#allocation5 + $0x1108] sm:$0xff] %v5205
  %5270 = vst [vmem:[#allocation5 + $0x1150] sm:$0xff] %v5206
  %5271 = vst [vmem:[#allocation5 + $0x1198] sm:$0xff] %v5207
  %5272 = vst [vmem:[#allocation5 + $0x11e0] sm:$0xff] %v5208
  %s5273 = scalar_lea.vmem [#allocation4], 48
  %v5274 = vld [vmem:[%s5273] sm:$0xff]
  %v5275 = vld [vmem:[%s5273 + $0x8] sm:$0xff]
  %v5276 = vld [vmem:[%s5273 + $0x18] sm:$0xff]
  %v5277 = vld [vmem:[%s5273 + $0x20] sm:$0xff]
  %v5278 = vld [vmem:[%s5273 + $0x30] sm:$0xff]
  %v5279 = vld [vmem:[%s5273 + $0x38] sm:$0xff]
  %v5280 = vld [vmem:[%s5273 + $0x48] sm:$0xff]
  %v5281 = vld [vmem:[%s5273 + $0x50] sm:$0xff]
  %v5282 = vld [vmem:[%s5273 + $0x60] sm:$0xff]
  %v5283 = vld [vmem:[%s5273 + $0x68] sm:$0xff]
  %v5284 = vld [vmem:[%s5273 + $0x78] sm:$0xff]
  %v5285 = vld [vmem:[%s5273 + $0x80] sm:$0xff]
  %v5286 = vld [vmem:[%s5273 + $0x90] sm:$0xff]
  %v5287 = vld [vmem:[%s5273 + $0x98] sm:$0xff]
  %v5288 = vld [vmem:[%s5273 + $0xa8] sm:$0xff]
  %v5289 = vld [vmem:[%s5273 + $0xb0] sm:$0xff]
  %v5290 = vld [vmem:[%s5273 + $0xc0] sm:$0xff]
  %v5291 = vld [vmem:[%s5273 + $0xc8] sm:$0xff]
  %v5292 = vld [vmem:[%s5273 + $0xd8] sm:$0xff]
  %v5293 = vld [vmem:[%s5273 + $0xe0] sm:$0xff]
  %v5294 = vld [vmem:[%s5273 + $0xf0] sm:$0xff]
  %v5295 = vld [vmem:[%s5273 + $0xf8] sm:$0xff]
  %v5296 = vld [vmem:[%s5273 + $0x108] sm:$0xff]
  %v5297 = vld [vmem:[%s5273 + $0x110] sm:$0xff]
  %v5298 = vld [vmem:[%s5273 + $0x120] sm:$0xff]
  %v5299 = vld [vmem:[%s5273 + $0x128] sm:$0xff]
  %v5300 = vld [vmem:[%s5273 + $0x138] sm:$0xff]
  %v5301 = vld [vmem:[%s5273 + $0x140] sm:$0xff]
  %v5302 = vld [vmem:[%s5273 + $0x150] sm:$0xff]
  %v5303 = vld [vmem:[%s5273 + $0x158] sm:$0xff]
  %v5304 = vld [vmem:[%s5273 + $0x168] sm:$0xff]
  %v5305 = vld [vmem:[%s5273 + $0x170] sm:$0xff]
  %v5306 = vld [vmem:[%s5273 + $0x1b0] sm:$0xff]
  %v5307 = vld [vmem:[%s5273 + $0x1b8] sm:$0xff]
  %v5308 = vld [vmem:[%s5273 + $0x1c8] sm:$0xff]
  %v5309 = vld [vmem:[%s5273 + $0x1d0] sm:$0xff]
  %v5310 = vld [vmem:[%s5273 + $0x1e0] sm:$0xff]
  %v5311 = vld [vmem:[%s5273 + $0x1e8] sm:$0xff]
  %v5312 = vld [vmem:[%s5273 + $0x1f8] sm:$0xff]
  %v5313 = vld [vmem:[%s5273 + $0x200] sm:$0xff]
  %v5314 = vld [vmem:[%s5273 + $0x210] sm:$0xff]
  %v5315 = vld [vmem:[%s5273 + $0x218] sm:$0xff]
  %v5316 = vld [vmem:[%s5273 + $0x228] sm:$0xff]
  %v5317 = vld [vmem:[%s5273 + $0x230] sm:$0xff]
  %v5318 = vld [vmem:[%s5273 + $0x240] sm:$0xff]
  %v5319 = vld [vmem:[%s5273 + $0x248] sm:$0xff]
  %v5320 = vld [vmem:[%s5273 + $0x258] sm:$0xff]
  %v5321 = vld [vmem:[%s5273 + $0x260] sm:$0xff]
  %v5322 = vld [vmem:[%s5273 + $0x270] sm:$0xff]
  %v5323 = vld [vmem:[%s5273 + $0x278] sm:$0xff]
  %v5324 = vld [vmem:[%s5273 + $0x288] sm:$0xff]
  %v5325 = vld [vmem:[%s5273 + $0x290] sm:$0xff]
  %v5326 = vld [vmem:[%s5273 + $0x2a0] sm:$0xff]
  %v5327 = vld [vmem:[%s5273 + $0x2a8] sm:$0xff]
  %v5328 = vld [vmem:[%s5273 + $0x2b8] sm:$0xff]
  %v5329 = vld [vmem:[%s5273 + $0x2c0] sm:$0xff]
  %v5330 = vld [vmem:[%s5273 + $0x2d0] sm:$0xff]
  %v5331 = vld [vmem:[%s5273 + $0x2d8] sm:$0xff]
  %v5332 = vld [vmem:[%s5273 + $0x2e8] sm:$0xff]
  %v5333 = vld [vmem:[%s5273 + $0x2f0] sm:$0xff]
  %v5334 = vld [vmem:[%s5273 + $0x300] sm:$0xff]
  %v5335 = vld [vmem:[%s5273 + $0x308] sm:$0xff]
  %v5336 = vld [vmem:[%s5273 + $0x318] sm:$0xff]
  %v5337 = vld [vmem:[%s5273 + $0x320] sm:$0xff]
  %5338 = vst [vmem:[#allocation5 + $0x30] sm:$0xff] %v5274
  %5339 = vst [vmem:[#allocation5 + $0x78] sm:$0xff] %v5275
  %5340 = vst [vmem:[#allocation5 + $0xc0] sm:$0xff] %v5276
  %5341 = vst [vmem:[#allocation5 + $0x108] sm:$0xff] %v5277
  %5342 = vst [vmem:[#allocation5 + $0x150] sm:$0xff] %v5278
  %5343 = vst [vmem:[#allocation5 + $0x198] sm:$0xff] %v5279
  %5344 = vst [vmem:[#allocation5 + $0x1e0] sm:$0xff] %v5280
  %5345 = vst [vmem:[#allocation5 + $0x228] sm:$0xff] %v5281
  %5346 = vst [vmem:[#allocation5 + $0x270] sm:$0xff] %v5282
  %5347 = vst [vmem:[#allocation5 + $0x2b8] sm:$0xff] %v5283
  %5348 = vst [vmem:[#allocation5 + $0x300] sm:$0xff] %v5284
  %5349 = vst [vmem:[#allocation5 + $0x348] sm:$0xff] %v5285
  %5350 = vst [vmem:[#allocation5 + $0x390] sm:$0xff] %v5286
  %5351 = vst [vmem:[#allocation5 + $0x3d8] sm:$0xff] %v5287
  %5352 = vst [vmem:[#allocation5 + $0x420] sm:$0xff] %v5288
  %5353 = vst [vmem:[#allocation5 + $0x468] sm:$0xff] %v5289
  %5354 = vst [vmem:[#allocation5 + $0x4b0] sm:$0xff] %v5290
  %5355 = vst [vmem:[#allocation5 + $0x4f8] sm:$0xff] %v5291
  %5356 = vst [vmem:[#allocation5 + $0x540] sm:$0xff] %v5292
  %5357 = vst [vmem:[#allocation5 + $0x588] sm:$0xff] %v5293
  %5358 = vst [vmem:[#allocation5 + $0x5d0] sm:$0xff] %v5294
  %5359 = vst [vmem:[#allocation5 + $0x618] sm:$0xff] %v5295
  %5360 = vst [vmem:[#allocation5 + $0x660] sm:$0xff] %v5296
  %5361 = vst [vmem:[#allocation5 + $0x6a8] sm:$0xff] %v5297
  %5362 = vst [vmem:[#allocation5 + $0x6f0] sm:$0xff] %v5298
  %5363 = vst [vmem:[#allocation5 + $0x738] sm:$0xff] %v5299
  %5364 = vst [vmem:[#allocation5 + $0x780] sm:$0xff] %v5300
  %5365 = vst [vmem:[#allocation5 + $0x7c8] sm:$0xff] %v5301
  %5366 = vst [vmem:[#allocation5 + $0x810] sm:$0xff] %v5302
  %5367 = vst [vmem:[#allocation5 + $0x858] sm:$0xff] %v5303
  %5368 = vst [vmem:[#allocation5 + $0x8a0] sm:$0xff] %v5304
  %5369 = vst [vmem:[#allocation5 + $0x8e8] sm:$0xff] %v5305
  %5370 = vst [vmem:[#allocation5 + $0x930] sm:$0xff] %v5306
  %5371 = vst [vmem:[#allocation5 + $0x978] sm:$0xff] %v5307
  %5372 = vst [vmem:[#allocation5 + $0x9c0] sm:$0xff] %v5308
  %5373 = vst [vmem:[#allocation5 + $0xa08] sm:$0xff] %v5309
  %5374 = vst [vmem:[#allocation5 + $0xa50] sm:$0xff] %v5310
  %5375 = vst [vmem:[#allocation5 + $0xa98] sm:$0xff] %v5311
  %5376 = vst [vmem:[#allocation5 + $0xae0] sm:$0xff] %v5312
  %5377 = vst [vmem:[#allocation5 + $0xb28] sm:$0xff] %v5313
  %5378 = vst [vmem:[#allocation5 + $0xb70] sm:$0xff] %v5314
  %5379 = vst [vmem:[#allocation5 + $0xbb8] sm:$0xff] %v5315
  %5380 = vst [vmem:[#allocation5 + $0xc00] sm:$0xff] %v5316
  %5381 = vst [vmem:[#allocation5 + $0xc48] sm:$0xff] %v5317
  %5382 = vst [vmem:[#allocation5 + $0xc90] sm:$0xff] %v5318
  %5383 = vst [vmem:[#allocation5 + $0xcd8] sm:$0xff] %v5319
  %5384 = vst [vmem:[#allocation5 + $0xd20] sm:$0xff] %v5320
  %5385 = vst [vmem:[#allocation5 + $0xd68] sm:$0xff] %v5321
  %5386 = vst [vmem:[#allocation5 + $0xdb0] sm:$0xff] %v5322
  %5387 = vst [vmem:[#allocation5 + $0xdf8] sm:$0xff] %v5323
  %5388 = vst [vmem:[#allocation5 + $0xe40] sm:$0xff] %v5324
  %5389 = vst [vmem:[#allocation5 + $0xe88] sm:$0xff] %v5325
  %5390 = vst [vmem:[#allocation5 + $0xed0] sm:$0xff] %v5326
  %5391 = vst [vmem:[#allocation5 + $0xf18] sm:$0xff] %v5327
  %5392 = vst [vmem:[#allocation5 + $0xf60] sm:$0xff] %v5328
  %5393 = vst [vmem:[#allocation5 + $0xfa8] sm:$0xff] %v5329
  %5394 = vst [vmem:[#allocation5 + $0xff0] sm:$0xff] %v5330
  %5395 = vst [vmem:[#allocation5 + $0x1038] sm:$0xff] %v5331
  %5396 = vst [vmem:[#allocation5 + $0x1080] sm:$0xff] %v5332
  %5397 = vst [vmem:[#allocation5 + $0x10c8] sm:$0xff] %v5333
  %5398 = vst [vmem:[#allocation5 + $0x1110] sm:$0xff] %v5334
  %5399 = vst [vmem:[#allocation5 + $0x1158] sm:$0xff] %v5335
  %5400 = vst [vmem:[#allocation5 + $0x11a0] sm:$0xff] %v5336
  %5401 = vst [vmem:[#allocation5 + $0x11e8] sm:$0xff] %v5337
  %v5402 = vld [vmem:[%s5273 + $0x1] sm:$0xff]
  %v5403 = vld [vmem:[%s5273 + $0x9] sm:$0xff]
  %v5404 = vld [vmem:[%s5273 + $0x19] sm:$0xff]
  %v5405 = vld [vmem:[%s5273 + $0x21] sm:$0xff]
  %v5406 = vld [vmem:[%s5273 + $0x31] sm:$0xff]
  %v5407 = vld [vmem:[%s5273 + $0x39] sm:$0xff]
  %v5408 = vld [vmem:[%s5273 + $0x49] sm:$0xff]
  %v5409 = vld [vmem:[%s5273 + $0x51] sm:$0xff]
  %v5410 = vld [vmem:[%s5273 + $0x61] sm:$0xff]
  %v5411 = vld [vmem:[%s5273 + $0x69] sm:$0xff]
  %v5412 = vld [vmem:[%s5273 + $0x79] sm:$0xff]
  %v5413 = vld [vmem:[%s5273 + $0x81] sm:$0xff]
  %v5414 = vld [vmem:[%s5273 + $0x91] sm:$0xff]
  %v5415 = vld [vmem:[%s5273 + $0x99] sm:$0xff]
  %v5416 = vld [vmem:[%s5273 + $0xa9] sm:$0xff]
  %v5417 = vld [vmem:[%s5273 + $0xb1] sm:$0xff]
  %v5418 = vld [vmem:[%s5273 + $0xc1] sm:$0xff]
  %v5419 = vld [vmem:[%s5273 + $0xc9] sm:$0xff]
  %v5420 = vld [vmem:[%s5273 + $0xd9] sm:$0xff]
  %v5421 = vld [vmem:[%s5273 + $0xe1] sm:$0xff]
  %v5422 = vld [vmem:[%s5273 + $0xf1] sm:$0xff]
  %v5423 = vld [vmem:[%s5273 + $0xf9] sm:$0xff]
  %v5424 = vld [vmem:[%s5273 + $0x109] sm:$0xff]
  %v5425 = vld [vmem:[%s5273 + $0x111] sm:$0xff]
  %v5426 = vld [vmem:[%s5273 + $0x121] sm:$0xff]
  %v5427 = vld [vmem:[%s5273 + $0x129] sm:$0xff]
  %v5428 = vld [vmem:[%s5273 + $0x139] sm:$0xff]
  %v5429 = vld [vmem:[%s5273 + $0x141] sm:$0xff]
  %v5430 = vld [vmem:[%s5273 + $0x151] sm:$0xff]
  %v5431 = vld [vmem:[%s5273 + $0x159] sm:$0xff]
  %v5432 = vld [vmem:[%s5273 + $0x169] sm:$0xff]
  %v5433 = vld [vmem:[%s5273 + $0x171] sm:$0xff]
  %v5434 = vld [vmem:[%s5273 + $0x1b1] sm:$0xff]
  %v5435 = vld [vmem:[%s5273 + $0x1b9] sm:$0xff]
  %v5436 = vld [vmem:[%s5273 + $0x1c9] sm:$0xff]
  %v5437 = vld [vmem:[%s5273 + $0x1d1] sm:$0xff]
  %v5438 = vld [vmem:[%s5273 + $0x1e1] sm:$0xff]
  %v5439 = vld [vmem:[%s5273 + $0x1e9] sm:$0xff]
  %v5440 = vld [vmem:[%s5273 + $0x1f9] sm:$0xff]
  %v5441 = vld [vmem:[%s5273 + $0x201] sm:$0xff]
  %v5442 = vld [vmem:[%s5273 + $0x211] sm:$0xff]
  %v5443 = vld [vmem:[%s5273 + $0x219] sm:$0xff]
  %v5444 = vld [vmem:[%s5273 + $0x229] sm:$0xff]
  %v5445 = vld [vmem:[%s5273 + $0x231] sm:$0xff]
  %v5446 = vld [vmem:[%s5273 + $0x241] sm:$0xff]
  %v5447 = vld [vmem:[%s5273 + $0x249] sm:$0xff]
  %v5448 = vld [vmem:[%s5273 + $0x259] sm:$0xff]
  %v5449 = vld [vmem:[%s5273 + $0x261] sm:$0xff]
  %v5450 = vld [vmem:[%s5273 + $0x271] sm:$0xff]
  %v5451 = vld [vmem:[%s5273 + $0x279] sm:$0xff]
  %v5452 = vld [vmem:[%s5273 + $0x289] sm:$0xff]
  %v5453 = vld [vmem:[%s5273 + $0x291] sm:$0xff]
  %v5454 = vld [vmem:[%s5273 + $0x2a1] sm:$0xff]
  %v5455 = vld [vmem:[%s5273 + $0x2a9] sm:$0xff]
  %v5456 = vld [vmem:[%s5273 + $0x2b9] sm:$0xff]
  %v5457 = vld [vmem:[%s5273 + $0x2c1] sm:$0xff]
  %v5458 = vld [vmem:[%s5273 + $0x2d1] sm:$0xff]
  %v5459 = vld [vmem:[%s5273 + $0x2d9] sm:$0xff]
  %v5460 = vld [vmem:[%s5273 + $0x2e9] sm:$0xff]
  %v5461 = vld [vmem:[%s5273 + $0x2f1] sm:$0xff]
  %v5462 = vld [vmem:[%s5273 + $0x301] sm:$0xff]
  %v5463 = vld [vmem:[%s5273 + $0x309] sm:$0xff]
  %v5464 = vld [vmem:[%s5273 + $0x319] sm:$0xff]
  %v5465 = vld [vmem:[%s5273 + $0x321] sm:$0xff]
  %5466 = vst [vmem:[#allocation5 + $0x38] sm:$0xff] %v5402
  %5467 = vst [vmem:[#allocation5 + $0x80] sm:$0xff] %v5403
  %5468 = vst [vmem:[#allocation5 + $0xc8] sm:$0xff] %v5404
  %5469 = vst [vmem:[#allocation5 + $0x110] sm:$0xff] %v5405
  %5470 = vst [vmem:[#allocation5 + $0x158] sm:$0xff] %v5406
  %5471 = vst [vmem:[#allocation5 + $0x1a0] sm:$0xff] %v5407
  %5472 = vst [vmem:[#allocation5 + $0x1e8] sm:$0xff] %v5408
  %5473 = vst [vmem:[#allocation5 + $0x230] sm:$0xff] %v5409
  %5474 = vst [vmem:[#allocation5 + $0x278] sm:$0xff] %v5410
  %5475 = vst [vmem:[#allocation5 + $0x2c0] sm:$0xff] %v5411
  %5476 = vst [vmem:[#allocation5 + $0x308] sm:$0xff] %v5412
  %5477 = vst [vmem:[#allocation5 + $0x350] sm:$0xff] %v5413
  %5478 = vst [vmem:[#allocation5 + $0x398] sm:$0xff] %v5414
  %5479 = vst [vmem:[#allocation5 + $0x3e0] sm:$0xff] %v5415
  %5480 = vst [vmem:[#allocation5 + $0x428] sm:$0xff] %v5416
  %5481 = vst [vmem:[#allocation5 + $0x470] sm:$0xff] %v5417
  %5482 = vst [vmem:[#allocation5 + $0x4b8] sm:$0xff] %v5418
  %5483 = vst [vmem:[#allocation5 + $0x500] sm:$0xff] %v5419
  %5484 = vst [vmem:[#allocation5 + $0x548] sm:$0xff] %v5420
  %5485 = vst [vmem:[#allocation5 + $0x590] sm:$0xff] %v5421
  %5486 = vst [vmem:[#allocation5 + $0x5d8] sm:$0xff] %v5422
  %5487 = vst [vmem:[#allocation5 + $0x620] sm:$0xff] %v5423
  %5488 = vst [vmem:[#allocation5 + $0x668] sm:$0xff] %v5424
  %5489 = vst [vmem:[#allocation5 + $0x6b0] sm:$0xff] %v5425
  %5490 = vst [vmem:[#allocation5 + $0x6f8] sm:$0xff] %v5426
  %5491 = vst [vmem:[#allocation5 + $0x740] sm:$0xff] %v5427
  %5492 = vst [vmem:[#allocation5 + $0x788] sm:$0xff] %v5428
  %5493 = vst [vmem:[#allocation5 + $0x7d0] sm:$0xff] %v5429
  %5494 = vst [vmem:[#allocation5 + $0x818] sm:$0xff] %v5430
  %5495 = vst [vmem:[#allocation5 + $0x860] sm:$0xff] %v5431
  %5496 = vst [vmem:[#allocation5 + $0x8a8] sm:$0xff] %v5432
  %5497 = vst [vmem:[#allocation5 + $0x8f0] sm:$0xff] %v5433
  %5498 = vst [vmem:[#allocation5 + $0x938] sm:$0xff] %v5434
  %5499 = vst [vmem:[#allocation5 + $0x980] sm:$0xff] %v5435
  %5500 = vst [vmem:[#allocation5 + $0x9c8] sm:$0xff] %v5436
  %5501 = vst [vmem:[#allocation5 + $0xa10] sm:$0xff] %v5437
  %5502 = vst [vmem:[#allocation5 + $0xa58] sm:$0xff] %v5438
  %5503 = vst [vmem:[#allocation5 + $0xaa0] sm:$0xff] %v5439
  %5504 = vst [vmem:[#allocation5 + $0xae8] sm:$0xff] %v5440
  %5505 = vst [vmem:[#allocation5 + $0xb30] sm:$0xff] %v5441
  %5506 = vst [vmem:[#allocation5 + $0xb78] sm:$0xff] %v5442
  %5507 = vst [vmem:[#allocation5 + $0xbc0] sm:$0xff] %v5443
  %5508 = vst [vmem:[#allocation5 + $0xc08] sm:$0xff] %v5444
  %5509 = vst [vmem:[#allocation5 + $0xc50] sm:$0xff] %v5445
  %5510 = vst [vmem:[#allocation5 + $0xc98] sm:$0xff] %v5446
  %5511 = vst [vmem:[#allocation5 + $0xce0] sm:$0xff] %v5447
  %5512 = vst [vmem:[#allocation5 + $0xd28] sm:$0xff] %v5448
  %5513 = vst [vmem:[#allocation5 + $0xd70] sm:$0xff] %v5449
  %5514 = vst [vmem:[#allocation5 + $0xdb8] sm:$0xff] %v5450
  %5515 = vst [vmem:[#allocation5 + $0xe00] sm:$0xff] %v5451
  %5516 = vst [vmem:[#allocation5 + $0xe48] sm:$0xff] %v5452
  %5517 = vst [vmem:[#allocation5 + $0xe90] sm:$0xff] %v5453
  %5518 = vst [vmem:[#allocation5 + $0xed8] sm:$0xff] %v5454
  %5519 = vst [vmem:[#allocation5 + $0xf20] sm:$0xff] %v5455
  %5520 = vst [vmem:[#allocation5 + $0xf68] sm:$0xff] %v5456
  %5521 = vst [vmem:[#allocation5 + $0xfb0] sm:$0xff] %v5457
  %5522 = vst [vmem:[#allocation5 + $0xff8] sm:$0xff] %v5458
  %5523 = vst [vmem:[#allocation5 + $0x1040] sm:$0xff] %v5459
  %5524 = vst [vmem:[#allocation5 + $0x1088] sm:$0xff] %v5460
  %5525 = vst [vmem:[#allocation5 + $0x10d0] sm:$0xff] %v5461
  %5526 = vst [vmem:[#allocation5 + $0x1118] sm:$0xff] %v5462
  %5527 = vst [vmem:[#allocation5 + $0x1160] sm:$0xff] %v5463
  %5528 = vst [vmem:[#allocation5 + $0x11a8] sm:$0xff] %v5464
  %5529 = vst [vmem:[#allocation5 + $0x11f0] sm:$0xff] %v5465
  %v5530 = vld [vmem:[%s5273 + $0x2] sm:$0xff]
  %v5531 = vld [vmem:[%s5273 + $0xa] sm:$0xff]
  %v5532 = vld [vmem:[%s5273 + $0x1a] sm:$0xff]
  %v5533 = vld [vmem:[%s5273 + $0x22] sm:$0xff]
  %v5534 = vld [vmem:[%s5273 + $0x32] sm:$0xff]
  %v5535 = vld [vmem:[%s5273 + $0x3a] sm:$0xff]
  %v5536 = vld [vmem:[%s5273 + $0x4a] sm:$0xff]
  %v5537 = vld [vmem:[%s5273 + $0x52] sm:$0xff]
  %v5538 = vld [vmem:[%s5273 + $0x62] sm:$0xff]
  %v5539 = vld [vmem:[%s5273 + $0x6a] sm:$0xff]
  %v5540 = vld [vmem:[%s5273 + $0x7a] sm:$0xff]
  %v5541 = vld [vmem:[%s5273 + $0x82] sm:$0xff]
  %v5542 = vld [vmem:[%s5273 + $0x92] sm:$0xff]
  %v5543 = vld [vmem:[%s5273 + $0x9a] sm:$0xff]
  %v5544 = vld [vmem:[%s5273 + $0xaa] sm:$0xff]
  %v5545 = vld [vmem:[%s5273 + $0xb2] sm:$0xff]
  %v5546 = vld [vmem:[%s5273 + $0xc2] sm:$0xff]
  %v5547 = vld [vmem:[%s5273 + $0xca] sm:$0xff]
  %v5548 = vld [vmem:[%s5273 + $0xda] sm:$0xff]
  %v5549 = vld [vmem:[%s5273 + $0xe2] sm:$0xff]
  %v5550 = vld [vmem:[%s5273 + $0xf2] sm:$0xff]
  %v5551 = vld [vmem:[%s5273 + $0xfa] sm:$0xff]
  %v5552 = vld [vmem:[%s5273 + $0x10a] sm:$0xff]
  %v5553 = vld [vmem:[%s5273 + $0x112] sm:$0xff]
  %v5554 = vld [vmem:[%s5273 + $0x122] sm:$0xff]
  %v5555 = vld [vmem:[%s5273 + $0x12a] sm:$0xff]
  %v5556 = vld [vmem:[%s5273 + $0x13a] sm:$0xff]
  %v5557 = vld [vmem:[%s5273 + $0x142] sm:$0xff]
  %v5558 = vld [vmem:[%s5273 + $0x152] sm:$0xff]
  %v5559 = vld [vmem:[%s5273 + $0x15a] sm:$0xff]
  %v5560 = vld [vmem:[%s5273 + $0x16a] sm:$0xff]
  %v5561 = vld [vmem:[%s5273 + $0x172] sm:$0xff]
  %v5562 = vld [vmem:[%s5273 + $0x1b2] sm:$0xff]
  %v5563 = vld [vmem:[%s5273 + $0x1ba] sm:$0xff]
  %v5564 = vld [vmem:[%s5273 + $0x1ca] sm:$0xff]
  %v5565 = vld [vmem:[%s5273 + $0x1d2] sm:$0xff]
  %v5566 = vld [vmem:[%s5273 + $0x1e2] sm:$0xff]
  %v5567 = vld [vmem:[%s5273 + $0x1ea] sm:$0xff]
  %v5568 = vld [vmem:[%s5273 + $0x1fa] sm:$0xff]
  %v5569 = vld [vmem:[%s5273 + $0x202] sm:$0xff]
  %v5570 = vld [vmem:[%s5273 + $0x212] sm:$0xff]
  %v5571 = vld [vmem:[%s5273 + $0x21a] sm:$0xff]
  %v5572 = vld [vmem:[%s5273 + $0x22a] sm:$0xff]
  %v5573 = vld [vmem:[%s5273 + $0x232] sm:$0xff]
  %v5574 = vld [vmem:[%s5273 + $0x242] sm:$0xff]
  %v5575 = vld [vmem:[%s5273 + $0x24a] sm:$0xff]
  %v5576 = vld [vmem:[%s5273 + $0x25a] sm:$0xff]
  %v5577 = vld [vmem:[%s5273 + $0x262] sm:$0xff]
  %v5578 = vld [vmem:[%s5273 + $0x272] sm:$0xff]
  %v5579 = vld [vmem:[%s5273 + $0x27a] sm:$0xff]
  %v5580 = vld [vmem:[%s5273 + $0x28a] sm:$0xff]
  %v5581 = vld [vmem:[%s5273 + $0x292] sm:$0xff]
  %v5582 = vld [vmem:[%s5273 + $0x2a2] sm:$0xff]
  %v5583 = vld [vmem:[%s5273 + $0x2aa] sm:$0xff]
  %v5584 = vld [vmem:[%s5273 + $0x2ba] sm:$0xff]
  %v5585 = vld [vmem:[%s5273 + $0x2c2] sm:$0xff]
  %v5586 = vld [vmem:[%s5273 + $0x2d2] sm:$0xff]
  %v5587 = vld [vmem:[%s5273 + $0x2da] sm:$0xff]
  %v5588 = vld [vmem:[%s5273 + $0x2ea] sm:$0xff]
  %v5589 = vld [vmem:[%s5273 + $0x2f2] sm:$0xff]
  %v5590 = vld [vmem:[%s5273 + $0x302] sm:$0xff]
  %v5591 = vld [vmem:[%s5273 + $0x30a] sm:$0xff]
  %v5592 = vld [vmem:[%s5273 + $0x31a] sm:$0xff]
  %v5593 = vld [vmem:[%s5273 + $0x322] sm:$0xff]
  %5594 = vst [vmem:[#allocation5 + $0x40] sm:$0xff] %v5530
  %5595 = vst [vmem:[#allocation5 + $0x88] sm:$0xff] %v5531
  %5596 = vst [vmem:[#allocation5 + $0xd0] sm:$0xff] %v5532
  %5597 = vst [vmem:[#allocation5 + $0x118] sm:$0xff] %v5533
  %5598 = vst [vmem:[#allocation5 + $0x160] sm:$0xff] %v5534
  %5599 = vst [vmem:[#allocation5 + $0x1a8] sm:$0xff] %v5535
  %5600 = vst [vmem:[#allocation5 + $0x1f0] sm:$0xff] %v5536
  %5601 = vst [vmem:[#allocation5 + $0x238] sm:$0xff] %v5537
  %5602 = vst [vmem:[#allocation5 + $0x280] sm:$0xff] %v5538
  %5603 = vst [vmem:[#allocation5 + $0x2c8] sm:$0xff] %v5539
  %5604 = vst [vmem:[#allocation5 + $0x310] sm:$0xff] %v5540
  %5605 = vst [vmem:[#allocation5 + $0x358] sm:$0xff] %v5541
  %5606 = vst [vmem:[#allocation5 + $0x3a0] sm:$0xff] %v5542
  %5607 = vst [vmem:[#allocation5 + $0x3e8] sm:$0xff] %v5543
  %5608 = vst [vmem:[#allocation5 + $0x430] sm:$0xff] %v5544
  %5609 = vst [vmem:[#allocation5 + $0x478] sm:$0xff] %v5545
  %5610 = vst [vmem:[#allocation5 + $0x4c0] sm:$0xff] %v5546
  %5611 = vst [vmem:[#allocation5 + $0x508] sm:$0xff] %v5547
  %5612 = vst [vmem:[#allocation5 + $0x550] sm:$0xff] %v5548
  %5613 = vst [vmem:[#allocation5 + $0x598] sm:$0xff] %v5549
  %5614 = vst [vmem:[#allocation5 + $0x5e0] sm:$0xff] %v5550
  %5615 = vst [vmem:[#allocation5 + $0x628] sm:$0xff] %v5551
  %5616 = vst [vmem:[#allocation5 + $0x670] sm:$0xff] %v5552
  %5617 = vst [vmem:[#allocation5 + $0x6b8] sm:$0xff] %v5553
  %5618 = vst [vmem:[#allocation5 + $0x700] sm:$0xff] %v5554
  %5619 = vst [vmem:[#allocation5 + $0x748] sm:$0xff] %v5555
  %5620 = vst [vmem:[#allocation5 + $0x790] sm:$0xff] %v5556
  %5621 = vst [vmem:[#allocation5 + $0x7d8] sm:$0xff] %v5557
  %5622 = vst [vmem:[#allocation5 + $0x820] sm:$0xff] %v5558
  %5623 = vst [vmem:[#allocation5 + $0x868] sm:$0xff] %v5559
  %5624 = vst [vmem:[#allocation5 + $0x8b0] sm:$0xff] %v5560
  %5625 = vst [vmem:[#allocation5 + $0x8f8] sm:$0xff] %v5561
  %5626 = vst [vmem:[#allocation5 + $0x940] sm:$0xff] %v5562
  %5627 = vst [vmem:[#allocation5 + $0x988] sm:$0xff] %v5563
  %5628 = vst [vmem:[#allocation5 + $0x9d0] sm:$0xff] %v5564
  %5629 = vst [vmem:[#allocation5 + $0xa18] sm:$0xff] %v5565
  %5630 = vst [vmem:[#allocation5 + $0xa60] sm:$0xff] %v5566
  %5631 = vst [vmem:[#allocation5 + $0xaa8] sm:$0xff] %v5567
  %5632 = vst [vmem:[#allocation5 + $0xaf0] sm:$0xff] %v5568
  %5633 = vst [vmem:[#allocation5 + $0xb38] sm:$0xff] %v5569
  %5634 = vst [vmem:[#allocation5 + $0xb80] sm:$0xff] %v5570
  %5635 = vst [vmem:[#allocation5 + $0xbc8] sm:$0xff] %v5571
  %5636 = vst [vmem:[#allocation5 + $0xc10] sm:$0xff] %v5572
  %5637 = vst [vmem:[#allocation5 + $0xc58] sm:$0xff] %v5573
  %5638 = vst [vmem:[#allocation5 + $0xca0] sm:$0xff] %v5574
  %5639 = vst [vmem:[#allocation5 + $0xce8] sm:$0xff] %v5575
  %5640 = vst [vmem:[#allocation5 + $0xd30] sm:$0xff] %v5576
  %5641 = vst [vmem:[#allocation5 + $0xd78] sm:$0xff] %v5577
  %5642 = vst [vmem:[#allocation5 + $0xdc0] sm:$0xff] %v5578
  %5643 = vst [vmem:[#allocation5 + $0xe08] sm:$0xff] %v5579
  %5644 = vst [vmem:[#allocation5 + $0xe50] sm:$0xff] %v5580
  %5645 = vst [vmem:[#allocation5 + $0xe98] sm:$0xff] %v5581
  %5646 = vst [vmem:[#allocation5 + $0xee0] sm:$0xff] %v5582
  %5647 = vst [vmem:[#allocation5 + $0xf28] sm:$0xff] %v5583
  %5648 = vst [vmem:[#allocation5 + $0xf70] sm:$0xff] %v5584
  %5649 = vst [vmem:[#allocation5 + $0xfb8] sm:$0xff] %v5585
  %5650 = vst [vmem:[#allocation5 + $0x1000] sm:$0xff] %v5586
  %5651 = vst [vmem:[#allocation5 + $0x1048] sm:$0xff] %v5587
  %5652 = vst [vmem:[#allocation5 + $0x1090] sm:$0xff] %v5588
  %5653 = vst [vmem:[#allocation5 + $0x10d8] sm:$0xff] %v5589
  %5654 = vst [vmem:[#allocation5 + $0x1120] sm:$0xff] %v5590
  %5655 = vst [vmem:[#allocation5 + $0x1168] sm:$0xff] %v5591
  %5656 = vst [vmem:[#allocation5 + $0x11b0] sm:$0xff] %v5592
  %5657 = vst [vmem:[#allocation5 + $0x11f8] sm:$0xff] %v5593
  %v5658 = vld [vmem:[#allocation5] sm:$0xff]
  %v5659 = vld [vmem:[#allocation5 + $0x8] sm:$0xff]
  %v5660 = vld [vmem:[#allocation5 + $0x10] sm:$0xff]
  %v5661 = vld [vmem:[#allocation5 + $0x18] sm:$0xff]
  %v5662 = vld [vmem:[#allocation5 + $0x20] sm:$0xff]
  %v5663 = vld [vmem:[#allocation5 + $0x28] sm:$0xff]
  %v5664 = vld [vmem:[#allocation5 + $0x30] sm:$0xff]
  %v5665 = vld [vmem:[#allocation5 + $0x38] sm:$0xff]
  %v5666 = vld [vmem:[#allocation5 + $0x40] sm:$0xff]
  %v5667 = vld [vmem:[#allocation5 + $0x48] sm:$0xff]
  %v5668 = vld [vmem:[#allocation5 + $0x50] sm:$0xff]
  %v5669 = vld [vmem:[#allocation5 + $0x58] sm:$0xff]
  %v5670 = vld [vmem:[#allocation5 + $0x60] sm:$0xff]
  %v5671 = vld [vmem:[#allocation5 + $0x68] sm:$0xff]
  %v5672 = vld [vmem:[#allocation5 + $0x70] sm:$0xff]
  %v5673 = vld [vmem:[#allocation5 + $0x78] sm:$0xff]
  %v5674 = vld [vmem:[#allocation5 + $0x80] sm:$0xff]
  %v5675 = vld [vmem:[#allocation5 + $0x88] sm:$0xff]
  %v5676 = vld [vmem:[#allocation5 + $0x90] sm:$0xff]
  %v5677 = vld [vmem:[#allocation5 + $0x98] sm:$0xff]
  %v5678 = vld [vmem:[#allocation5 + $0xa0] sm:$0xff]
  %v5679 = vld [vmem:[#allocation5 + $0xa8] sm:$0xff]
  %v5680 = vld [vmem:[#allocation5 + $0xb0] sm:$0xff]
  %v5681 = vld [vmem:[#allocation5 + $0xb8] sm:$0xff]
  %v5682 = vld [vmem:[#allocation5 + $0xc0] sm:$0xff]
  %v5683 = vld [vmem:[#allocation5 + $0xc8] sm:$0xff]
  %v5684 = vld [vmem:[#allocation5 + $0xd0] sm:$0xff]
  %v5685 = vld [vmem:[#allocation5 + $0xd8] sm:$0xff]
  %v5686 = vld [vmem:[#allocation5 + $0xe0] sm:$0xff]
  %v5687 = vld [vmem:[#allocation5 + $0xe8] sm:$0xff]
  %v5688 = vld [vmem:[#allocation5 + $0xf0] sm:$0xff]
  %v5689 = vld [vmem:[#allocation5 + $0xf8] sm:$0xff]
  %v5690 = vld [vmem:[#allocation5 + $0x100] sm:$0xff]
  %v5691 = vld [vmem:[#allocation5 + $0x108] sm:$0xff]
  %v5692 = vld [vmem:[#allocation5 + $0x110] sm:$0xff]
  %v5693 = vld [vmem:[#allocation5 + $0x118] sm:$0xff]
  %v5694 = vld [vmem:[#allocation5 + $0x120] sm:$0xff]
  %v5695 = vld [vmem:[#allocation5 + $0x128] sm:$0xff]
  %v5696 = vld [vmem:[#allocation5 + $0x130] sm:$0xff]
  %v5697 = vld [vmem:[#allocation5 + $0x138] sm:$0xff]
  %v5698 = vld [vmem:[#allocation5 + $0x140] sm:$0xff]
  %v5699 = vld [vmem:[#allocation5 + $0x148] sm:$0xff]
  %v5700 = vld [vmem:[#allocation5 + $0x150] sm:$0xff]
  %v5701 = vld [vmem:[#allocation5 + $0x158] sm:$0xff]
  %v5702 = vld [vmem:[#allocation5 + $0x160] sm:$0xff]
  %v5703 = vld [vmem:[#allocation5 + $0x168] sm:$0xff]
  %v5704 = vld [vmem:[#allocation5 + $0x170] sm:$0xff]
  %v5705 = vld [vmem:[#allocation5 + $0x178] sm:$0xff]
  %v5706 = vld [vmem:[#allocation5 + $0x180] sm:$0xff]
  %v5707 = vld [vmem:[#allocation5 + $0x188] sm:$0xff]
  %v5708 = vld [vmem:[#allocation5 + $0x190] sm:$0xff]
  %v5709 = vld [vmem:[#allocation5 + $0x198] sm:$0xff]
  %v5710 = vld [vmem:[#allocation5 + $0x1a0] sm:$0xff]
  %v5711 = vld [vmem:[#allocation5 + $0x1a8] sm:$0xff]
  %v5712 = vld [vmem:[#allocation5 + $0x1b0] sm:$0xff]
  %v5713 = vld [vmem:[#allocation5 + $0x1b8] sm:$0xff]
  %v5714 = vld [vmem:[#allocation5 + $0x1c0] sm:$0xff]
  %v5715 = vld [vmem:[#allocation5 + $0x1c8] sm:$0xff]
  %v5716 = vld [vmem:[#allocation5 + $0x1d0] sm:$0xff]
  %v5717 = vld [vmem:[#allocation5 + $0x1d8] sm:$0xff]
  %v5718 = vld [vmem:[#allocation5 + $0x1e0] sm:$0xff]
  %v5719 = vld [vmem:[#allocation5 + $0x1e8] sm:$0xff]
  %v5720 = vld [vmem:[#allocation5 + $0x1f0] sm:$0xff]
  %v5721 = vld [vmem:[#allocation5 + $0x1f8] sm:$0xff]
  %v5722 = vld [vmem:[#allocation5 + $0x200] sm:$0xff]
  %v5723 = vld [vmem:[#allocation5 + $0x208] sm:$0xff]
  %v5724 = vld [vmem:[#allocation5 + $0x210] sm:$0xff]
  %v5725 = vld [vmem:[#allocation5 + $0x218] sm:$0xff]
  %v5726 = vld [vmem:[#allocation5 + $0x220] sm:$0xff]
  %v5727 = vld [vmem:[#allocation5 + $0x228] sm:$0xff]
  %v5728 = vld [vmem:[#allocation5 + $0x230] sm:$0xff]
  %v5729 = vld [vmem:[#allocation5 + $0x238] sm:$0xff]
  %v5730 = vld [vmem:[#allocation5 + $0x240] sm:$0xff]
  %v5731 = vld [vmem:[#allocation5 + $0x248] sm:$0xff]
  %v5732 = vld [vmem:[#allocation5 + $0x250] sm:$0xff]
  %v5733 = vld [vmem:[#allocation5 + $0x258] sm:$0xff]
  %v5734 = vld [vmem:[#allocation5 + $0x260] sm:$0xff]
  %v5735 = vld [vmem:[#allocation5 + $0x268] sm:$0xff]
  %v5736 = vld [vmem:[#allocation5 + $0x270] sm:$0xff]
  %v5737 = vld [vmem:[#allocation5 + $0x278] sm:$0xff]
  %v5738 = vld [vmem:[#allocation5 + $0x280] sm:$0xff]
  %v5739 = vld [vmem:[#allocation5 + $0x288] sm:$0xff]
  %v5740 = vld [vmem:[#allocation5 + $0x290] sm:$0xff]
  %v5741 = vld [vmem:[#allocation5 + $0x298] sm:$0xff]
  %v5742 = vld [vmem:[#allocation5 + $0x2a0] sm:$0xff]
  %v5743 = vld [vmem:[#allocation5 + $0x2a8] sm:$0xff]
  %v5744 = vld [vmem:[#allocation5 + $0x2b0] sm:$0xff]
  %v5745 = vld [vmem:[#allocation5 + $0x2b8] sm:$0xff]
  %v5746 = vld [vmem:[#allocation5 + $0x2c0] sm:$0xff]
  %v5747 = vld [vmem:[#allocation5 + $0x2c8] sm:$0xff]
  %v5748 = vld [vmem:[#allocation5 + $0x2d0] sm:$0xff]
  %v5749 = vld [vmem:[#allocation5 + $0x2d8] sm:$0xff]
  %v5750 = vld [vmem:[#allocation5 + $0x2e0] sm:$0xff]
  %v5751 = vld [vmem:[#allocation5 + $0x2e8] sm:$0xff]
  %v5752 = vld [vmem:[#allocation5 + $0x2f0] sm:$0xff]
  %v5753 = vld [vmem:[#allocation5 + $0x2f8] sm:$0xff]
  %v5754 = vld [vmem:[#allocation5 + $0x300] sm:$0xff]
  %v5755 = vld [vmem:[#allocation5 + $0x308] sm:$0xff]
  %v5756 = vld [vmem:[#allocation5 + $0x310] sm:$0xff]
  %v5757 = vld [vmem:[#allocation5 + $0x318] sm:$0xff]
  %v5758 = vld [vmem:[#allocation5 + $0x320] sm:$0xff]
  %v5759 = vld [vmem:[#allocation5 + $0x328] sm:$0xff]
  %v5760 = vld [vmem:[#allocation5 + $0x330] sm:$0xff]
  %v5761 = vld [vmem:[#allocation5 + $0x338] sm:$0xff]
  %v5762 = vld [vmem:[#allocation5 + $0x340] sm:$0xff]
  %v5763 = vld [vmem:[#allocation5 + $0x348] sm:$0xff]
  %v5764 = vld [vmem:[#allocation5 + $0x350] sm:$0xff]
  %v5765 = vld [vmem:[#allocation5 + $0x358] sm:$0xff]
  %v5766 = vld [vmem:[#allocation5 + $0x360] sm:$0xff]
  %v5767 = vld [vmem:[#allocation5 + $0x368] sm:$0xff]
  %v5768 = vld [vmem:[#allocation5 + $0x370] sm:$0xff]
  %v5769 = vld [vmem:[#allocation5 + $0x378] sm:$0xff]
  %v5770 = vld [vmem:[#allocation5 + $0x380] sm:$0xff]
  %v5771 = vld [vmem:[#allocation5 + $0x388] sm:$0xff]
  %v5772 = vld [vmem:[#allocation5 + $0x390] sm:$0xff]
  %v5773 = vld [vmem:[#allocation5 + $0x398] sm:$0xff]
  %v5774 = vld [vmem:[#allocation5 + $0x3a0] sm:$0xff]
  %v5775 = vld [vmem:[#allocation5 + $0x3a8] sm:$0xff]
  %v5776 = vld [vmem:[#allocation5 + $0x3b0] sm:$0xff]
  %v5777 = vld [vmem:[#allocation5 + $0x3b8] sm:$0xff]
  %v5778 = vld [vmem:[#allocation5 + $0x3c0] sm:$0xff]
  %v5779 = vld [vmem:[#allocation5 + $0x3c8] sm:$0xff]
  %v5780 = vld [vmem:[#allocation5 + $0x3d0] sm:$0xff]
  %v5781 = vld [vmem:[#allocation5 + $0x3d8] sm:$0xff]
  %v5782 = vld [vmem:[#allocation5 + $0x3e0] sm:$0xff]
  %v5783 = vld [vmem:[#allocation5 + $0x3e8] sm:$0xff]
  %v5784 = vld [vmem:[#allocation5 + $0x3f0] sm:$0xff]
  %v5785 = vld [vmem:[#allocation5 + $0x3f8] sm:$0xff]
  %v5786 = vld [vmem:[#allocation5 + $0x400] sm:$0xff]
  %v5787 = vld [vmem:[#allocation5 + $0x408] sm:$0xff]
  %v5788 = vld [vmem:[#allocation5 + $0x410] sm:$0xff]
  %v5789 = vld [vmem:[#allocation5 + $0x418] sm:$0xff]
  %v5790 = vld [vmem:[#allocation5 + $0x420] sm:$0xff]
  %v5791 = vld [vmem:[#allocation5 + $0x428] sm:$0xff]
  %v5792 = vld [vmem:[#allocation5 + $0x430] sm:$0xff]
  %v5793 = vld [vmem:[#allocation5 + $0x438] sm:$0xff]
  %v5794 = vld [vmem:[#allocation5 + $0x440] sm:$0xff]
  %v5795 = vld [vmem:[#allocation5 + $0x448] sm:$0xff]
  %v5796 = vld [vmem:[#allocation5 + $0x450] sm:$0xff]
  %v5797 = vld [vmem:[#allocation5 + $0x458] sm:$0xff]
  %v5798 = vld [vmem:[#allocation5 + $0x460] sm:$0xff]
  %v5799 = vld [vmem:[#allocation5 + $0x468] sm:$0xff]
  %v5800 = vld [vmem:[#allocation5 + $0x470] sm:$0xff]
  %v5801 = vld [vmem:[#allocation5 + $0x478] sm:$0xff]
  %v5802 = vld [vmem:[#allocation5 + $0x480] sm:$0xff]
  %v5803 = vld [vmem:[#allocation5 + $0x488] sm:$0xff]
  %v5804 = vld [vmem:[#allocation5 + $0x490] sm:$0xff]
  %v5805 = vld [vmem:[#allocation5 + $0x498] sm:$0xff]
  %v5806 = vld [vmem:[#allocation5 + $0x4a0] sm:$0xff]
  %v5807 = vld [vmem:[#allocation5 + $0x4a8] sm:$0xff]
  %v5808 = vld [vmem:[#allocation5 + $0x4b0] sm:$0xff]
  %v5809 = vld [vmem:[#allocation5 + $0x4b8] sm:$0xff]
  %v5810 = vld [vmem:[#allocation5 + $0x4c0] sm:$0xff]
  %v5811 = vld [vmem:[#allocation5 + $0x4c8] sm:$0xff]
  %v5812 = vld [vmem:[#allocation5 + $0x4d0] sm:$0xff]
  %v5813 = vld [vmem:[#allocation5 + $0x4d8] sm:$0xff]
  %v5814 = vld [vmem:[#allocation5 + $0x4e0] sm:$0xff]
  %v5815 = vld [vmem:[#allocation5 + $0x4e8] sm:$0xff]
  %v5816 = vld [vmem:[#allocation5 + $0x4f0] sm:$0xff]
  %v5817 = vld [vmem:[#allocation5 + $0x4f8] sm:$0xff]
  %v5818 = vld [vmem:[#allocation5 + $0x500] sm:$0xff]
  %v5819 = vld [vmem:[#allocation5 + $0x508] sm:$0xff]
  %v5820 = vld [vmem:[#allocation5 + $0x510] sm:$0xff]
  %v5821 = vld [vmem:[#allocation5 + $0x518] sm:$0xff]
  %v5822 = vld [vmem:[#allocation5 + $0x520] sm:$0xff]
  %v5823 = vld [vmem:[#allocation5 + $0x528] sm:$0xff]
  %v5824 = vld [vmem:[#allocation5 + $0x530] sm:$0xff]
  %v5825 = vld [vmem:[#allocation5 + $0x538] sm:$0xff]
  %v5826 = vld [vmem:[#allocation5 + $0x540] sm:$0xff]
  %v5827 = vld [vmem:[#allocation5 + $0x548] sm:$0xff]
  %v5828 = vld [vmem:[#allocation5 + $0x550] sm:$0xff]
  %v5829 = vld [vmem:[#allocation5 + $0x558] sm:$0xff]
  %v5830 = vld [vmem:[#allocation5 + $0x560] sm:$0xff]
  %v5831 = vld [vmem:[#allocation5 + $0x568] sm:$0xff]
  %v5832 = vld [vmem:[#allocation5 + $0x570] sm:$0xff]
  %v5833 = vld [vmem:[#allocation5 + $0x578] sm:$0xff]
  %v5834 = vld [vmem:[#allocation5 + $0x580] sm:$0xff]
  %v5835 = vld [vmem:[#allocation5 + $0x588] sm:$0xff]
  %v5836 = vld [vmem:[#allocation5 + $0x590] sm:$0xff]
  %v5837 = vld [vmem:[#allocation5 + $0x598] sm:$0xff]
  %v5838 = vld [vmem:[#allocation5 + $0x5a0] sm:$0xff]
  %v5839 = vld [vmem:[#allocation5 + $0x5a8] sm:$0xff]
  %v5840 = vld [vmem:[#allocation5 + $0x5b0] sm:$0xff]
  %v5841 = vld [vmem:[#allocation5 + $0x5b8] sm:$0xff]
  %v5842 = vld [vmem:[#allocation5 + $0x5c0] sm:$0xff]
  %v5843 = vld [vmem:[#allocation5 + $0x5c8] sm:$0xff]
  %v5844 = vld [vmem:[#allocation5 + $0x5d0] sm:$0xff]
  %v5845 = vld [vmem:[#allocation5 + $0x5d8] sm:$0xff]
  %v5846 = vld [vmem:[#allocation5 + $0x5e0] sm:$0xff]
  %v5847 = vld [vmem:[#allocation5 + $0x5e8] sm:$0xff]
  %v5848 = vld [vmem:[#allocation5 + $0x5f0] sm:$0xff]
  %v5849 = vld [vmem:[#allocation5 + $0x5f8] sm:$0xff]
  %v5850 = vld [vmem:[#allocation5 + $0x600] sm:$0xff]
  %v5851 = vld [vmem:[#allocation5 + $0x608] sm:$0xff]
  %v5852 = vld [vmem:[#allocation5 + $0x610] sm:$0xff]
  %v5853 = vld [vmem:[#allocation5 + $0x618] sm:$0xff]
  %v5854 = vld [vmem:[#allocation5 + $0x620] sm:$0xff]
  %v5855 = vld [vmem:[#allocation5 + $0x628] sm:$0xff]
  %v5856 = vld [vmem:[#allocation5 + $0x630] sm:$0xff]
  %v5857 = vld [vmem:[#allocation5 + $0x638] sm:$0xff]
  %v5858 = vld [vmem:[#allocation5 + $0x640] sm:$0xff]
  %v5859 = vld [vmem:[#allocation5 + $0x648] sm:$0xff]
  %v5860 = vld [vmem:[#allocation5 + $0x650] sm:$0xff]
  %v5861 = vld [vmem:[#allocation5 + $0x658] sm:$0xff]
  %v5862 = vld [vmem:[#allocation5 + $0x660] sm:$0xff]
  %v5863 = vld [vmem:[#allocation5 + $0x668] sm:$0xff]
  %v5864 = vld [vmem:[#allocation5 + $0x670] sm:$0xff]
  %v5865 = vld [vmem:[#allocation5 + $0x678] sm:$0xff]
  %v5866 = vld [vmem:[#allocation5 + $0x680] sm:$0xff]
  %v5867 = vld [vmem:[#allocation5 + $0x688] sm:$0xff]
  %v5868 = vld [vmem:[#allocation5 + $0x690] sm:$0xff]
  %v5869 = vld [vmem:[#allocation5 + $0x698] sm:$0xff]
  %v5870 = vld [vmem:[#allocation5 + $0x6a0] sm:$0xff]
  %v5871 = vld [vmem:[#allocation5 + $0x6a8] sm:$0xff]
  %v5872 = vld [vmem:[#allocation5 + $0x6b0] sm:$0xff]
  %v5873 = vld [vmem:[#allocation5 + $0x6b8] sm:$0xff]
  %v5874 = vld [vmem:[#allocation5 + $0x6c0] sm:$0xff]
  %v5875 = vld [vmem:[#allocation5 + $0x6c8] sm:$0xff]
  %v5876 = vld [vmem:[#allocation5 + $0x6d0] sm:$0xff]
  %v5877 = vld [vmem:[#allocation5 + $0x6d8] sm:$0xff]
  %v5878 = vld [vmem:[#allocation5 + $0x6e0] sm:$0xff]
  %v5879 = vld [vmem:[#allocation5 + $0x6e8] sm:$0xff]
  %v5880 = vld [vmem:[#allocation5 + $0x6f0] sm:$0xff]
  %v5881 = vld [vmem:[#allocation5 + $0x6f8] sm:$0xff]
  %v5882 = vld [vmem:[#allocation5 + $0x700] sm:$0xff]
  %v5883 = vld [vmem:[#allocation5 + $0x708] sm:$0xff]
  %v5884 = vld [vmem:[#allocation5 + $0x710] sm:$0xff]
  %v5885 = vld [vmem:[#allocation5 + $0x718] sm:$0xff]
  %v5886 = vld [vmem:[#allocation5 + $0x720] sm:$0xff]
  %v5887 = vld [vmem:[#allocation5 + $0x728] sm:$0xff]
  %v5888 = vld [vmem:[#allocation5 + $0x730] sm:$0xff]
  %v5889 = vld [vmem:[#allocation5 + $0x738] sm:$0xff]
  %v5890 = vld [vmem:[#allocation5 + $0x740] sm:$0xff]
  %v5891 = vld [vmem:[#allocation5 + $0x748] sm:$0xff]
  %v5892 = vld [vmem:[#allocation5 + $0x750] sm:$0xff]
  %v5893 = vld [vmem:[#allocation5 + $0x758] sm:$0xff]
  %v5894 = vld [vmem:[#allocation5 + $0x760] sm:$0xff]
  %v5895 = vld [vmem:[#allocation5 + $0x768] sm:$0xff]
  %v5896 = vld [vmem:[#allocation5 + $0x770] sm:$0xff]
  %v5897 = vld [vmem:[#allocation5 + $0x778] sm:$0xff]
  %v5898 = vld [vmem:[#allocation5 + $0x780] sm:$0xff]
  %v5899 = vld [vmem:[#allocation5 + $0x788] sm:$0xff]
  %v5900 = vld [vmem:[#allocation5 + $0x790] sm:$0xff]
  %v5901 = vld [vmem:[#allocation5 + $0x798] sm:$0xff]
  %v5902 = vld [vmem:[#allocation5 + $0x7a0] sm:$0xff]
  %v5903 = vld [vmem:[#allocation5 + $0x7a8] sm:$0xff]
  %v5904 = vld [vmem:[#allocation5 + $0x7b0] sm:$0xff]
  %v5905 = vld [vmem:[#allocation5 + $0x7b8] sm:$0xff]
  %v5906 = vld [vmem:[#allocation5 + $0x7c0] sm:$0xff]
  %v5907 = vld [vmem:[#allocation5 + $0x7c8] sm:$0xff]
  %v5908 = vld [vmem:[#allocation5 + $0x7d0] sm:$0xff]
  %v5909 = vld [vmem:[#allocation5 + $0x7d8] sm:$0xff]
  %v5910 = vld [vmem:[#allocation5 + $0x7e0] sm:$0xff]
  %v5911 = vld [vmem:[#allocation5 + $0x7e8] sm:$0xff]
  %v5912 = vld [vmem:[#allocation5 + $0x7f0] sm:$0xff]
  %v5913 = vld [vmem:[#allocation5 + $0x7f8] sm:$0xff]
  %v5914 = vld [vmem:[#allocation5 + $0x800] sm:$0xff]
  %v5915 = vld [vmem:[#allocation5 + $0x808] sm:$0xff]
  %v5916 = vld [vmem:[#allocation5 + $0x810] sm:$0xff]
  %v5917 = vld [vmem:[#allocation5 + $0x818] sm:$0xff]
  %v5918 = vld [vmem:[#allocation5 + $0x820] sm:$0xff]
  %v5919 = vld [vmem:[#allocation5 + $0x828] sm:$0xff]
  %v5920 = vld [vmem:[#allocation5 + $0x830] sm:$0xff]
  %v5921 = vld [vmem:[#allocation5 + $0x838] sm:$0xff]
  %v5922 = vld [vmem:[#allocation5 + $0x840] sm:$0xff]
  %v5923 = vld [vmem:[#allocation5 + $0x848] sm:$0xff]
  %v5924 = vld [vmem:[#allocation5 + $0x850] sm:$0xff]
  %v5925 = vld [vmem:[#allocation5 + $0x858] sm:$0xff]
  %v5926 = vld [vmem:[#allocation5 + $0x860] sm:$0xff]
  %v5927 = vld [vmem:[#allocation5 + $0x868] sm:$0xff]
  %v5928 = vld [vmem:[#allocation5 + $0x870] sm:$0xff]
  %v5929 = vld [vmem:[#allocation5 + $0x878] sm:$0xff]
  %v5930 = vld [vmem:[#allocation5 + $0x880] sm:$0xff]
  %v5931 = vld [vmem:[#allocation5 + $0x888] sm:$0xff]
  %v5932 = vld [vmem:[#allocation5 + $0x890] sm:$0xff]
  %v5933 = vld [vmem:[#allocation5 + $0x898] sm:$0xff]
  %v5934 = vld [vmem:[#allocation5 + $0x8a0] sm:$0xff]
  %v5935 = vld [vmem:[#allocation5 + $0x8a8] sm:$0xff]
  %v5936 = vld [vmem:[#allocation5 + $0x8b0] sm:$0xff]
  %v5937 = vld [vmem:[#allocation5 + $0x8b8] sm:$0xff]
  %v5938 = vld [vmem:[#allocation5 + $0x8c0] sm:$0xff]
  %v5939 = vld [vmem:[#allocation5 + $0x8c8] sm:$0xff]
  %v5940 = vld [vmem:[#allocation5 + $0x8d0] sm:$0xff]
  %v5941 = vld [vmem:[#allocation5 + $0x8d8] sm:$0xff]
  %v5942 = vld [vmem:[#allocation5 + $0x8e0] sm:$0xff]
  %v5943 = vld [vmem:[#allocation5 + $0x8e8] sm:$0xff]
  %v5944 = vld [vmem:[#allocation5 + $0x8f0] sm:$0xff]
  %v5945 = vld [vmem:[#allocation5 + $0x8f8] sm:$0xff]
  %v5946 = vld [vmem:[#allocation5 + $0x900] sm:$0xff]
  %v5947 = vld [vmem:[#allocation5 + $0x908] sm:$0xff]
  %v5948 = vld [vmem:[#allocation5 + $0x910] sm:$0xff]
  %v5949 = vld [vmem:[#allocation5 + $0x918] sm:$0xff]
  %v5950 = vld [vmem:[#allocation5 + $0x920] sm:$0xff]
  %v5951 = vld [vmem:[#allocation5 + $0x928] sm:$0xff]
  %v5952 = vld [vmem:[#allocation5 + $0x930] sm:$0xff]
  %v5953 = vld [vmem:[#allocation5 + $0x938] sm:$0xff]
  %v5954 = vld [vmem:[#allocation5 + $0x940] sm:$0xff]
  %v5955 = vld [vmem:[#allocation5 + $0x948] sm:$0xff]
  %v5956 = vld [vmem:[#allocation5 + $0x950] sm:$0xff]
  %v5957 = vld [vmem:[#allocation5 + $0x958] sm:$0xff]
  %v5958 = vld [vmem:[#allocation5 + $0x960] sm:$0xff]
  %v5959 = vld [vmem:[#allocation5 + $0x968] sm:$0xff]
  %v5960 = vld [vmem:[#allocation5 + $0x970] sm:$0xff]
  %v5961 = vld [vmem:[#allocation5 + $0x978] sm:$0xff]
  %v5962 = vld [vmem:[#allocation5 + $0x980] sm:$0xff]
  %v5963 = vld [vmem:[#allocation5 + $0x988] sm:$0xff]
  %v5964 = vld [vmem:[#allocation5 + $0x990] sm:$0xff]
  %v5965 = vld [vmem:[#allocation5 + $0x998] sm:$0xff]
  %v5966 = vld [vmem:[#allocation5 + $0x9a0] sm:$0xff]
  %v5967 = vld [vmem:[#allocation5 + $0x9a8] sm:$0xff]
  %v5968 = vld [vmem:[#allocation5 + $0x9b0] sm:$0xff]
  %v5969 = vld [vmem:[#allocation5 + $0x9b8] sm:$0xff]
  %v5970 = vld [vmem:[#allocation5 + $0x9c0] sm:$0xff]
  %v5971 = vld [vmem:[#allocation5 + $0x9c8] sm:$0xff]
  %v5972 = vld [vmem:[#allocation5 + $0x9d0] sm:$0xff]
  %v5973 = vld [vmem:[#allocation5 + $0x9d8] sm:$0xff]
  %v5974 = vld [vmem:[#allocation5 + $0x9e0] sm:$0xff]
  %v5975 = vld [vmem:[#allocation5 + $0x9e8] sm:$0xff]
  %v5976 = vld [vmem:[#allocation5 + $0x9f0] sm:$0xff]
  %v5977 = vld [vmem:[#allocation5 + $0x9f8] sm:$0xff]
  %v5978 = vld [vmem:[#allocation5 + $0xa00] sm:$0xff]
  %v5979 = vld [vmem:[#allocation5 + $0xa08] sm:$0xff]
  %v5980 = vld [vmem:[#allocation5 + $0xa10] sm:$0xff]
  %v5981 = vld [vmem:[#allocation5 + $0xa18] sm:$0xff]
  %v5982 = vld [vmem:[#allocation5 + $0xa20] sm:$0xff]
  %v5983 = vld [vmem:[#allocation5 + $0xa28] sm:$0xff]
  %v5984 = vld [vmem:[#allocation5 + $0xa30] sm:$0xff]
  %v5985 = vld [vmem:[#allocation5 + $0xa38] sm:$0xff]
  %v5986 = vld [vmem:[#allocation5 + $0xa40] sm:$0xff]
  %v5987 = vld [vmem:[#allocation5 + $0xa48] sm:$0xff]
  %v5988 = vld [vmem:[#allocation5 + $0xa50] sm:$0xff]
  %v5989 = vld [vmem:[#allocation5 + $0xa58] sm:$0xff]
  %v5990 = vld [vmem:[#allocation5 + $0xa60] sm:$0xff]
  %v5991 = vld [vmem:[#allocation5 + $0xa68] sm:$0xff]
  %v5992 = vld [vmem:[#allocation5 + $0xa70] sm:$0xff]
  %v5993 = vld [vmem:[#allocation5 + $0xa78] sm:$0xff]
  %v5994 = vld [vmem:[#allocation5 + $0xa80] sm:$0xff]
  %v5995 = vld [vmem:[#allocation5 + $0xa88] sm:$0xff]
  %v5996 = vld [vmem:[#allocation5 + $0xa90] sm:$0xff]
  %v5997 = vld [vmem:[#allocation5 + $0xa98] sm:$0xff]
  %v5998 = vld [vmem:[#allocation5 + $0xaa0] sm:$0xff]
  %v5999 = vld [vmem:[#allocation5 + $0xaa8] sm:$0xff]
  %v6000 = vld [vmem:[#allocation5 + $0xab0] sm:$0xff]
  %v6001 = vld [vmem:[#allocation5 + $0xab8] sm:$0xff]
  %v6002 = vld [vmem:[#allocation5 + $0xac0] sm:$0xff]
  %v6003 = vld [vmem:[#allocation5 + $0xac8] sm:$0xff]
  %v6004 = vld [vmem:[#allocation5 + $0xad0] sm:$0xff]
  %v6005 = vld [vmem:[#allocation5 + $0xad8] sm:$0xff]
  %v6006 = vld [vmem:[#allocation5 + $0xae0] sm:$0xff]
  %v6007 = vld [vmem:[#allocation5 + $0xae8] sm:$0xff]
  %v6008 = vld [vmem:[#allocation5 + $0xaf0] sm:$0xff]
  %v6009 = vld [vmem:[#allocation5 + $0xaf8] sm:$0xff]
  %v6010 = vld [vmem:[#allocation5 + $0xb00] sm:$0xff]
  %v6011 = vld [vmem:[#allocation5 + $0xb08] sm:$0xff]
  %v6012 = vld [vmem:[#allocation5 + $0xb10] sm:$0xff]
  %v6013 = vld [vmem:[#allocation5 + $0xb18] sm:$0xff]
  %v6014 = vld [vmem:[#allocation5 + $0xb20] sm:$0xff]
  %v6015 = vld [vmem:[#allocation5 + $0xb28] sm:$0xff]
  %v6016 = vld [vmem:[#allocation5 + $0xb30] sm:$0xff]
  %v6017 = vld [vmem:[#allocation5 + $0xb38] sm:$0xff]
  %v6018 = vld [vmem:[#allocation5 + $0xb40] sm:$0xff]
  %v6019 = vld [vmem:[#allocation5 + $0xb48] sm:$0xff]
  %v6020 = vld [vmem:[#allocation5 + $0xb50] sm:$0xff]
  %v6021 = vld [vmem:[#allocation5 + $0xb58] sm:$0xff]
  %v6022 = vld [vmem:[#allocation5 + $0xb60] sm:$0xff]
  %v6023 = vld [vmem:[#allocation5 + $0xb68] sm:$0xff]
  %v6024 = vld [vmem:[#allocation5 + $0xb70] sm:$0xff]
  %v6025 = vld [vmem:[#allocation5 + $0xb78] sm:$0xff]
  %v6026 = vld [vmem:[#allocation5 + $0xb80] sm:$0xff]
  %v6027 = vld [vmem:[#allocation5 + $0xb88] sm:$0xff]
  %v6028 = vld [vmem:[#allocation5 + $0xb90] sm:$0xff]
  %v6029 = vld [vmem:[#allocation5 + $0xb98] sm:$0xff]
  %v6030 = vld [vmem:[#allocation5 + $0xba0] sm:$0xff]
  %v6031 = vld [vmem:[#allocation5 + $0xba8] sm:$0xff]
  %v6032 = vld [vmem:[#allocation5 + $0xbb0] sm:$0xff]
  %v6033 = vld [vmem:[#allocation5 + $0xbb8] sm:$0xff]
  %v6034 = vld [vmem:[#allocation5 + $0xbc0] sm:$0xff]
  %v6035 = vld [vmem:[#allocation5 + $0xbc8] sm:$0xff]
  %v6036 = vld [vmem:[#allocation5 + $0xbd0] sm:$0xff]
  %v6037 = vld [vmem:[#allocation5 + $0xbd8] sm:$0xff]
  %v6038 = vld [vmem:[#allocation5 + $0xbe0] sm:$0xff]
  %v6039 = vld [vmem:[#allocation5 + $0xbe8] sm:$0xff]
  %v6040 = vld [vmem:[#allocation5 + $0xbf0] sm:$0xff]
  %v6041 = vld [vmem:[#allocation5 + $0xbf8] sm:$0xff]
  %v6042 = vld [vmem:[#allocation5 + $0xc00] sm:$0xff]
  %v6043 = vld [vmem:[#allocation5 + $0xc08] sm:$0xff]
  %v6044 = vld [vmem:[#allocation5 + $0xc10] sm:$0xff]
  %v6045 = vld [vmem:[#allocation5 + $0xc18] sm:$0xff]
  %v6046 = vld [vmem:[#allocation5 + $0xc20] sm:$0xff]
  %v6047 = vld [vmem:[#allocation5 + $0xc28] sm:$0xff]
  %v6048 = vld [vmem:[#allocation5 + $0xc30] sm:$0xff]
  %v6049 = vld [vmem:[#allocation5 + $0xc38] sm:$0xff]
  %v6050 = vld [vmem:[#allocation5 + $0xc40] sm:$0xff]
  %v6051 = vld [vmem:[#allocation5 + $0xc48] sm:$0xff]
  %v6052 = vld [vmem:[#allocation5 + $0xc50] sm:$0xff]
  %v6053 = vld [vmem:[#allocation5 + $0xc58] sm:$0xff]
  %v6054 = vld [vmem:[#allocation5 + $0xc60] sm:$0xff]
  %v6055 = vld [vmem:[#allocation5 + $0xc68] sm:$0xff]
  %v6056 = vld [vmem:[#allocation5 + $0xc70] sm:$0xff]
  %v6057 = vld [vmem:[#allocation5 + $0xc78] sm:$0xff]
  %v6058 = vld [vmem:[#allocation5 + $0xc80] sm:$0xff]
  %v6059 = vld [vmem:[#allocation5 + $0xc88] sm:$0xff]
  %v6060 = vld [vmem:[#allocation5 + $0xc90] sm:$0xff]
  %v6061 = vld [vmem:[#allocation5 + $0xc98] sm:$0xff]
  %v6062 = vld [vmem:[#allocation5 + $0xca0] sm:$0xff]
  %v6063 = vld [vmem:[#allocation5 + $0xca8] sm:$0xff]
  %v6064 = vld [vmem:[#allocation5 + $0xcb0] sm:$0xff]
  %v6065 = vld [vmem:[#allocation5 + $0xcb8] sm:$0xff]
  %v6066 = vld [vmem:[#allocation5 + $0xcc0] sm:$0xff]
  %v6067 = vld [vmem:[#allocation5 + $0xcc8] sm:$0xff]
  %v6068 = vld [vmem:[#allocation5 + $0xcd0] sm:$0xff]
  %v6069 = vld [vmem:[#allocation5 + $0xcd8] sm:$0xff]
  %v6070 = vld [vmem:[#allocation5 + $0xce0] sm:$0xff]
  %v6071 = vld [vmem:[#allocation5 + $0xce8] sm:$0xff]
  %v6072 = vld [vmem:[#allocation5 + $0xcf0] sm:$0xff]
  %v6073 = vld [vmem:[#allocation5 + $0xcf8] sm:$0xff]
  %v6074 = vld [vmem:[#allocation5 + $0xd00] sm:$0xff]
  %v6075 = vld [vmem:[#allocation5 + $0xd08] sm:$0xff]
  %v6076 = vld [vmem:[#allocation5 + $0xd10] sm:$0xff]
  %v6077 = vld [vmem:[#allocation5 + $0xd18] sm:$0xff]
  %v6078 = vld [vmem:[#allocation5 + $0xd20] sm:$0xff]
  %v6079 = vld [vmem:[#allocation5 + $0xd28] sm:$0xff]
  %v6080 = vld [vmem:[#allocation5 + $0xd30] sm:$0xff]
  %v6081 = vld [vmem:[#allocation5 + $0xd38] sm:$0xff]
  %v6082 = vld [vmem:[#allocation5 + $0xd40] sm:$0xff]
  %v6083 = vld [vmem:[#allocation5 + $0xd48] sm:$0xff]
  %v6084 = vld [vmem:[#allocation5 + $0xd50] sm:$0xff]
  %v6085 = vld [vmem:[#allocation5 + $0xd58] sm:$0xff]
  %v6086 = vld [vmem:[#allocation5 + $0xd60] sm:$0xff]
  %v6087 = vld [vmem:[#allocation5 + $0xd68] sm:$0xff]
  %v6088 = vld [vmem:[#allocation5 + $0xd70] sm:$0xff]
  %v6089 = vld [vmem:[#allocation5 + $0xd78] sm:$0xff]
  %v6090 = vld [vmem:[#allocation5 + $0xd80] sm:$0xff]
  %v6091 = vld [vmem:[#allocation5 + $0xd88] sm:$0xff]
  %v6092 = vld [vmem:[#allocation5 + $0xd90] sm:$0xff]
  %v6093 = vld [vmem:[#allocation5 + $0xd98] sm:$0xff]
  %v6094 = vld [vmem:[#allocation5 + $0xda0] sm:$0xff]
  %v6095 = vld [vmem:[#allocation5 + $0xda8] sm:$0xff]
  %v6096 = vld [vmem:[#allocation5 + $0xdb0] sm:$0xff]
  %v6097 = vld [vmem:[#allocation5 + $0xdb8] sm:$0xff]
  %v6098 = vld [vmem:[#allocation5 + $0xdc0] sm:$0xff]
  %v6099 = vld [vmem:[#allocation5 + $0xdc8] sm:$0xff]
  %v6100 = vld [vmem:[#allocation5 + $0xdd0] sm:$0xff]
  %v6101 = vld [vmem:[#allocation5 + $0xdd8] sm:$0xff]
  %v6102 = vld [vmem:[#allocation5 + $0xde0] sm:$0xff]
  %v6103 = vld [vmem:[#allocation5 + $0xde8] sm:$0xff]
  %v6104 = vld [vmem:[#allocation5 + $0xdf0] sm:$0xff]
  %v6105 = vld [vmem:[#allocation5 + $0xdf8] sm:$0xff]
  %v6106 = vld [vmem:[#allocation5 + $0xe00] sm:$0xff]
  %v6107 = vld [vmem:[#allocation5 + $0xe08] sm:$0xff]
  %v6108 = vld [vmem:[#allocation5 + $0xe10] sm:$0xff]
  %v6109 = vld [vmem:[#allocation5 + $0xe18] sm:$0xff]
  %v6110 = vld [vmem:[#allocation5 + $0xe20] sm:$0xff]
  %v6111 = vld [vmem:[#allocation5 + $0xe28] sm:$0xff]
  %v6112 = vld [vmem:[#allocation5 + $0xe30] sm:$0xff]
  %v6113 = vld [vmem:[#allocation5 + $0xe38] sm:$0xff]
  %v6114 = vld [vmem:[#allocation5 + $0xe40] sm:$0xff]
  %v6115 = vld [vmem:[#allocation5 + $0xe48] sm:$0xff]
  %v6116 = vld [vmem:[#allocation5 + $0xe50] sm:$0xff]
  %v6117 = vld [vmem:[#allocation5 + $0xe58] sm:$0xff]
  %v6118 = vld [vmem:[#allocation5 + $0xe60] sm:$0xff]
  %v6119 = vld [vmem:[#allocation5 + $0xe68] sm:$0xff]
  %v6120 = vld [vmem:[#allocation5 + $0xe70] sm:$0xff]
  %v6121 = vld [vmem:[#allocation5 + $0xe78] sm:$0xff]
  %v6122 = vld [vmem:[#allocation5 + $0xe80] sm:$0xff]
  %v6123 = vld [vmem:[#allocation5 + $0xe88] sm:$0xff]
  %v6124 = vld [vmem:[#allocation5 + $0xe90] sm:$0xff]
  %v6125 = vld [vmem:[#allocation5 + $0xe98] sm:$0xff]
  %v6126 = vld [vmem:[#allocation5 + $0xea0] sm:$0xff]
  %v6127 = vld [vmem:[#allocation5 + $0xea8] sm:$0xff]
  %v6128 = vld [vmem:[#allocation5 + $0xeb0] sm:$0xff]
  %v6129 = vld [vmem:[#allocation5 + $0xeb8] sm:$0xff]
  %v6130 = vld [vmem:[#allocation5 + $0xec0] sm:$0xff]
  %v6131 = vld [vmem:[#allocation5 + $0xec8] sm:$0xff]
  %v6132 = vld [vmem:[#allocation5 + $0xed0] sm:$0xff]
  %v6133 = vld [vmem:[#allocation5 + $0xed8] sm:$0xff]
  %v6134 = vld [vmem:[#allocation5 + $0xee0] sm:$0xff]
  %v6135 = vld [vmem:[#allocation5 + $0xee8] sm:$0xff]
  %v6136 = vld [vmem:[#allocation5 + $0xef0] sm:$0xff]
  %v6137 = vld [vmem:[#allocation5 + $0xef8] sm:$0xff]
  %v6138 = vld [vmem:[#allocation5 + $0xf00] sm:$0xff]
  %v6139 = vld [vmem:[#allocation5 + $0xf08] sm:$0xff]
  %v6140 = vld [vmem:[#allocation5 + $0xf10] sm:$0xff]
  %v6141 = vld [vmem:[#allocation5 + $0xf18] sm:$0xff]
  %v6142 = vld [vmem:[#allocation5 + $0xf20] sm:$0xff]
  %v6143 = vld [vmem:[#allocation5 + $0xf28] sm:$0xff]
  %v6144 = vld [vmem:[#allocation5 + $0xf30] sm:$0xff]
  %v6145 = vld [vmem:[#allocation5 + $0xf38] sm:$0xff]
  %v6146 = vld [vmem:[#allocation5 + $0xf40] sm:$0xff]
  %v6147 = vld [vmem:[#allocation5 + $0xf48] sm:$0xff]
  %v6148 = vld [vmem:[#allocation5 + $0xf50] sm:$0xff]
  %v6149 = vld [vmem:[#allocation5 + $0xf58] sm:$0xff]
  %v6150 = vld [vmem:[#allocation5 + $0xf60] sm:$0xff]
  %v6151 = vld [vmem:[#allocation5 + $0xf68] sm:$0xff]
  %v6152 = vld [vmem:[#allocation5 + $0xf70] sm:$0xff]
  %v6153 = vld [vmem:[#allocation5 + $0xf78] sm:$0xff]
  %v6154 = vld [vmem:[#allocation5 + $0xf80] sm:$0xff]
  %v6155 = vld [vmem:[#allocation5 + $0xf88] sm:$0xff]
  %v6156 = vld [vmem:[#allocation5 + $0xf90] sm:$0xff]
  %v6157 = vld [vmem:[#allocation5 + $0xf98] sm:$0xff]
  %v6158 = vld [vmem:[#allocation5 + $0xfa0] sm:$0xff]
  %v6159 = vld [vmem:[#allocation5 + $0xfa8] sm:$0xff]
  %v6160 = vld [vmem:[#allocation5 + $0xfb0] sm:$0xff]
  %v6161 = vld [vmem:[#allocation5 + $0xfb8] sm:$0xff]
  %v6162 = vld [vmem:[#allocation5 + $0xfc0] sm:$0xff]
  %v6163 = vld [vmem:[#allocation5 + $0xfc8] sm:$0xff]
  %v6164 = vld [vmem:[#allocation5 + $0xfd0] sm:$0xff]
  %v6165 = vld [vmem:[#allocation5 + $0xfd8] sm:$0xff]
  %v6166 = vld [vmem:[#allocation5 + $0xfe0] sm:$0xff]
  %v6167 = vld [vmem:[#allocation5 + $0xfe8] sm:$0xff]
  %v6168 = vld [vmem:[#allocation5 + $0xff0] sm:$0xff]
  %v6169 = vld [vmem:[#allocation5 + $0xff8] sm:$0xff]
  %v6170 = vld [vmem:[#allocation5 + $0x1000] sm:$0xff]
  %v6171 = vld [vmem:[#allocation5 + $0x1008] sm:$0xff]
  %v6172 = vld [vmem:[#allocation5 + $0x1010] sm:$0xff]
  %v6173 = vld [vmem:[#allocation5 + $0x1018] sm:$0xff]
  %v6174 = vld [vmem:[#allocation5 + $0x1020] sm:$0xff]
  %v6175 = vld [vmem:[#allocation5 + $0x1028] sm:$0xff]
  %v6176 = vld [vmem:[#allocation5 + $0x1030] sm:$0xff]
  %v6177 = vld [vmem:[#allocation5 + $0x1038] sm:$0xff]
  %v6178 = vld [vmem:[#allocation5 + $0x1040] sm:$0xff]
  %v6179 = vld [vmem:[#allocation5 + $0x1048] sm:$0xff]
  %v6180 = vld [vmem:[#allocation5 + $0x1050] sm:$0xff]
  %v6181 = vld [vmem:[#allocation5 + $0x1058] sm:$0xff]
  %v6182 = vld [vmem:[#allocation5 + $0x1060] sm:$0xff]
  %v6183 = vld [vmem:[#allocation5 + $0x1068] sm:$0xff]
  %v6184 = vld [vmem:[#allocation5 + $0x1070] sm:$0xff]
  %v6185 = vld [vmem:[#allocation5 + $0x1078] sm:$0xff]
  %v6186 = vld [vmem:[#allocation5 + $0x1080] sm:$0xff]
  %v6187 = vld [vmem:[#allocation5 + $0x1088] sm:$0xff]
  %v6188 = vld [vmem:[#allocation5 + $0x1090] sm:$0xff]
  %v6189 = vld [vmem:[#allocation5 + $0x1098] sm:$0xff]
  %v6190 = vld [vmem:[#allocation5 + $0x10a0] sm:$0xff]
  %v6191 = vld [vmem:[#allocation5 + $0x10a8] sm:$0xff]
  %v6192 = vld [vmem:[#allocation5 + $0x10b0] sm:$0xff]
  %v6193 = vld [vmem:[#allocation5 + $0x10b8] sm:$0xff]
  %v6194 = vld [vmem:[#allocation5 + $0x10c0] sm:$0xff]
  %v6195 = vld [vmem:[#allocation5 + $0x10c8] sm:$0xff]
  %v6196 = vld [vmem:[#allocation5 + $0x10d0] sm:$0xff]
  %v6197 = vld [vmem:[#allocation5 + $0x10d8] sm:$0xff]
  %v6198 = vld [vmem:[#allocation5 + $0x10e0] sm:$0xff]
  %v6199 = vld [vmem:[#allocation5 + $0x10e8] sm:$0xff]
  %v6200 = vld [vmem:[#allocation5 + $0x10f0] sm:$0xff]
  %v6201 = vld [vmem:[#allocation5 + $0x10f8] sm:$0xff]
  %v6202 = vld [vmem:[#allocation5 + $0x1100] sm:$0xff]
  %v6203 = vld [vmem:[#allocation5 + $0x1108] sm:$0xff]
  %v6204 = vld [vmem:[#allocation5 + $0x1110] sm:$0xff]
  %v6205 = vld [vmem:[#allocation5 + $0x1118] sm:$0xff]
  %v6206 = vld [vmem:[#allocation5 + $0x1120] sm:$0xff]
  %v6207 = vld [vmem:[#allocation5 + $0x1128] sm:$0xff]
  %v6208 = vld [vmem:[#allocation5 + $0x1130] sm:$0xff]
  %v6209 = vld [vmem:[#allocation5 + $0x1138] sm:$0xff]
  %v6210 = vld [vmem:[#allocation5 + $0x1140] sm:$0xff]
  %v6211 = vld [vmem:[#allocation5 + $0x1148] sm:$0xff]
  %v6212 = vld [vmem:[#allocation5 + $0x1150] sm:$0xff]
  %v6213 = vld [vmem:[#allocation5 + $0x1158] sm:$0xff]
  %v6214 = vld [vmem:[#allocation5 + $0x1160] sm:$0xff]
  %v6215 = vld [vmem:[#allocation5 + $0x1168] sm:$0xff]
  %v6216 = vld [vmem:[#allocation5 + $0x1170] sm:$0xff]
  %v6217 = vld [vmem:[#allocation5 + $0x1178] sm:$0xff]
  %v6218 = vld [vmem:[#allocation5 + $0x1180] sm:$0xff]
  %v6219 = vld [vmem:[#allocation5 + $0x1188] sm:$0xff]
  %v6220 = vld [vmem:[#allocation5 + $0x1190] sm:$0xff]
  %v6221 = vld [vmem:[#allocation5 + $0x1198] sm:$0xff]
  %v6222 = vld [vmem:[#allocation5 + $0x11a0] sm:$0xff]
  %v6223 = vld [vmem:[#allocation5 + $0x11a8] sm:$0xff]
  %v6224 = vld [vmem:[#allocation5 + $0x11b0] sm:$0xff]
  %v6225 = vld [vmem:[#allocation5 + $0x11b8] sm:$0xff]
  %v6226 = vld [vmem:[#allocation5 + $0x11c0] sm:$0xff]
  %v6227 = vld [vmem:[#allocation5 + $0x11c8] sm:$0xff]
  %v6228 = vld [vmem:[#allocation5 + $0x11d0] sm:$0xff]
  %v6229 = vld [vmem:[#allocation5 + $0x11d8] sm:$0xff]
  %v6230 = vld [vmem:[#allocation5 + $0x11e0] sm:$0xff]
  %v6231 = vld [vmem:[#allocation5 + $0x11e8] sm:$0xff]
  %v6232 = vld [vmem:[#allocation5 + $0x11f0] sm:$0xff]
  %v6233 = vld [vmem:[#allocation5 + $0x11f8] sm:$0xff]
  %v6234 = vld [vmem:[%s3] sm:$0xff]
  %v6235 = vld [vmem:[%s3 + $0x8] sm:$0xff]
  %v6236 = vld [vmem:[%s3 + $0x10] sm:$0xff]
  %v6237 = vld [vmem:[%s3 + $0x18] sm:$0xff]
  %v6238 = vld [vmem:[%s3 + $0x20] sm:$0xff]
  %v6239 = vld [vmem:[%s3 + $0x28] sm:$0xff]
  %v6240 = vld [vmem:[%s3 + $0x30] sm:$0xff]
  %v6241 = vld [vmem:[%s3 + $0x38] sm:$0xff]
  %v6242 = vld [vmem:[%s3 + $0x40] sm:$0xff]
  %v6243 = vld [vmem:[%s3 + $0x48] sm:$0xff]
  %v6244 = vld [vmem:[%s3 + $0x50] sm:$0xff]
  %v6245 = vld [vmem:[%s3 + $0x58] sm:$0xff]
  %v6246 = vld [vmem:[%s3 + $0x60] sm:$0xff]
  %v6247 = vld [vmem:[%s3 + $0x68] sm:$0xff]
  %v6248 = vld [vmem:[%s3 + $0x70] sm:$0xff]
  %v6249 = vld [vmem:[%s3 + $0x78] sm:$0xff]
  %v6250 = vld [vmem:[%s3 + $0x80] sm:$0xff]
  %v6251 = vld [vmem:[%s3 + $0x88] sm:$0xff]
  %v6252 = vld [vmem:[%s3 + $0x90] sm:$0xff]
  %v6253 = vld [vmem:[%s3 + $0x98] sm:$0xff]
  %v6254 = vld [vmem:[%s3 + $0xa0] sm:$0xff]
  %v6255 = vld [vmem:[%s3 + $0xa8] sm:$0xff]
  %v6256 = vld [vmem:[%s3 + $0xb0] sm:$0xff]
  %v6257 = vld [vmem:[%s3 + $0xb8] sm:$0xff]
  %v6258 = vld [vmem:[%s3 + $0xc0] sm:$0xff]
  %v6259 = vld [vmem:[%s3 + $0xc8] sm:$0xff]
  %v6260 = vld [vmem:[%s3 + $0xd0] sm:$0xff]
  %v6261 = vld [vmem:[%s3 + $0xd8] sm:$0xff]
  %v6262 = vld [vmem:[%s3 + $0xe0] sm:$0xff]
  %v6263 = vld [vmem:[%s3 + $0xe8] sm:$0xff]
  %v6264 = vld [vmem:[%s3 + $0xf0] sm:$0xff]
  %v6265 = vld [vmem:[%s3 + $0xf8] sm:$0xff]
  %v6266 = vld [vmem:[%s3 + $0x100] sm:$0xff]
  %v6267 = vld [vmem:[%s3 + $0x108] sm:$0xff]
  %v6268 = vld [vmem:[%s3 + $0x110] sm:$0xff]
  %v6269 = vld [vmem:[%s3 + $0x118] sm:$0xff]
  %v6270 = vld [vmem:[%s3 + $0x120] sm:$0xff]
  %v6271 = vld [vmem:[%s3 + $0x128] sm:$0xff]
  %v6272 = vld [vmem:[%s3 + $0x130] sm:$0xff]
  %v6273 = vld [vmem:[%s3 + $0x138] sm:$0xff]
  %v6274 = vld [vmem:[%s3 + $0x140] sm:$0xff]
  %v6275 = vld [vmem:[%s3 + $0x148] sm:$0xff]
  %v6276 = vld [vmem:[%s3 + $0x150] sm:$0xff]
  %v6277 = vld [vmem:[%s3 + $0x158] sm:$0xff]
  %v6278 = vld [vmem:[%s3 + $0x160] sm:$0xff]
  %v6279 = vld [vmem:[%s3 + $0x168] sm:$0xff]
  %v6280 = vld [vmem:[%s3 + $0x170] sm:$0xff]
  %v6281 = vld [vmem:[%s3 + $0x178] sm:$0xff]
  %v6282 = vld [vmem:[%s3 + $0x180] sm:$0xff]
  %v6283 = vld [vmem:[%s3 + $0x188] sm:$0xff]
  %v6284 = vld [vmem:[%s3 + $0x190] sm:$0xff]
  %v6285 = vld [vmem:[%s3 + $0x198] sm:$0xff]
  %v6286 = vld [vmem:[%s3 + $0x1a0] sm:$0xff]
  %v6287 = vld [vmem:[%s3 + $0x1a8] sm:$0xff]
  %v6288 = vld [vmem:[%s3 + $0x1b0] sm:$0xff]
  %v6289 = vld [vmem:[%s3 + $0x1b8] sm:$0xff]
  %v6290 = vld [vmem:[%s3 + $0x1c0] sm:$0xff]
  %v6291 = vld [vmem:[%s3 + $0x1c8] sm:$0xff]
  %v6292 = vld [vmem:[%s3 + $0x1d0] sm:$0xff]
  %v6293 = vld [vmem:[%s3 + $0x1d8] sm:$0xff]
  %v6294 = vld [vmem:[%s3 + $0x1e0] sm:$0xff]
  %v6295 = vld [vmem:[%s3 + $0x1e8] sm:$0xff]
  %v6296 = vld [vmem:[%s3 + $0x1f0] sm:$0xff]
  %v6297 = vld [vmem:[%s3 + $0x1f8] sm:$0xff]
  %v6298 = vld [vmem:[%s3 + $0x200] sm:$0xff]
  %v6299 = vld [vmem:[%s3 + $0x208] sm:$0xff]
  %v6300 = vld [vmem:[%s3 + $0x210] sm:$0xff]
  %v6301 = vld [vmem:[%s3 + $0x218] sm:$0xff]
  %v6302 = vld [vmem:[%s3 + $0x220] sm:$0xff]
  %v6303 = vld [vmem:[%s3 + $0x228] sm:$0xff]
  %v6304 = vld [vmem:[%s3 + $0x230] sm:$0xff]
  %v6305 = vld [vmem:[%s3 + $0x238] sm:$0xff]
  %v6306 = vld [vmem:[%s3 + $0x240] sm:$0xff]
  %v6307 = vld [vmem:[%s3 + $0x248] sm:$0xff]
  %v6308 = vld [vmem:[%s3 + $0x250] sm:$0xff]
  %v6309 = vld [vmem:[%s3 + $0x258] sm:$0xff]
  %v6310 = vld [vmem:[%s3 + $0x260] sm:$0xff]
  %v6311 = vld [vmem:[%s3 + $0x268] sm:$0xff]
  %v6312 = vld [vmem:[%s3 + $0x270] sm:$0xff]
  %v6313 = vld [vmem:[%s3 + $0x278] sm:$0xff]
  %v6314 = vld [vmem:[%s3 + $0x280] sm:$0xff]
  %v6315 = vld [vmem:[%s3 + $0x288] sm:$0xff]
  %v6316 = vld [vmem:[%s3 + $0x290] sm:$0xff]
  %v6317 = vld [vmem:[%s3 + $0x298] sm:$0xff]
  %v6318 = vld [vmem:[%s3 + $0x2a0] sm:$0xff]
  %v6319 = vld [vmem:[%s3 + $0x2a8] sm:$0xff]
  %v6320 = vld [vmem:[%s3 + $0x2b0] sm:$0xff]
  %v6321 = vld [vmem:[%s3 + $0x2b8] sm:$0xff]
  %v6322 = vld [vmem:[%s3 + $0x2c0] sm:$0xff]
  %v6323 = vld [vmem:[%s3 + $0x2c8] sm:$0xff]
  %v6324 = vld [vmem:[%s3 + $0x2d0] sm:$0xff]
  %v6325 = vld [vmem:[%s3 + $0x2d8] sm:$0xff]
  %v6326 = vld [vmem:[%s3 + $0x2e0] sm:$0xff]
  %v6327 = vld [vmem:[%s3 + $0x2e8] sm:$0xff]
  %v6328 = vld [vmem:[%s3 + $0x2f0] sm:$0xff]
  %v6329 = vld [vmem:[%s3 + $0x2f8] sm:$0xff]
  %v6330 = vld [vmem:[%s3 + $0x300] sm:$0xff]
  %v6331 = vld [vmem:[%s3 + $0x308] sm:$0xff]
  %v6332 = vld [vmem:[%s3 + $0x310] sm:$0xff]
  %v6333 = vld [vmem:[%s3 + $0x318] sm:$0xff]
  %v6334 = vld [vmem:[%s3 + $0x320] sm:$0xff]
  %v6335 = vld [vmem:[%s3 + $0x328] sm:$0xff]
  %v6336 = vld [vmem:[%s3 + $0x330] sm:$0xff]
  %v6337 = vld [vmem:[%s3 + $0x338] sm:$0xff]
  %v6338 = vld [vmem:[%s3 + $0x340] sm:$0xff]
  %v6339 = vld [vmem:[%s3 + $0x348] sm:$0xff]
  %v6340 = vld [vmem:[%s3 + $0x350] sm:$0xff]
  %v6341 = vld [vmem:[%s3 + $0x358] sm:$0xff]
  %v6342 = vld [vmem:[%s3 + $0x360] sm:$0xff]
  %v6343 = vld [vmem:[%s3 + $0x368] sm:$0xff]
  %v6344 = vld [vmem:[%s3 + $0x370] sm:$0xff]
  %v6345 = vld [vmem:[%s3 + $0x378] sm:$0xff]
  %v6346 = vld [vmem:[%s3 + $0x380] sm:$0xff]
  %v6347 = vld [vmem:[%s3 + $0x388] sm:$0xff]
  %v6348 = vld [vmem:[%s3 + $0x390] sm:$0xff]
  %v6349 = vld [vmem:[%s3 + $0x398] sm:$0xff]
  %v6350 = vld [vmem:[%s3 + $0x3a0] sm:$0xff]
  %v6351 = vld [vmem:[%s3 + $0x3a8] sm:$0xff]
  %v6352 = vld [vmem:[%s3 + $0x3b0] sm:$0xff]
  %v6353 = vld [vmem:[%s3 + $0x3b8] sm:$0xff]
  %v6354 = vld [vmem:[%s3 + $0x3c0] sm:$0xff]
  %v6355 = vld [vmem:[%s3 + $0x3c8] sm:$0xff]
  %v6356 = vld [vmem:[%s3 + $0x3d0] sm:$0xff]
  %v6357 = vld [vmem:[%s3 + $0x3d8] sm:$0xff]
  %v6358 = vld [vmem:[%s3 + $0x3e0] sm:$0xff]
  %v6359 = vld [vmem:[%s3 + $0x3e8] sm:$0xff]
  %v6360 = vld [vmem:[%s3 + $0x3f0] sm:$0xff]
  %v6361 = vld [vmem:[%s3 + $0x3f8] sm:$0xff]
  %v6362 = vld [vmem:[%s3 + $0x400] sm:$0xff]
  %v6363 = vld [vmem:[%s3 + $0x408] sm:$0xff]
  %v6364 = vld [vmem:[%s3 + $0x410] sm:$0xff]
  %v6365 = vld [vmem:[%s3 + $0x418] sm:$0xff]
  %v6366 = vld [vmem:[%s3 + $0x420] sm:$0xff]
  %v6367 = vld [vmem:[%s3 + $0x428] sm:$0xff]
  %v6368 = vld [vmem:[%s3 + $0x430] sm:$0xff]
  %v6369 = vld [vmem:[%s3 + $0x438] sm:$0xff]
  %v6370 = vld [vmem:[%s3 + $0x440] sm:$0xff]
  %v6371 = vld [vmem:[%s3 + $0x448] sm:$0xff]
  %v6372 = vld [vmem:[%s3 + $0x450] sm:$0xff]
  %v6373 = vld [vmem:[%s3 + $0x458] sm:$0xff]
  %v6374 = vld [vmem:[%s3 + $0x460] sm:$0xff]
  %v6375 = vld [vmem:[%s3 + $0x468] sm:$0xff]
  %v6376 = vld [vmem:[%s3 + $0x470] sm:$0xff]
  %v6377 = vld [vmem:[%s3 + $0x478] sm:$0xff]
  %v6378 = vld [vmem:[%s4] sm:$0x1]
  %v6380 = vlaneseq
  %v6381 = vshrl.u32 %v6380, 7
  %v6382 = vsub.s32 0, %v6381
  %v6383 = vrot.slane %v6378, %v6382
  %6385 = vmatprep.subr.mxu0 0.0
  %6386 = vmatpush1.msra.mxu0 %v6234
  %6387 = vmatprep.subr.mxu0 0.0
  %6388 = vmatpush1.msra.mxu0 %v6235
  %6389 = vmatprep.subr.mxu0 0.0
  %6390 = vmatpush1.msra.mxu0 %v6236
  %6391 = vmatprep.subr.mxu0 0.0
  %6392 = vmatpush1.msra.mxu0 %v6237
  %6393 = vmatprep.subr.mxu0 0.0
  %6394 = vmatpush1.msra.mxu0 %v6238
  %6395 = vmatprep.subr.mxu0 0.0
  %6396 = vmatpush1.msra.mxu0 %v6239
  %6397 = vmatprep.subr.mxu0 0.0
  %6398 = vmatpush1.msra.mxu0 %v6240
  %6399 = vmatprep.subr.mxu0 0.0
  %6400 = vmatpush1.msra.mxu0 %v6241
  %6401 = vmatprep.subr.mxu0 0.0
  %6402 = vmatpush1.msra.mxu0 %v6242
  %6403 = vmatprep.subr.mxu0 0.0
  %6404 = vmatpush1.msra.mxu0 %v6243
  %6405 = vmatprep.subr.mxu0 0.0
  %6406 = vmatpush1.msra.mxu0 %v6244
  %6407 = vmatprep.subr.mxu0 0.0
  %6408 = vmatpush1.msra.mxu0 %v6245
  %6409 = vmatprep.subr.mxu0 0.0
  %6410 = vmatpush1.msra.mxu0 %v6246
  %6411 = vmatprep.subr.mxu0 0.0
  %6412 = vmatpush1.msra.mxu0 %v6247
  %6413 = vmatprep.subr.mxu0 0.0
  %6414 = vmatpush1.msra.mxu0 %v6248
  %6415 = vmatprep.subr.mxu0 0.0
  %6416 = vmatpush1.msra.mxu0 %v6249
  %6417 = vmatprep.subr.mxu0 0.0
  %6418 = vmatpush1.msra.mxu0 %v6250
  %6419 = vmatprep.subr.mxu0 0.0
  %6420 = vmatpush1.msra.mxu0 %v6251
  %6421 = vmatprep.subr.mxu0 0.0
  %6422 = vmatpush1.msra.mxu0 %v6252
  %6423 = vmatprep.subr.mxu0 0.0
  %6424 = vmatpush1.msra.mxu0 %v6253
  %6425 = vmatprep.subr.mxu0 0.0
  %6426 = vmatpush1.msra.mxu0 %v6254
  %6427 = vmatprep.subr.mxu0 0.0
  %6428 = vmatpush1.msra.mxu0 %v6255
  %6429 = vmatprep.subr.mxu0 0.0
  %6430 = vmatpush1.msra.mxu0 %v6256
  %6431 = vmatprep.subr.mxu0 0.0
  %6432 = vmatpush1.msra.mxu0 %v6257
  %6433 = vmatprep.subr.mxu0 0.0
  %6434 = vmatpush1.msra.mxu0 %v6258
  %6435 = vmatprep.subr.mxu0 0.0
  %6436 = vmatpush1.msra.mxu0 %v6259
  %6437 = vmatprep.subr.mxu0 0.0
  %6438 = vmatpush1.msra.mxu0 %v6260
  %6439 = vmatprep.subr.mxu0 0.0
  %6440 = vmatpush1.msra.mxu0 %v6261
  %6441 = vmatprep.subr.mxu0 0.0
  %6442 = vmatpush1.msra.mxu0 %v6262
  %6443 = vmatprep.subr.mxu0 0.0
  %6444 = vmatpush1.msra.mxu0 %v6263
  %6445 = vmatprep.subr.mxu0 0.0
  %6446 = vmatpush1.msra.mxu0 %v6264
  %6447 = vmatprep.subr.mxu0 0.0
  %6448 = vmatpush1.msra.mxu0 %v6265
  %6449 = vmatprep.mubr.f32.mxu0 %v5659
  %6450 = vmatmul.mubr.f32.gmra.mrb[0].mxu0 %v5658
  %v6451 = vpop.f32.mrb[0].mxu0
  %v6452 = vadd.f32 %v6383, %v6451
  %v6453 = vpop.f32.mrb[0].mxu0
  %6454 = vmatprep.mubr.f32.mxu0 %v5668
  %6455 = vmatmul.mubr.f32.gmra.mrb[0].mxu0 %v5667
  %v6456 = vpop.f32.mrb[0].mxu0
  %v6457 = vadd.f32 %v6383, %v6456
  %v6458 = vpop.f32.mrb[0].mxu0
  %6459 = vmatprep.mubr.f32.mxu0 %v5677
  %6460 = vmatmul.mubr.f32.gmra.mrb[0].mxu0 %v5676
  %v6461 = vpop.f32.mrb[0].mxu0
  %v6462 = vadd.f32 %v6383, %v6461
  %v6463 = vpop.f32.mrb[0].mxu0
  %6464 = vmatprep.mubr.f32.mxu0 %v5686
  %6465 = vmatmul.mubr.f32.gmra.mrb[0].mxu0 %v5685
  %v6466 = vpop.f32.mrb[0].mxu0
  %v6467 = vadd.f32 %v6383, %v6466
  %v6468 = vpop.f32.mrb[0].mxu0
  %6469 = vmatprep.mubr.f32.mxu0 %v5695
  %6470 = vmatmul.mubr.f32.gmra.mrb[0].mxu0 %v5694
  %v6471 = vpop.f32.mrb[0].mxu0
  %v6472 = vadd.f32 %v6383, %v6471
  %v6473 = vpop.f32.mrb[0].mxu0
  %6474 = vmatprep.mubr.f32.mxu0 %v5704
  %6475 = vmatmul.mubr.f32.gmra.mrb[0].mxu0 %v5703
  %v6476 = vpop.f32.mrb[0].mxu0
  %v6477 = vadd.f32 %v6383, %v6476
  %v6478 = vpop.f32.mrb[0].mxu0
  %6479 = vmatprep.mubr.f32.mxu0 %v5713
  %6480 = vmatmul.mubr.f32.gmra.mrb[0].mxu0 %v5712
  %v6481 = vpop.f32.mrb[0].mxu0
  %v6482 = vadd.f32 %v6383, %v6481
  %v6483 = vpop.f32.mrb[0].mxu0
  %6484 = vmatprep.mubr.f32.mxu0 %v5722
  %6485 = vmatmul.mubr.f32.gmra.mrb[0].mxu0 %v5721
  %v6486 = vpop.f32.mrb[0].mxu0
  %v6487 = vadd.f32 %v6383, %v6486
  %v6488 = vpop.f32.mrb[0].mxu0
  %6489 = vmatprep.mubr.f32.mxu0 %v5731
  %6490 = vmatmul.mubr.f32.gmra.mrb[0].mxu0 %v5730
  %v6491 = vpop.f32.mrb[0].mxu0
  %v6492 = vadd.f32 %v6383, %v6491
  %v6493 = vpop.f32.mrb[0].mxu0
  %6494 = vmatprep.mubr.f32.mxu0 %v5740
  %6495 = vmatmul.mubr.f32.gmra.mrb[0].mxu0 %v5739
  %v6496 = vpop.f32.mrb[0].mxu0
  %v6497 = vadd.f32 %v6383, %v6496
  %v6498 = vpop.f32.mrb[0].mxu0
  %6499 = vmatprep.mubr.f32.mxu0 %v5749
  %6500 = vmatmul.mubr.f32.gmra.mrb[0].mxu0 %v5748
  %v6501 = vpop.f32.mrb[0].mxu0
  %v6502 = vadd.f32 %v6383, %v6501
  %v6503 = vpop.f32.mrb[0].mxu0
  %6504 = vmatprep.mubr.f32.mxu0 %v5758
  %6505 = vmatmul.mubr.f32.gmra.mrb[0].mxu0 %v5757
  %v6506 = vpop.f32.mrb[0].mxu0
  %v6507 = vadd.f32 %v6383, %v6506
  %v6508 = vpop.f32.mrb[0].mxu0
  %6509 = vmatprep.mubr.f32.mxu0 %v5767
  %6510 = vmatmul.mubr.f32.gmra.mrb[0].mxu0 %v5766
  %v6511 = vpop.f32.mrb[0].mxu0
  %v6512 = vadd.f32 %v6383, %v6511
  %v6513 = vpop.f32.mrb[0].mxu0
  %6514 = vmatprep.mubr.f32.mxu0 %v5776
  %6515 = vmatmul.mubr.f32.gmra.mrb[0].mxu0 %v5775
  %v6516 = vpop.f32.mrb[0].mxu0
  %v6517 = vadd.f32 %v6383, %v6516
  %v6518 = vpop.f32.mrb[0].mxu0
  %6519 = vmatprep.mubr.f32.mxu0 %v5785
  %6520 = vmatmul.mubr.f32.gmra.mrb[0].mxu0 %v5784
  %v6521 = vpop.f32.mrb[0].mxu0
  %v6522 = vadd.f32 %v6383, %v6521
  %v6523 = vpop.f32.mrb[0].mxu0
  %6524 = vmatprep.mubr.f32.mxu0 %v5794
  %6525 = vmatmul.mubr.f32.gmra.mrb[0].mxu0 %v5793
  %v6526 = vpop.f32.mrb[0].mxu0
  %v6527 = vadd.f32 %v6383, %v6526
  %v6528 = vpop.f32.mrb[0].mxu0
  %6529 = vmatprep.mubr.f32.mxu0 %v5803
  %6530 = vmatmul.mubr.f32.gmra.mrb[0].mxu0 %v5802
  %v6531 = vpop.f32.mrb[0].mxu0
  %v6532 = vadd.f32 %v6383, %v6531
  %v6533 = vpop.f32.mrb[0].mxu0
  %6534 = vmatprep.mubr.f32.mxu0 %v5812
  %6535 = vmatmul.mubr.f32.gmra.mrb[0].mxu0 %v5811
  %v6536 = vpop.f32.mrb[0].mxu0
  %v6537 = vadd.f32 %v6383, %v6536
  %v6538 = vpop.f32.mrb[0].mxu0
  %6539 = vmatprep.mubr.f32.mxu0 %v5821
  %6540 = vmatmul.mubr.f32.gmra.mrb[0].mxu0 %v5820
  %v6541 = vpop.f32.mrb[0].mxu0
  %v6542 = vadd.f32 %v6383, %v6541
  %v6543 = vpop.f32.mrb[0].mxu0
  %6544 = vmatprep.mubr.f32.mxu0 %v5830
  %6545 = vmatmul.mubr.f32.gmra.mrb[0].mxu0 %v5829
  %v6546 = vpop.f32.mrb[0].mxu0
  %v6547 = vadd.f32 %v6383, %v6546
  %v6548 = vpop.f32.mrb[0].mxu0
  %6549 = vmatprep.mubr.f32.mxu0 %v5839
  %6550 = vmatmul.mubr.f32.gmra.mrb[0].mxu0 %v5838
  %v6551 = vpop.f32.mrb[0].mxu0
  %v6552 = vadd.f32 %v6383, %v6551
  %v6553 = vpop.f32.mrb[0].mxu0
  %6554 = vmatprep.mubr.f32.mxu0 %v5848
  %6555 = vmatmul.mubr.f32.gmra.mrb[0].mxu0 %v5847
  %v6556 = vpop.f32.mrb[0].mxu0
  %v6557 = vadd.f32 %v6383, %v6556
  %v6558 = vpop.f32.mrb[0].mxu0
  %6559 = vmatprep.mubr.f32.mxu0 %v5857
  %6560 = vmatmul.mubr.f32.gmra.mrb[0].mxu0 %v5856
  %v6561 = vpop.f32.mrb[0].mxu0
  %v6562 = vadd.f32 %v6383, %v6561
  %v6563 = vpop.f32.mrb[0].mxu0
  %6564 = vmatprep.mubr.f32.mxu0 %v5866
  %6565 = vmatmul.mubr.f32.gmra.mrb[0].mxu0 %v5865
  %v6566 = vpop.f32.mrb[0].mxu0
  %v6567 = vadd.f32 %v6383, %v6566
  %v6568 = vpop.f32.mrb[0].mxu0
  %6569 = vmatprep.mubr.f32.mxu0 %v5875
  %6570 = vmatmul.mubr.f32.gmra.mrb[0].mxu0 %v5874
  %v6571 = vpop.f32.mrb[0].mxu0
  %v6572 = vadd.f32 %v6383, %v6571
  %v6573 = vpop.f32.mrb[0].mxu0
  %6574 = vmatprep.mubr.f32.mxu0 %v5884
  %6575 = vmatmul.mubr.f32.gmra.mrb[0].mxu0 %v5883
  %v6576 = vpop.f32.mrb[0].mxu0
  %v6577 = vadd.f32 %v6383, %v6576
  %v6578 = vpop.f32.mrb[0].mxu0
  %6579 = vmatprep.mubr.f32.mxu0 %v5893
  %6580 = vmatmul.mubr.f32.gmra.mrb[0].mxu0 %v5892
  %v6581 = vpop.f32.mrb[0].mxu0
  %v6582 = vadd.f32 %v6383, %v6581
  %v6583 = vpop.f32.mrb[0].mxu0
  %6584 = vmatprep.mubr.f32.mxu0 %v5902
  %6585 = vmatmul.mubr.f32.gmra.mrb[0].mxu0 %v5901
  %v6586 = vpop.f32.mrb[0].mxu0
  %v6587 = vadd.f32 %v6383, %v6586
  %v6588 = vpop.f32.mrb[0].mxu0
  %6589 = vmatprep.mubr.f32.mxu0 %v5911
  %6590 = vmatmul.mubr.f32.gmra.mrb[0].mxu0 %v5910
  %v6591 = vpop.f32.mrb[0].mxu0
  %v6592 = vadd.f32 %v6383, %v6591
  %v6593 = vpop.f32.mrb[0].mxu0
  %6594 = vmatprep.mubr.f32.mxu0 %v5920
  %6595 = vmatmul.mubr.f32.gmra.mrb[0].mxu0 %v5919
  %v6596 = vpop.f32.mrb[0].mxu0
  %v6597 = vadd.f32 %v6383, %v6596
  %v6598 = vpop.f32.mrb[0].mxu0
  %6599 = vmatprep.mubr.f32.mxu0 %v5929
  %6600 = vmatmul.mubr.f32.gmra.mrb[0].mxu0 %v5928
  %v6601 = vpop.f32.mrb[0].mxu0
  %v6602 = vadd.f32 %v6383, %v6601
  %v6603 = vpop.f32.mrb[0].mxu0
  %6604 = vmatprep.mubr.f32.mxu0 %v5938
  %6605 = vmatmul.mubr.f32.gmra.mrb[0].mxu0 %v5937
  %v6606 = vpop.f32.mrb[0].mxu0
  %v6607 = vadd.f32 %v6383, %v6606
  %v6608 = vpop.f32.mrb[0].mxu0
  %6609 = vmatprep.mubr.f32.mxu0 %v5947
  %6610 = vmatmul.mubr.f32.gmra.mrb[0].mxu0 %v5946
  %v6611 = vpop.f32.mrb[0].mxu0
  %v6612 = vadd.f32 %v6383, %v6611
  %v6613 = vpop.f32.mrb[0].mxu0
  %6614 = vmatprep.mubr.f32.mxu0 %v5956
  %6615 = vmatmul.mubr.f32.gmra.mrb[0].mxu0 %v5955
  %v6616 = vpop.f32.mrb[0].mxu0
  %v6617 = vadd.f32 %v6383, %v6616
  %v6618 = vpop.f32.mrb[0].mxu0
  %6619 = vmatprep.mubr.f32.mxu0 %v5965
  %6620 = vmatmul.mubr.f32.gmra.mrb[0].mxu0 %v5964
  %v6621 = vpop.f32.mrb[0].mxu0
  %v6622 = vadd.f32 %v6383, %v6621
  %v6623 = vpop.f32.mrb[0].mxu0
  %6624 = vmatprep.mubr.f32.mxu0 %v5974
  %6625 = vmatmul.mubr.f32.gmra.mrb[0].mxu0 %v5973
  %v6626 = vpop.f32.mrb[0].mxu0
  %v6627 = vadd.f32 %v6383, %v6626
  %v6628 = vpop.f32.mrb[0].mxu0
  %6629 = vmatprep.mubr.f32.mxu0 %v5983
  %6630 = vmatmul.mubr.f32.gmra.mrb[0].mxu0 %v5982
  %v6631 = vpop.f32.mrb[0].mxu0
  %v6632 = vadd.f32 %v6383, %v6631
  %v6633 = vpop.f32.mrb[0].mxu0
  %6634 = vmatprep.mubr.f32.mxu0 %v5992
  %6635 = vmatmul.mubr.f32.gmra.mrb[0].mxu0 %v5991
  %v6636 = vpop.f32.mrb[0].mxu0
  %v6637 = vadd.f32 %v6383, %v6636
  %v6638 = vpop.f32.mrb[0].mxu0
  %6639 = vmatprep.mubr.f32.mxu0 %v6001
  %6640 = vmatmul.mubr.f32.gmra.mrb[0].mxu0 %v6000
  %v6641 = vpop.f32.mrb[0].mxu0
  %v6642 = vadd.f32 %v6383, %v6641
  %v6643 = vpop.f32.mrb[0].mxu0
  %6644 = vmatprep.mubr.f32.mxu0 %v6010
  %6645 = vmatmul.mubr.f32.gmra.mrb[0].mxu0 %v6009
  %v6646 = vpop.f32.mrb[0].mxu0
  %v6647 = vadd.f32 %v6383, %v6646
  %v6648 = vpop.f32.mrb[0].mxu0
  %6649 = vmatprep.mubr.f32.mxu0 %v6019
  %6650 = vmatmul.mubr.f32.gmra.mrb[0].mxu0 %v6018
  %v6651 = vpop.f32.mrb[0].mxu0
  %v6652 = vadd.f32 %v6383, %v6651
  %v6653 = vpop.f32.mrb[0].mxu0
  %6654 = vmatprep.mubr.f32.mxu0 %v6028
  %6655 = vmatmul.mubr.f32.gmra.mrb[0].mxu0 %v6027
  %v6656 = vpop.f32.mrb[0].mxu0
  %v6657 = vadd.f32 %v6383, %v6656
  %v6658 = vpop.f32.mrb[0].mxu0
  %6659 = vmatprep.mubr.f32.mxu0 %v6037
  %6660 = vmatmul.mubr.f32.gmra.mrb[0].mxu0 %v6036
  %v6661 = vpop.f32.mrb[0].mxu0
  %v6662 = vadd.f32 %v6383, %v6661
  %v6663 = vpop.f32.mrb[0].mxu0
  %6664 = vmatprep.mubr.f32.mxu0 %v6046
  %6665 = vmatmul.mubr.f32.gmra.mrb[0].mxu0 %v6045
  %v6666 = vpop.f32.mrb[0].mxu0
  %v6667 = vadd.f32 %v6383, %v6666
  %v6668 = vpop.f32.mrb[0].mxu0
  %6669 = vmatprep.mubr.f32.mxu0 %v6055
  %6670 = vmatmul.mubr.f32.gmra.mrb[0].mxu0 %v6054
  %v6671 = vpop.f32.mrb[0].mxu0
  %v6672 = vadd.f32 %v6383, %v6671
  %v6673 = vpop.f32.mrb[0].mxu0
  %6674 = vmatprep.mubr.f32.mxu0 %v6064
  %6675 = vmatmul.mubr.f32.gmra.mrb[0].mxu0 %v6063
  %v6676 = vpop.f32.mrb[0].mxu0
  %v6677 = vadd.f32 %v6383, %v6676
  %v6678 = vpop.f32.mrb[0].mxu0
  %6679 = vmatprep.mubr.f32.mxu0 %v6073
  %6680 = vmatmul.mubr.f32.gmra.mrb[0].mxu0 %v6072
  %v6681 = vpop.f32.mrb[0].mxu0
  %v6682 = vadd.f32 %v6383, %v6681
  %v6683 = vpop.f32.mrb[0].mxu0
  %6684 = vmatprep.mubr.f32.mxu0 %v6082
  %6685 = vmatmul.mubr.f32.gmra.mrb[0].mxu0 %v6081
  %v6686 = vpop.f32.mrb[0].mxu0
  %v6687 = vadd.f32 %v6383, %v6686
  %v6688 = vpop.f32.mrb[0].mxu0
  %6689 = vmatprep.mubr.f32.mxu0 %v6091
  %6690 = vmatmul.mubr.f32.gmra.mrb[0].mxu0 %v6090
  %v6691 = vpop.f32.mrb[0].mxu0
  %v6692 = vadd.f32 %v6383, %v6691
  %v6693 = vpop.f32.mrb[0].mxu0
  %6694 = vmatprep.mubr.f32.mxu0 %v6100
  %6695 = vmatmul.mubr.f32.gmra.mrb[0].mxu0 %v6099
  %v6696 = vpop.f32.mrb[0].mxu0
  %v6697 = vadd.f32 %v6383, %v6696
  %v6698 = vpop.f32.mrb[0].mxu0
  %6699 = vmatprep.mubr.f32.mxu0 %v6109
  %6700 = vmatmul.mubr.f32.gmra.mrb[0].mxu0 %v6108
  %v6701 = vpop.f32.mrb[0].mxu0
  %v6702 = vadd.f32 %v6383, %v6701
  %v6703 = vpop.f32.mrb[0].mxu0
  %6704 = vmatprep.mubr.f32.mxu0 %v6118
  %6705 = vmatmul.mubr.f32.gmra.mrb[0].mxu0 %v6117
  %v6706 = vpop.f32.mrb[0].mxu0
  %v6707 = vadd.f32 %v6383, %v6706
  %v6708 = vpop.f32.mrb[0].mxu0
  %6709 = vmatprep.mubr.f32.mxu0 %v6127
  %6710 = vmatmul.mubr.f32.gmra.mrb[0].mxu0 %v6126
  %v6711 = vpop.f32.mrb[0].mxu0
  %v6712 = vadd.f32 %v6383, %v6711
  %v6713 = vpop.f32.mrb[0].mxu0
  %6714 = vmatprep.mubr.f32.mxu0 %v6136
  %6715 = vmatmul.mubr.f32.gmra.mrb[0].mxu0 %v6135
  %v6716 = vpop.f32.mrb[0].mxu0
  %v6717 = vadd.f32 %v6383, %v6716
  %v6718 = vpop.f32.mrb[0].mxu0
  %6719 = vmatprep.mubr.f32.mxu0 %v6145
  %6720 = vmatmul.mubr.f32.gmra.mrb[0].mxu0 %v6144
  %v6721 = vpop.f32.mrb[0].mxu0
  %v6722 = vadd.f32 %v6383, %v6721
  %v6723 = vpop.f32.mrb[0].mxu0
  %6724 = vmatprep.mubr.f32.mxu0 %v6154
  %6725 = vmatmul.mubr.f32.gmra.mrb[0].mxu0 %v6153
  %v6726 = vpop.f32.mrb[0].mxu0
  %v6727 = vadd.f32 %v6383, %v6726
  %v6728 = vpop.f32.mrb[0].mxu0
  %6729 = vmatprep.mubr.f32.mxu0 %v6163
  %6730 = vmatmul.mubr.f32.gmra.mrb[0].mxu0 %v6162
  %v6731 = vpop.f32.mrb[0].mxu0
  %v6732 = vadd.f32 %v6383, %v6731
  %v6733 = vpop.f32.mrb[0].mxu0
  %6734 = vmatprep.mubr.f32.mxu0 %v6172
  %6735 = vmatmul.mubr.f32.gmra.mrb[0].mxu0 %v6171
  %v6736 = vpop.f32.mrb[0].mxu0
  %v6737 = vadd.f32 %v6383, %v6736
  %v6738 = vpop.f32.mrb[0].mxu0
  %6739 = vmatprep.mubr.f32.mxu0 %v6181
  %6740 = vmatmul.mubr.f32.gmra.mrb[0].mxu0 %v6180
  %v6741 = vpop.f32.mrb[0].mxu0
  %v6742 = vadd.f32 %v6383, %v6741
  %v6743 = vpop.f32.mrb[0].mxu0
  %6744 = vmatprep.mubr.f32.mxu0 %v6190
  %6745 = vmatmul.mubr.f32.gmra.mrb[0].mxu0 %v6189
  %v6746 = vpop.f32.mrb[0].mxu0
  %v6747 = vadd.f32 %v6383, %v6746
  %v6748 = vpop.f32.mrb[0].mxu0
  %6749 = vmatprep.mubr.f32.mxu0 %v6199
  %6750 = vmatmul.mubr.f32.gmra.mrb[0].mxu0 %v6198
  %v6751 = vpop.f32.mrb[0].mxu0
  %v6752 = vadd.f32 %v6383, %v6751
  %v6753 = vpop.f32.mrb[0].mxu0
  %6754 = vmatprep.mubr.f32.mxu0 %v6208
  %6755 = vmatmul.mubr.f32.gmra.mrb[0].mxu0 %v6207
  %v6756 = vpop.f32.mrb[0].mxu0
  %v6757 = vadd.f32 %v6383, %v6756
  %v6758 = vpop.f32.mrb[0].mxu0
  %6759 = vmatprep.mubr.f32.mxu0 %v6217
  %6760 = vmatmul.mubr.f32.gmra.mrb[0].mxu0 %v6216
  %v6761 = vpop.f32.mrb[0].mxu0
  %v6762 = vadd.f32 %v6383, %v6761
  %v6763 = vpop.f32.mrb[0].mxu0
  %6764 = vmatprep.mubr.f32.mxu0 %v6226
  %6765 = vmatmul.mubr.f32.gmra.mrb[0].mxu0 %v6225
  %v6766 = vpop.f32.mrb[0].mxu0
  %v6767 = vadd.f32 %v6383, %v6766
  %v6768 = vpop.f32.mrb[0].mxu0
  %6769 = vdwg.mxu0
  %6770 = vmatprep.subr.mxu0 0.0
  %6771 = vmatpush1.msra.mxu0 %v6266
  %6772 = vmatprep.subr.mxu0 0.0
  %6773 = vmatpush1.msra.mxu0 %v6267
  %6774 = vmatprep.subr.mxu0 0.0
  %6775 = vmatpush1.msra.mxu0 %v6268
  %6776 = vmatprep.subr.mxu0 0.0
  %6777 = vmatpush1.msra.mxu0 %v6269
  %6778 = vmatprep.subr.mxu0 0.0
  %6779 = vmatpush1.msra.mxu0 %v6270
  %6780 = vmatprep.subr.mxu0 0.0
  %6781 = vmatpush1.msra.mxu0 %v6271
  %6782 = vmatprep.subr.mxu0 0.0
  %6783 = vmatpush1.msra.mxu0 %v6272
  %6784 = vmatprep.subr.mxu0 0.0
  %6785 = vmatpush1.msra.mxu0 %v6273
  %6786 = vmatprep.subr.mxu0 0.0
  %6787 = vmatpush1.msra.mxu0 %v6274
  %6788 = vmatprep.subr.mxu0 0.0
  %6789 = vmatpush1.msra.mxu0 %v6275
  %6790 = vmatprep.subr.mxu0 0.0
  %6791 = vmatpush1.msra.mxu0 %v6276
  %6792 = vmatprep.subr.mxu0 0.0
  %6793 = vmatpush1.msra.mxu0 %v6277
  %6794 = vmatprep.subr.mxu0 0.0
  %6795 = vmatpush1.msra.mxu0 %v6278
  %6796 = vmatprep.subr.mxu0 0.0
  %6797 = vmatpush1.msra.mxu0 %v6279
  %6798 = vmatprep.subr.mxu0 0.0
  %6799 = vmatpush1.msra.mxu0 %v6280
  %6800 = vmatprep.subr.mxu0 0.0
  %6801 = vmatpush1.msra.mxu0 %v6281
  %6802 = vmatprep.subr.mxu0 0.0
  %6803 = vmatpush1.msra.mxu0 %v6282
  %6804 = vmatprep.subr.mxu0 0.0
  %6805 = vmatpush1.msra.mxu0 %v6283
  %6806 = vmatprep.subr.mxu0 0.0
  %6807 = vmatpush1.msra.mxu0 %v6284
  %6808 = vmatprep.subr.mxu0 0.0
  %6809 = vmatpush1.msra.mxu0 %v6285
  %6810 = vmatprep.subr.mxu0 0.0
  %6811 = vmatpush1.msra.mxu0 %v6286
  %6812 = vmatprep.subr.mxu0 0.0
  %6813 = vmatpush1.msra.mxu0 %v6287
  %6814 = vmatprep.subr.mxu0 0.0
  %6815 = vmatpush1.msra.mxu0 %v6288
  %6816 = vmatprep.subr.mxu0 0.0
  %6817 = vmatpush1.msra.mxu0 %v6289
  %6818 = vmatprep.subr.mxu0 0.0
  %6819 = vmatpush1.msra.mxu0 %v6290
  %6820 = vmatprep.subr.mxu0 0.0
  %6821 = vmatpush1.msra.mxu0 %v6291
  %6822 = vmatprep.subr.mxu0 0.0
  %6823 = vmatpush1.msra.mxu0 %v6292
  %6824 = vmatprep.subr.mxu0 0.0
  %6825 = vmatpush1.msra.mxu0 %v6293
  %6826 = vmatprep.subr.mxu0 0.0
  %6827 = vmatpush1.msra.mxu0 %v6294
  %6828 = vmatprep.subr.mxu0 0.0
  %6829 = vmatpush1.msra.mxu0 %v6295
  %6830 = vmatprep.subr.mxu0 0.0
  %6831 = vmatpush1.msra.mxu0 %v6296
  %6832 = vmatprep.subr.mxu0 0.0
  %6833 = vmatpush1.msra.mxu0 %v6297
  %6834 = vmatprep.mubr.f32.mxu0 %v5661
  %6835 = vmatmul.mubr.f32.gmra.mrb[0].mxu0 %v5660
  %v6836 = vpop.f32.mrb[0].mxu0
  %v6837 = vadd.f32 %v6452, %v6836
  %v6838 = vpop.f32.mrb[0].mxu0
  %6839 = vmatprep.mubr.f32.mxu0 %v5670
  %6840 = vmatmul.mubr.f32.gmra.mrb[0].mxu0 %v5669
  %v6841 = vpop.f32.mrb[0].mxu0
  %v6842 = vadd.f32 %v6457, %v6841
  %v6843 = vpop.f32.mrb[0].mxu0
  %6844 = vmatprep.mubr.f32.mxu0 %v5679
  %6845 = vmatmul.mubr.f32.gmra.mrb[0].mxu0 %v5678
  %v6846 = vpop.f32.mrb[0].mxu0
  %v6847 = vadd.f32 %v6462, %v6846
  %v6848 = vpop.f32.mrb[0].mxu0
  %6849 = vmatprep.mubr.f32.mxu0 %v5688
  %6850 = vmatmul.mubr.f32.gmra.mrb[0].mxu0 %v5687
  %v6851 = vpop.f32.mrb[0].mxu0
  %v6852 = vadd.f32 %v6467, %v6851
  %v6853 = vpop.f32.mrb[0].mxu0
  %6854 = vmatprep.mubr.f32.mxu0 %v5697
  %6855 = vmatmul.mubr.f32.gmra.mrb[0].mxu0 %v5696
  %v6856 = vpop.f32.mrb[0].mxu0
  %v6857 = vadd.f32 %v6472, %v6856
  %v6858 = vpop.f32.mrb[0].mxu0
  %6859 = vmatprep.mubr.f32.mxu0 %v5706
  %6860 = vmatmul.mubr.f32.gmra.mrb[0].mxu0 %v5705
  %v6861 = vpop.f32.mrb[0].mxu0
  %v6862 = vadd.f32 %v6477, %v6861
  %v6863 = vpop.f32.mrb[0].mxu0
  %6864 = vmatprep.mubr.f32.mxu0 %v5715
  %6865 = vmatmul.mubr.f32.gmra.mrb[0].mxu0 %v5714
  %v6866 = vpop.f32.mrb[0].mxu0
  %v6867 = vadd.f32 %v6482, %v6866
  %v6868 = vpop.f32.mrb[0].mxu0
  %6869 = vmatprep.mubr.f32.mxu0 %v5724
  %6870 = vmatmul.mubr.f32.gmra.mrb[0].mxu0 %v5723
  %v6871 = vpop.f32.mrb[0].mxu0
  %v6872 = vadd.f32 %v6487, %v6871
  %v6873 = vpop.f32.mrb[0].mxu0
  %6874 = vmatprep.mubr.f32.mxu0 %v5733
  %6875 = vmatmul.mubr.f32.gmra.mrb[0].mxu0 %v5732
  %v6876 = vpop.f32.mrb[0].mxu0
  %v6877 = vadd.f32 %v6492, %v6876
  %v6878 = vpop.f32.mrb[0].mxu0
  %6879 = vmatprep.mubr.f32.mxu0 %v5742
  %6880 = vmatmul.mubr.f32.gmra.mrb[0].mxu0 %v5741
  %v6881 = vpop.f32.mrb[0].mxu0
  %v6882 = vadd.f32 %v6497, %v6881
  %v6883 = vpop.f32.mrb[0].mxu0
  %6884 = vmatprep.mubr.f32.mxu0 %v5751
  %6885 = vmatmul.mubr.f32.gmra.mrb[0].mxu0 %v5750
  %v6886 = vpop.f32.mrb[0].mxu0
  %v6887 = vadd.f32 %v6502, %v6886
  %v6888 = vpop.f32.mrb[0].mxu0
  %6889 = vmatprep.mubr.f32.mxu0 %v5760
  %6890 = vmatmul.mubr.f32.gmra.mrb[0].mxu0 %v5759
  %v6891 = vpop.f32.mrb[0].mxu0
  %v6892 = vadd.f32 %v6507, %v6891
  %v6893 = vpop.f32.mrb[0].mxu0
  %6894 = vmatprep.mubr.f32.mxu0 %v5769
  %6895 = vmatmul.mubr.f32.gmra.mrb[0].mxu0 %v5768
  %v6896 = vpop.f32.mrb[0].mxu0
  %v6897 = vadd.f32 %v6512, %v6896
  %v6898 = vpop.f32.mrb[0].mxu0
  %6899 = vmatprep.mubr.f32.mxu0 %v5778
  %6900 = vmatmul.mubr.f32.gmra.mrb[0].mxu0 %v5777
  %v6901 = vpop.f32.mrb[0].mxu0
  %v6902 = vadd.f32 %v6517, %v6901
  %v6903 = vpop.f32.mrb[0].mxu0
  %6904 = vmatprep.mubr.f32.mxu0 %v5787
  %6905 = vmatmul.mubr.f32.gmra.mrb[0].mxu0 %v5786
  %v6906 = vpop.f32.mrb[0].mxu0
  %v6907 = vadd.f32 %v6522, %v6906
  %v6908 = vpop.f32.mrb[0].mxu0
  %6909 = vmatprep.mubr.f32.mxu0 %v5796
  %6910 = vmatmul.mubr.f32.gmra.mrb[0].mxu0 %v5795
  %v6911 = vpop.f32.mrb[0].mxu0
  %v6912 = vadd.f32 %v6527, %v6911
  %v6913 = vpop.f32.mrb[0].mxu0
  %6914 = vmatprep.mubr.f32.mxu0 %v5805
  %6915 = vmatmul.mubr.f32.gmra.mrb[0].mxu0 %v5804
  %v6916 = vpop.f32.mrb[0].mxu0
  %v6917 = vadd.f32 %v6532, %v6916
  %v6918 = vpop.f32.mrb[0].mxu0
  %6919 = vmatprep.mubr.f32.mxu0 %v5814
  %6920 = vmatmul.mubr.f32.gmra.mrb[0].mxu0 %v5813
  %v6921 = vpop.f32.mrb[0].mxu0
  %v6922 = vadd.f32 %v6537, %v6921
  %v6923 = vpop.f32.mrb[0].mxu0
  %6924 = vmatprep.mubr.f32.mxu0 %v5823
  %6925 = vmatmul.mubr.f32.gmra.mrb[0].mxu0 %v5822
  %v6926 = vpop.f32.mrb[0].mxu0
  %v6927 = vadd.f32 %v6542, %v6926
  %v6928 = vpop.f32.mrb[0].mxu0
  %6929 = vmatprep.mubr.f32.mxu0 %v5832
  %6930 = vmatmul.mubr.f32.gmra.mrb[0].mxu0 %v5831
  %v6931 = vpop.f32.mrb[0].mxu0
  %v6932 = vadd.f32 %v6547, %v6931
  %v6933 = vpop.f32.mrb[0].mxu0
  %6934 = vmatprep.mubr.f32.mxu0 %v5841
  %6935 = vmatmul.mubr.f32.gmra.mrb[0].mxu0 %v5840
  %v6936 = vpop.f32.mrb[0].mxu0
  %v6937 = vadd.f32 %v6552, %v6936
  %v6938 = vpop.f32.mrb[0].mxu0
  %6939 = vmatprep.mubr.f32.mxu0 %v5850
  %6940 = vmatmul.mubr.f32.gmra.mrb[0].mxu0 %v5849
  %v6941 = vpop.f32.mrb[0].mxu0
  %v6942 = vadd.f32 %v6557, %v6941
  %v6943 = vpop.f32.mrb[0].mxu0
  %6944 = vmatprep.mubr.f32.mxu0 %v5859
  %6945 = vmatmul.mubr.f32.gmra.mrb[0].mxu0 %v5858
  %v6946 = vpop.f32.mrb[0].mxu0
  %v6947 = vadd.f32 %v6562, %v6946
  %v6948 = vpop.f32.mrb[0].mxu0
  %6949 = vmatprep.mubr.f32.mxu0 %v5868
  %6950 = vmatmul.mubr.f32.gmra.mrb[0].mxu0 %v5867
  %v6951 = vpop.f32.mrb[0].mxu0
  %v6952 = vadd.f32 %v6567, %v6951
  %v6953 = vpop.f32.mrb[0].mxu0
  %6954 = vmatprep.mubr.f32.mxu0 %v5877
  %6955 = vmatmul.mubr.f32.gmra.mrb[0].mxu0 %v5876
  %v6956 = vpop.f32.mrb[0].mxu0
  %v6957 = vadd.f32 %v6572, %v6956
  %v6958 = vpop.f32.mrb[0].mxu0
  %6959 = vmatprep.mubr.f32.mxu0 %v5886
  %6960 = vmatmul.mubr.f32.gmra.mrb[0].mxu0 %v5885
  %v6961 = vpop.f32.mrb[0].mxu0
  %v6962 = vadd.f32 %v6577, %v6961
  %v6963 = vpop.f32.mrb[0].mxu0
  %6964 = vmatprep.mubr.f32.mxu0 %v5895
  %6965 = vmatmul.mubr.f32.gmra.mrb[0].mxu0 %v5894
  %v6966 = vpop.f32.mrb[0].mxu0
  %v6967 = vadd.f32 %v6582, %v6966
  %v6968 = vpop.f32.mrb[0].mxu0
  %6969 = vmatprep.mubr.f32.mxu0 %v5904
  %6970 = vmatmul.mubr.f32.gmra.mrb[0].mxu0 %v5903
  %v6971 = vpop.f32.mrb[0].mxu0
  %v6972 = vadd.f32 %v6587, %v6971
  %v6973 = vpop.f32.mrb[0].mxu0
  %6974 = vmatprep.mubr.f32.mxu0 %v5913
  %6975 = vmatmul.mubr.f32.gmra.mrb[0].mxu0 %v5912
  %v6976 = vpop.f32.mrb[0].mxu0
  %v6977 = vadd.f32 %v6592, %v6976
  %v6978 = vpop.f32.mrb[0].mxu0
  %6979 = vmatprep.mubr.f32.mxu0 %v5922
  %6980 = vmatmul.mubr.f32.gmra.mrb[0].mxu0 %v5921
  %v6981 = vpop.f32.mrb[0].mxu0
  %v6982 = vadd.f32 %v6597, %v6981
  %v6983 = vpop.f32.mrb[0].mxu0
  %6984 = vmatprep.mubr.f32.mxu0 %v5931
  %6985 = vmatmul.mubr.f32.gmra.mrb[0].mxu0 %v5930
  %v6986 = vpop.f32.mrb[0].mxu0
  %v6987 = vadd.f32 %v6602, %v6986
  %v6988 = vpop.f32.mrb[0].mxu0
  %6989 = vmatprep.mubr.f32.mxu0 %v5940
  %6990 = vmatmul.mubr.f32.gmra.mrb[0].mxu0 %v5939
  %v6991 = vpop.f32.mrb[0].mxu0
  %v6992 = vadd.f32 %v6607, %v6991
  %v6993 = vpop.f32.mrb[0].mxu0
  %6994 = vmatprep.mubr.f32.mxu0 %v5949
  %6995 = vmatmul.mubr.f32.gmra.mrb[0].mxu0 %v5948
  %v6996 = vpop.f32.mrb[0].mxu0
  %v6997 = vadd.f32 %v6612, %v6996
  %v6998 = vpop.f32.mrb[0].mxu0
  %6999 = vmatprep.mubr.f32.mxu0 %v5958
  %7000 = vmatmul.mubr.f32.gmra.mrb[0].mxu0 %v5957
  %v7001 = vpop.f32.mrb[0].mxu0
  %v7002 = vadd.f32 %v6617, %v7001
  %v7003 = vpop.f32.mrb[0].mxu0
  %7004 = vmatprep.mubr.f32.mxu0 %v5967
  %7005 = vmatmul.mubr.f32.gmra.mrb[0].mxu0 %v5966
  %v7006 = vpop.f32.mrb[0].mxu0
  %v7007 = vadd.f32 %v6622, %v7006
  %v7008 = vpop.f32.mrb[0].mxu0
  %7009 = vmatprep.mubr.f32.mxu0 %v5976
  %7010 = vmatmul.mubr.f32.gmra.mrb[0].mxu0 %v5975
  %v7011 = vpop.f32.mrb[0].mxu0
  %v7012 = vadd.f32 %v6627, %v7011
  %v7013 = vpop.f32.mrb[0].mxu0
  %7014 = vmatprep.mubr.f32.mxu0 %v5985
  %7015 = vmatmul.mubr.f32.gmra.mrb[0].mxu0 %v5984
  %v7016 = vpop.f32.mrb[0].mxu0
  %v7017 = vadd.f32 %v6632, %v7016
  %v7018 = vpop.f32.mrb[0].mxu0
  %7019 = vmatprep.mubr.f32.mxu0 %v5994
  %7020 = vmatmul.mubr.f32.gmra.mrb[0].mxu0 %v5993
  %v7021 = vpop.f32.mrb[0].mxu0
  %v7022 = vadd.f32 %v6637, %v7021
  %v7023 = vpop.f32.mrb[0].mxu0
  %7024 = vmatprep.mubr.f32.mxu0 %v6003
  %7025 = vmatmul.mubr.f32.gmra.mrb[0].mxu0 %v6002
  %v7026 = vpop.f32.mrb[0].mxu0
  %v7027 = vadd.f32 %v6642, %v7026
  %v7028 = vpop.f32.mrb[0].mxu0
  %7029 = vmatprep.mubr.f32.mxu0 %v6012
  %7030 = vmatmul.mubr.f32.gmra.mrb[0].mxu0 %v6011
  %v7031 = vpop.f32.mrb[0].mxu0
  %v7032 = vadd.f32 %v6647, %v7031
  %v7033 = vpop.f32.mrb[0].mxu0
  %7034 = vmatprep.mubr.f32.mxu0 %v6021
  %7035 = vmatmul.mubr.f32.gmra.mrb[0].mxu0 %v6020
  %v7036 = vpop.f32.mrb[0].mxu0
  %v7037 = vadd.f32 %v6652, %v7036
  %v7038 = vpop.f32.mrb[0].mxu0
  %7039 = vmatprep.mubr.f32.mxu0 %v6030
  %7040 = vmatmul.mubr.f32.gmra.mrb[0].mxu0 %v6029
  %v7041 = vpop.f32.mrb[0].mxu0
  %v7042 = vadd.f32 %v6657, %v7041
  %v7043 = vpop.f32.mrb[0].mxu0
  %7044 = vmatprep.mubr.f32.mxu0 %v6039
  %7045 = vmatmul.mubr.f32.gmra.mrb[0].mxu0 %v6038
  %v7046 = vpop.f32.mrb[0].mxu0
  %v7047 = vadd.f32 %v6662, %v7046
  %v7048 = vpop.f32.mrb[0].mxu0
  %7049 = vmatprep.mubr.f32.mxu0 %v6048
  %7050 = vmatmul.mubr.f32.gmra.mrb[0].mxu0 %v6047
  %v7051 = vpop.f32.mrb[0].mxu0
  %v7052 = vadd.f32 %v6667, %v7051
  %v7053 = vpop.f32.mrb[0].mxu0
  %7054 = vmatprep.mubr.f32.mxu0 %v6057
  %7055 = vmatmul.mubr.f32.gmra.mrb[0].mxu0 %v6056
  %v7056 = vpop.f32.mrb[0].mxu0
  %v7057 = vadd.f32 %v6672, %v7056
  %v7058 = vpop.f32.mrb[0].mxu0
  %7059 = vmatprep.mubr.f32.mxu0 %v6066
  %7060 = vmatmul.mubr.f32.gmra.mrb[0].mxu0 %v6065
  %v7061 = vpop.f32.mrb[0].mxu0
  %v7062 = vadd.f32 %v6677, %v7061
  %v7063 = vpop.f32.mrb[0].mxu0
  %7064 = vmatprep.mubr.f32.mxu0 %v6075
  %7065 = vmatmul.mubr.f32.gmra.mrb[0].mxu0 %v6074
  %v7066 = vpop.f32.mrb[0].mxu0
  %v7067 = vadd.f32 %v6682, %v7066
  %v7068 = vpop.f32.mrb[0].mxu0
  %7069 = vmatprep.mubr.f32.mxu0 %v6084
  %7070 = vmatmul.mubr.f32.gmra.mrb[0].mxu0 %v6083
  %v7071 = vpop.f32.mrb[0].mxu0
  %v7072 = vadd.f32 %v6687, %v7071
  %v7073 = vpop.f32.mrb[0].mxu0
  %7074 = vmatprep.mubr.f32.mxu0 %v6093
  %7075 = vmatmul.mubr.f32.gmra.mrb[0].mxu0 %v6092
  %v7076 = vpop.f32.mrb[0].mxu0
  %v7077 = vadd.f32 %v6692, %v7076
  %v7078 = vpop.f32.mrb[0].mxu0
  %7079 = vmatprep.mubr.f32.mxu0 %v6102
  %7080 = vmatmul.mubr.f32.gmra.mrb[0].mxu0 %v6101
  %v7081 = vpop.f32.mrb[0].mxu0
  %v7082 = vadd.f32 %v6697, %v7081
  %v7083 = vpop.f32.mrb[0].mxu0
  %7084 = vmatprep.mubr.f32.mxu0 %v6111
  %7085 = vmatmul.mubr.f32.gmra.mrb[0].mxu0 %v6110
  %v7086 = vpop.f32.mrb[0].mxu0
  %v7087 = vadd.f32 %v6702, %v7086
  %v7088 = vpop.f32.mrb[0].mxu0
  %7089 = vmatprep.mubr.f32.mxu0 %v6120
  %7090 = vmatmul.mubr.f32.gmra.mrb[0].mxu0 %v6119
  %v7091 = vpop.f32.mrb[0].mxu0
  %v7092 = vadd.f32 %v6707, %v7091
  %v7093 = vpop.f32.mrb[0].mxu0
  %7094 = vmatprep.mubr.f32.mxu0 %v6129
  %7095 = vmatmul.mubr.f32.gmra.mrb[0].mxu0 %v6128
  %v7096 = vpop.f32.mrb[0].mxu0
  %v7097 = vadd.f32 %v6712, %v7096
  %v7098 = vpop.f32.mrb[0].mxu0
  %7099 = vmatprep.mubr.f32.mxu0 %v6138
  %7100 = vmatmul.mubr.f32.gmra.mrb[0].mxu0 %v6137
  %v7101 = vpop.f32.mrb[0].mxu0
  %v7102 = vadd.f32 %v6717, %v7101
  %v7103 = vpop.f32.mrb[0].mxu0
  %7104 = vmatprep.mubr.f32.mxu0 %v6147
  %7105 = vmatmul.mubr.f32.gmra.mrb[0].mxu0 %v6146
  %v7106 = vpop.f32.mrb[0].mxu0
  %v7107 = vadd.f32 %v6722, %v7106
  %v7108 = vpop.f32.mrb[0].mxu0
  %7109 = vmatprep.mubr.f32.mxu0 %v6156
  %7110 = vmatmul.mubr.f32.gmra.mrb[0].mxu0 %v6155
  %v7111 = vpop.f32.mrb[0].mxu0
  %v7112 = vadd.f32 %v6727, %v7111
  %v7113 = vpop.f32.mrb[0].mxu0
  %7114 = vmatprep.mubr.f32.mxu0 %v6165
  %7115 = vmatmul.mubr.f32.gmra.mrb[0].mxu0 %v6164
  %v7116 = vpop.f32.mrb[0].mxu0
  %v7117 = vadd.f32 %v6732, %v7116
  %v7118 = vpop.f32.mrb[0].mxu0
  %7119 = vmatprep.mubr.f32.mxu0 %v6174
  %7120 = vmatmul.mubr.f32.gmra.mrb[0].mxu0 %v6173
  %v7121 = vpop.f32.mrb[0].mxu0
  %v7122 = vadd.f32 %v6737, %v7121
  %v7123 = vpop.f32.mrb[0].mxu0
  %7124 = vmatprep.mubr.f32.mxu0 %v6183
  %7125 = vmatmul.mubr.f32.gmra.mrb[0].mxu0 %v6182
  %v7126 = vpop.f32.mrb[0].mxu0
  %v7127 = vadd.f32 %v6742, %v7126
  %v7128 = vpop.f32.mrb[0].mxu0
  %7129 = vmatprep.mubr.f32.mxu0 %v6192
  %7130 = vmatmul.mubr.f32.gmra.mrb[0].mxu0 %v6191
  %v7131 = vpop.f32.mrb[0].mxu0
  %v7132 = vadd.f32 %v6747, %v7131
  %v7133 = vpop.f32.mrb[0].mxu0
  %7134 = vmatprep.mubr.f32.mxu0 %v6201
  %7135 = vmatmul.mubr.f32.gmra.mrb[0].mxu0 %v6200
  %v7136 = vpop.f32.mrb[0].mxu0
  %v7137 = vadd.f32 %v6752, %v7136
  %v7138 = vpop.f32.mrb[0].mxu0
  %7139 = vmatprep.mubr.f32.mxu0 %v6210
  %7140 = vmatmul.mubr.f32.gmra.mrb[0].mxu0 %v6209
  %v7141 = vpop.f32.mrb[0].mxu0
  %v7142 = vadd.f32 %v6757, %v7141
  %v7143 = vpop.f32.mrb[0].mxu0
  %7144 = vmatprep.mubr.f32.mxu0 %v6219
  %7145 = vmatmul.mubr.f32.gmra.mrb[0].mxu0 %v6218
  %v7146 = vpop.f32.mrb[0].mxu0
  %v7147 = vadd.f32 %v6762, %v7146
  %v7148 = vpop.f32.mrb[0].mxu0
  %7149 = vmatprep.mubr.f32.mxu0 %v6228
  %7150 = vmatmul.mubr.f32.gmra.mrb[0].mxu0 %v6227
  %v7151 = vpop.f32.mrb[0].mxu0
  %v7152 = vadd.f32 %v6767, %v7151
  %v7153 = vpop.f32.mrb[0].mxu0
  %7154 = vdwg.mxu0
  %7155 = vmatprep.subr.mxu0 0.0
  %7156 = vmatpush1.msra.mxu0 %v6298
  %7157 = vmatprep.subr.mxu0 0.0
  %7158 = vmatpush1.msra.mxu0 %v6299
  %7159 = vmatprep.subr.mxu0 0.0
  %7160 = vmatpush1.msra.mxu0 %v6300
  %7161 = vmatprep.subr.mxu0 0.0
  %7162 = vmatpush1.msra.mxu0 %v6301
  %7163 = vmatprep.subr.mxu0 0.0
  %7164 = vmatpush1.msra.mxu0 %v6302
  %7165 = vmatprep.subr.mxu0 0.0
  %7166 = vmatpush1.msra.mxu0 %v6303
  %7167 = vmatprep.subr.mxu0 0.0
  %7168 = vmatpush1.msra.mxu0 %v6304
  %7169 = vmatprep.subr.mxu0 0.0
  %7170 = vmatpush1.msra.mxu0 %v6305
  %7171 = vmatprep.subr.mxu0 0.0
  %7172 = vmatpush1.msra.mxu0 %v6306
  %7173 = vmatprep.subr.mxu0 0.0
  %7174 = vmatpush1.msra.mxu0 %v6307
  %7175 = vmatprep.subr.mxu0 0.0
  %7176 = vmatpush1.msra.mxu0 %v6308
  %7177 = vmatprep.subr.mxu0 0.0
  %7178 = vmatpush1.msra.mxu0 %v6309
  %7179 = vmatprep.subr.mxu0 0.0
  %7180 = vmatpush1.msra.mxu0 %v6310
  %7181 = vmatprep.subr.mxu0 0.0
  %7182 = vmatpush1.msra.mxu0 %v6311
  %7183 = vmatprep.subr.mxu0 0.0
  %7184 = vmatpush1.msra.mxu0 %v6312
  %7185 = vmatprep.subr.mxu0 0.0
  %7186 = vmatpush1.msra.mxu0 %v6313
  %7187 = vmatprep.subr.mxu0 0.0
  %7188 = vmatpush1.msra.mxu0 %v6314
  %7189 = vmatprep.subr.mxu0 0.0
  %7190 = vmatpush1.msra.mxu0 %v6315
  %7191 = vmatprep.subr.mxu0 0.0
  %7192 = vmatpush1.msra.mxu0 %v6316
  %7193 = vmatprep.subr.mxu0 0.0
  %7194 = vmatpush1.msra.mxu0 %v6317
  %7195 = vmatprep.subr.mxu0 0.0
  %7196 = vmatpush1.msra.mxu0 %v6318
  %7197 = vmatprep.subr.mxu0 0.0
  %7198 = vmatpush1.msra.mxu0 %v6319
  %7199 = vmatprep.subr.mxu0 0.0
  %7200 = vmatpush1.msra.mxu0 %v6320
  %7201 = vmatprep.subr.mxu0 0.0
  %7202 = vmatpush1.msra.mxu0 %v6321
  %7203 = vmatprep.subr.mxu0 0.0
  %7204 = vmatpush1.msra.mxu0 %v6322
  %7205 = vmatprep.subr.mxu0 0.0
  %7206 = vmatpush1.msra.mxu0 %v6323
  %7207 = vmatprep.subr.mxu0 0.0
  %7208 = vmatpush1.msra.mxu0 %v6324
  %7209 = vmatprep.subr.mxu0 0.0
  %7210 = vmatpush1.msra.mxu0 %v6325
  %7211 = vmatprep.subr.mxu0 0.0
  %7212 = vmatpush1.msra.mxu0 %v6326
  %7213 = vmatprep.subr.mxu0 0.0
  %7214 = vmatpush1.msra.mxu0 %v6327
  %7215 = vmatprep.subr.mxu0 0.0
  %7216 = vmatpush1.msra.mxu0 %v6328
  %7217 = vmatprep.subr.mxu0 0.0
  %7218 = vmatpush1.msra.mxu0 %v6329
  %7219 = vmatprep.mubr.f32.mxu0 %v5663
  %7220 = vmatmul.mubr.f32.gmra.mrb[0].mxu0 %v5662
  %v7221 = vpop.f32.mrb[0].mxu0
  %v7222 = vadd.f32 %v6837, %v7221
  %v7223 = vpop.f32.mrb[0].mxu0
  %7224 = vmatprep.mubr.f32.mxu0 %v5672
  %7225 = vmatmul.mubr.f32.gmra.mrb[0].mxu0 %v5671
  %v7226 = vpop.f32.mrb[0].mxu0
  %v7227 = vadd.f32 %v6842, %v7226
  %v7228 = vpop.f32.mrb[0].mxu0
  %7229 = vmatprep.mubr.f32.mxu0 %v5681
  %7230 = vmatmul.mubr.f32.gmra.mrb[0].mxu0 %v5680
  %v7231 = vpop.f32.mrb[0].mxu0
  %v7232 = vadd.f32 %v6847, %v7231
  %v7233 = vpop.f32.mrb[0].mxu0
  %7234 = vmatprep.mubr.f32.mxu0 %v5690
  %7235 = vmatmul.mubr.f32.gmra.mrb[0].mxu0 %v5689
  %v7236 = vpop.f32.mrb[0].mxu0
  %v7237 = vadd.f32 %v6852, %v7236
  %v7238 = vpop.f32.mrb[0].mxu0
  %7239 = vmatprep.mubr.f32.mxu0 %v5699
  %7240 = vmatmul.mubr.f32.gmra.mrb[0].mxu0 %v5698
  %v7241 = vpop.f32.mrb[0].mxu0
  %v7242 = vadd.f32 %v6857, %v7241
  %v7243 = vpop.f32.mrb[0].mxu0
  %7244 = vmatprep.mubr.f32.mxu0 %v5708
  %7245 = vmatmul.mubr.f32.gmra.mrb[0].mxu0 %v5707
  %v7246 = vpop.f32.mrb[0].mxu0
  %v7247 = vadd.f32 %v6862, %v7246
  %v7248 = vpop.f32.mrb[0].mxu0
  %7249 = vmatprep.mubr.f32.mxu0 %v5717
  %7250 = vmatmul.mubr.f32.gmra.mrb[0].mxu0 %v5716
  %v7251 = vpop.f32.mrb[0].mxu0
  %v7252 = vadd.f32 %v6867, %v7251
  %v7253 = vpop.f32.mrb[0].mxu0
  %7254 = vmatprep.mubr.f32.mxu0 %v5726
  %7255 = vmatmul.mubr.f32.gmra.mrb[0].mxu0 %v5725
  %v7256 = vpop.f32.mrb[0].mxu0
  %v7257 = vadd.f32 %v6872, %v7256
  %v7258 = vpop.f32.mrb[0].mxu0
  %7259 = vmatprep.mubr.f32.mxu0 %v5735
  %7260 = vmatmul.mubr.f32.gmra.mrb[0].mxu0 %v5734
  %v7261 = vpop.f32.mrb[0].mxu0
  %v7262 = vadd.f32 %v6877, %v7261
  %v7263 = vpop.f32.mrb[0].mxu0
  %7264 = vmatprep.mubr.f32.mxu0 %v5744
  %7265 = vmatmul.mubr.f32.gmra.mrb[0].mxu0 %v5743
  %v7266 = vpop.f32.mrb[0].mxu0
  %v7267 = vadd.f32 %v6882, %v7266
  %v7268 = vpop.f32.mrb[0].mxu0
  %7269 = vmatprep.mubr.f32.mxu0 %v5753
  %7270 = vmatmul.mubr.f32.gmra.mrb[0].mxu0 %v5752
  %v7271 = vpop.f32.mrb[0].mxu0
  %v7272 = vadd.f32 %v6887, %v7271
  %v7273 = vpop.f32.mrb[0].mxu0
  %7274 = vmatprep.mubr.f32.mxu0 %v5762
  %7275 = vmatmul.mubr.f32.gmra.mrb[0].mxu0 %v5761
  %v7276 = vpop.f32.mrb[0].mxu0
  %v7277 = vadd.f32 %v6892, %v7276
  %v7278 = vpop.f32.mrb[0].mxu0
  %7279 = vmatprep.mubr.f32.mxu0 %v5771
  %7280 = vmatmul.mubr.f32.gmra.mrb[0].mxu0 %v5770
  %v7281 = vpop.f32.mrb[0].mxu0
  %v7282 = vadd.f32 %v6897, %v7281
  %v7283 = vpop.f32.mrb[0].mxu0
  %7284 = vmatprep.mubr.f32.mxu0 %v5780
  %7285 = vmatmul.mubr.f32.gmra.mrb[0].mxu0 %v5779
  %v7286 = vpop.f32.mrb[0].mxu0
  %v7287 = vadd.f32 %v6902, %v7286
  %v7288 = vpop.f32.mrb[0].mxu0
  %7289 = vmatprep.mubr.f32.mxu0 %v5789
  %7290 = vmatmul.mubr.f32.gmra.mrb[0].mxu0 %v5788
  %v7291 = vpop.f32.mrb[0].mxu0
  %v7292 = vadd.f32 %v6907, %v7291
  %v7293 = vpop.f32.mrb[0].mxu0
  %7294 = vmatprep.mubr.f32.mxu0 %v5798
  %7295 = vmatmul.mubr.f32.gmra.mrb[0].mxu0 %v5797
  %v7296 = vpop.f32.mrb[0].mxu0
  %v7297 = vadd.f32 %v6912, %v7296
  %v7298 = vpop.f32.mrb[0].mxu0
  %7299 = vmatprep.mubr.f32.mxu0 %v5807
  %7300 = vmatmul.mubr.f32.gmra.mrb[0].mxu0 %v5806
  %v7301 = vpop.f32.mrb[0].mxu0
  %v7302 = vadd.f32 %v6917, %v7301
  %v7303 = vpop.f32.mrb[0].mxu0
  %7304 = vmatprep.mubr.f32.mxu0 %v5816
  %7305 = vmatmul.mubr.f32.gmra.mrb[0].mxu0 %v5815
  %v7306 = vpop.f32.mrb[0].mxu0
  %v7307 = vadd.f32 %v6922, %v7306
  %v7308 = vpop.f32.mrb[0].mxu0
  %7309 = vmatprep.mubr.f32.mxu0 %v5825
  %7310 = vmatmul.mubr.f32.gmra.mrb[0].mxu0 %v5824
  %v7311 = vpop.f32.mrb[0].mxu0
  %v7312 = vadd.f32 %v6927, %v7311
  %v7313 = vpop.f32.mrb[0].mxu0
  %7314 = vmatprep.mubr.f32.mxu0 %v5834
  %7315 = vmatmul.mubr.f32.gmra.mrb[0].mxu0 %v5833
  %v7316 = vpop.f32.mrb[0].mxu0
  %v7317 = vadd.f32 %v6932, %v7316
  %v7318 = vpop.f32.mrb[0].mxu0
  %7319 = vmatprep.mubr.f32.mxu0 %v5843
  %7320 = vmatmul.mubr.f32.gmra.mrb[0].mxu0 %v5842
  %v7321 = vpop.f32.mrb[0].mxu0
  %v7322 = vadd.f32 %v6937, %v7321
  %v7323 = vpop.f32.mrb[0].mxu0
  %7324 = vmatprep.mubr.f32.mxu0 %v5852
  %7325 = vmatmul.mubr.f32.gmra.mrb[0].mxu0 %v5851
  %v7326 = vpop.f32.mrb[0].mxu0
  %v7327 = vadd.f32 %v6942, %v7326
  %v7328 = vpop.f32.mrb[0].mxu0
  %7329 = vmatprep.mubr.f32.mxu0 %v5861
  %7330 = vmatmul.mubr.f32.gmra.mrb[0].mxu0 %v5860
  %v7331 = vpop.f32.mrb[0].mxu0
  %v7332 = vadd.f32 %v6947, %v7331
  %v7333 = vpop.f32.mrb[0].mxu0
  %7334 = vmatprep.mubr.f32.mxu0 %v5870
  %7335 = vmatmul.mubr.f32.gmra.mrb[0].mxu0 %v5869
  %v7336 = vpop.f32.mrb[0].mxu0
  %v7337 = vadd.f32 %v6952, %v7336
  %v7338 = vpop.f32.mrb[0].mxu0
  %7339 = vmatprep.mubr.f32.mxu0 %v5879
  %7340 = vmatmul.mubr.f32.gmra.mrb[0].mxu0 %v5878
  %v7341 = vpop.f32.mrb[0].mxu0
  %v7342 = vadd.f32 %v6957, %v7341
  %v7343 = vpop.f32.mrb[0].mxu0
  %7344 = vmatprep.mubr.f32.mxu0 %v5888
  %7345 = vmatmul.mubr.f32.gmra.mrb[0].mxu0 %v5887
  %v7346 = vpop.f32.mrb[0].mxu0
  %v7347 = vadd.f32 %v6962, %v7346
  %v7348 = vpop.f32.mrb[0].mxu0
  %7349 = vmatprep.mubr.f32.mxu0 %v5897
  %7350 = vmatmul.mubr.f32.gmra.mrb[0].mxu0 %v5896
  %v7351 = vpop.f32.mrb[0].mxu0
  %v7352 = vadd.f32 %v6967, %v7351
  %v7353 = vpop.f32.mrb[0].mxu0
  %7354 = vmatprep.mubr.f32.mxu0 %v5906
  %7355 = vmatmul.mubr.f32.gmra.mrb[0].mxu0 %v5905
  %v7356 = vpop.f32.mrb[0].mxu0
  %v7357 = vadd.f32 %v6972, %v7356
  %v7358 = vpop.f32.mrb[0].mxu0
  %7359 = vmatprep.mubr.f32.mxu0 %v5915
  %7360 = vmatmul.mubr.f32.gmra.mrb[0].mxu0 %v5914
  %v7361 = vpop.f32.mrb[0].mxu0
  %v7362 = vadd.f32 %v6977, %v7361
  %v7363 = vpop.f32.mrb[0].mxu0
  %7364 = vmatprep.mubr.f32.mxu0 %v5924
  %7365 = vmatmul.mubr.f32.gmra.mrb[0].mxu0 %v5923
  %v7366 = vpop.f32.mrb[0].mxu0
  %v7367 = vadd.f32 %v6982, %v7366
  %v7368 = vpop.f32.mrb[0].mxu0
  %7369 = vmatprep.mubr.f32.mxu0 %v5933
  %7370 = vmatmul.mubr.f32.gmra.mrb[0].mxu0 %v5932
  %v7371 = vpop.f32.mrb[0].mxu0
  %v7372 = vadd.f32 %v6987, %v7371
  %v7373 = vpop.f32.mrb[0].mxu0
  %7374 = vmatprep.mubr.f32.mxu0 %v5942
  %7375 = vmatmul.mubr.f32.gmra.mrb[0].mxu0 %v5941
  %v7376 = vpop.f32.mrb[0].mxu0
  %v7377 = vadd.f32 %v6992, %v7376
  %v7378 = vpop.f32.mrb[0].mxu0
  %7379 = vmatprep.mubr.f32.mxu0 %v5951
  %7380 = vmatmul.mubr.f32.gmra.mrb[0].mxu0 %v5950
  %v7381 = vpop.f32.mrb[0].mxu0
  %v7382 = vadd.f32 %v6997, %v7381
  %v7383 = vpop.f32.mrb[0].mxu0
  %7384 = vmatprep.mubr.f32.mxu0 %v5960
  %7385 = vmatmul.mubr.f32.gmra.mrb[0].mxu0 %v5959
  %v7386 = vpop.f32.mrb[0].mxu0
  %v7387 = vadd.f32 %v7002, %v7386
  %v7388 = vpop.f32.mrb[0].mxu0
  %7389 = vmatprep.mubr.f32.mxu0 %v5969
  %7390 = vmatmul.mubr.f32.gmra.mrb[0].mxu0 %v5968
  %v7391 = vpop.f32.mrb[0].mxu0
  %v7392 = vadd.f32 %v7007, %v7391
  %v7393 = vpop.f32.mrb[0].mxu0
  %7394 = vmatprep.mubr.f32.mxu0 %v5978
  %7395 = vmatmul.mubr.f32.gmra.mrb[0].mxu0 %v5977
  %v7396 = vpop.f32.mrb[0].mxu0
  %v7397 = vadd.f32 %v7012, %v7396
  %v7398 = vpop.f32.mrb[0].mxu0
  %7399 = vmatprep.mubr.f32.mxu0 %v5987
  %7400 = vmatmul.mubr.f32.gmra.mrb[0].mxu0 %v5986
  %v7401 = vpop.f32.mrb[0].mxu0
  %v7402 = vadd.f32 %v7017, %v7401
  %v7403 = vpop.f32.mrb[0].mxu0
  %7404 = vmatprep.mubr.f32.mxu0 %v5996
  %7405 = vmatmul.mubr.f32.gmra.mrb[0].mxu0 %v5995
  %v7406 = vpop.f32.mrb[0].mxu0
  %v7407 = vadd.f32 %v7022, %v7406
  %v7408 = vpop.f32.mrb[0].mxu0
  %7409 = vmatprep.mubr.f32.mxu0 %v6005
  %7410 = vmatmul.mubr.f32.gmra.mrb[0].mxu0 %v6004
  %v7411 = vpop.f32.mrb[0].mxu0
  %v7412 = vadd.f32 %v7027, %v7411
  %v7413 = vpop.f32.mrb[0].mxu0
  %7414 = vmatprep.mubr.f32.mxu0 %v6014
  %7415 = vmatmul.mubr.f32.gmra.mrb[0].mxu0 %v6013
  %v7416 = vpop.f32.mrb[0].mxu0
  %v7417 = vadd.f32 %v7032, %v7416
  %v7418 = vpop.f32.mrb[0].mxu0
  %7419 = vmatprep.mubr.f32.mxu0 %v6023
  %7420 = vmatmul.mubr.f32.gmra.mrb[0].mxu0 %v6022
  %v7421 = vpop.f32.mrb[0].mxu0
  %v7422 = vadd.f32 %v7037, %v7421
  %v7423 = vpop.f32.mrb[0].mxu0
  %7424 = vmatprep.mubr.f32.mxu0 %v6032
  %7425 = vmatmul.mubr.f32.gmra.mrb[0].mxu0 %v6031
  %v7426 = vpop.f32.mrb[0].mxu0
  %v7427 = vadd.f32 %v7042, %v7426
  %v7428 = vpop.f32.mrb[0].mxu0
  %7429 = vmatprep.mubr.f32.mxu0 %v6041
  %7430 = vmatmul.mubr.f32.gmra.mrb[0].mxu0 %v6040
  %v7431 = vpop.f32.mrb[0].mxu0
  %v7432 = vadd.f32 %v7047, %v7431
  %v7433 = vpop.f32.mrb[0].mxu0
  %7434 = vmatprep.mubr.f32.mxu0 %v6050
  %7435 = vmatmul.mubr.f32.gmra.mrb[0].mxu0 %v6049
  %v7436 = vpop.f32.mrb[0].mxu0
  %v7437 = vadd.f32 %v7052, %v7436
  %v7438 = vpop.f32.mrb[0].mxu0
  %7439 = vmatprep.mubr.f32.mxu0 %v6059
  %7440 = vmatmul.mubr.f32.gmra.mrb[0].mxu0 %v6058
  %v7441 = vpop.f32.mrb[0].mxu0
  %v7442 = vadd.f32 %v7057, %v7441
  %v7443 = vpop.f32.mrb[0].mxu0
  %7444 = vmatprep.mubr.f32.mxu0 %v6068
  %7445 = vmatmul.mubr.f32.gmra.mrb[0].mxu0 %v6067
  %v7446 = vpop.f32.mrb[0].mxu0
  %v7447 = vadd.f32 %v7062, %v7446
  %v7448 = vpop.f32.mrb[0].mxu0
  %7449 = vmatprep.mubr.f32.mxu0 %v6077
  %7450 = vmatmul.mubr.f32.gmra.mrb[0].mxu0 %v6076
  %v7451 = vpop.f32.mrb[0].mxu0
  %v7452 = vadd.f32 %v7067, %v7451
  %v7453 = vpop.f32.mrb[0].mxu0
  %7454 = vmatprep.mubr.f32.mxu0 %v6086
  %7455 = vmatmul.mubr.f32.gmra.mrb[0].mxu0 %v6085
  %v7456 = vpop.f32.mrb[0].mxu0
  %v7457 = vadd.f32 %v7072, %v7456
  %v7458 = vpop.f32.mrb[0].mxu0
  %7459 = vmatprep.mubr.f32.mxu0 %v6095
  %7460 = vmatmul.mubr.f32.gmra.mrb[0].mxu0 %v6094
  %v7461 = vpop.f32.mrb[0].mxu0
  %v7462 = vadd.f32 %v7077, %v7461
  %v7463 = vpop.f32.mrb[0].mxu0
  %7464 = vmatprep.mubr.f32.mxu0 %v6104
  %7465 = vmatmul.mubr.f32.gmra.mrb[0].mxu0 %v6103
  %v7466 = vpop.f32.mrb[0].mxu0
  %v7467 = vadd.f32 %v7082, %v7466
  %v7468 = vpop.f32.mrb[0].mxu0
  %7469 = vmatprep.mubr.f32.mxu0 %v6113
  %7470 = vmatmul.mubr.f32.gmra.mrb[0].mxu0 %v6112
  %v7471 = vpop.f32.mrb[0].mxu0
  %v7472 = vadd.f32 %v7087, %v7471
  %v7473 = vpop.f32.mrb[0].mxu0
  %7474 = vmatprep.mubr.f32.mxu0 %v6122
  %7475 = vmatmul.mubr.f32.gmra.mrb[0].mxu0 %v6121
  %v7476 = vpop.f32.mrb[0].mxu0
  %v7477 = vadd.f32 %v7092, %v7476
  %v7478 = vpop.f32.mrb[0].mxu0
  %7479 = vmatprep.mubr.f32.mxu0 %v6131
  %7480 = vmatmul.mubr.f32.gmra.mrb[0].mxu0 %v6130
  %v7481 = vpop.f32.mrb[0].mxu0
  %v7482 = vadd.f32 %v7097, %v7481
  %v7483 = vpop.f32.mrb[0].mxu0
  %7484 = vmatprep.mubr.f32.mxu0 %v6140
  %7485 = vmatmul.mubr.f32.gmra.mrb[0].mxu0 %v6139
  %v7486 = vpop.f32.mrb[0].mxu0
  %v7487 = vadd.f32 %v7102, %v7486
  %v7488 = vpop.f32.mrb[0].mxu0
  %7489 = vmatprep.mubr.f32.mxu0 %v6149
  %7490 = vmatmul.mubr.f32.gmra.mrb[0].mxu0 %v6148
  %v7491 = vpop.f32.mrb[0].mxu0
  %v7492 = vadd.f32 %v7107, %v7491
  %v7493 = vpop.f32.mrb[0].mxu0
  %7494 = vmatprep.mubr.f32.mxu0 %v6158
  %7495 = vmatmul.mubr.f32.gmra.mrb[0].mxu0 %v6157
  %v7496 = vpop.f32.mrb[0].mxu0
  %v7497 = vadd.f32 %v7112, %v7496
  %v7498 = vpop.f32.mrb[0].mxu0
  %7499 = vmatprep.mubr.f32.mxu0 %v6167
  %7500 = vmatmul.mubr.f32.gmra.mrb[0].mxu0 %v6166
  %v7501 = vpop.f32.mrb[0].mxu0
  %v7502 = vadd.f32 %v7117, %v7501
  %v7503 = vpop.f32.mrb[0].mxu0
  %7504 = vmatprep.mubr.f32.mxu0 %v6176
  %7505 = vmatmul.mubr.f32.gmra.mrb[0].mxu0 %v6175
  %v7506 = vpop.f32.mrb[0].mxu0
  %v7507 = vadd.f32 %v7122, %v7506
  %v7508 = vpop.f32.mrb[0].mxu0
  %7509 = vmatprep.mubr.f32.mxu0 %v6185
  %7510 = vmatmul.mubr.f32.gmra.mrb[0].mxu0 %v6184
  %v7511 = vpop.f32.mrb[0].mxu0
  %v7512 = vadd.f32 %v7127, %v7511
  %v7513 = vpop.f32.mrb[0].mxu0
  %7514 = vmatprep.mubr.f32.mxu0 %v6194
  %7515 = vmatmul.mubr.f32.gmra.mrb[0].mxu0 %v6193
  %v7516 = vpop.f32.mrb[0].mxu0
  %v7517 = vadd.f32 %v7132, %v7516
  %v7518 = vpop.f32.mrb[0].mxu0
  %7519 = vmatprep.mubr.f32.mxu0 %v6203
  %7520 = vmatmul.mubr.f32.gmra.mrb[0].mxu0 %v6202
  %v7521 = vpop.f32.mrb[0].mxu0
  %v7522 = vadd.f32 %v7137, %v7521
  %v7523 = vpop.f32.mrb[0].mxu0
  %7524 = vmatprep.mubr.f32.mxu0 %v6212
  %7525 = vmatmul.mubr.f32.gmra.mrb[0].mxu0 %v6211
  %v7526 = vpop.f32.mrb[0].mxu0
  %v7527 = vadd.f32 %v7142, %v7526
  %v7528 = vpop.f32.mrb[0].mxu0
  %7529 = vmatprep.mubr.f32.mxu0 %v6221
  %7530 = vmatmul.mubr.f32.gmra.mrb[0].mxu0 %v6220
  %v7531 = vpop.f32.mrb[0].mxu0
  %v7532 = vadd.f32 %v7147, %v7531
  %v7533 = vpop.f32.mrb[0].mxu0
  %7534 = vmatprep.mubr.f32.mxu0 %v6230
  %7535 = vmatmul.mubr.f32.gmra.mrb[0].mxu0 %v6229
  %v7536 = vpop.f32.mrb[0].mxu0
  %v7537 = vadd.f32 %v7152, %v7536
  %v7538 = vpop.f32.mrb[0].mxu0
  %7539 = vdwg.mxu0
  %7540 = vmatprep.subr.mxu0 0.0
  %7541 = vmatpush1.msra.mxu0 %v6330
  %7542 = vmatprep.subr.mxu0 0.0
  %7543 = vmatpush1.msra.mxu0 %v6331
  %7544 = vmatprep.subr.mxu0 0.0
  %7545 = vmatpush1.msra.mxu0 %v6332
  %7546 = vmatprep.subr.mxu0 0.0
  %7547 = vmatpush1.msra.mxu0 %v6333
  %7548 = vmatprep.subr.mxu0 0.0
  %7549 = vmatpush1.msra.mxu0 %v6334
  %7550 = vmatprep.subr.mxu0 0.0
  %7551 = vmatpush1.msra.mxu0 %v6335
  %7552 = vmatprep.subr.mxu0 0.0
  %7553 = vmatpush1.msra.mxu0 %v6336
  %7554 = vmatprep.subr.mxu0 0.0
  %7555 = vmatpush1.msra.mxu0 %v6337
  %7556 = vmatprep.subr.mxu0 0.0
  %7557 = vmatpush1.msra.mxu0 %v6338
  %7558 = vmatprep.subr.mxu0 0.0
  %7559 = vmatpush1.msra.mxu0 %v6339
  %7560 = vmatprep.subr.mxu0 0.0
  %7561 = vmatpush1.msra.mxu0 %v6340
  %7562 = vmatprep.subr.mxu0 0.0
  %7563 = vmatpush1.msra.mxu0 %v6341
  %7564 = vmatprep.subr.mxu0 0.0
  %7565 = vmatpush1.msra.mxu0 %v6342
  %7566 = vmatprep.subr.mxu0 0.0
  %7567 = vmatpush1.msra.mxu0 %v6343
  %7568 = vmatprep.subr.mxu0 0.0
  %7569 = vmatpush1.msra.mxu0 %v6344
  %7570 = vmatprep.subr.mxu0 0.0
  %7571 = vmatpush1.msra.mxu0 %v6345
  %7572 = vmatprep.subr.mxu0 0.0
  %7573 = vmatpush1.msra.mxu0 %v6346
  %7574 = vmatprep.subr.mxu0 0.0
  %7575 = vmatpush1.msra.mxu0 %v6347
  %7576 = vmatprep.subr.mxu0 0.0
  %7577 = vmatpush1.msra.mxu0 %v6348
  %7578 = vmatprep.subr.mxu0 0.0
  %7579 = vmatpush1.msra.mxu0 %v6349
  %7580 = vmatprep.subr.mxu0 0.0
  %7581 = vmatpush1.msra.mxu0 %v6350
  %7582 = vmatprep.subr.mxu0 0.0
  %7583 = vmatpush1.msra.mxu0 %v6351
  %7584 = vmatprep.subr.mxu0 0.0
  %7585 = vmatpush1.msra.mxu0 %v6352
  %7586 = vmatprep.subr.mxu0 0.0
  %7587 = vmatpush1.msra.mxu0 %v6353
  %7588 = vmatprep.subr.mxu0 0.0
  %7589 = vmatpush1.msra.mxu0 %v6354
  %7590 = vmatprep.subr.mxu0 0.0
  %7591 = vmatpush1.msra.mxu0 %v6355
  %7592 = vmatprep.subr.mxu0 0.0
  %7593 = vmatpush1.msra.mxu0 %v6356
  %7594 = vmatprep.subr.mxu0 0.0
  %7595 = vmatpush1.msra.mxu0 %v6357
  %7596 = vmatprep.subr.mxu0 0.0
  %7597 = vmatpush1.msra.mxu0 %v6358
  %7598 = vmatprep.subr.mxu0 0.0
  %7599 = vmatpush1.msra.mxu0 %v6359
  %7600 = vmatprep.subr.mxu0 0.0
  %7601 = vmatpush1.msra.mxu0 %v6360
  %7602 = vmatprep.subr.mxu0 0.0
  %7603 = vmatpush1.msra.mxu0 %v6361
  %7604 = vmatprep.mubr.f32.mxu0 %v5665
  %7605 = vmatmul.mubr.f32.gmra.mrb[0].mxu0 %v5664
  %v7606 = vpop.f32.mrb[0].mxu0
  %v7607 = vadd.f32 %v7222, %v7606
  %v7608 = vpop.f32.mrb[0].mxu0
  %7609 = vmatprep.mubr.f32.mxu0 %v5674
  %7610 = vmatmul.mubr.f32.gmra.mrb[0].mxu0 %v5673
  %v7611 = vpop.f32.mrb[0].mxu0
  %v7612 = vadd.f32 %v7227, %v7611
  %v7613 = vpop.f32.mrb[0].mxu0
  %7614 = vmatprep.mubr.f32.mxu0 %v5683
  %7615 = vmatmul.mubr.f32.gmra.mrb[0].mxu0 %v5682
  %v7616 = vpop.f32.mrb[0].mxu0
  %v7617 = vadd.f32 %v7232, %v7616
  %v7618 = vpop.f32.mrb[0].mxu0
  %7619 = vmatprep.mubr.f32.mxu0 %v5692
  %7620 = vmatmul.mubr.f32.gmra.mrb[0].mxu0 %v5691
  %v7621 = vpop.f32.mrb[0].mxu0
  %v7622 = vadd.f32 %v7237, %v7621
  %v7623 = vpop.f32.mrb[0].mxu0
  %7624 = vmatprep.mubr.f32.mxu0 %v5701
  %7625 = vmatmul.mubr.f32.gmra.mrb[0].mxu0 %v5700
  %v7626 = vpop.f32.mrb[0].mxu0
  %v7627 = vadd.f32 %v7242, %v7626
  %v7628 = vpop.f32.mrb[0].mxu0
  %7629 = vmatprep.mubr.f32.mxu0 %v5710
  %7630 = vmatmul.mubr.f32.gmra.mrb[0].mxu0 %v5709
  %v7631 = vpop.f32.mrb[0].mxu0
  %v7632 = vadd.f32 %v7247, %v7631
  %v7633 = vpop.f32.mrb[0].mxu0
  %7634 = vmatprep.mubr.f32.mxu0 %v5719
  %7635 = vmatmul.mubr.f32.gmra.mrb[0].mxu0 %v5718
  %v7636 = vpop.f32.mrb[0].mxu0
  %v7637 = vadd.f32 %v7252, %v7636
  %v7638 = vpop.f32.mrb[0].mxu0
  %7639 = vmatprep.mubr.f32.mxu0 %v5728
  %7640 = vmatmul.mubr.f32.gmra.mrb[0].mxu0 %v5727
  %v7641 = vpop.f32.mrb[0].mxu0
  %v7642 = vadd.f32 %v7257, %v7641
  %v7643 = vpop.f32.mrb[0].mxu0
  %7644 = vmatprep.mubr.f32.mxu0 %v5737
  %7645 = vmatmul.mubr.f32.gmra.mrb[0].mxu0 %v5736
  %v7646 = vpop.f32.mrb[0].mxu0
  %v7647 = vadd.f32 %v7262, %v7646
  %v7648 = vpop.f32.mrb[0].mxu0
  %7649 = vmatprep.mubr.f32.mxu0 %v5746
  %7650 = vmatmul.mubr.f32.gmra.mrb[0].mxu0 %v5745
  %v7651 = vpop.f32.mrb[0].mxu0
  %v7652 = vadd.f32 %v7267, %v7651
  %v7653 = vpop.f32.mrb[0].mxu0
  %7654 = vmatprep.mubr.f32.mxu0 %v5755
  %7655 = vmatmul.mubr.f32.gmra.mrb[0].mxu0 %v5754
  %v7656 = vpop.f32.mrb[0].mxu0
  %v7657 = vadd.f32 %v7272, %v7656
  %v7658 = vpop.f32.mrb[0].mxu0
  %7659 = vmatprep.mubr.f32.mxu0 %v5764
  %7660 = vmatmul.mubr.f32.gmra.mrb[0].mxu0 %v5763
  %v7661 = vpop.f32.mrb[0].mxu0
  %v7662 = vadd.f32 %v7277, %v7661
  %v7663 = vpop.f32.mrb[0].mxu0
  %7664 = vmatprep.mubr.f32.mxu0 %v5773
  %7665 = vmatmul.mubr.f32.gmra.mrb[0].mxu0 %v5772
  %v7666 = vpop.f32.mrb[0].mxu0
  %v7667 = vadd.f32 %v7282, %v7666
  %v7668 = vpop.f32.mrb[0].mxu0
  %7669 = vmatprep.mubr.f32.mxu0 %v5782
  %7670 = vmatmul.mubr.f32.gmra.mrb[0].mxu0 %v5781
  %v7671 = vpop.f32.mrb[0].mxu0
  %v7672 = vadd.f32 %v7287, %v7671
  %v7673 = vpop.f32.mrb[0].mxu0
  %7674 = vmatprep.mubr.f32.mxu0 %v5791
  %7675 = vmatmul.mubr.f32.gmra.mrb[0].mxu0 %v5790
  %v7676 = vpop.f32.mrb[0].mxu0
  %v7677 = vadd.f32 %v7292, %v7676
  %v7678 = vpop.f32.mrb[0].mxu0
  %7679 = vmatprep.mubr.f32.mxu0 %v5800
  %7680 = vmatmul.mubr.f32.gmra.mrb[0].mxu0 %v5799
  %v7681 = vpop.f32.mrb[0].mxu0
  %v7682 = vadd.f32 %v7297, %v7681
  %v7683 = vpop.f32.mrb[0].mxu0
  %7684 = vmatprep.mubr.f32.mxu0 %v5809
  %7685 = vmatmul.mubr.f32.gmra.mrb[0].mxu0 %v5808
  %v7686 = vpop.f32.mrb[0].mxu0
  %v7687 = vadd.f32 %v7302, %v7686
  %v7688 = vpop.f32.mrb[0].mxu0
  %7689 = vmatprep.mubr.f32.mxu0 %v5818
  %7690 = vmatmul.mubr.f32.gmra.mrb[0].mxu0 %v5817
  %v7691 = vpop.f32.mrb[0].mxu0
  %v7692 = vadd.f32 %v7307, %v7691
  %v7693 = vpop.f32.mrb[0].mxu0
  %7694 = vmatprep.mubr.f32.mxu0 %v5827
  %7695 = vmatmul.mubr.f32.gmra.mrb[0].mxu0 %v5826
  %v7696 = vpop.f32.mrb[0].mxu0
  %v7697 = vadd.f32 %v7312, %v7696
  %v7698 = vpop.f32.mrb[0].mxu0
  %7699 = vmatprep.mubr.f32.mxu0 %v5836
  %7700 = vmatmul.mubr.f32.gmra.mrb[0].mxu0 %v5835
  %v7701 = vpop.f32.mrb[0].mxu0
  %v7702 = vadd.f32 %v7317, %v7701
  %v7703 = vpop.f32.mrb[0].mxu0
  %7704 = vmatprep.mubr.f32.mxu0 %v5845
  %7705 = vmatmul.mubr.f32.gmra.mrb[0].mxu0 %v5844
  %v7706 = vpop.f32.mrb[0].mxu0
  %v7707 = vadd.f32 %v7322, %v7706
  %v7708 = vpop.f32.mrb[0].mxu0
  %7709 = vmatprep.mubr.f32.mxu0 %v5854
  %7710 = vmatmul.mubr.f32.gmra.mrb[0].mxu0 %v5853
  %v7711 = vpop.f32.mrb[0].mxu0
  %v7712 = vadd.f32 %v7327, %v7711
  %v7713 = vpop.f32.mrb[0].mxu0
  %7714 = vmatprep.mubr.f32.mxu0 %v5863
  %7715 = vmatmul.mubr.f32.gmra.mrb[0].mxu0 %v5862
  %v7716 = vpop.f32.mrb[0].mxu0
  %v7717 = vadd.f32 %v7332, %v7716
  %v7718 = vpop.f32.mrb[0].mxu0
  %7719 = vmatprep.mubr.f32.mxu0 %v5872
  %7720 = vmatmul.mubr.f32.gmra.mrb[0].mxu0 %v5871
  %v7721 = vpop.f32.mrb[0].mxu0
  %v7722 = vadd.f32 %v7337, %v7721
  %v7723 = vpop.f32.mrb[0].mxu0
  %7724 = vmatprep.mubr.f32.mxu0 %v5881
  %7725 = vmatmul.mubr.f32.gmra.mrb[0].mxu0 %v5880
  %v7726 = vpop.f32.mrb[0].mxu0
  %v7727 = vadd.f32 %v7342, %v7726
  %v7728 = vpop.f32.mrb[0].mxu0
  %7729 = vmatprep.mubr.f32.mxu0 %v5890
  %7730 = vmatmul.mubr.f32.gmra.mrb[0].mxu0 %v5889
  %v7731 = vpop.f32.mrb[0].mxu0
  %v7732 = vadd.f32 %v7347, %v7731
  %v7733 = vpop.f32.mrb[0].mxu0
  %7734 = vmatprep.mubr.f32.mxu0 %v5899
  %7735 = vmatmul.mubr.f32.gmra.mrb[0].mxu0 %v5898
  %v7736 = vpop.f32.mrb[0].mxu0
  %v7737 = vadd.f32 %v7352, %v7736
  %v7738 = vpop.f32.mrb[0].mxu0
  %7739 = vmatprep.mubr.f32.mxu0 %v5908
  %7740 = vmatmul.mubr.f32.gmra.mrb[0].mxu0 %v5907
  %v7741 = vpop.f32.mrb[0].mxu0
  %v7742 = vadd.f32 %v7357, %v7741
  %v7743 = vpop.f32.mrb[0].mxu0
  %7744 = vmatprep.mubr.f32.mxu0 %v5917
  %7745 = vmatmul.mubr.f32.gmra.mrb[0].mxu0 %v5916
  %v7746 = vpop.f32.mrb[0].mxu0
  %v7747 = vadd.f32 %v7362, %v7746
  %v7748 = vpop.f32.mrb[0].mxu0
  %7749 = vmatprep.mubr.f32.mxu0 %v5926
  %7750 = vmatmul.mubr.f32.gmra.mrb[0].mxu0 %v5925
  %v7751 = vpop.f32.mrb[0].mxu0
  %v7752 = vadd.f32 %v7367, %v7751
  %v7753 = vpop.f32.mrb[0].mxu0
  %7754 = vmatprep.mubr.f32.mxu0 %v5935
  %7755 = vmatmul.mubr.f32.gmra.mrb[0].mxu0 %v5934
  %v7756 = vpop.f32.mrb[0].mxu0
  %v7757 = vadd.f32 %v7372, %v7756
  %v7758 = vpop.f32.mrb[0].mxu0
  %7759 = vmatprep.mubr.f32.mxu0 %v5944
  %7760 = vmatmul.mubr.f32.gmra.mrb[0].mxu0 %v5943
  %v7761 = vpop.f32.mrb[0].mxu0
  %v7762 = vadd.f32 %v7377, %v7761
  %v7763 = vpop.f32.mrb[0].mxu0
  %7764 = vmatprep.mubr.f32.mxu0 %v5953
  %7765 = vmatmul.mubr.f32.gmra.mrb[0].mxu0 %v5952
  %v7766 = vpop.f32.mrb[0].mxu0
  %v7767 = vadd.f32 %v7382, %v7766
  %v7768 = vpop.f32.mrb[0].mxu0
  %7769 = vmatprep.mubr.f32.mxu0 %v5962
  %7770 = vmatmul.mubr.f32.gmra.mrb[0].mxu0 %v5961
  %v7771 = vpop.f32.mrb[0].mxu0
  %v7772 = vadd.f32 %v7387, %v7771
  %v7773 = vpop.f32.mrb[0].mxu0
  %7774 = vmatprep.mubr.f32.mxu0 %v5971
  %7775 = vmatmul.mubr.f32.gmra.mrb[0].mxu0 %v5970
  %v7776 = vpop.f32.mrb[0].mxu0
  %v7777 = vadd.f32 %v7392, %v7776
  %v7778 = vpop.f32.mrb[0].mxu0
  %7779 = vmatprep.mubr.f32.mxu0 %v5980
  %7780 = vmatmul.mubr.f32.gmra.mrb[0].mxu0 %v5979
  %v7781 = vpop.f32.mrb[0].mxu0
  %v7782 = vadd.f32 %v7397, %v7781
  %v7783 = vpop.f32.mrb[0].mxu0
  %7784 = vmatprep.mubr.f32.mxu0 %v5989
  %7785 = vmatmul.mubr.f32.gmra.mrb[0].mxu0 %v5988
  %v7786 = vpop.f32.mrb[0].mxu0
  %v7787 = vadd.f32 %v7402, %v7786
  %v7788 = vpop.f32.mrb[0].mxu0
  %7789 = vmatprep.mubr.f32.mxu0 %v5998
  %7790 = vmatmul.mubr.f32.gmra.mrb[0].mxu0 %v5997
  %v7791 = vpop.f32.mrb[0].mxu0
  %v7792 = vadd.f32 %v7407, %v7791
  %v7793 = vpop.f32.mrb[0].mxu0
  %7794 = vmatprep.mubr.f32.mxu0 %v6007
  %7795 = vmatmul.mubr.f32.gmra.mrb[0].mxu0 %v6006
  %v7796 = vpop.f32.mrb[0].mxu0
  %v7797 = vadd.f32 %v7412, %v7796
  %v7798 = vpop.f32.mrb[0].mxu0
  %7799 = vmatprep.mubr.f32.mxu0 %v6016
  %7800 = vmatmul.mubr.f32.gmra.mrb[0].mxu0 %v6015
  %v7801 = vpop.f32.mrb[0].mxu0
  %v7802 = vadd.f32 %v7417, %v7801
  %v7803 = vpop.f32.mrb[0].mxu0
  %7804 = vmatprep.mubr.f32.mxu0 %v6025
  %7805 = vmatmul.mubr.f32.gmra.mrb[0].mxu0 %v6024
  %v7806 = vpop.f32.mrb[0].mxu0
  %v7807 = vadd.f32 %v7422, %v7806
  %v7808 = vpop.f32.mrb[0].mxu0
  %7809 = vmatprep.mubr.f32.mxu0 %v6034
  %7810 = vmatmul.mubr.f32.gmra.mrb[0].mxu0 %v6033
  %v7811 = vpop.f32.mrb[0].mxu0
  %v7812 = vadd.f32 %v7427, %v7811
  %v7813 = vpop.f32.mrb[0].mxu0
  %7814 = vmatprep.mubr.f32.mxu0 %v6043
  %7815 = vmatmul.mubr.f32.gmra.mrb[0].mxu0 %v6042
  %v7816 = vpop.f32.mrb[0].mxu0
  %v7817 = vadd.f32 %v7432, %v7816
  %v7818 = vpop.f32.mrb[0].mxu0
  %7819 = vmatprep.mubr.f32.mxu0 %v6052
  %7820 = vmatmul.mubr.f32.gmra.mrb[0].mxu0 %v6051
  %v7821 = vpop.f32.mrb[0].mxu0
  %v7822 = vadd.f32 %v7437, %v7821
  %v7823 = vpop.f32.mrb[0].mxu0
  %7824 = vmatprep.mubr.f32.mxu0 %v6061
  %7825 = vmatmul.mubr.f32.gmra.mrb[0].mxu0 %v6060
  %v7826 = vpop.f32.mrb[0].mxu0
  %v7827 = vadd.f32 %v7442, %v7826
  %v7828 = vpop.f32.mrb[0].mxu0
  %7829 = vmatprep.mubr.f32.mxu0 %v6070
  %7830 = vmatmul.mubr.f32.gmra.mrb[0].mxu0 %v6069
  %v7831 = vpop.f32.mrb[0].mxu0
  %v7832 = vadd.f32 %v7447, %v7831
  %v7833 = vpop.f32.mrb[0].mxu0
  %7834 = vmatprep.mubr.f32.mxu0 %v6079
  %7835 = vmatmul.mubr.f32.gmra.mrb[0].mxu0 %v6078
  %v7836 = vpop.f32.mrb[0].mxu0
  %v7837 = vadd.f32 %v7452, %v7836
  %v7838 = vpop.f32.mrb[0].mxu0
  %7839 = vmatprep.mubr.f32.mxu0 %v6088
  %7840 = vmatmul.mubr.f32.gmra.mrb[0].mxu0 %v6087
  %v7841 = vpop.f32.mrb[0].mxu0
  %v7842 = vadd.f32 %v7457, %v7841
  %v7843 = vpop.f32.mrb[0].mxu0
  %7844 = vmatprep.mubr.f32.mxu0 %v6097
  %7845 = vmatmul.mubr.f32.gmra.mrb[0].mxu0 %v6096
  %v7846 = vpop.f32.mrb[0].mxu0
  %v7847 = vadd.f32 %v7462, %v7846
  %v7848 = vpop.f32.mrb[0].mxu0
  %7849 = vmatprep.mubr.f32.mxu0 %v6106
  %7850 = vmatmul.mubr.f32.gmra.mrb[0].mxu0 %v6105
  %v7851 = vpop.f32.mrb[0].mxu0
  %v7852 = vadd.f32 %v7467, %v7851
  %v7853 = vpop.f32.mrb[0].mxu0
  %7854 = vmatprep.mubr.f32.mxu0 %v6115
  %7855 = vmatmul.mubr.f32.gmra.mrb[0].mxu0 %v6114
  %v7856 = vpop.f32.mrb[0].mxu0
  %v7857 = vadd.f32 %v7472, %v7856
  %v7858 = vpop.f32.mrb[0].mxu0
  %7859 = vmatprep.mubr.f32.mxu0 %v6124
  %7860 = vmatmul.mubr.f32.gmra.mrb[0].mxu0 %v6123
  %v7861 = vpop.f32.mrb[0].mxu0
  %v7862 = vadd.f32 %v7477, %v7861
  %v7863 = vpop.f32.mrb[0].mxu0
  %7864 = vmatprep.mubr.f32.mxu0 %v6133
  %7865 = vmatmul.mubr.f32.gmra.mrb[0].mxu0 %v6132
  %v7866 = vpop.f32.mrb[0].mxu0
  %v7867 = vadd.f32 %v7482, %v7866
  %v7868 = vpop.f32.mrb[0].mxu0
  %7869 = vmatprep.mubr.f32.mxu0 %v6142
  %7870 = vmatmul.mubr.f32.gmra.mrb[0].mxu0 %v6141
  %v7871 = vpop.f32.mrb[0].mxu0
  %v7872 = vadd.f32 %v7487, %v7871
  %v7873 = vpop.f32.mrb[0].mxu0
  %7874 = vmatprep.mubr.f32.mxu0 %v6151
  %7875 = vmatmul.mubr.f32.gmra.mrb[0].mxu0 %v6150
  %v7876 = vpop.f32.mrb[0].mxu0
  %v7877 = vadd.f32 %v7492, %v7876
  %v7878 = vpop.f32.mrb[0].mxu0
  %7879 = vmatprep.mubr.f32.mxu0 %v6160
  %7880 = vmatmul.mubr.f32.gmra.mrb[0].mxu0 %v6159
  %v7881 = vpop.f32.mrb[0].mxu0
  %v7882 = vadd.f32 %v7497, %v7881
  %v7883 = vpop.f32.mrb[0].mxu0
  %7884 = vmatprep.mubr.f32.mxu0 %v6169
  %7885 = vmatmul.mubr.f32.gmra.mrb[0].mxu0 %v6168
  %v7886 = vpop.f32.mrb[0].mxu0
  %v7887 = vadd.f32 %v7502, %v7886
  %v7888 = vpop.f32.mrb[0].mxu0
  %7889 = vmatprep.mubr.f32.mxu0 %v6178
  %7890 = vmatmul.mubr.f32.gmra.mrb[0].mxu0 %v6177
  %v7891 = vpop.f32.mrb[0].mxu0
  %v7892 = vadd.f32 %v7507, %v7891
  %v7893 = vpop.f32.mrb[0].mxu0
  %7894 = vmatprep.mubr.f32.mxu0 %v6187
  %7895 = vmatmul.mubr.f32.gmra.mrb[0].mxu0 %v6186
  %v7896 = vpop.f32.mrb[0].mxu0
  %v7897 = vadd.f32 %v7512, %v7896
  %v7898 = vpop.f32.mrb[0].mxu0
  %7899 = vmatprep.mubr.f32.mxu0 %v6196
  %7900 = vmatmul.mubr.f32.gmra.mrb[0].mxu0 %v6195
  %v7901 = vpop.f32.mrb[0].mxu0
  %v7902 = vadd.f32 %v7517, %v7901
  %v7903 = vpop.f32.mrb[0].mxu0
  %7904 = vmatprep.mubr.f32.mxu0 %v6205
  %7905 = vmatmul.mubr.f32.gmra.mrb[0].mxu0 %v6204
  %v7906 = vpop.f32.mrb[0].mxu0
  %v7907 = vadd.f32 %v7522, %v7906
  %v7908 = vpop.f32.mrb[0].mxu0
  %7909 = vmatprep.mubr.f32.mxu0 %v6214
  %7910 = vmatmul.mubr.f32.gmra.mrb[0].mxu0 %v6213
  %v7911 = vpop.f32.mrb[0].mxu0
  %v7912 = vadd.f32 %v7527, %v7911
  %v7913 = vpop.f32.mrb[0].mxu0
  %7914 = vmatprep.mubr.f32.mxu0 %v6223
  %7915 = vmatmul.mubr.f32.gmra.mrb[0].mxu0 %v6222
  %v7916 = vpop.f32.mrb[0].mxu0
  %v7917 = vadd.f32 %v7532, %v7916
  %v7918 = vpop.f32.mrb[0].mxu0
  %7919 = vmatprep.mubr.f32.mxu0 %v6232
  %7920 = vmatmul.mubr.f32.gmra.mrb[0].mxu0 %v6231
  %v7921 = vpop.f32.mrb[0].mxu0
  %v7922 = vadd.f32 %v7537, %v7921
  %v7923 = vpop.f32.mrb[0].mxu0
  %7924 = vdwg.mxu0
  %7925 = vmatprep.subr.mxu0 0.0
  %7926 = vmatpush1.msra.mxu0 %v6362
  %7927 = vmatprep.subr.mxu0 0.0
  %7928 = vmatpush1.msra.mxu0 %v6363
  %7929 = vmatprep.subr.mxu0 0.0
  %7930 = vmatpush1.msra.mxu0 %v6364
  %7931 = vmatprep.subr.mxu0 0.0
  %7932 = vmatpush1.msra.mxu0 %v6365
  %7933 = vmatprep.subr.mxu0 0.0
  %7934 = vmatpush1.msra.mxu0 %v6366
  %7935 = vmatprep.subr.mxu0 0.0
  %7936 = vmatpush1.msra.mxu0 %v6367
  %7937 = vmatprep.subr.mxu0 0.0
  %7938 = vmatpush1.msra.mxu0 %v6368
  %7939 = vmatprep.subr.mxu0 0.0
  %7940 = vmatpush1.msra.mxu0 %v6369
  %7941 = vmatprep.subr.mxu0 0.0
  %7942 = vmatpush1.msra.mxu0 %v6370
  %7943 = vmatprep.subr.mxu0 0.0
  %7944 = vmatpush1.msra.mxu0 %v6371
  %7945 = vmatprep.subr.mxu0 0.0
  %7946 = vmatpush1.msra.mxu0 %v6372
  %7947 = vmatprep.subr.mxu0 0.0
  %7948 = vmatpush1.msra.mxu0 %v6373
  %7949 = vmatprep.subr.mxu0 0.0
  %7950 = vmatpush1.msra.mxu0 %v6374
  %7951 = vmatprep.subr.mxu0 0.0
  %7952 = vmatpush1.msra.mxu0 %v6375
  %7953 = vmatprep.subr.mxu0 0.0
  %7954 = vmatpush1.msra.mxu0 %v6376
  %7955 = vmatprep.subr.mxu0 0.0
  %7956 = vmatpush1.msra.mxu0 %v6377
  %7957 = vmatprep.subr.mxu0 0.0
  %7958 = vmatpush1.msra.mxu0 0.0
  %7959 = vmatprep.subr.mxu0 0.0
  %7960 = vmatpush1.msra.mxu0 0.0
  %7961 = vmatprep.subr.mxu0 0.0
  %7962 = vmatpush1.msra.mxu0 0.0
  %7963 = vmatprep.subr.mxu0 0.0
  %7964 = vmatpush1.msra.mxu0 0.0
  %7965 = vmatprep.subr.mxu0 0.0
  %7966 = vmatpush1.msra.mxu0 0.0
  %7967 = vmatprep.subr.mxu0 0.0
  %7968 = vmatpush1.msra.mxu0 0.0
  %7969 = vmatprep.subr.mxu0 0.0
  %7970 = vmatpush1.msra.mxu0 0.0
  %7971 = vmatprep.subr.mxu0 0.0
  %7972 = vmatpush1.msra.mxu0 0.0
  %7973 = vmatprep.subr.mxu0 0.0
  %7974 = vmatpush1.msra.mxu0 0.0
  %7975 = vmatprep.subr.mxu0 0.0
  %7976 = vmatpush1.msra.mxu0 0.0
  %7977 = vmatprep.subr.mxu0 0.0
  %7978 = vmatpush1.msra.mxu0 0.0
  %7979 = vmatprep.subr.mxu0 0.0
  %7980 = vmatpush1.msra.mxu0 0.0
  %7981 = vmatprep.subr.mxu0 0.0
  %7982 = vmatpush1.msra.mxu0 0.0
  %7983 = vmatprep.subr.mxu0 0.0
  %7984 = vmatpush1.msra.mxu0 0.0
  %7985 = vmatprep.subr.mxu0 0.0
  %7986 = vmatpush1.msra.mxu0 0.0
  %7987 = vmatprep.subr.mxu0 0.0
  %7988 = vmatpush1.msra.mxu0 0.0
  %7989 = vmatprep.mubr.f32.mxu0 0.0
  %7990 = vmatmul.mubr.f32.gmra.mrb[0].mxu0 %v5666
  %v7991 = vpop.f32.mrb[0].mxu0
  %v7992 = vadd.f32 %v7607, %v7991
  %v7993 = vpop.f32.mrb[0].mxu0
  %7994 = vmatprep.mubr.f32.mxu0 0.0
  %7995 = vmatmul.mubr.f32.gmra.mrb[0].mxu0 %v5675
  %v7996 = vpop.f32.mrb[0].mxu0
  %v7997 = vadd.f32 %v7612, %v7996
  %v7998 = vpop.f32.mrb[0].mxu0
  %7999 = vmatprep.mubr.f32.mxu0 0.0
  %8000 = vmatmul.mubr.f32.gmra.mrb[0].mxu0 %v5684
  %v8001 = vpop.f32.mrb[0].mxu0
  %v8002 = vadd.f32 %v7617, %v8001
  %v8003 = vpop.f32.mrb[0].mxu0
  %8004 = vmatprep.mubr.f32.mxu0 0.0
  %8005 = vmatmul.mubr.f32.gmra.mrb[0].mxu0 %v5693
  %v8006 = vpop.f32.mrb[0].mxu0
  %v8007 = vadd.f32 %v7622, %v8006
  %v8008 = vpop.f32.mrb[0].mxu0
  %8009 = vmatprep.mubr.f32.mxu0 0.0
  %8010 = vmatmul.mubr.f32.gmra.mrb[0].mxu0 %v5702
  %v8011 = vpop.f32.mrb[0].mxu0
  %v8012 = vadd.f32 %v7627, %v8011
  %v8013 = vpop.f32.mrb[0].mxu0
  %8014 = vmatprep.mubr.f32.mxu0 0.0
  %8015 = vmatmul.mubr.f32.gmra.mrb[0].mxu0 %v5711
  %v8016 = vpop.f32.mrb[0].mxu0
  %v8017 = vadd.f32 %v7632, %v8016
  %v8018 = vpop.f32.mrb[0].mxu0
  %8019 = vmatprep.mubr.f32.mxu0 0.0
  %8020 = vmatmul.mubr.f32.gmra.mrb[0].mxu0 %v5720
  %v8021 = vpop.f32.mrb[0].mxu0
  %v8022 = vadd.f32 %v7637, %v8021
  %v8023 = vpop.f32.mrb[0].mxu0
  %8024 = vmatprep.mubr.f32.mxu0 0.0
  %8025 = vmatmul.mubr.f32.gmra.mrb[0].mxu0 %v5729
  %v8026 = vpop.f32.mrb[0].mxu0
  %v8027 = vadd.f32 %v7642, %v8026
  %v8028 = vpop.f32.mrb[0].mxu0
  %8029 = vmatprep.mubr.f32.mxu0 0.0
  %8030 = vmatmul.mubr.f32.gmra.mrb[0].mxu0 %v5738
  %v8031 = vpop.f32.mrb[0].mxu0
  %v8032 = vadd.f32 %v7647, %v8031
  %v8033 = vpop.f32.mrb[0].mxu0
  %8034 = vmatprep.mubr.f32.mxu0 0.0
  %8035 = vmatmul.mubr.f32.gmra.mrb[0].mxu0 %v5747
  %v8036 = vpop.f32.mrb[0].mxu0
  %v8037 = vadd.f32 %v7652, %v8036
  %v8038 = vpop.f32.mrb[0].mxu0
  %8039 = vmatprep.mubr.f32.mxu0 0.0
  %8040 = vmatmul.mubr.f32.gmra.mrb[0].mxu0 %v5756
  %v8041 = vpop.f32.mrb[0].mxu0
  %v8042 = vadd.f32 %v7657, %v8041
  %v8043 = vpop.f32.mrb[0].mxu0
  %8044 = vmatprep.mubr.f32.mxu0 0.0
  %8045 = vmatmul.mubr.f32.gmra.mrb[0].mxu0 %v5765
  %v8046 = vpop.f32.mrb[0].mxu0
  %v8047 = vadd.f32 %v7662, %v8046
  %v8048 = vpop.f32.mrb[0].mxu0
  %8049 = vmatprep.mubr.f32.mxu0 0.0
  %8050 = vmatmul.mubr.f32.gmra.mrb[0].mxu0 %v5774
  %v8051 = vpop.f32.mrb[0].mxu0
  %v8052 = vadd.f32 %v7667, %v8051
  %v8053 = vpop.f32.mrb[0].mxu0
  %8054 = vmatprep.mubr.f32.mxu0 0.0
  %8055 = vmatmul.mubr.f32.gmra.mrb[0].mxu0 %v5783
  %v8056 = vpop.f32.mrb[0].mxu0
  %v8057 = vadd.f32 %v7672, %v8056
  %v8058 = vpop.f32.mrb[0].mxu0
  %8059 = vmatprep.mubr.f32.mxu0 0.0
  %8060 = vmatmul.mubr.f32.gmra.mrb[0].mxu0 %v5792
  %v8061 = vpop.f32.mrb[0].mxu0
  %v8062 = vadd.f32 %v7677, %v8061
  %v8063 = vpop.f32.mrb[0].mxu0
  %8064 = vmatprep.mubr.f32.mxu0 0.0
  %8065 = vmatmul.mubr.f32.gmra.mrb[0].mxu0 %v5801
  %v8066 = vpop.f32.mrb[0].mxu0
  %v8067 = vadd.f32 %v7682, %v8066
  %v8068 = vpop.f32.mrb[0].mxu0
  %8069 = vmatprep.mubr.f32.mxu0 0.0
  %8070 = vmatmul.mubr.f32.gmra.mrb[0].mxu0 %v5810
  %v8071 = vpop.f32.mrb[0].mxu0
  %v8072 = vadd.f32 %v7687, %v8071
  %v8073 = vpop.f32.mrb[0].mxu0
  %8074 = vmatprep.mubr.f32.mxu0 0.0
  %8075 = vmatmul.mubr.f32.gmra.mrb[0].mxu0 %v5819
  %v8076 = vpop.f32.mrb[0].mxu0
  %v8077 = vadd.f32 %v7692, %v8076
  %v8078 = vpop.f32.mrb[0].mxu0
  %8079 = vmatprep.mubr.f32.mxu0 0.0
  %8080 = vmatmul.mubr.f32.gmra.mrb[0].mxu0 %v5828
  %v8081 = vpop.f32.mrb[0].mxu0
  %v8082 = vadd.f32 %v7697, %v8081
  %v8083 = vpop.f32.mrb[0].mxu0
  %8084 = vmatprep.mubr.f32.mxu0 0.0
  %8085 = vmatmul.mubr.f32.gmra.mrb[0].mxu0 %v5837
  %v8086 = vpop.f32.mrb[0].mxu0
  %v8087 = vadd.f32 %v7702, %v8086
  %v8088 = vpop.f32.mrb[0].mxu0
  %8089 = vmatprep.mubr.f32.mxu0 0.0
  %8090 = vmatmul.mubr.f32.gmra.mrb[0].mxu0 %v5846
  %v8091 = vpop.f32.mrb[0].mxu0
  %v8092 = vadd.f32 %v7707, %v8091
  %v8093 = vpop.f32.mrb[0].mxu0
  %8094 = vmatprep.mubr.f32.mxu0 0.0
  %8095 = vmatmul.mubr.f32.gmra.mrb[0].mxu0 %v5855
  %v8096 = vpop.f32.mrb[0].mxu0
  %v8097 = vadd.f32 %v7712, %v8096
  %v8098 = vpop.f32.mrb[0].mxu0
  %8099 = vmatprep.mubr.f32.mxu0 0.0
  %8100 = vmatmul.mubr.f32.gmra.mrb[0].mxu0 %v5864
  %v8101 = vpop.f32.mrb[0].mxu0
  %v8102 = vadd.f32 %v7717, %v8101
  %v8103 = vpop.f32.mrb[0].mxu0
  %8104 = vmatprep.mubr.f32.mxu0 0.0
  %8105 = vmatmul.mubr.f32.gmra.mrb[0].mxu0 %v5873
  %v8106 = vpop.f32.mrb[0].mxu0
  %v8107 = vadd.f32 %v7722, %v8106
  %v8108 = vpop.f32.mrb[0].mxu0
  %8109 = vmatprep.mubr.f32.mxu0 0.0
  %8110 = vmatmul.mubr.f32.gmra.mrb[0].mxu0 %v5882
  %v8111 = vpop.f32.mrb[0].mxu0
  %v8112 = vadd.f32 %v7727, %v8111
  %v8113 = vpop.f32.mrb[0].mxu0
  %8114 = vmatprep.mubr.f32.mxu0 0.0
  %8115 = vmatmul.mubr.f32.gmra.mrb[0].mxu0 %v5891
  %v8116 = vpop.f32.mrb[0].mxu0
  %v8117 = vadd.f32 %v7732, %v8116
  %v8118 = vpop.f32.mrb[0].mxu0
  %8119 = vmatprep.mubr.f32.mxu0 0.0
  %8120 = vmatmul.mubr.f32.gmra.mrb[0].mxu0 %v5900
  %v8121 = vpop.f32.mrb[0].mxu0
  %v8122 = vadd.f32 %v7737, %v8121
  %v8123 = vpop.f32.mrb[0].mxu0
  %8124 = vmatprep.mubr.f32.mxu0 0.0
  %8125 = vmatmul.mubr.f32.gmra.mrb[0].mxu0 %v5909
  %v8126 = vpop.f32.mrb[0].mxu0
  %v8127 = vadd.f32 %v7742, %v8126
  %v8128 = vpop.f32.mrb[0].mxu0
  %8129 = vmatprep.mubr.f32.mxu0 0.0
  %8130 = vmatmul.mubr.f32.gmra.mrb[0].mxu0 %v5918
  %v8131 = vpop.f32.mrb[0].mxu0
  %v8132 = vadd.f32 %v7747, %v8131
  %v8133 = vpop.f32.mrb[0].mxu0
  %8134 = vmatprep.mubr.f32.mxu0 0.0
  %8135 = vmatmul.mubr.f32.gmra.mrb[0].mxu0 %v5927
  %v8136 = vpop.f32.mrb[0].mxu0
  %v8137 = vadd.f32 %v7752, %v8136
  %v8138 = vpop.f32.mrb[0].mxu0
  %8139 = vmatprep.mubr.f32.mxu0 0.0
  %8140 = vmatmul.mubr.f32.gmra.mrb[0].mxu0 %v5936
  %v8141 = vpop.f32.mrb[0].mxu0
  %v8142 = vadd.f32 %v7757, %v8141
  %v8143 = vpop.f32.mrb[0].mxu0
  %8144 = vmatprep.mubr.f32.mxu0 0.0
  %8145 = vmatmul.mubr.f32.gmra.mrb[0].mxu0 %v5945
  %v8146 = vpop.f32.mrb[0].mxu0
  %v8147 = vadd.f32 %v7762, %v8146
  %v8148 = vpop.f32.mrb[0].mxu0
  %8149 = vmatprep.mubr.f32.mxu0 0.0
  %8150 = vmatmul.mubr.f32.gmra.mrb[0].mxu0 %v5954
  %v8151 = vpop.f32.mrb[0].mxu0
  %v8152 = vadd.f32 %v7767, %v8151
  %v8153 = vpop.f32.mrb[0].mxu0
  %8154 = vmatprep.mubr.f32.mxu0 0.0
  %8155 = vmatmul.mubr.f32.gmra.mrb[0].mxu0 %v5963
  %v8156 = vpop.f32.mrb[0].mxu0
  %v8157 = vadd.f32 %v7772, %v8156
  %v8158 = vpop.f32.mrb[0].mxu0
  %8159 = vmatprep.mubr.f32.mxu0 0.0
  %8160 = vmatmul.mubr.f32.gmra.mrb[0].mxu0 %v5972
  %v8161 = vpop.f32.mrb[0].mxu0
  %v8162 = vadd.f32 %v7777, %v8161
  %v8163 = vpop.f32.mrb[0].mxu0
  %8164 = vmatprep.mubr.f32.mxu0 0.0
  %8165 = vmatmul.mubr.f32.gmra.mrb[0].mxu0 %v5981
  %v8166 = vpop.f32.mrb[0].mxu0
  %v8167 = vadd.f32 %v7782, %v8166
  %v8168 = vpop.f32.mrb[0].mxu0
  %8169 = vmatprep.mubr.f32.mxu0 0.0
  %8170 = vmatmul.mubr.f32.gmra.mrb[0].mxu0 %v5990
  %v8171 = vpop.f32.mrb[0].mxu0
  %v8172 = vadd.f32 %v7787, %v8171
  %v8173 = vpop.f32.mrb[0].mxu0
  %8174 = vmatprep.mubr.f32.mxu0 0.0
  %8175 = vmatmul.mubr.f32.gmra.mrb[0].mxu0 %v5999
  %v8176 = vpop.f32.mrb[0].mxu0
  %v8177 = vadd.f32 %v7792, %v8176
  %v8178 = vpop.f32.mrb[0].mxu0
  %8179 = vmatprep.mubr.f32.mxu0 0.0
  %8180 = vmatmul.mubr.f32.gmra.mrb[0].mxu0 %v6008
  %v8181 = vpop.f32.mrb[0].mxu0
  %v8182 = vadd.f32 %v7797, %v8181
  %v8183 = vpop.f32.mrb[0].mxu0
  %8184 = vmatprep.mubr.f32.mxu0 0.0
  %8185 = vmatmul.mubr.f32.gmra.mrb[0].mxu0 %v6017
  %v8186 = vpop.f32.mrb[0].mxu0
  %v8187 = vadd.f32 %v7802, %v8186
  %v8188 = vpop.f32.mrb[0].mxu0
  %8189 = vmatprep.mubr.f32.mxu0 0.0
  %8190 = vmatmul.mubr.f32.gmra.mrb[0].mxu0 %v6026
  %v8191 = vpop.f32.mrb[0].mxu0
  %v8192 = vadd.f32 %v7807, %v8191
  %v8193 = vpop.f32.mrb[0].mxu0
  %8194 = vmatprep.mubr.f32.mxu0 0.0
  %8195 = vmatmul.mubr.f32.gmra.mrb[0].mxu0 %v6035
  %v8196 = vpop.f32.mrb[0].mxu0
  %v8197 = vadd.f32 %v7812, %v8196
  %v8198 = vpop.f32.mrb[0].mxu0
  %8199 = vmatprep.mubr.f32.mxu0 0.0
  %8200 = vmatmul.mubr.f32.gmra.mrb[0].mxu0 %v6044
  %v8201 = vpop.f32.mrb[0].mxu0
  %v8202 = vadd.f32 %v7817, %v8201
  %v8203 = vpop.f32.mrb[0].mxu0
  %8204 = vmatprep.mubr.f32.mxu0 0.0
  %8205 = vmatmul.mubr.f32.gmra.mrb[0].mxu0 %v6053
  %v8206 = vpop.f32.mrb[0].mxu0
  %v8207 = vadd.f32 %v7822, %v8206
  %v8208 = vpop.f32.mrb[0].mxu0
  %8209 = vmatprep.mubr.f32.mxu0 0.0
  %8210 = vmatmul.mubr.f32.gmra.mrb[0].mxu0 %v6062
  %v8211 = vpop.f32.mrb[0].mxu0
  %v8212 = vadd.f32 %v7827, %v8211
  %v8213 = vpop.f32.mrb[0].mxu0
  %8214 = vmatprep.mubr.f32.mxu0 0.0
  %8215 = vmatmul.mubr.f32.gmra.mrb[0].mxu0 %v6071
  %v8216 = vpop.f32.mrb[0].mxu0
  %v8217 = vadd.f32 %v7832, %v8216
  %v8218 = vpop.f32.mrb[0].mxu0
  %8219 = vmatprep.mubr.f32.mxu0 0.0
  %8220 = vmatmul.mubr.f32.gmra.mrb[0].mxu0 %v6080
  %v8221 = vpop.f32.mrb[0].mxu0
  %v8222 = vadd.f32 %v7837, %v8221
  %v8223 = vpop.f32.mrb[0].mxu0
  %8224 = vmatprep.mubr.f32.mxu0 0.0
  %8225 = vmatmul.mubr.f32.gmra.mrb[0].mxu0 %v6089
  %v8226 = vpop.f32.mrb[0].mxu0
  %v8227 = vadd.f32 %v7842, %v8226
  %v8228 = vpop.f32.mrb[0].mxu0
  %8229 = vmatprep.mubr.f32.mxu0 0.0
  %8230 = vmatmul.mubr.f32.gmra.mrb[0].mxu0 %v6098
  %v8231 = vpop.f32.mrb[0].mxu0
  %v8232 = vadd.f32 %v7847, %v8231
  %v8233 = vpop.f32.mrb[0].mxu0
  %8234 = vmatprep.mubr.f32.mxu0 0.0
  %8235 = vmatmul.mubr.f32.gmra.mrb[0].mxu0 %v6107
  %v8236 = vpop.f32.mrb[0].mxu0
  %v8237 = vadd.f32 %v7852, %v8236
  %v8238 = vpop.f32.mrb[0].mxu0
  %8239 = vmatprep.mubr.f32.mxu0 0.0
  %8240 = vmatmul.mubr.f32.gmra.mrb[0].mxu0 %v6116
  %v8241 = vpop.f32.mrb[0].mxu0
  %v8242 = vadd.f32 %v7857, %v8241
  %v8243 = vpop.f32.mrb[0].mxu0
  %8244 = vmatprep.mubr.f32.mxu0 0.0
  %8245 = vmatmul.mubr.f32.gmra.mrb[0].mxu0 %v6125
  %v8246 = vpop.f32.mrb[0].mxu0
  %v8247 = vadd.f32 %v7862, %v8246
  %v8248 = vpop.f32.mrb[0].mxu0
  %8249 = vmatprep.mubr.f32.mxu0 0.0
  %8250 = vmatmul.mubr.f32.gmra.mrb[0].mxu0 %v6134
  %v8251 = vpop.f32.mrb[0].mxu0
  %v8252 = vadd.f32 %v7867, %v8251
  %v8253 = vpop.f32.mrb[0].mxu0
  %8254 = vmatprep.mubr.f32.mxu0 0.0
  %8255 = vmatmul.mubr.f32.gmra.mrb[0].mxu0 %v6143
  %v8256 = vpop.f32.mrb[0].mxu0
  %v8257 = vadd.f32 %v7872, %v8256
  %v8258 = vpop.f32.mrb[0].mxu0
  %8259 = vmatprep.mubr.f32.mxu0 0.0
  %8260 = vmatmul.mubr.f32.gmra.mrb[0].mxu0 %v6152
  %v8261 = vpop.f32.mrb[0].mxu0
  %v8262 = vadd.f32 %v7877, %v8261
  %v8263 = vpop.f32.mrb[0].mxu0
  %8264 = vmatprep.mubr.f32.mxu0 0.0
  %8265 = vmatmul.mubr.f32.gmra.mrb[0].mxu0 %v6161
  %v8266 = vpop.f32.mrb[0].mxu0
  %v8267 = vadd.f32 %v7882, %v8266
  %v8268 = vpop.f32.mrb[0].mxu0
  %8269 = vmatprep.mubr.f32.mxu0 0.0
  %8270 = vmatmul.mubr.f32.gmra.mrb[0].mxu0 %v6170
  %v8271 = vpop.f32.mrb[0].mxu0
  %v8272 = vadd.f32 %v7887, %v8271
  %v8273 = vpop.f32.mrb[0].mxu0
  %8274 = vmatprep.mubr.f32.mxu0 0.0
  %8275 = vmatmul.mubr.f32.gmra.mrb[0].mxu0 %v6179
  %v8276 = vpop.f32.mrb[0].mxu0
  %v8277 = vadd.f32 %v7892, %v8276
  %v8278 = vpop.f32.mrb[0].mxu0
  %8279 = vmatprep.mubr.f32.mxu0 0.0
  %8280 = vmatmul.mubr.f32.gmra.mrb[0].mxu0 %v6188
  %v8281 = vpop.f32.mrb[0].mxu0
  %v8282 = vadd.f32 %v7897, %v8281
  %v8283 = vpop.f32.mrb[0].mxu0
  %8284 = vmatprep.mubr.f32.mxu0 0.0
  %8285 = vmatmul.mubr.f32.gmra.mrb[0].mxu0 %v6197
  %v8286 = vpop.f32.mrb[0].mxu0
  %v8287 = vadd.f32 %v7902, %v8286
  %v8288 = vpop.f32.mrb[0].mxu0
  %8289 = vmatprep.mubr.f32.mxu0 0.0
  %8290 = vmatmul.mubr.f32.gmra.mrb[0].mxu0 %v6206
  %v8291 = vpop.f32.mrb[0].mxu0
  %v8292 = vadd.f32 %v7907, %v8291
  %v8293 = vpop.f32.mrb[0].mxu0
  %8294 = vmatprep.mubr.f32.mxu0 0.0
  %8295 = vmatmul.mubr.f32.gmra.mrb[0].mxu0 %v6215
  %v8296 = vpop.f32.mrb[0].mxu0
  %v8297 = vadd.f32 %v7912, %v8296
  %v8298 = vpop.f32.mrb[0].mxu0
  %8299 = vmatprep.mubr.f32.mxu0 0.0
  %8300 = vmatmul.mubr.f32.gmra.mrb[0].mxu0 %v6224
  %v8301 = vpop.f32.mrb[0].mxu0
  %v8302 = vadd.f32 %v7917, %v8301
  %v8303 = vpop.f32.mrb[0].mxu0
  %8304 = vmatprep.mubr.f32.mxu0 0.0
  %8305 = vmatmul.mubr.f32.gmra.mrb[0].mxu0 %v6233
  %v8306 = vpop.f32.mrb[0].mxu0
  %v8307 = vadd.f32 %v7922, %v8306
  %v8308 = vpop.f32.mrb[0].mxu0
  %8309 = vdwg.mxu0
  %v8310 = vadd.f32 %v7992, %v7997
  %v8311 = vadd.f32 %v8310, %v8002
  %v8312 = vadd.f32 %v8311, %v8007
  %v8313 = vadd.f32 %v8312, %v8012
  %v8314 = vadd.f32 %v8313, %v8017
  %v8315 = vadd.f32 %v8314, %v8022
  %v8316 = vadd.f32 %v8315, %v8027
  %v8317 = vadd.f32 %v8316, %v8032
  %v8318 = vadd.f32 %v8317, %v8037
  %v8319 = vadd.f32 %v8318, %v8042
  %v8320 = vadd.f32 %v8319, %v8047
  %v8321 = vadd.f32 %v8320, %v8052
  %v8322 = vadd.f32 %v8321, %v8057
  %v8323 = vadd.f32 %v8322, %v8062
  %v8324 = vadd.f32 %v8323, %v8067
  %v8325 = vadd.f32 %v8324, %v8072
  %v8326 = vadd.f32 %v8325, %v8077
  %v8327 = vadd.f32 %v8326, %v8082
  %v8328 = vadd.f32 %v8327, %v8087
  %v8329 = vadd.f32 %v8328, %v8092
  %v8330 = vadd.f32 %v8329, %v8097
  %v8331 = vadd.f32 %v8330, %v8102
  %v8332 = vadd.f32 %v8331, %v8107
  %v8333 = vadd.f32 %v8332, %v8112
  %v8334 = vadd.f32 %v8333, %v8117
  %v8335 = vadd.f32 %v8334, %v8122
  %v8336 = vadd.f32 %v8335, %v8127
  %v8337 = vadd.f32 %v8336, %v8132
  %v8338 = vadd.f32 %v8337, %v8137
  %v8339 = vadd.f32 %v8338, %v8142
  %v8340 = vadd.f32 %v8339, %v8147
  %v8341 = vrot.slane %v8340, 4
  %v8342 = vadd.f32 %v8340, %v8341
  %v8343 = vrot.slane %v8342, 2
  %v8344 = vadd.f32 %v8342, %v8343
  %v8345 = vrot.slane %v8344, 1
  %v8346 = vadd.f32 %v8344, %v8345
  %v8347 = vadd.f32 %v8152, %v8157
  %v8348 = vadd.f32 %v8347, %v8162
  %v8349 = vadd.f32 %v8348, %v8167
  %v8350 = vadd.f32 %v8349, %v8172
  %v8351 = vadd.f32 %v8350, %v8177
  %v8352 = vadd.f32 %v8351, %v8182
  %v8353 = vadd.f32 %v8352, %v8187
  %v8354 = vadd.f32 %v8353, %v8192
  %v8355 = vadd.f32 %v8354, %v8197
  %v8356 = vadd.f32 %v8355, %v8202
  %v8357 = vadd.f32 %v8356, %v8207
  %v8358 = vadd.f32 %v8357, %v8212
  %v8359 = vadd.f32 %v8358, %v8217
  %v8360 = vadd.f32 %v8359, %v8222
  %v8361 = vadd.f32 %v8360, %v8227
  %v8362 = vadd.f32 %v8361, %v8232
  %v8363 = vadd.f32 %v8362, %v8237
  %v8364 = vadd.f32 %v8363, %v8242
  %v8365 = vadd.f32 %v8364, %v8247
  %v8366 = vadd.f32 %v8365, %v8252
  %v8367 = vadd.f32 %v8366, %v8257
  %v8368 = vadd.f32 %v8367, %v8262
  %v8369 = vadd.f32 %v8368, %v8267
  %v8370 = vadd.f32 %v8369, %v8272
  %v8371 = vadd.f32 %v8370, %v8277
  %v8372 = vadd.f32 %v8371, %v8282
  %v8373 = vadd.f32 %v8372, %v8287
  %v8374 = vadd.f32 %v8373, %v8292
  %v8375 = vadd.f32 %v8374, %v8297
  %v8376 = vadd.f32 %v8375, %v8302
  %v8377 = vadd.f32 %v8376, %v8307
  %v8378 = vrot.slane %v8377, 4
  %v8379 = vadd.f32 %v8377, %v8378
  %v8380 = vrot.slane %v8379, 2
  %v8381 = vadd.f32 %v8379, %v8380
  %v8382 = vrot.slane %v8381, 1
  %v8383 = vadd.f32 %v8381, %v8382
  %v8384 = vrcp.pop 256.0
  %v8385 = vmul.f32 %v8346, %v8384
  %v8386 = vmul.f32 %v8383, %v8384
  %v8387 = vld [vmem:[%s5] sm:$0x3]
  %v8388 = vmul.f32 %v8385, %v8387
  %v8389 = vmul.f32 %v8386, %v8387
  %vm8390 = vcmask 1041408
  %v8391 = vsel %vm8390, %v8388, 0.0
  %8392 = vadd.xlane.f32.xlu0 %v8391
  %v8393 = vpop.xlane.xlu0 %8392
  %v8394 = vsel %vm8390, %v8389, 0.0
  %8395 = vadd.xlane.f32.xlu0 %v8394
  %v8396 = vpop.xlane.xlu0 %8395
  %v8397 = vld [vmem:[%s6] sm:$0x1]
  %v8399 = vlaneseq
  %v8400 = vshrl.u32 %v8399, 7
  %v8401 = vsub.s32 0, %v8400
  %v8402 = vrot.slane %v8397, %v8401
  %8404 = vbcast.lane.b32.xlu0 %v8402, 256
  %v8405 = vpop.permute.xlu0 %8404
  %v8407 = vadd.f32 %v8393, %v8405
  %v8408 = vadd.f32 %v8396, %v8405
  %v8409 = vmax.f32 %v8407, 0.0
  %v8410 = vmax.f32 %v8408, 0.0
  %v8411 = vld [vmem:[%s7] sm:$0x3]
  %8413 = vset.pattern.permute.xlu0 0
  %8414 = vperm.xlu0 %8413, %v8409
  %v8415 = vpop.permute.xlu0 %8414
  %8418 = vset.pattern.permute.xlu0 0
  %8419 = vperm.xlu0 %8418, %v8410
  %v8420 = vpop.permute.xlu0 %8419
  %v8422 = vmul.f32 %v8415, %v8411
  %v8423 = vmul.f32 %v8420, %v8411
  %v8424 = vsel %vm8390, %v8422, 0.0
  %v8425 = vrot.slane %v8424, 4
  %v8426 = vadd.f32 %v8424, %v8425
  %v8427 = vrot.slane %v8426, 2
  %v8428 = vadd.f32 %v8426, %v8427
  %v8429 = vrot.slane %v8428, 1
  %v8430 = vadd.f32 %v8428, %v8429
  %v8431 = vsel %vm8390, %v8423, 0.0
  %v8432 = vrot.slane %v8431, 4
  %v8433 = vadd.f32 %v8431, %v8432
  %v8434 = vrot.slane %v8433, 2
  %v8435 = vadd.f32 %v8433, %v8434
  %v8436 = vrot.slane %v8435, 1
  %v8437 = vadd.f32 %v8435, %v8436
  %v8438 = vld [vmem:[%s8] sm:$0x1]
  %v8440 = vlaneseq
  %v8441 = vshrl.u32 %v8440, 7
  %v8442 = vsub.s32 0, %v8441
  %v8443 = vrot.slane %v8438, %v8442
  %v8445 = vadd.f32 %v8430, %v8443
  %v8446 = vadd.f32 %v8437, %v8443
  %v8447 = vxor.u32 %v8445, 2147483648
  %v8448 = vxor.u32 %v8446, 2147483648
  %v8449 = vmul.f32 %v8447, 1.442695
  %v8450 = vpow.pop %v8449
  %v8451 = vmul.f32 %v8448, 1.442695
  %v8452 = vpow.pop %v8451
  %v8453 = vadd.f32 %v8450, 1.0
  %v8454 = vadd.f32 %v8452, 1.0
  %v8455 = vrcp.pop %v8453
  %v8456 = vmul.f32 1.0, %v8455
  %v8457 = vrcp.pop %v8454
  %v8458 = vmul.f32 1.0, %v8457
  %v8459 = vlaneseq
  %v8460 = vshrl.u32 %v8459, 7
  %v8461 = vsub.s32 0, %v8460
  %v8462 = vrot.slane %v8456, %v8461
  %v8463 = vlaneseq
  %v8464 = vshrl.u32 %v8463, 7
  %v8465 = vsub.s32 0, %v8464
  %v8466 = vrot.slane %v8458, %v8465
  %v8467 = vmul.f32 %v7992, %v8462
  %v8468 = vmul.f32 %v7997, %v8462
  %v8469 = vmul.f32 %v8002, %v8462
  %v8470 = vmul.f32 %v8007, %v8462
  %v8471 = vmul.f32 %v8012, %v8462
  %v8472 = vmul.f32 %v8017, %v8462
  %v8473 = vmul.f32 %v8022, %v8462
  %v8474 = vmul.f32 %v8027, %v8462
  %v8475 = vmul.f32 %v8032, %v8462
  %v8476 = vmul.f32 %v8037, %v8462
  %v8477 = vmul.f32 %v8042, %v8462
  %v8478 = vmul.f32 %v8047, %v8462
  %v8479 = vmul.f32 %v8052, %v8462
  %v8480 = vmul.f32 %v8057, %v8462
  %v8481 = vmul.f32 %v8062, %v8462
  %v8482 = vmul.f32 %v8067, %v8462
  %v8483 = vmul.f32 %v8072, %v8462
  %v8484 = vmul.f32 %v8077, %v8462
  %v8485 = vmul.f32 %v8082, %v8462
  %v8486 = vmul.f32 %v8087, %v8462
  %v8487 = vmul.f32 %v8092, %v8462
  %v8488 = vmul.f32 %v8097, %v8462
  %v8489 = vmul.f32 %v8102, %v8462
  %v8490 = vmul.f32 %v8107, %v8462
  %v8491 = vmul.f32 %v8112, %v8462
  %v8492 = vmul.f32 %v8117, %v8462
  %v8493 = vmul.f32 %v8122, %v8462
  %v8494 = vmul.f32 %v8127, %v8462
  %v8495 = vmul.f32 %v8132, %v8462
  %v8496 = vmul.f32 %v8137, %v8462
  %v8497 = vmul.f32 %v8142, %v8462
  %v8498 = vmul.f32 %v8147, %v8462
  %v8499 = vmul.f32 %v8152, %v8466
  %v8500 = vmul.f32 %v8157, %v8466
  %v8501 = vmul.f32 %v8162, %v8466
  %v8502 = vmul.f32 %v8167, %v8466
  %v8503 = vmul.f32 %v8172, %v8466
  %v8504 = vmul.f32 %v8177, %v8466
  %v8505 = vmul.f32 %v8182, %v8466
  %v8506 = vmul.f32 %v8187, %v8466
  %v8507 = vmul.f32 %v8192, %v8466
  %v8508 = vmul.f32 %v8197, %v8466
  %v8509 = vmul.f32 %v8202, %v8466
  %v8510 = vmul.f32 %v8207, %v8466
  %v8511 = vmul.f32 %v8212, %v8466
  %v8512 = vmul.f32 %v8217, %v8466
  %v8513 = vmul.f32 %v8222, %v8466
  %v8514 = vmul.f32 %v8227, %v8466
  %v8515 = vmul.f32 %v8232, %v8466
  %v8516 = vmul.f32 %v8237, %v8466
  %v8517 = vmul.f32 %v8242, %v8466
  %v8518 = vmul.f32 %v8247, %v8466
  %v8519 = vmul.f32 %v8252, %v8466
  %v8520 = vmul.f32 %v8257, %v8466
  %v8521 = vmul.f32 %v8262, %v8466
  %v8522 = vmul.f32 %v8267, %v8466
  %v8523 = vmul.f32 %v8272, %v8466
  %v8524 = vmul.f32 %v8277, %v8466
  %v8525 = vmul.f32 %v8282, %v8466
  %v8526 = vmul.f32 %v8287, %v8466
  %v8527 = vmul.f32 %v8292, %v8466
  %v8528 = vmul.f32 %v8297, %v8466
  %v8529 = vmul.f32 %v8302, %v8466
  %v8530 = vmul.f32 %v8307, %v8466
  %8531 = vst [vmem:[%s9] sm:$0xff] %v8467
  %8532 = vst [vmem:[%s9 + $0x8] sm:$0xff] %v8468
  %8533 = vst [vmem:[%s9 + $0x10] sm:$0xff] %v8469
  %8534 = vst [vmem:[%s9 + $0x18] sm:$0xff] %v8470
  %8535 = vst [vmem:[%s9 + $0x20] sm:$0xff] %v8471
  %8536 = vst [vmem:[%s9 + $0x28] sm:$0xff] %v8472
  %8537 = vst [vmem:[%s9 + $0x30] sm:$0xff] %v8473
  %8538 = vst [vmem:[%s9 + $0x38] sm:$0xff] %v8474
  %8539 = vst [vmem:[%s9 + $0x40] sm:$0xff] %v8475
  %8540 = vst [vmem:[%s9 + $0x48] sm:$0xff] %v8476
  %8541 = vst [vmem:[%s9 + $0x50] sm:$0xff] %v8477
  %8542 = vst [vmem:[%s9 + $0x58] sm:$0xff] %v8478
  %8543 = vst [vmem:[%s9 + $0x60] sm:$0xff] %v8479
  %8544 = vst [vmem:[%s9 + $0x68] sm:$0xff] %v8480
  %8545 = vst [vmem:[%s9 + $0x70] sm:$0xff] %v8481
  %8546 = vst [vmem:[%s9 + $0x78] sm:$0xff] %v8482
  %8547 = vst [vmem:[%s9 + $0x80] sm:$0xff] %v8483
  %8548 = vst [vmem:[%s9 + $0x88] sm:$0xff] %v8484
  %8549 = vst [vmem:[%s9 + $0x90] sm:$0xff] %v8485
  %8550 = vst [vmem:[%s9 + $0x98] sm:$0xff] %v8486
  %8551 = vst [vmem:[%s9 + $0xa0] sm:$0xff] %v8487
  %8552 = vst [vmem:[%s9 + $0xa8] sm:$0xff] %v8488
  %8553 = vst [vmem:[%s9 + $0xb0] sm:$0xff] %v8489
  %8554 = vst [vmem:[%s9 + $0xb8] sm:$0xff] %v8490
  %8555 = vst [vmem:[%s9 + $0xc0] sm:$0xff] %v8491
  %8556 = vst [vmem:[%s9 + $0xc8] sm:$0xff] %v8492
  %8557 = vst [vmem:[%s9 + $0xd0] sm:$0xff] %v8493
  %8558 = vst [vmem:[%s9 + $0xd8] sm:$0xff] %v8494
  %8559 = vst [vmem:[%s9 + $0xe0] sm:$0xff] %v8495
  %8560 = vst [vmem:[%s9 + $0xe8] sm:$0xff] %v8496
  %8561 = vst [vmem:[%s9 + $0xf0] sm:$0xff] %v8497
  %8562 = vst [vmem:[%s9 + $0xf8] sm:$0xff] %v8498
  %8563 = vst [vmem:[%s9 + $0x100] sm:$0xff] %v8499
  %8564 = vst [vmem:[%s9 + $0x108] sm:$0xff] %v8500
  %8565 = vst [vmem:[%s9 + $0x110] sm:$0xff] %v8501
  %8566 = vst [vmem:[%s9 + $0x118] sm:$0xff] %v8502
  %8567 = vst [vmem:[%s9 + $0x120] sm:$0xff] %v8503
  %8568 = vst [vmem:[%s9 + $0x128] sm:$0xff] %v8504
  %8569 = vst [vmem:[%s9 + $0x130] sm:$0xff] %v8505
  %8570 = vst [vmem:[%s9 + $0x138] sm:$0xff] %v8506
  %8571 = vst [vmem:[%s9 + $0x140] sm:$0xff] %v8507
  %8572 = vst [vmem:[%s9 + $0x148] sm:$0xff] %v8508
  %8573 = vst [vmem:[%s9 + $0x150] sm:$0xff] %v8509
  %8574 = vst [vmem:[%s9 + $0x158] sm:$0xff] %v8510
  %8575 = vst [vmem:[%s9 + $0x160] sm:$0xff] %v8511
  %8576 = vst [vmem:[%s9 + $0x168] sm:$0xff] %v8512
  %8577 = vst [vmem:[%s9 + $0x170] sm:$0xff] %v8513
  %8578 = vst [vmem:[%s9 + $0x178] sm:$0xff] %v8514
  %8579 = vst [vmem:[%s9 + $0x180] sm:$0xff] %v8515
  %8580 = vst [vmem:[%s9 + $0x188] sm:$0xff] %v8516
  %8581 = vst [vmem:[%s9 + $0x190] sm:$0xff] %v8517
  %8582 = vst [vmem:[%s9 + $0x198] sm:$0xff] %v8518
  %8583 = vst [vmem:[%s9 + $0x1a0] sm:$0xff] %v8519
  %8584 = vst [vmem:[%s9 + $0x1a8] sm:$0xff] %v8520
  %8585 = vst [vmem:[%s9 + $0x1b0] sm:$0xff] %v8521
  %8586 = vst [vmem:[%s9 + $0x1b8] sm:$0xff] %v8522
  %8587 = vst [vmem:[%s9 + $0x1c0] sm:$0xff] %v8523
  %8588 = vst [vmem:[%s9 + $0x1c8] sm:$0xff] %v8524
  %8589 = vst [vmem:[%s9 + $0x1d0] sm:$0xff] %v8525
  %8590 = vst [vmem:[%s9 + $0x1d8] sm:$0xff] %v8526
  %8591 = vst [vmem:[%s9 + $0x1e0] sm:$0xff] %v8527
  %8592 = vst [vmem:[%s9 + $0x1e8] sm:$0xff] %v8528
  %8593 = vst [vmem:[%s9 + $0x1f0] sm:$0xff] %v8529
  %8594 = vst [vmem:[%s9 + $0x1f8] sm:$0xff] %v8530
  // Predicated region
  $region38: #{cab_forward.1} parent=0 // pred_check
    _
  $region39: #{cab_forward.1} parent=0 // pred_check_branch
    %8596 = sbr.rel (0) target = $region41
  $region40: #{cab_forward.1} parent=0 // pred_region
    _
  $region41: #{cab_forward.1} parent=0 // pred_fallthru
    _
  // Predicated region
  $region42: #{cab_forward.1} parent=0 // pred_check
    _
  $region43: #{cab_forward.1} parent=0 // pred_check_branch
    %8598 = sbr.rel (0) target = $region45
  $region44: #{cab_forward.1} parent=0 // pred_region
    _
  $region45: #{cab_forward.1} parent=0 // pred_fallthru
    _

</llo_original>
